<compile_context>
chip_gen: v6e
topology: v6e:2x2x1
jax: 0.10.0
libtpu: 0.0.40
codegen_flags: <defaults>
</compile_context>

<pallas_src>
import functools

import jax
import jax.numpy as jnp
from jax import lax
from jax.experimental import pallas as pl
from jax.experimental.pallas import tpu as pltpu


def _round_up(x, m):
    return (x + m - 1) // m * m


# ---------------------------------------------------------------------------
# Recurrent kernel: stacked LSTM over a chunk of timesteps per grid step.
# ---------------------------------------------------------------------------
def _lstm_recurrent_kernel(num_layers, t_chunk, b_pad, h_pad, matmul_dtype,
                           *refs):
    """refs = [x,                                  (VMEM: (t_chunk, B_p, E_p) f32)
               wx_hbm_0..wx_hbm_{L-1},             (pl.ANY: (in_p, 4*H_p))
               wh_hbm_0..wh_hbm_{L-1},             (pl.ANY: (H_p, 4*H_p))
               b_0..b_{L-1},                       (VMEM: (1, 4*H_p) f32)
               h_out,                              (VMEM: (t_chunk, B_p, H_p))
               wx_scr_0.., wh_scr_0..,             (VMEM scratch, matmul_dtype)
               zx_scr,                             (VMEM (t_chunk, B_p, 4*H_p) f32)
               h_scr, c_scr,                       (VMEM (L, B_p, H_p) f32)
               dma_sem]                            (DMA semaphores (2*L,))
    """
    L = num_layers
    H = h_pad
    B = b_pad

    x_ref = refs[0]
    wx_hbm = refs[1:1 + L]
    wh_hbm = refs[1 + L:1 + 2 * L]
    b_refs = refs[1 + 2 * L:1 + 3 * L]
    h_out_ref = refs[1 + 3 * L]
    scratch = refs[2 + 3 * L:]
    wx_scr = scratch[:L]
    wh_scr = scratch[L:2 * L]
    zx_scr = scratch[2 * L]
    h_scr = scratch[2 * L + 1]
    c_scr = scratch[2 * L + 2]
    dma_sem = scratch[2 * L + 3]

    @pl.when(pl.program_id(0) == 0)
    def _():
        # One-time weight load HBM -> VMEM (single-buffered, grid-invariant;
        # avoids the default 2x double-buffer VMEM cost for weights).
        copies = []
        for l in range(L):
            copies.append(
                pltpu.make_async_copy(wx_hbm[l], wx_scr[l], dma_sem.at[2 * l]))
            copies.append(
                pltpu.make_async_copy(wh_hbm[l], wh_scr[l],
                                      dma_sem.at[2 * l + 1]))
        for cp in copies:
            cp.start()
        for cp in copies:
            cp.wait()
        # h0 / c0 are zeros in the PyTorch module.
        h_scr[...] = jnp.zeros_like(h_scr)
        c_scr[...] = jnp.zeros_like(c_scr)

    # Layer-0 input projection for the WHOLE chunk: one big MXU matmul with
    # M = t_chunk * B_p rows, hoisted off the serial recurrence path.
    x_chunk = x_ref[...].reshape(t_chunk * B, -1).astype(matmul_dtype)
    zx0 = (jnp.dot(x_chunk, wx_scr[0][...],
                   preferred_element_type=jnp.float32)
           + b_refs[0][...])                                # (t_chunk*B, 4H)
    zx_scr[...] = zx0.reshape(t_chunk, B, 4 * H)

    def gates(z, c_prev):
        # Lane-aligned static gate slices (H multiple of 128); gate order
        # i, f, g, o as in torch.nn.LSTM.
        i_g = jax.nn.sigmoid(z[:, 0 * H:1 * H])
        f_g = jax.nn.sigmoid(z[:, 1 * H:2 * H])
        g_g = jnp.tanh(z[:, 2 * H:3 * H])
        o_g = jax.nn.sigmoid(z[:, 3 * H:4 * H])
        c_new = f_g * c_prev + i_g * g_g                    # f32 recurrence
        h_new = o_g * jnp.tanh(c_new)
        return h_new, c_new

    def step(i, carry):
        # Layer 0: only h_{t-1} @ W_hh sits on the serial critical path.
        z = zx_scr[i] + jnp.dot(h_scr[0].astype(matmul_dtype),
                                wh_scr[0][...],
                                preferred_element_type=jnp.float32)
        h_new, c_new = gates(z, c_scr[0])
        h_scr[0] = h_new
        c_scr[0] = c_new
        inp = h_new
        for l in range(1, L):
            z = (jnp.dot(inp.astype(matmul_dtype), wx_scr[l][...],
                         preferred_element_type=jnp.float32)
                 + jnp.dot(h_scr[l].astype(matmul_dtype), wh_scr[l][...],
                           preferred_element_type=jnp.float32)
                 + b_refs[l][...])
            h_new, c_new = gates(z, c_scr[l])
            h_scr[l] = h_new
            c_scr[l] = c_new
            inp = h_new
        h_out_ref[i] = inp                                  # last-layer hidden
        return carry

    lax.fori_loop(0, t_chunk, step, 0, unroll=True)


# ---------------------------------------------------------------------------
# Hoisted vocab projection: logits = h @ W_out + b_out, fully parallel grid.
# ---------------------------------------------------------------------------
def _vocab_proj_kernel(matmul_dtype, h_ref, w_ref, b_ref, o_ref):
    h = h_ref[...].astype(matmul_dtype)
    o_ref[...] = (jnp.dot(h, w_ref[...], preferred_element_type=jnp.float32)
                  + b_ref[...])


# ---------------------------------------------------------------------------
# Wrapper
# ---------------------------------------------------------------------------
def _prep_layer_params(w_ih, w_hh, b, in_pad, h_pad, matmul_dtype):
    """Padded split weights Wx (in_pad, 4H_p), Wh (H_p, 4H_p), bias (1, 4H_p).

    Column layout is 4 gates of width h_pad each; padding rows/cols are zero,
    so padded hidden units stay exactly 0 through the recurrence.
    """
    _, in_size, H = w_ih.shape
    Wx = jnp.zeros((in_pad, 4 * h_pad), jnp.float32)
    Wh = jnp.zeros((h_pad, 4 * h_pad), jnp.float32)
    bb = jnp.zeros((1, 4 * h_pad), jnp.float32)
    for g in range(4):
        Wx = Wx.at[:in_size, g * h_pad:g * h_pad + H].set(w_ih[g])
        Wh = Wh.at[:H, g * h_pad:g * h_pad + H].set(w_hh[g])
        bb = bb.at[:, g * h_pad:g * h_pad + H].set(b[g])
    return Wx.astype(matmul_dtype), Wh.astype(matmul_dtype), bb


def lstm_decoder_forward(encoder_out, captions, params, *,
                         t_chunk=8, matmul_dtype=jnp.bfloat16):
    """Pallas-backed forward pass of LstmDecoder.

    encoder_out: (B, E) float32
    captions:    (T, B) int32 token ids
    returns:     (T+1, B, V) float32 logits
    """
    embed_table = params["embed"]      # (V, E)
    layer_params = params["layers"]    # [(w_ih(4,in,H), w_hh(4,H,H), b(4,1,H))]
    w_out = params["w_out"]            # (H, V)
    b_out = params["b_out"]            # (1, V)

    # Glue: embedding lookup + concat with encoder_out (time-major).
    # TODO(synk): nn.Dropout(0.5) is stochastic in train mode; inference
    #             (identity) semantics are implemented here.
    emb = jnp.take(embed_table, captions, axis=0)            # (T, B, E)
    x = jnp.concatenate([encoder_out[None], emb], axis=0)    # (T+1, B, E)
    x = x.astype(jnp.float32)

    T1, B, E = x.shape
    H, V = w_out.shape
    L = len(layer_params)

    # Pad to the vreg tile: batch -> x8 (sublane), features -> x128 (lane).
    B_p = _round_up(B, 8)
    E_p = _round_up(E, 128)
    H_p = _round_up(H, 128)
    V_p = _round_up(V, 128)
    T_p = _round_up(T1, t_chunk)

    x_p = jnp.zeros((T_p, B_p, E_p), jnp.float32).at[:T1, :B, :E].set(x)

    Wxs, Whs, bs = [], [], []
    for l, (w_ih, w_hh, b) in enumerate(layer_params):
        in_pad = E_p if l == 0 else H_p
        Wx, Wh, bb = _prep_layer_params(w_ih, w_hh, b, in_pad, H_p,
                                        matmul_dtype)
        Wxs.append(Wx)
        Whs.append(Wh)
        bs.append(bb)

    # -------------------- recurrent part: h_t per timestep ----------------
    rec_kernel = functools.partial(_lstm_recurrent_kernel, L, t_chunk, B_p,
                                   H_p, matmul_dtype)

    in_specs = [pl.BlockSpec((t_chunk, B_p, E_p), lambda t: (t, 0, 0))]
    # Grid-invariant weights: keep in HBM (pl.ANY), copied ONCE into VMEM
    # scratch on grid step 0 (no per-step re-DMA, no 2x double-buffering).
    in_specs += [pl.BlockSpec(memory_space=pl.ANY) for _ in range(2 * L)]
    in_specs += [pl.BlockSpec((1, 4 * H_p), lambda t: (0, 0))
                 for _ in range(L)]

    scratch_shapes = [pltpu.VMEM(w.shape, matmul_dtype) for w in Wxs]
    scratch_shapes += [pltpu.VMEM(w.shape, matmul_dtype) for w in Whs]
    scratch_shapes += [
        pltpu.VMEM((t_chunk, B_p, 4 * H_p), jnp.float32),  # layer-0 x-proj
        pltpu.VMEM((L, B_p, H_p), jnp.float32),            # h state per layer
        pltpu.VMEM((L, B_p, H_p), jnp.float32),            # c state per layer
        pltpu.SemaphoreType.DMA((2 * L,)),
    ]

    h_all = pl.pallas_call(
        rec_kernel,
        out_shape=jax.ShapeDtypeStruct((T_p, B_p, H_p), jnp.float32),
        grid_spec=pltpu.PrefetchScalarGridSpec(
            num_scalar_prefetch=0,
            grid=(T_p // t_chunk,),
            in_specs=in_specs,
            out_specs=pl.BlockSpec((t_chunk, B_p, H_p), lambda t: (t, 0, 0)),
            scratch_shapes=scratch_shapes,
        ),
        compiler_params=pltpu.CompilerParams(
            dimension_semantics=("arbitrary",),   # recurrent over time
            vmem_limit_bytes=32 * 1024 * 1024,
        ),
    )(x_p, *Wxs, *Whs, *bs)

    # -------------------- hoisted vocab projection -------------------------
    w_out_p = (jnp.zeros((H_p, V_p), jnp.float32)
               .at[:H, :V].set(w_out).astype(matmul_dtype))
    b_out_p = jnp.zeros((1, V_p), jnp.float32).at[:, :V].set(b_out)

    M = T_p * B_p
    TM = t_chunk * B_p                        # divides M exactly
    TV = V_p                                  # lane-aligned V tile
    for cand in (4096, 2048, 1024, 512):
        if V_p % cand == 0:
            TV = cand
            break

    h2 = h_all.reshape(M, H_p)
    proj_kernel = functools.partial(_vocab_proj_kernel, matmul_dtype)
    logits_p = pl.pallas_call(
        proj_kernel,
        out_shape=jax.ShapeDtypeStruct((M, V_p), jnp.float32),
        grid_spec=pltpu.PrefetchScalarGridSpec(
            num_scalar_prefetch=0,
            grid=(M // TM, V_p // TV),
            in_specs=[
                pl.BlockSpec((TM, H_p), lambda i, j: (i, 0)),
                pl.BlockSpec((H_p, TV), lambda i, j: (0, j)),
                pl.BlockSpec((1, TV), lambda i, j: (0, j)),
            ],
            out_specs=pl.BlockSpec((TM, TV), lambda i, j: (i, j)),
        ),
        compiler_params=pltpu.CompilerParams(
            dimension_semantics=("parallel", "parallel"),
            vmem_limit_bytes=32 * 1024 * 1024,
        ),
    )(h2, w_out_p, b_out_p)

    logits = logits_p.reshape(T_p, B_p, V_p)[:T1, :B, :V]
    return logits


# ---------------------------------------------------------------------------
# Pure-JAX reference (f32, same math as the PyTorch module) and params.
# ---------------------------------------------------------------------------
def reference_forward(encoder_out, captions, params):
    emb = jnp.take(params["embed"], captions, axis=0)
    x = jnp.concatenate([encoder_out[None], emb], axis=0).astype(jnp.float32)
    L = len(params["layers"])
    T1, B, _ = x.shape
    H = params["w_out"].shape[0]
    h = jnp.zeros((L, B, H), jnp.float32)
    c = jnp.zeros((L, B, H), jnp.float32)
    outs = []
    for t in range(T1):
        inp = x[t]
        hs, cs = [], []
        for l, (w_ih, w_hh, b) in enumerate(params["layers"]):
            z = [inp @ w_ih[g] + h[l] @ w_hh[g] + b[g] for g in range(4)]
            i = jax.nn.sigmoid(z[0])
            f = jax.nn.sigmoid(z[1])
            g_ = jnp.tanh(z[2])
            o = jax.nn.sigmoid(z[3])
            cn = f * c[l] + i * g_
            hn = o * jnp.tanh(cn)
            hs.append(hn)
            cs.append(cn)
            inp = hn
        h = jnp.stack(hs)
        c = jnp.stack(cs)
        outs.append(inp @ params["w_out"] + params["b_out"])
    return jnp.stack(outs)


def make_params(key, embed_size, hidden_size, vocab_size, num_layers):
    """Deterministic synthetic parameters (shapes from LstmDecoder.__init__)."""
    keys = jax.random.split(key, 2 + 3 * num_layers + 2)
    k = iter(keys)
    scale = 0.1
    embed = scale * jax.random.normal(next(k), (vocab_size, embed_size),
                                      jnp.float32)
    layers = []
    for l in range(num_layers):
        in_size = embed_size if l == 0 else hidden_size
        w_ih = scale * jax.random.normal(next(k), (4, in_size, hidden_size),
                                         jnp.float32)
        w_hh = scale * jax.random.normal(next(k), (4, hidden_size, hidden_size),
                                         jnp.float32)
        b = scale * jax.random.normal(next(k), (4, 1, hidden_size),
                                      jnp.float32)
        layers.append((w_ih, w_hh, b))
    w_out = scale * jax.random.normal(next(k), (hidden_size, vocab_size),
                                      jnp.float32)
    b_out = scale * jax.random.normal(next(k), (1, vocab_size), jnp.float32)
    return {"embed": embed, "layers": layers, "w_out": w_out, "b_out": b_out}


if __name__ == "__main__":
    embed_size = 32
    hidden_size = 32
    vocab_size = 64
    num_layers = 2
    batch = 2
    seq_len = 8

    root = jax.random.PRNGKey(0)
    k_params, k_enc, k_cap = jax.random.split(root, 3)

    params = make_params(k_params, embed_size, hidden_size, vocab_size,
                         num_layers)
    encoder_out = jax.random.normal(k_enc, (batch, embed_size), jnp.float32)
    captions = jax.random.randint(k_cap, (seq_len, batch), 0, vocab_size,
                                  dtype=jnp.int32)

    ref = jax.block_until_ready(
        reference_forward(encoder_out, captions, params))

    # f32 MXU path: tight correctness check against the pure-JAX reference.
    out_f32 = jax.block_until_ready(
        lstm_decoder_forward(encoder_out, captions, params,
                             matmul_dtype=jnp.float32))
    assert out_f32.shape == (seq_len + 1, batch, vocab_size), out_f32.shape
    err_f32 = float(jnp.max(jnp.abs(out_f32 - ref)))
    assert jnp.allclose(out_f32, ref, atol=1e-4, rtol=1e-4), err_f32

    # bf16 MXU path (default; MXU-native on v5e/v6e/v7x): loose sanity check.
    out_bf16 = jax.block_until_ready(
        lstm_decoder_forward(encoder_out, captions, params,
                             matmul_dtype=jnp.bfloat16))
    assert out_bf16.shape == (seq_len + 1, batch, vocab_size), out_bf16.shape
    err_bf16 = float(jnp.max(jnp.abs(out_bf16 - ref)))
    assert jnp.allclose(out_bf16, ref, atol=2e-2, rtol=2e-2), err_bf16

    print("KERNEL_OK")
</pallas_src>

<mosaic_0001>
module attributes {stable_mosaic.version = 11 : i64} {
  func.func @_lstm_recurrent_kernel(%arg0: i32, %arg1: memref<8x8x128xf32, #tpu.memory_space<vmem>>, %arg2: memref<128x512xf32, #tpu.memory_space<any>>, %arg3: memref<128x512xf32, #tpu.memory_space<any>>, %arg4: memref<128x512xf32, #tpu.memory_space<any>>, %arg5: memref<128x512xf32, #tpu.memory_space<any>>, %arg6: memref<1x512xf32, #tpu.memory_space<vmem>>, %arg7: memref<1x512xf32, #tpu.memory_space<vmem>>, %arg8: memref<8x8x128xf32, #tpu.memory_space<vmem>>, %arg9: memref<128x512xf32, #tpu.memory_space<vmem>>, %arg10: memref<128x512xf32, #tpu.memory_space<vmem>>, %arg11: memref<128x512xf32, #tpu.memory_space<vmem>>, %arg12: memref<128x512xf32, #tpu.memory_space<vmem>>, %arg13: memref<8x8x512xf32, #tpu.memory_space<vmem>>, %arg14: memref<2x8x128xf32, #tpu.memory_space<vmem>>, %arg15: memref<2x8x128xf32, #tpu.memory_space<vmem>>, %arg16: memref<4x!tpu.dma_semaphore, #tpu.memory_space<semaphore_mem>>) attributes {dimension_semantics = [#tpu.dimension_semantics<arbitrary>], iteration_bounds = array<i64: 2>, scalar_prefetch = 0 : i64, scratch_operands = 8 : i64, tpu.core_type = #tpu.core_type<tc>, window_params = [{transform_indices = @transform_0, window_bounds = array<i64: 8, 8, 128>}, {}, {}, {}, {}, {pipeline_mode = #tpu.pipeline_mode<synchronous>, transform_indices = @transform_5, window_bounds = array<i64: 1, 512>}, {pipeline_mode = #tpu.pipeline_mode<synchronous>, transform_indices = @transform_6, window_bounds = array<i64: 1, 512>}, {transform_indices = @transform_7, window_bounds = array<i64: 8, 8, 128>}]} {
    %c0_i32 = arith.constant 0 : i32
    %0 = arith.cmpi eq, %arg0, %c0_i32 : i32
    %1 = arith.extui %0 : i1 to i32
    %c0_i32_0 = arith.constant 0 : i32
    %2 = arith.cmpi ne, %1, %c0_i32_0 : i32
    scf.if %2 {
      %c0_i32_370 = arith.constant 0 : i32
      %716 = tpu.memref_slice %arg16[%c0_i32_370] : memref<4x!tpu.dma_semaphore, #tpu.memory_space<semaphore_mem>> -> memref<1x!tpu.dma_semaphore, #tpu.memory_space<semaphore_mem>>
      %717 = tpu.memref_squeeze %716 : memref<1x!tpu.dma_semaphore, #tpu.memory_space<semaphore_mem>> -> memref<!tpu.dma_semaphore, #tpu.memory_space<semaphore_mem>>
      tpu.enqueue_dma source(%arg2 : memref<128x512xf32, #tpu.memory_space<any>>) target(%arg9 : memref<128x512xf32, #tpu.memory_space<vmem>>) target_semaphore(%717 : memref<!tpu.dma_semaphore, #tpu.memory_space<semaphore_mem>>)
      %c1_i32_371 = arith.constant 1 : i32
      %718 = tpu.memref_slice %arg16[%c1_i32_371] : memref<4x!tpu.dma_semaphore, #tpu.memory_space<semaphore_mem>> -> memref<1x!tpu.dma_semaphore, #tpu.memory_space<semaphore_mem>>
      %719 = tpu.memref_squeeze %718 : memref<1x!tpu.dma_semaphore, #tpu.memory_space<semaphore_mem>> -> memref<!tpu.dma_semaphore, #tpu.memory_space<semaphore_mem>>
      tpu.enqueue_dma source(%arg4 : memref<128x512xf32, #tpu.memory_space<any>>) target(%arg11 : memref<128x512xf32, #tpu.memory_space<vmem>>) target_semaphore(%719 : memref<!tpu.dma_semaphore, #tpu.memory_space<semaphore_mem>>)
      %c2_i32_372 = arith.constant 2 : i32
      %720 = tpu.memref_slice %arg16[%c2_i32_372] : memref<4x!tpu.dma_semaphore, #tpu.memory_space<semaphore_mem>> -> memref<1x!tpu.dma_semaphore, #tpu.memory_space<semaphore_mem>>
      %721 = tpu.memref_squeeze %720 : memref<1x!tpu.dma_semaphore, #tpu.memory_space<semaphore_mem>> -> memref<!tpu.dma_semaphore, #tpu.memory_space<semaphore_mem>>
      tpu.enqueue_dma source(%arg3 : memref<128x512xf32, #tpu.memory_space<any>>) target(%arg10 : memref<128x512xf32, #tpu.memory_space<vmem>>) target_semaphore(%721 : memref<!tpu.dma_semaphore, #tpu.memory_space<semaphore_mem>>)
      %c3_i32_373 = arith.constant 3 : i32
      %722 = tpu.memref_slice %arg16[%c3_i32_373] : memref<4x!tpu.dma_semaphore, #tpu.memory_space<semaphore_mem>> -> memref<1x!tpu.dma_semaphore, #tpu.memory_space<semaphore_mem>>
      %723 = tpu.memref_squeeze %722 : memref<1x!tpu.dma_semaphore, #tpu.memory_space<semaphore_mem>> -> memref<!tpu.dma_semaphore, #tpu.memory_space<semaphore_mem>>
      tpu.enqueue_dma source(%arg5 : memref<128x512xf32, #tpu.memory_space<any>>) target(%arg12 : memref<128x512xf32, #tpu.memory_space<vmem>>) target_semaphore(%723 : memref<!tpu.dma_semaphore, #tpu.memory_space<semaphore_mem>>)
      %c0_i32_374 = arith.constant 0 : i32
      %724 = tpu.memref_slice %arg16[%c0_i32_374] : memref<4x!tpu.dma_semaphore, #tpu.memory_space<semaphore_mem>> -> memref<1x!tpu.dma_semaphore, #tpu.memory_space<semaphore_mem>>
      %725 = tpu.memref_squeeze %724 : memref<1x!tpu.dma_semaphore, #tpu.memory_space<semaphore_mem>> -> memref<!tpu.dma_semaphore, #tpu.memory_space<semaphore_mem>>
      tpu.wait_dma2 semaphore(%725 : memref<!tpu.dma_semaphore, #tpu.memory_space<semaphore_mem>>) src(%arg2 : memref<128x512xf32, #tpu.memory_space<any>>) dst(%arg9 : memref<128x512xf32, #tpu.memory_space<vmem>>)
      %c1_i32_375 = arith.constant 1 : i32
      %726 = tpu.memref_slice %arg16[%c1_i32_375] : memref<4x!tpu.dma_semaphore, #tpu.memory_space<semaphore_mem>> -> memref<1x!tpu.dma_semaphore, #tpu.memory_space<semaphore_mem>>
      %727 = tpu.memref_squeeze %726 : memref<1x!tpu.dma_semaphore, #tpu.memory_space<semaphore_mem>> -> memref<!tpu.dma_semaphore, #tpu.memory_space<semaphore_mem>>
      tpu.wait_dma2 semaphore(%727 : memref<!tpu.dma_semaphore, #tpu.memory_space<semaphore_mem>>) src(%arg4 : memref<128x512xf32, #tpu.memory_space<any>>) dst(%arg11 : memref<128x512xf32, #tpu.memory_space<vmem>>)
      %c2_i32_376 = arith.constant 2 : i32
      %728 = tpu.memref_slice %arg16[%c2_i32_376] : memref<4x!tpu.dma_semaphore, #tpu.memory_space<semaphore_mem>> -> memref<1x!tpu.dma_semaphore, #tpu.memory_space<semaphore_mem>>
      %729 = tpu.memref_squeeze %728 : memref<1x!tpu.dma_semaphore, #tpu.memory_space<semaphore_mem>> -> memref<!tpu.dma_semaphore, #tpu.memory_space<semaphore_mem>>
      tpu.wait_dma2 semaphore(%729 : memref<!tpu.dma_semaphore, #tpu.memory_space<semaphore_mem>>) src(%arg3 : memref<128x512xf32, #tpu.memory_space<any>>) dst(%arg10 : memref<128x512xf32, #tpu.memory_space<vmem>>)
      %c3_i32_377 = arith.constant 3 : i32
      %730 = tpu.memref_slice %arg16[%c3_i32_377] : memref<4x!tpu.dma_semaphore, #tpu.memory_space<semaphore_mem>> -> memref<1x!tpu.dma_semaphore, #tpu.memory_space<semaphore_mem>>
      %731 = tpu.memref_squeeze %730 : memref<1x!tpu.dma_semaphore, #tpu.memory_space<semaphore_mem>> -> memref<!tpu.dma_semaphore, #tpu.memory_space<semaphore_mem>>
      tpu.wait_dma2 semaphore(%731 : memref<!tpu.dma_semaphore, #tpu.memory_space<semaphore_mem>>) src(%arg5 : memref<128x512xf32, #tpu.memory_space<any>>) dst(%arg12 : memref<128x512xf32, #tpu.memory_space<vmem>>)
      %cst_378 = arith.constant 0.000000e+00 : f32
      %732 = vector.broadcast %cst_378 : f32 to vector<2x8x128xf32>
      %c0_379 = arith.constant 0 : index
      %c0_380 = arith.constant 0 : index
      %c0_381 = arith.constant 0 : index
      %733 = vector.load %arg14[%c0_379, %c0_380, %c0_381] : memref<2x8x128xf32, #tpu.memory_space<vmem>>, vector<2x8x128xf32>
      tpu.vector_store %arg14[%c0_379, %c0_380, %c0_381], %732 {strides = array<i32>} : memref<2x8x128xf32, #tpu.memory_space<vmem>>, vector<2x8x128xf32>,
      %cst_382 = arith.constant 0.000000e+00 : f32
      %734 = vector.broadcast %cst_382 : f32 to vector<2x8x128xf32>
      %c0_383 = arith.constant 0 : index
      %c0_384 = arith.constant 0 : index
      %c0_385 = arith.constant 0 : index
      %735 = vector.load %arg15[%c0_383, %c0_384, %c0_385] : memref<2x8x128xf32, #tpu.memory_space<vmem>>, vector<2x8x128xf32>
      tpu.vector_store %arg15[%c0_383, %c0_384, %c0_385], %734 {strides = array<i32>} : memref<2x8x128xf32, #tpu.memory_space<vmem>>, vector<2x8x128xf32>,
    } else {
    }
    %c0 = arith.constant 0 : index
    %c0_1 = arith.constant 0 : index
    %c0_2 = arith.constant 0 : index
    %3 = vector.load %arg1[%c0, %c0_1, %c0_2] : memref<8x8x128xf32, #tpu.memory_space<vmem>>, vector<8x8x128xf32>
    %4 = vector.shape_cast %3 : vector<8x8x128xf32> to vector<64x128xf32>
    %c0_3 = arith.constant 0 : index
    %c0_4 = arith.constant 0 : index
    %5 = vector.load %arg9[%c0_3, %c0_4] : memref<128x512xf32, #tpu.memory_space<vmem>>, vector<128x512xf32>
    %cst = arith.constant dense<0.000000e+00> : vector<64x512xf32>
    %6 = tpu.matmul %4, %5, %cst {dimension_numbers = #tpu.dot_dimension_numbers<[1], [0], [0], [1], [0, 0, 1, 1], [], []>} : vector<64x128xf32>, vector<128x512xf32>, vector<64x512xf32> -> vector<64x512xf32>
    %c0_5 = arith.constant 0 : index
    %c0_6 = arith.constant 0 : index
    %7 = vector.load %arg6[%c0_5, %c0_6] : memref<1x512xf32, #tpu.memory_space<vmem>>, vector<1x512xf32>
    %8 = vector.broadcast %7 : vector<1x512xf32> to vector<64x512xf32>
    %9 = arith.addf %6, %8 : vector<64x512xf32>
    %10 = vector.shape_cast %9 : vector<64x512xf32> to vector<8x8x512xf32>
    %c0_7 = arith.constant 0 : index
    %c0_8 = arith.constant 0 : index
    %c0_9 = arith.constant 0 : index
    %11 = vector.load %arg13[%c0_7, %c0_8, %c0_9] : memref<8x8x512xf32, #tpu.memory_space<vmem>>, vector<8x8x512xf32>
    tpu.vector_store %arg13[%c0_7, %c0_8, %c0_9], %10 {strides = array<i32>} : memref<8x8x512xf32, #tpu.memory_space<vmem>>, vector<8x8x512xf32>,
    %c0_i32_10 = arith.constant 0 : i32
    %12 = arith.index_cast %c0_i32_10 : i32 to index
    %c0_11 = arith.constant 0 : index
    %c0_12 = arith.constant 0 : index
    %13 = vector.load %arg13[%12, %c0_11, %c0_12] : memref<8x8x512xf32, #tpu.memory_space<vmem>>, vector<1x8x512xf32>
    %14 = vector.shape_cast %13 : vector<1x8x512xf32> to vector<8x512xf32>
    %c0_13 = arith.constant 0 : index
    %c0_14 = arith.constant 0 : index
    %c0_15 = arith.constant 0 : index
    %15 = vector.load %arg14[%c0_13, %c0_14, %c0_15] : memref<2x8x128xf32, #tpu.memory_space<vmem>>, vector<1x8x128xf32>
    %16 = vector.shape_cast %15 : vector<1x8x128xf32> to vector<8x128xf32>
    %c0_16 = arith.constant 0 : index
    %c0_17 = arith.constant 0 : index
    %17 = vector.load %arg11[%c0_16, %c0_17] : memref<128x512xf32, #tpu.memory_space<vmem>>, vector<128x512xf32>
    %cst_18 = arith.constant dense<0.000000e+00> : vector<8x512xf32>
    %18 = tpu.matmul %16, %17, %cst_18 {dimension_numbers = #tpu.dot_dimension_numbers<[1], [0], [0], [1], [0, 0, 1, 1], [], []>} : vector<8x128xf32>, vector<128x512xf32>, vector<8x512xf32> -> vector<8x512xf32>
    %19 = arith.addf %14, %18 : vector<8x512xf32>
    %c0_19 = arith.constant 0 : index
    %c0_20 = arith.constant 0 : index
    %c0_21 = arith.constant 0 : index
    %20 = vector.load %arg15[%c0_19, %c0_20, %c0_21] : memref<2x8x128xf32, #tpu.memory_space<vmem>>, vector<1x8x128xf32>
    %21 = vector.shape_cast %20 : vector<1x8x128xf32> to vector<8x128xf32>
    %22 = vector.extract_strided_slice %19 {offsets = [0, 0], sizes = [8, 128], strides = [1, 1]} : vector<8x512xf32> to vector<8x128xf32>
    %23 = arith.negf %22 : vector<8x128xf32>
    %24 = math.exp %23 : vector<8x128xf32>
    %cst_22 = arith.constant 1.000000e+00 : f32
    %25 = vector.broadcast %cst_22 : f32 to vector<8x128xf32>
    %26 = arith.addf %25, %24 : vector<8x128xf32>
    %27 = arith.divf %25, %26 : vector<8x128xf32>
    %28 = vector.extract_strided_slice %19 {offsets = [0, 128], sizes = [8, 128], strides = [1, 1]} : vector<8x512xf32> to vector<8x128xf32>
    %29 = arith.negf %28 : vector<8x128xf32>
    %30 = math.exp %29 : vector<8x128xf32>
    %cst_23 = arith.constant 1.000000e+00 : f32
    %31 = vector.broadcast %cst_23 : f32 to vector<8x128xf32>
    %32 = arith.addf %31, %30 : vector<8x128xf32>
    %33 = arith.divf %31, %32 : vector<8x128xf32>
    %34 = vector.extract_strided_slice %19 {offsets = [0, 256], sizes = [8, 128], strides = [1, 1]} : vector<8x512xf32> to vector<8x128xf32>
    %35 = math.tanh %34 : vector<8x128xf32>
    %36 = vector.extract_strided_slice %19 {offsets = [0, 384], sizes = [8, 128], strides = [1, 1]} : vector<8x512xf32> to vector<8x128xf32>
    %37 = arith.negf %36 : vector<8x128xf32>
    %38 = math.exp %37 : vector<8x128xf32>
    %cst_24 = arith.constant 1.000000e+00 : f32
    %39 = vector.broadcast %cst_24 : f32 to vector<8x128xf32>
    %40 = arith.addf %39, %38 : vector<8x128xf32>
    %41 = arith.divf %39, %40 : vector<8x128xf32>
    %42 = arith.mulf %33, %21 : vector<8x128xf32>
    %43 = arith.mulf %27, %35 : vector<8x128xf32>
    %44 = arith.addf %42, %43 : vector<8x128xf32>
    %45 = math.tanh %44 : vector<8x128xf32>
    %46 = arith.mulf %41, %45 : vector<8x128xf32>
    %c0_25 = arith.constant 0 : index
    %c0_26 = arith.constant 0 : index
    %c0_27 = arith.constant 0 : index
    %47 = vector.load %arg14[%c0_25, %c0_26, %c0_27] : memref<2x8x128xf32, #tpu.memory_space<vmem>>, vector<1x8x128xf32>
    %48 = vector.shape_cast %47 : vector<1x8x128xf32> to vector<8x128xf32>
    %49 = vector.shape_cast %46 : vector<8x128xf32> to vector<1x8x128xf32>
    tpu.vector_store %arg14[%c0_25, %c0_26, %c0_27], %49 {strides = array<i32>} : memref<2x8x128xf32, #tpu.memory_space<vmem>>, vector<1x8x128xf32>,
    %c0_28 = arith.constant 0 : index
    %c0_29 = arith.constant 0 : index
    %c0_30 = arith.constant 0 : index
    %50 = vector.load %arg15[%c0_28, %c0_29, %c0_30] : memref<2x8x128xf32, #tpu.memory_space<vmem>>, vector<1x8x128xf32>
    %51 = vector.shape_cast %50 : vector<1x8x128xf32> to vector<8x128xf32>
    %52 = vector.shape_cast %44 : vector<8x128xf32> to vector<1x8x128xf32>
    tpu.vector_store %arg15[%c0_28, %c0_29, %c0_30], %52 {strides = array<i32>} : memref<2x8x128xf32, #tpu.memory_space<vmem>>, vector<1x8x128xf32>,
    %c0_31 = arith.constant 0 : index
    %c0_32 = arith.constant 0 : index
    %53 = vector.load %arg10[%c0_31, %c0_32] : memref<128x512xf32, #tpu.memory_space<vmem>>, vector<128x512xf32>
    %cst_33 = arith.constant dense<0.000000e+00> : vector<8x512xf32>
    %54 = tpu.matmul %46, %53, %cst_33 {dimension_numbers = #tpu.dot_dimension_numbers<[1], [0], [0], [1], [0, 0, 1, 1], [], []>} : vector<8x128xf32>, vector<128x512xf32>, vector<8x512xf32> -> vector<8x512xf32>
    %c1 = arith.constant 1 : index
    %c0_34 = arith.constant 0 : index
    %c0_35 = arith.constant 0 : index
    %55 = vector.load %arg14[%c1, %c0_34, %c0_35] : memref<2x8x128xf32, #tpu.memory_space<vmem>>, vector<1x8x128xf32>
    %56 = vector.shape_cast %55 : vector<1x8x128xf32> to vector<8x128xf32>
    %c0_36 = arith.constant 0 : index
    %c0_37 = arith.constant 0 : index
    %57 = vector.load %arg12[%c0_36, %c0_37] : memref<128x512xf32, #tpu.memory_space<vmem>>, vector<128x512xf32>
    %cst_38 = arith.constant dense<0.000000e+00> : vector<8x512xf32>
    %58 = tpu.matmul %56, %57, %cst_38 {dimension_numbers = #tpu.dot_dimension_numbers<[1], [0], [0], [1], [0, 0, 1, 1], [], []>} : vector<8x128xf32>, vector<128x512xf32>, vector<8x512xf32> -> vector<8x512xf32>
    %59 = arith.addf %54, %58 : vector<8x512xf32>
    %c0_39 = arith.constant 0 : index
    %c0_40 = arith.constant 0 : index
    %60 = vector.load %arg7[%c0_39, %c0_40] : memref<1x512xf32, #tpu.memory_space<vmem>>, vector<1x512xf32>
    %61 = vector.broadcast %60 : vector<1x512xf32> to vector<8x512xf32>
    %62 = arith.addf %59, %61 : vector<8x512xf32>
    %c1_41 = arith.constant 1 : index
    %c0_42 = arith.constant 0 : index
    %c0_43 = arith.constant 0 : index
    %63 = vector.load %arg15[%c1_41, %c0_42, %c0_43] : memref<2x8x128xf32, #tpu.memory_space<vmem>>, vector<1x8x128xf32>
    %64 = vector.shape_cast %63 : vector<1x8x128xf32> to vector<8x128xf32>
    %65 = vector.extract_strided_slice %62 {offsets = [0, 0], sizes = [8, 128], strides = [1, 1]} : vector<8x512xf32> to vector<8x128xf32>
    %66 = arith.negf %65 : vector<8x128xf32>
    %67 = math.exp %66 : vector<8x128xf32>
    %cst_44 = arith.constant 1.000000e+00 : f32
    %68 = vector.broadcast %cst_44 : f32 to vector<8x128xf32>
    %69 = arith.addf %68, %67 : vector<8x128xf32>
    %70 = arith.divf %68, %69 : vector<8x128xf32>
    %71 = vector.extract_strided_slice %62 {offsets = [0, 128], sizes = [8, 128], strides = [1, 1]} : vector<8x512xf32> to vector<8x128xf32>
    %72 = arith.negf %71 : vector<8x128xf32>
    %73 = math.exp %72 : vector<8x128xf32>
    %cst_45 = arith.constant 1.000000e+00 : f32
    %74 = vector.broadcast %cst_45 : f32 to vector<8x128xf32>
    %75 = arith.addf %74, %73 : vector<8x128xf32>
    %76 = arith.divf %74, %75 : vector<8x128xf32>
    %77 = vector.extract_strided_slice %62 {offsets = [0, 256], sizes = [8, 128], strides = [1, 1]} : vector<8x512xf32> to vector<8x128xf32>
    %78 = math.tanh %77 : vector<8x128xf32>
    %79 = vector.extract_strided_slice %62 {offsets = [0, 384], sizes = [8, 128], strides = [1, 1]} : vector<8x512xf32> to vector<8x128xf32>
    %80 = arith.negf %79 : vector<8x128xf32>
    %81 = math.exp %80 : vector<8x128xf32>
    %cst_46 = arith.constant 1.000000e+00 : f32
    %82 = vector.broadcast %cst_46 : f32 to vector<8x128xf32>
    %83 = arith.addf %82, %81 : vector<8x128xf32>
    %84 = arith.divf %82, %83 : vector<8x128xf32>
    %85 = arith.mulf %76, %64 : vector<8x128xf32>
    %86 = arith.mulf %70, %78 : vector<8x128xf32>
    %87 = arith.addf %85, %86 : vector<8x128xf32>
    %88 = math.tanh %87 : vector<8x128xf32>
    %89 = arith.mulf %84, %88 : vector<8x128xf32>
    %c1_47 = arith.constant 1 : index
    %c0_48 = arith.constant 0 : index
    %c0_49 = arith.constant 0 : index
    %90 = vector.load %arg14[%c1_47, %c0_48, %c0_49] : memref<2x8x128xf32, #tpu.memory_space<vmem>>, vector<1x8x128xf32>
    %91 = vector.shape_cast %90 : vector<1x8x128xf32> to vector<8x128xf32>
    %92 = vector.shape_cast %89 : vector<8x128xf32> to vector<1x8x128xf32>
    tpu.vector_store %arg14[%c1_47, %c0_48, %c0_49], %92 {strides = array<i32>} : memref<2x8x128xf32, #tpu.memory_space<vmem>>, vector<1x8x128xf32>,
    %c1_50 = arith.constant 1 : index
    %c0_51 = arith.constant 0 : index
    %c0_52 = arith.constant 0 : index
    %93 = vector.load %arg15[%c1_50, %c0_51, %c0_52] : memref<2x8x128xf32, #tpu.memory_space<vmem>>, vector<1x8x128xf32>
    %94 = vector.shape_cast %93 : vector<1x8x128xf32> to vector<8x128xf32>
    %95 = vector.shape_cast %87 : vector<8x128xf32> to vector<1x8x128xf32>
    tpu.vector_store %arg15[%c1_50, %c0_51, %c0_52], %95 {strides = array<i32>} : memref<2x8x128xf32, #tpu.memory_space<vmem>>, vector<1x8x128xf32>,
    %96 = arith.index_cast %c0_i32_10 : i32 to index
    %c0_53 = arith.constant 0 : index
    %c0_54 = arith.constant 0 : index
    %97 = vector.load %arg8[%96, %c0_53, %c0_54] : memref<8x8x128xf32, #tpu.memory_space<vmem>>, vector<1x8x128xf32>
    %98 = vector.shape_cast %97 : vector<1x8x128xf32> to vector<8x128xf32>
    %99 = vector.shape_cast %89 : vector<8x128xf32> to vector<1x8x128xf32>
    tpu.vector_store %arg8[%96, %c0_53, %c0_54], %99 {strides = array<i32>} : memref<8x8x128xf32, #tpu.memory_space<vmem>>, vector<1x8x128xf32>,
    %c1_i32 = arith.constant 1 : i32
    %100 = arith.index_cast %c1_i32 : i32 to index
    %c0_55 = arith.constant 0 : index
    %c0_56 = arith.constant 0 : index
    %101 = vector.load %arg13[%100, %c0_55, %c0_56] : memref<8x8x512xf32, #tpu.memory_space<vmem>>, vector<1x8x512xf32>
    %102 = vector.shape_cast %101 : vector<1x8x512xf32> to vector<8x512xf32>
    %c0_57 = arith.constant 0 : index
    %c0_58 = arith.constant 0 : index
    %c0_59 = arith.constant 0 : index
    %103 = vector.load %arg14[%c0_57, %c0_58, %c0_59] : memref<2x8x128xf32, #tpu.memory_space<vmem>>, vector<1x8x128xf32>
    %104 = vector.shape_cast %103 : vector<1x8x128xf32> to vector<8x128xf32>
    %c0_60 = arith.constant 0 : index
    %c0_61 = arith.constant 0 : index
    %105 = vector.load %arg11[%c0_60, %c0_61] : memref<128x512xf32, #tpu.memory_space<vmem>>, vector<128x512xf32>
    %cst_62 = arith.constant dense<0.000000e+00> : vector<8x512xf32>
    %106 = tpu.matmul %104, %105, %cst_62 {dimension_numbers = #tpu.dot_dimension_numbers<[1], [0], [0], [1], [0, 0, 1, 1], [], []>} : vector<8x128xf32>, vector<128x512xf32>, vector<8x512xf32> -> vector<8x512xf32>
    %107 = arith.addf %102, %106 : vector<8x512xf32>
    %c0_63 = arith.constant 0 : index
    %c0_64 = arith.constant 0 : index
    %c0_65 = arith.constant 0 : index
    %108 = vector.load %arg15[%c0_63, %c0_64, %c0_65] : memref<2x8x128xf32, #tpu.memory_space<vmem>>, vector<1x8x128xf32>
    %109 = vector.shape_cast %108 : vector<1x8x128xf32> to vector<8x128xf32>
    %110 = vector.extract_strided_slice %107 {offsets = [0, 0], sizes = [8, 128], strides = [1, 1]} : vector<8x512xf32> to vector<8x128xf32>
    %111 = arith.negf %110 : vector<8x128xf32>
    %112 = math.exp %111 : vector<8x128xf32>
    %cst_66 = arith.constant 1.000000e+00 : f32
    %113 = vector.broadcast %cst_66 : f32 to vector<8x128xf32>
    %114 = arith.addf %113, %112 : vector<8x128xf32>
    %115 = arith.divf %113, %114 : vector<8x128xf32>
    %116 = vector.extract_strided_slice %107 {offsets = [0, 128], sizes = [8, 128], strides = [1, 1]} : vector<8x512xf32> to vector<8x128xf32>
    %117 = arith.negf %116 : vector<8x128xf32>
    %118 = math.exp %117 : vector<8x128xf32>
    %cst_67 = arith.constant 1.000000e+00 : f32
    %119 = vector.broadcast %cst_67 : f32 to vector<8x128xf32>
    %120 = arith.addf %119, %118 : vector<8x128xf32>
    %121 = arith.divf %119, %120 : vector<8x128xf32>
    %122 = vector.extract_strided_slice %107 {offsets = [0, 256], sizes = [8, 128], strides = [1, 1]} : vector<8x512xf32> to vector<8x128xf32>
    %123 = math.tanh %122 : vector<8x128xf32>
    %124 = vector.extract_strided_slice %107 {offsets = [0, 384], sizes = [8, 128], strides = [1, 1]} : vector<8x512xf32> to vector<8x128xf32>
    %125 = arith.negf %124 : vector<8x128xf32>
    %126 = math.exp %125 : vector<8x128xf32>
    %cst_68 = arith.constant 1.000000e+00 : f32
    %127 = vector.broadcast %cst_68 : f32 to vector<8x128xf32>
    %128 = arith.addf %127, %126 : vector<8x128xf32>
    %129 = arith.divf %127, %128 : vector<8x128xf32>
    %130 = arith.mulf %121, %109 : vector<8x128xf32>
    %131 = arith.mulf %115, %123 : vector<8x128xf32>
    %132 = arith.addf %130, %131 : vector<8x128xf32>
    %133 = math.tanh %132 : vector<8x128xf32>
    %134 = arith.mulf %129, %133 : vector<8x128xf32>
    %c0_69 = arith.constant 0 : index
    %c0_70 = arith.constant 0 : index
    %c0_71 = arith.constant 0 : index
    %135 = vector.load %arg14[%c0_69, %c0_70, %c0_71] : memref<2x8x128xf32, #tpu.memory_space<vmem>>, vector<1x8x128xf32>
    %136 = vector.shape_cast %135 : vector<1x8x128xf32> to vector<8x128xf32>
    %137 = vector.shape_cast %134 : vector<8x128xf32> to vector<1x8x128xf32>
    tpu.vector_store %arg14[%c0_69, %c0_70, %c0_71], %137 {strides = array<i32>} : memref<2x8x128xf32, #tpu.memory_space<vmem>>, vector<1x8x128xf32>,
    %c0_72 = arith.constant 0 : index
    %c0_73 = arith.constant 0 : index
    %c0_74 = arith.constant 0 : index
    %138 = vector.load %arg15[%c0_72, %c0_73, %c0_74] : memref<2x8x128xf32, #tpu.memory_space<vmem>>, vector<1x8x128xf32>
    %139 = vector.shape_cast %138 : vector<1x8x128xf32> to vector<8x128xf32>
    %140 = vector.shape_cast %132 : vector<8x128xf32> to vector<1x8x128xf32>
    tpu.vector_store %arg15[%c0_72, %c0_73, %c0_74], %140 {strides = array<i32>} : memref<2x8x128xf32, #tpu.memory_space<vmem>>, vector<1x8x128xf32>,
    %c0_75 = arith.constant 0 : index
    %c0_76 = arith.constant 0 : index
    %141 = vector.load %arg10[%c0_75, %c0_76] : memref<128x512xf32, #tpu.memory_space<vmem>>, vector<128x512xf32>
    %cst_77 = arith.constant dense<0.000000e+00> : vector<8x512xf32>
    %142 = tpu.matmul %134, %141, %cst_77 {dimension_numbers = #tpu.dot_dimension_numbers<[1], [0], [0], [1], [0, 0, 1, 1], [], []>} : vector<8x128xf32>, vector<128x512xf32>, vector<8x512xf32> -> vector<8x512xf32>
    %c1_78 = arith.constant 1 : index
    %c0_79 = arith.constant 0 : index
    %c0_80 = arith.constant 0 : index
    %143 = vector.load %arg14[%c1_78, %c0_79, %c0_80] : memref<2x8x128xf32, #tpu.memory_space<vmem>>, vector<1x8x128xf32>
    %144 = vector.shape_cast %143 : vector<1x8x128xf32> to vector<8x128xf32>
    %c0_81 = arith.constant 0 : index
    %c0_82 = arith.constant 0 : index
    %145 = vector.load %arg12[%c0_81, %c0_82] : memref<128x512xf32, #tpu.memory_space<vmem>>, vector<128x512xf32>
    %cst_83 = arith.constant dense<0.000000e+00> : vector<8x512xf32>
    %146 = tpu.matmul %144, %145, %cst_83 {dimension_numbers = #tpu.dot_dimension_numbers<[1], [0], [0], [1], [0, 0, 1, 1], [], []>} : vector<8x128xf32>, vector<128x512xf32>, vector<8x512xf32> -> vector<8x512xf32>
    %147 = arith.addf %142, %146 : vector<8x512xf32>
    %c0_84 = arith.constant 0 : index
    %c0_85 = arith.constant 0 : index
    %148 = vector.load %arg7[%c0_84, %c0_85] : memref<1x512xf32, #tpu.memory_space<vmem>>, vector<1x512xf32>
    %149 = vector.broadcast %148 : vector<1x512xf32> to vector<8x512xf32>
    %150 = arith.addf %147, %149 : vector<8x512xf32>
    %c1_86 = arith.constant 1 : index
    %c0_87 = arith.constant 0 : index
    %c0_88 = arith.constant 0 : index
    %151 = vector.load %arg15[%c1_86, %c0_87, %c0_88] : memref<2x8x128xf32, #tpu.memory_space<vmem>>, vector<1x8x128xf32>
    %152 = vector.shape_cast %151 : vector<1x8x128xf32> to vector<8x128xf32>
    %153 = vector.extract_strided_slice %150 {offsets = [0, 0], sizes = [8, 128], strides = [1, 1]} : vector<8x512xf32> to vector<8x128xf32>
    %154 = arith.negf %153 : vector<8x128xf32>
    %155 = math.exp %154 : vector<8x128xf32>
    %cst_89 = arith.constant 1.000000e+00 : f32
    %156 = vector.broadcast %cst_89 : f32 to vector<8x128xf32>
    %157 = arith.addf %156, %155 : vector<8x128xf32>
    %158 = arith.divf %156, %157 : vector<8x128xf32>
    %159 = vector.extract_strided_slice %150 {offsets = [0, 128], sizes = [8, 128], strides = [1, 1]} : vector<8x512xf32> to vector<8x128xf32>
    %160 = arith.negf %159 : vector<8x128xf32>
    %161 = math.exp %160 : vector<8x128xf32>
    %cst_90 = arith.constant 1.000000e+00 : f32
    %162 = vector.broadcast %cst_90 : f32 to vector<8x128xf32>
    %163 = arith.addf %162, %161 : vector<8x128xf32>
    %164 = arith.divf %162, %163 : vector<8x128xf32>
    %165 = vector.extract_strided_slice %150 {offsets = [0, 256], sizes = [8, 128], strides = [1, 1]} : vector<8x512xf32> to vector<8x128xf32>
    %166 = math.tanh %165 : vector<8x128xf32>
    %167 = vector.extract_strided_slice %150 {offsets = [0, 384], sizes = [8, 128], strides = [1, 1]} : vector<8x512xf32> to vector<8x128xf32>
    %168 = arith.negf %167 : vector<8x128xf32>
    %169 = math.exp %168 : vector<8x128xf32>
    %cst_91 = arith.constant 1.000000e+00 : f32
    %170 = vector.broadcast %cst_91 : f32 to vector<8x128xf32>
    %171 = arith.addf %170, %169 : vector<8x128xf32>
    %172 = arith.divf %170, %171 : vector<8x128xf32>
    %173 = arith.mulf %164, %152 : vector<8x128xf32>
    %174 = arith.mulf %158, %166 : vector<8x128xf32>
    %175 = arith.addf %173, %174 : vector<8x128xf32>
    %176 = math.tanh %175 : vector<8x128xf32>
    %177 = arith.mulf %172, %176 : vector<8x128xf32>
    %c1_92 = arith.constant 1 : index
    %c0_93 = arith.constant 0 : index
    %c0_94 = arith.constant 0 : index
    %178 = vector.load %arg14[%c1_92, %c0_93, %c0_94] : memref<2x8x128xf32, #tpu.memory_space<vmem>>, vector<1x8x128xf32>
    %179 = vector.shape_cast %178 : vector<1x8x128xf32> to vector<8x128xf32>
    %180 = vector.shape_cast %177 : vector<8x128xf32> to vector<1x8x128xf32>
    tpu.vector_store %arg14[%c1_92, %c0_93, %c0_94], %180 {strides = array<i32>} : memref<2x8x128xf32, #tpu.memory_space<vmem>>, vector<1x8x128xf32>,
    %c1_95 = arith.constant 1 : index
    %c0_96 = arith.constant 0 : index
    %c0_97 = arith.constant 0 : index
    %181 = vector.load %arg15[%c1_95, %c0_96, %c0_97] : memref<2x8x128xf32, #tpu.memory_space<vmem>>, vector<1x8x128xf32>
    %182 = vector.shape_cast %181 : vector<1x8x128xf32> to vector<8x128xf32>
    %183 = vector.shape_cast %175 : vector<8x128xf32> to vector<1x8x128xf32>
    tpu.vector_store %arg15[%c1_95, %c0_96, %c0_97], %183 {strides = array<i32>} : memref<2x8x128xf32, #tpu.memory_space<vmem>>, vector<1x8x128xf32>,
    %184 = arith.index_cast %c1_i32 : i32 to index
    %c0_98 = arith.constant 0 : index
    %c0_99 = arith.constant 0 : index
    %185 = vector.load %arg8[%184, %c0_98, %c0_99] : memref<8x8x128xf32, #tpu.memory_space<vmem>>, vector<1x8x128xf32>
    %186 = vector.shape_cast %185 : vector<1x8x128xf32> to vector<8x128xf32>
    %187 = vector.shape_cast %177 : vector<8x128xf32> to vector<1x8x128xf32>
    tpu.vector_store %arg8[%184, %c0_98, %c0_99], %187 {strides = array<i32>} : memref<8x8x128xf32, #tpu.memory_space<vmem>>, vector<1x8x128xf32>,
    %c2_i32 = arith.constant 2 : i32
    %188 = arith.index_cast %c2_i32 : i32 to index
    %c0_100 = arith.constant 0 : index
    %c0_101 = arith.constant 0 : index
    %189 = vector.load %arg13[%188, %c0_100, %c0_101] : memref<8x8x512xf32, #tpu.memory_space<vmem>>, vector<1x8x512xf32>
    %190 = vector.shape_cast %189 : vector<1x8x512xf32> to vector<8x512xf32>
    %c0_102 = arith.constant 0 : index
    %c0_103 = arith.constant 0 : index
    %c0_104 = arith.constant 0 : index
    %191 = vector.load %arg14[%c0_102, %c0_103, %c0_104] : memref<2x8x128xf32, #tpu.memory_space<vmem>>, vector<1x8x128xf32>
    %192 = vector.shape_cast %191 : vector<1x8x128xf32> to vector<8x128xf32>
    %c0_105 = arith.constant 0 : index
    %c0_106 = arith.constant 0 : index
    %193 = vector.load %arg11[%c0_105, %c0_106] : memref<128x512xf32, #tpu.memory_space<vmem>>, vector<128x512xf32>
    %cst_107 = arith.constant dense<0.000000e+00> : vector<8x512xf32>
    %194 = tpu.matmul %192, %193, %cst_107 {dimension_numbers = #tpu.dot_dimension_numbers<[1], [0], [0], [1], [0, 0, 1, 1], [], []>} : vector<8x128xf32>, vector<128x512xf32>, vector<8x512xf32> -> vector<8x512xf32>
    %195 = arith.addf %190, %194 : vector<8x512xf32>
    %c0_108 = arith.constant 0 : index
    %c0_109 = arith.constant 0 : index
    %c0_110 = arith.constant 0 : index
    %196 = vector.load %arg15[%c0_108, %c0_109, %c0_110] : memref<2x8x128xf32, #tpu.memory_space<vmem>>, vector<1x8x128xf32>
    %197 = vector.shape_cast %196 : vector<1x8x128xf32> to vector<8x128xf32>
    %198 = vector.extract_strided_slice %195 {offsets = [0, 0], sizes = [8, 128], strides = [1, 1]} : vector<8x512xf32> to vector<8x128xf32>
    %199 = arith.negf %198 : vector<8x128xf32>
    %200 = math.exp %199 : vector<8x128xf32>
    %cst_111 = arith.constant 1.000000e+00 : f32
    %201 = vector.broadcast %cst_111 : f32 to vector<8x128xf32>
    %202 = arith.addf %201, %200 : vector<8x128xf32>
    %203 = arith.divf %201, %202 : vector<8x128xf32>
    %204 = vector.extract_strided_slice %195 {offsets = [0, 128], sizes = [8, 128], strides = [1, 1]} : vector<8x512xf32> to vector<8x128xf32>
    %205 = arith.negf %204 : vector<8x128xf32>
    %206 = math.exp %205 : vector<8x128xf32>
    %cst_112 = arith.constant 1.000000e+00 : f32
    %207 = vector.broadcast %cst_112 : f32 to vector<8x128xf32>
    %208 = arith.addf %207, %206 : vector<8x128xf32>
    %209 = arith.divf %207, %208 : vector<8x128xf32>
    %210 = vector.extract_strided_slice %195 {offsets = [0, 256], sizes = [8, 128], strides = [1, 1]} : vector<8x512xf32> to vector<8x128xf32>
    %211 = math.tanh %210 : vector<8x128xf32>
    %212 = vector.extract_strided_slice %195 {offsets = [0, 384], sizes = [8, 128], strides = [1, 1]} : vector<8x512xf32> to vector<8x128xf32>
    %213 = arith.negf %212 : vector<8x128xf32>
    %214 = math.exp %213 : vector<8x128xf32>
    %cst_113 = arith.constant 1.000000e+00 : f32
    %215 = vector.broadcast %cst_113 : f32 to vector<8x128xf32>
    %216 = arith.addf %215, %214 : vector<8x128xf32>
    %217 = arith.divf %215, %216 : vector<8x128xf32>
    %218 = arith.mulf %209, %197 : vector<8x128xf32>
    %219 = arith.mulf %203, %211 : vector<8x128xf32>
    %220 = arith.addf %218, %219 : vector<8x128xf32>
    %221 = math.tanh %220 : vector<8x128xf32>
    %222 = arith.mulf %217, %221 : vector<8x128xf32>
    %c0_114 = arith.constant 0 : index
    %c0_115 = arith.constant 0 : index
    %c0_116 = arith.constant 0 : index
    %223 = vector.load %arg14[%c0_114, %c0_115, %c0_116] : memref<2x8x128xf32, #tpu.memory_space<vmem>>, vector<1x8x128xf32>
    %224 = vector.shape_cast %223 : vector<1x8x128xf32> to vector<8x128xf32>
    %225 = vector.shape_cast %222 : vector<8x128xf32> to vector<1x8x128xf32>
    tpu.vector_store %arg14[%c0_114, %c0_115, %c0_116], %225 {strides = array<i32>} : memref<2x8x128xf32, #tpu.memory_space<vmem>>, vector<1x8x128xf32>,
    %c0_117 = arith.constant 0 : index
    %c0_118 = arith.constant 0 : index
    %c0_119 = arith.constant 0 : index
    %226 = vector.load %arg15[%c0_117, %c0_118, %c0_119] : memref<2x8x128xf32, #tpu.memory_space<vmem>>, vector<1x8x128xf32>
    %227 = vector.shape_cast %226 : vector<1x8x128xf32> to vector<8x128xf32>
    %228 = vector.shape_cast %220 : vector<8x128xf32> to vector<1x8x128xf32>
    tpu.vector_store %arg15[%c0_117, %c0_118, %c0_119], %228 {strides = array<i32>} : memref<2x8x128xf32, #tpu.memory_space<vmem>>, vector<1x8x128xf32>,
    %c0_120 = arith.constant 0 : index
    %c0_121 = arith.constant 0 : index
    %229 = vector.load %arg10[%c0_120, %c0_121] : memref<128x512xf32, #tpu.memory_space<vmem>>, vector<128x512xf32>
    %cst_122 = arith.constant dense<0.000000e+00> : vector<8x512xf32>
    %230 = tpu.matmul %222, %229, %cst_122 {dimension_numbers = #tpu.dot_dimension_numbers<[1], [0], [0], [1], [0, 0, 1, 1], [], []>} : vector<8x128xf32>, vector<128x512xf32>, vector<8x512xf32> -> vector<8x512xf32>
    %c1_123 = arith.constant 1 : index
    %c0_124 = arith.constant 0 : index
    %c0_125 = arith.constant 0 : index
    %231 = vector.load %arg14[%c1_123, %c0_124, %c0_125] : memref<2x8x128xf32, #tpu.memory_space<vmem>>, vector<1x8x128xf32>
    %232 = vector.shape_cast %231 : vector<1x8x128xf32> to vector<8x128xf32>
    %c0_126 = arith.constant 0 : index
    %c0_127 = arith.constant 0 : index
    %233 = vector.load %arg12[%c0_126, %c0_127] : memref<128x512xf32, #tpu.memory_space<vmem>>, vector<128x512xf32>
    %cst_128 = arith.constant dense<0.000000e+00> : vector<8x512xf32>
    %234 = tpu.matmul %232, %233, %cst_128 {dimension_numbers = #tpu.dot_dimension_numbers<[1], [0], [0], [1], [0, 0, 1, 1], [], []>} : vector<8x128xf32>, vector<128x512xf32>, vector<8x512xf32> -> vector<8x512xf32>
    %235 = arith.addf %230, %234 : vector<8x512xf32>
    %c0_129 = arith.constant 0 : index
    %c0_130 = arith.constant 0 : index
    %236 = vector.load %arg7[%c0_129, %c0_130] : memref<1x512xf32, #tpu.memory_space<vmem>>, vector<1x512xf32>
    %237 = vector.broadcast %236 : vector<1x512xf32> to vector<8x512xf32>
    %238 = arith.addf %235, %237 : vector<8x512xf32>
    %c1_131 = arith.constant 1 : index
    %c0_132 = arith.constant 0 : index
    %c0_133 = arith.constant 0 : index
    %239 = vector.load %arg15[%c1_131, %c0_132, %c0_133] : memref<2x8x128xf32, #tpu.memory_space<vmem>>, vector<1x8x128xf32>
    %240 = vector.shape_cast %239 : vector<1x8x128xf32> to vector<8x128xf32>
    %241 = vector.extract_strided_slice %238 {offsets = [0, 0], sizes = [8, 128], strides = [1, 1]} : vector<8x512xf32> to vector<8x128xf32>
    %242 = arith.negf %241 : vector<8x128xf32>
    %243 = math.exp %242 : vector<8x128xf32>
    %cst_134 = arith.constant 1.000000e+00 : f32
    %244 = vector.broadcast %cst_134 : f32 to vector<8x128xf32>
    %245 = arith.addf %244, %243 : vector<8x128xf32>
    %246 = arith.divf %244, %245 : vector<8x128xf32>
    %247 = vector.extract_strided_slice %238 {offsets = [0, 128], sizes = [8, 128], strides = [1, 1]} : vector<8x512xf32> to vector<8x128xf32>
    %248 = arith.negf %247 : vector<8x128xf32>
    %249 = math.exp %248 : vector<8x128xf32>
    %cst_135 = arith.constant 1.000000e+00 : f32
    %250 = vector.broadcast %cst_135 : f32 to vector<8x128xf32>
    %251 = arith.addf %250, %249 : vector<8x128xf32>
    %252 = arith.divf %250, %251 : vector<8x128xf32>
    %253 = vector.extract_strided_slice %238 {offsets = [0, 256], sizes = [8, 128], strides = [1, 1]} : vector<8x512xf32> to vector<8x128xf32>
    %254 = math.tanh %253 : vector<8x128xf32>
    %255 = vector.extract_strided_slice %238 {offsets = [0, 384], sizes = [8, 128], strides = [1, 1]} : vector<8x512xf32> to vector<8x128xf32>
    %256 = arith.negf %255 : vector<8x128xf32>
    %257 = math.exp %256 : vector<8x128xf32>
    %cst_136 = arith.constant 1.000000e+00 : f32
    %258 = vector.broadcast %cst_136 : f32 to vector<8x128xf32>
    %259 = arith.addf %258, %257 : vector<8x128xf32>
    %260 = arith.divf %258, %259 : vector<8x128xf32>
    %261 = arith.mulf %252, %240 : vector<8x128xf32>
    %262 = arith.mulf %246, %254 : vector<8x128xf32>
    %263 = arith.addf %261, %262 : vector<8x128xf32>
    %264 = math.tanh %263 : vector<8x128xf32>
    %265 = arith.mulf %260, %264 : vector<8x128xf32>
    %c1_137 = arith.constant 1 : index
    %c0_138 = arith.constant 0 : index
    %c0_139 = arith.constant 0 : index
    %266 = vector.load %arg14[%c1_137, %c0_138, %c0_139] : memref<2x8x128xf32, #tpu.memory_space<vmem>>, vector<1x8x128xf32>
    %267 = vector.shape_cast %266 : vector<1x8x128xf32> to vector<8x128xf32>
    %268 = vector.shape_cast %265 : vector<8x128xf32> to vector<1x8x128xf32>
    tpu.vector_store %arg14[%c1_137, %c0_138, %c0_139], %268 {strides = array<i32>} : memref<2x8x128xf32, #tpu.memory_space<vmem>>, vector<1x8x128xf32>,
    %c1_140 = arith.constant 1 : index
    %c0_141 = arith.constant 0 : index
    %c0_142 = arith.constant 0 : index
    %269 = vector.load %arg15[%c1_140, %c0_141, %c0_142] : memref<2x8x128xf32, #tpu.memory_space<vmem>>, vector<1x8x128xf32>
    %270 = vector.shape_cast %269 : vector<1x8x128xf32> to vector<8x128xf32>
    %271 = vector.shape_cast %263 : vector<8x128xf32> to vector<1x8x128xf32>
    tpu.vector_store %arg15[%c1_140, %c0_141, %c0_142], %271 {strides = array<i32>} : memref<2x8x128xf32, #tpu.memory_space<vmem>>, vector<1x8x128xf32>,
    %272 = arith.index_cast %c2_i32 : i32 to index
    %c0_143 = arith.constant 0 : index
    %c0_144 = arith.constant 0 : index
    %273 = vector.load %arg8[%272, %c0_143, %c0_144] : memref<8x8x128xf32, #tpu.memory_space<vmem>>, vector<1x8x128xf32>
    %274 = vector.shape_cast %273 : vector<1x8x128xf32> to vector<8x128xf32>
    %275 = vector.shape_cast %265 : vector<8x128xf32> to vector<1x8x128xf32>
    tpu.vector_store %arg8[%272, %c0_143, %c0_144], %275 {strides = array<i32>} : memref<8x8x128xf32, #tpu.memory_space<vmem>>, vector<1x8x128xf32>,
    %c3_i32 = arith.constant 3 : i32
    %276 = arith.index_cast %c3_i32 : i32 to index
    %c0_145 = arith.constant 0 : index
    %c0_146 = arith.constant 0 : index
    %277 = vector.load %arg13[%276, %c0_145, %c0_146] : memref<8x8x512xf32, #tpu.memory_space<vmem>>, vector<1x8x512xf32>
    %278 = vector.shape_cast %277 : vector<1x8x512xf32> to vector<8x512xf32>
    %c0_147 = arith.constant 0 : index
    %c0_148 = arith.constant 0 : index
    %c0_149 = arith.constant 0 : index
    %279 = vector.load %arg14[%c0_147, %c0_148, %c0_149] : memref<2x8x128xf32, #tpu.memory_space<vmem>>, vector<1x8x128xf32>
    %280 = vector.shape_cast %279 : vector<1x8x128xf32> to vector<8x128xf32>
    %c0_150 = arith.constant 0 : index
    %c0_151 = arith.constant 0 : index
    %281 = vector.load %arg11[%c0_150, %c0_151] : memref<128x512xf32, #tpu.memory_space<vmem>>, vector<128x512xf32>
    %cst_152 = arith.constant dense<0.000000e+00> : vector<8x512xf32>
    %282 = tpu.matmul %280, %281, %cst_152 {dimension_numbers = #tpu.dot_dimension_numbers<[1], [0], [0], [1], [0, 0, 1, 1], [], []>} : vector<8x128xf32>, vector<128x512xf32>, vector<8x512xf32> -> vector<8x512xf32>
    %283 = arith.addf %278, %282 : vector<8x512xf32>
    %c0_153 = arith.constant 0 : index
    %c0_154 = arith.constant 0 : index
    %c0_155 = arith.constant 0 : index
    %284 = vector.load %arg15[%c0_153, %c0_154, %c0_155] : memref<2x8x128xf32, #tpu.memory_space<vmem>>, vector<1x8x128xf32>
    %285 = vector.shape_cast %284 : vector<1x8x128xf32> to vector<8x128xf32>
    %286 = vector.extract_strided_slice %283 {offsets = [0, 0], sizes = [8, 128], strides = [1, 1]} : vector<8x512xf32> to vector<8x128xf32>
    %287 = arith.negf %286 : vector<8x128xf32>
    %288 = math.exp %287 : vector<8x128xf32>
    %cst_156 = arith.constant 1.000000e+00 : f32
    %289 = vector.broadcast %cst_156 : f32 to vector<8x128xf32>
    %290 = arith.addf %289, %288 : vector<8x128xf32>
    %291 = arith.divf %289, %290 : vector<8x128xf32>
    %292 = vector.extract_strided_slice %283 {offsets = [0, 128], sizes = [8, 128], strides = [1, 1]} : vector<8x512xf32> to vector<8x128xf32>
    %293 = arith.negf %292 : vector<8x128xf32>
    %294 = math.exp %293 : vector<8x128xf32>
    %cst_157 = arith.constant 1.000000e+00 : f32
    %295 = vector.broadcast %cst_157 : f32 to vector<8x128xf32>
    %296 = arith.addf %295, %294 : vector<8x128xf32>
    %297 = arith.divf %295, %296 : vector<8x128xf32>
    %298 = vector.extract_strided_slice %283 {offsets = [0, 256], sizes = [8, 128], strides = [1, 1]} : vector<8x512xf32> to vector<8x128xf32>
    %299 = math.tanh %298 : vector<8x128xf32>
    %300 = vector.extract_strided_slice %283 {offsets = [0, 384], sizes = [8, 128], strides = [1, 1]} : vector<8x512xf32> to vector<8x128xf32>
    %301 = arith.negf %300 : vector<8x128xf32>
    %302 = math.exp %301 : vector<8x128xf32>
    %cst_158 = arith.constant 1.000000e+00 : f32
    %303 = vector.broadcast %cst_158 : f32 to vector<8x128xf32>
    %304 = arith.addf %303, %302 : vector<8x128xf32>
    %305 = arith.divf %303, %304 : vector<8x128xf32>
    %306 = arith.mulf %297, %285 : vector<8x128xf32>
    %307 = arith.mulf %291, %299 : vector<8x128xf32>
    %308 = arith.addf %306, %307 : vector<8x128xf32>
    %309 = math.tanh %308 : vector<8x128xf32>
    %310 = arith.mulf %305, %309 : vector<8x128xf32>
    %c0_159 = arith.constant 0 : index
    %c0_160 = arith.constant 0 : index
    %c0_161 = arith.constant 0 : index
    %311 = vector.load %arg14[%c0_159, %c0_160, %c0_161] : memref<2x8x128xf32, #tpu.memory_space<vmem>>, vector<1x8x128xf32>
    %312 = vector.shape_cast %311 : vector<1x8x128xf32> to vector<8x128xf32>
    %313 = vector.shape_cast %310 : vector<8x128xf32> to vector<1x8x128xf32>
    tpu.vector_store %arg14[%c0_159, %c0_160, %c0_161], %313 {strides = array<i32>} : memref<2x8x128xf32, #tpu.memory_space<vmem>>, vector<1x8x128xf32>,
    %c0_162 = arith.constant 0 : index
    %c0_163 = arith.constant 0 : index
    %c0_164 = arith.constant 0 : index
    %314 = vector.load %arg15[%c0_162, %c0_163, %c0_164] : memref<2x8x128xf32, #tpu.memory_space<vmem>>, vector<1x8x128xf32>
    %315 = vector.shape_cast %314 : vector<1x8x128xf32> to vector<8x128xf32>
    %316 = vector.shape_cast %308 : vector<8x128xf32> to vector<1x8x128xf32>
    tpu.vector_store %arg15[%c0_162, %c0_163, %c0_164], %316 {strides = array<i32>} : memref<2x8x128xf32, #tpu.memory_space<vmem>>, vector<1x8x128xf32>,
    %c0_165 = arith.constant 0 : index
    %c0_166 = arith.constant 0 : index
    %317 = vector.load %arg10[%c0_165, %c0_166] : memref<128x512xf32, #tpu.memory_space<vmem>>, vector<128x512xf32>
    %cst_167 = arith.constant dense<0.000000e+00> : vector<8x512xf32>
    %318 = tpu.matmul %310, %317, %cst_167 {dimension_numbers = #tpu.dot_dimension_numbers<[1], [0], [0], [1], [0, 0, 1, 1], [], []>} : vector<8x128xf32>, vector<128x512xf32>, vector<8x512xf32> -> vector<8x512xf32>
    %c1_168 = arith.constant 1 : index
    %c0_169 = arith.constant 0 : index
    %c0_170 = arith.constant 0 : index
    %319 = vector.load %arg14[%c1_168, %c0_169, %c0_170] : memref<2x8x128xf32, #tpu.memory_space<vmem>>, vector<1x8x128xf32>
    %320 = vector.shape_cast %319 : vector<1x8x128xf32> to vector<8x128xf32>
    %c0_171 = arith.constant 0 : index
    %c0_172 = arith.constant 0 : index
    %321 = vector.load %arg12[%c0_171, %c0_172] : memref<128x512xf32, #tpu.memory_space<vmem>>, vector<128x512xf32>
    %cst_173 = arith.constant dense<0.000000e+00> : vector<8x512xf32>
    %322 = tpu.matmul %320, %321, %cst_173 {dimension_numbers = #tpu.dot_dimension_numbers<[1], [0], [0], [1], [0, 0, 1, 1], [], []>} : vector<8x128xf32>, vector<128x512xf32>, vector<8x512xf32> -> vector<8x512xf32>
    %323 = arith.addf %318, %322 : vector<8x512xf32>
    %c0_174 = arith.constant 0 : index
    %c0_175 = arith.constant 0 : index
    %324 = vector.load %arg7[%c0_174, %c0_175] : memref<1x512xf32, #tpu.memory_space<vmem>>, vector<1x512xf32>
    %325 = vector.broadcast %324 : vector<1x512xf32> to vector<8x512xf32>
    %326 = arith.addf %323, %325 : vector<8x512xf32>
    %c1_176 = arith.constant 1 : index
    %c0_177 = arith.constant 0 : index
    %c0_178 = arith.constant 0 : index
    %327 = vector.load %arg15[%c1_176, %c0_177, %c0_178] : memref<2x8x128xf32, #tpu.memory_space<vmem>>, vector<1x8x128xf32>
    %328 = vector.shape_cast %327 : vector<1x8x128xf32> to vector<8x128xf32>
    %329 = vector.extract_strided_slice %326 {offsets = [0, 0], sizes = [8, 128], strides = [1, 1]} : vector<8x512xf32> to vector<8x128xf32>
    %330 = arith.negf %329 : vector<8x128xf32>
    %331 = math.exp %330 : vector<8x128xf32>
    %cst_179 = arith.constant 1.000000e+00 : f32
    %332 = vector.broadcast %cst_179 : f32 to vector<8x128xf32>
    %333 = arith.addf %332, %331 : vector<8x128xf32>
    %334 = arith.divf %332, %333 : vector<8x128xf32>
    %335 = vector.extract_strided_slice %326 {offsets = [0, 128], sizes = [8, 128], strides = [1, 1]} : vector<8x512xf32> to vector<8x128xf32>
    %336 = arith.negf %335 : vector<8x128xf32>
    %337 = math.exp %336 : vector<8x128xf32>
    %cst_180 = arith.constant 1.000000e+00 : f32
    %338 = vector.broadcast %cst_180 : f32 to vector<8x128xf32>
    %339 = arith.addf %338, %337 : vector<8x128xf32>
    %340 = arith.divf %338, %339 : vector<8x128xf32>
    %341 = vector.extract_strided_slice %326 {offsets = [0, 256], sizes = [8, 128], strides = [1, 1]} : vector<8x512xf32> to vector<8x128xf32>
    %342 = math.tanh %341 : vector<8x128xf32>
    %343 = vector.extract_strided_slice %326 {offsets = [0, 384], sizes = [8, 128], strides = [1, 1]} : vector<8x512xf32> to vector<8x128xf32>
    %344 = arith.negf %343 : vector<8x128xf32>
    %345 = math.exp %344 : vector<8x128xf32>
    %cst_181 = arith.constant 1.000000e+00 : f32
    %346 = vector.broadcast %cst_181 : f32 to vector<8x128xf32>
    %347 = arith.addf %346, %345 : vector<8x128xf32>
    %348 = arith.divf %346, %347 : vector<8x128xf32>
    %349 = arith.mulf %340, %328 : vector<8x128xf32>
    %350 = arith.mulf %334, %342 : vector<8x128xf32>
    %351 = arith.addf %349, %350 : vector<8x128xf32>
    %352 = math.tanh %351 : vector<8x128xf32>
    %353 = arith.mulf %348, %352 : vector<8x128xf32>
    %c1_182 = arith.constant 1 : index
    %c0_183 = arith.constant 0 : index
    %c0_184 = arith.constant 0 : index
    %354 = vector.load %arg14[%c1_182, %c0_183, %c0_184] : memref<2x8x128xf32, #tpu.memory_space<vmem>>, vector<1x8x128xf32>
    %355 = vector.shape_cast %354 : vector<1x8x128xf32> to vector<8x128xf32>
    %356 = vector.shape_cast %353 : vector<8x128xf32> to vector<1x8x128xf32>
    tpu.vector_store %arg14[%c1_182, %c0_183, %c0_184], %356 {strides = array<i32>} : memref<2x8x128xf32, #tpu.memory_space<vmem>>, vector<1x8x128xf32>,
    %c1_185 = arith.constant 1 : index
    %c0_186 = arith.constant 0 : index
    %c0_187 = arith.constant 0 : index
    %357 = vector.load %arg15[%c1_185, %c0_186, %c0_187] : memref<2x8x128xf32, #tpu.memory_space<vmem>>, vector<1x8x128xf32>
    %358 = vector.shape_cast %357 : vector<1x8x128xf32> to vector<8x128xf32>
    %359 = vector.shape_cast %351 : vector<8x128xf32> to vector<1x8x128xf32>
    tpu.vector_store %arg15[%c1_185, %c0_186, %c0_187], %359 {strides = array<i32>} : memref<2x8x128xf32, #tpu.memory_space<vmem>>, vector<1x8x128xf32>,
    %360 = arith.index_cast %c3_i32 : i32 to index
    %c0_188 = arith.constant 0 : index
    %c0_189 = arith.constant 0 : index
    %361 = vector.load %arg8[%360, %c0_188, %c0_189] : memref<8x8x128xf32, #tpu.memory_space<vmem>>, vector<1x8x128xf32>
    %362 = vector.shape_cast %361 : vector<1x8x128xf32> to vector<8x128xf32>
    %363 = vector.shape_cast %353 : vector<8x128xf32> to vector<1x8x128xf32>
    tpu.vector_store %arg8[%360, %c0_188, %c0_189], %363 {strides = array<i32>} : memref<8x8x128xf32, #tpu.memory_space<vmem>>, vector<1x8x128xf32>,
    %c4_i32 = arith.constant 4 : i32
    %364 = arith.index_cast %c4_i32 : i32 to index
    %c0_190 = arith.constant 0 : index
    %c0_191 = arith.constant 0 : index
    %365 = vector.load %arg13[%364, %c0_190, %c0_191] : memref<8x8x512xf32, #tpu.memory_space<vmem>>, vector<1x8x512xf32>
    %366 = vector.shape_cast %365 : vector<1x8x512xf32> to vector<8x512xf32>
    %c0_192 = arith.constant 0 : index
    %c0_193 = arith.constant 0 : index
    %c0_194 = arith.constant 0 : index
    %367 = vector.load %arg14[%c0_192, %c0_193, %c0_194] : memref<2x8x128xf32, #tpu.memory_space<vmem>>, vector<1x8x128xf32>
    %368 = vector.shape_cast %367 : vector<1x8x128xf32> to vector<8x128xf32>
    %c0_195 = arith.constant 0 : index
    %c0_196 = arith.constant 0 : index
    %369 = vector.load %arg11[%c0_195, %c0_196] : memref<128x512xf32, #tpu.memory_space<vmem>>, vector<128x512xf32>
    %cst_197 = arith.constant dense<0.000000e+00> : vector<8x512xf32>
    %370 = tpu.matmul %368, %369, %cst_197 {dimension_numbers = #tpu.dot_dimension_numbers<[1], [0], [0], [1], [0, 0, 1, 1], [], []>} : vector<8x128xf32>, vector<128x512xf32>, vector<8x512xf32> -> vector<8x512xf32>
    %371 = arith.addf %366, %370 : vector<8x512xf32>
    %c0_198 = arith.constant 0 : index
    %c0_199 = arith.constant 0 : index
    %c0_200 = arith.constant 0 : index
    %372 = vector.load %arg15[%c0_198, %c0_199, %c0_200] : memref<2x8x128xf32, #tpu.memory_space<vmem>>, vector<1x8x128xf32>
    %373 = vector.shape_cast %372 : vector<1x8x128xf32> to vector<8x128xf32>
    %374 = vector.extract_strided_slice %371 {offsets = [0, 0], sizes = [8, 128], strides = [1, 1]} : vector<8x512xf32> to vector<8x128xf32>
    %375 = arith.negf %374 : vector<8x128xf32>
    %376 = math.exp %375 : vector<8x128xf32>
    %cst_201 = arith.constant 1.000000e+00 : f32
    %377 = vector.broadcast %cst_201 : f32 to vector<8x128xf32>
    %378 = arith.addf %377, %376 : vector<8x128xf32>
    %379 = arith.divf %377, %378 : vector<8x128xf32>
    %380 = vector.extract_strided_slice %371 {offsets = [0, 128], sizes = [8, 128], strides = [1, 1]} : vector<8x512xf32> to vector<8x128xf32>
    %381 = arith.negf %380 : vector<8x128xf32>
    %382 = math.exp %381 : vector<8x128xf32>
    %cst_202 = arith.constant 1.000000e+00 : f32
    %383 = vector.broadcast %cst_202 : f32 to vector<8x128xf32>
    %384 = arith.addf %383, %382 : vector<8x128xf32>
    %385 = arith.divf %383, %384 : vector<8x128xf32>
    %386 = vector.extract_strided_slice %371 {offsets = [0, 256], sizes = [8, 128], strides = [1, 1]} : vector<8x512xf32> to vector<8x128xf32>
    %387 = math.tanh %386 : vector<8x128xf32>
    %388 = vector.extract_strided_slice %371 {offsets = [0, 384], sizes = [8, 128], strides = [1, 1]} : vector<8x512xf32> to vector<8x128xf32>
    %389 = arith.negf %388 : vector<8x128xf32>
    %390 = math.exp %389 : vector<8x128xf32>
    %cst_203 = arith.constant 1.000000e+00 : f32
    %391 = vector.broadcast %cst_203 : f32 to vector<8x128xf32>
    %392 = arith.addf %391, %390 : vector<8x128xf32>
    %393 = arith.divf %391, %392 : vector<8x128xf32>
    %394 = arith.mulf %385, %373 : vector<8x128xf32>
    %395 = arith.mulf %379, %387 : vector<8x128xf32>
    %396 = arith.addf %394, %395 : vector<8x128xf32>
    %397 = math.tanh %396 : vector<8x128xf32>
    %398 = arith.mulf %393, %397 : vector<8x128xf32>
    %c0_204 = arith.constant 0 : index
    %c0_205 = arith.constant 0 : index
    %c0_206 = arith.constant 0 : index
    %399 = vector.load %arg14[%c0_204, %c0_205, %c0_206] : memref<2x8x128xf32, #tpu.memory_space<vmem>>, vector<1x8x128xf32>
    %400 = vector.shape_cast %399 : vector<1x8x128xf32> to vector<8x128xf32>
    %401 = vector.shape_cast %398 : vector<8x128xf32> to vector<1x8x128xf32>
    tpu.vector_store %arg14[%c0_204, %c0_205, %c0_206], %401 {strides = array<i32>} : memref<2x8x128xf32, #tpu.memory_space<vmem>>, vector<1x8x128xf32>,
    %c0_207 = arith.constant 0 : index
    %c0_208 = arith.constant 0 : index
    %c0_209 = arith.constant 0 : index
    %402 = vector.load %arg15[%c0_207, %c0_208, %c0_209] : memref<2x8x128xf32, #tpu.memory_space<vmem>>, vector<1x8x128xf32>
    %403 = vector.shape_cast %402 : vector<1x8x128xf32> to vector<8x128xf32>
    %404 = vector.shape_cast %396 : vector<8x128xf32> to vector<1x8x128xf32>
    tpu.vector_store %arg15[%c0_207, %c0_208, %c0_209], %404 {strides = array<i32>} : memref<2x8x128xf32, #tpu.memory_space<vmem>>, vector<1x8x128xf32>,
    %c0_210 = arith.constant 0 : index
    %c0_211 = arith.constant 0 : index
    %405 = vector.load %arg10[%c0_210, %c0_211] : memref<128x512xf32, #tpu.memory_space<vmem>>, vector<128x512xf32>
    %cst_212 = arith.constant dense<0.000000e+00> : vector<8x512xf32>
    %406 = tpu.matmul %398, %405, %cst_212 {dimension_numbers = #tpu.dot_dimension_numbers<[1], [0], [0], [1], [0, 0, 1, 1], [], []>} : vector<8x128xf32>, vector<128x512xf32>, vector<8x512xf32> -> vector<8x512xf32>
    %c1_213 = arith.constant 1 : index
    %c0_214 = arith.constant 0 : index
    %c0_215 = arith.constant 0 : index
    %407 = vector.load %arg14[%c1_213, %c0_214, %c0_215] : memref<2x8x128xf32, #tpu.memory_space<vmem>>, vector<1x8x128xf32>
    %408 = vector.shape_cast %407 : vector<1x8x128xf32> to vector<8x128xf32>
    %c0_216 = arith.constant 0 : index
    %c0_217 = arith.constant 0 : index
    %409 = vector.load %arg12[%c0_216, %c0_217] : memref<128x512xf32, #tpu.memory_space<vmem>>, vector<128x512xf32>
    %cst_218 = arith.constant dense<0.000000e+00> : vector<8x512xf32>
    %410 = tpu.matmul %408, %409, %cst_218 {dimension_numbers = #tpu.dot_dimension_numbers<[1], [0], [0], [1], [0, 0, 1, 1], [], []>} : vector<8x128xf32>, vector<128x512xf32>, vector<8x512xf32> -> vector<8x512xf32>
    %411 = arith.addf %406, %410 : vector<8x512xf32>
    %c0_219 = arith.constant 0 : index
    %c0_220 = arith.constant 0 : index
    %412 = vector.load %arg7[%c0_219, %c0_220] : memref<1x512xf32, #tpu.memory_space<vmem>>, vector<1x512xf32>
    %413 = vector.broadcast %412 : vector<1x512xf32> to vector<8x512xf32>
    %414 = arith.addf %411, %413 : vector<8x512xf32>
    %c1_221 = arith.constant 1 : index
    %c0_222 = arith.constant 0 : index
    %c0_223 = arith.constant 0 : index
    %415 = vector.load %arg15[%c1_221, %c0_222, %c0_223] : memref<2x8x128xf32, #tpu.memory_space<vmem>>, vector<1x8x128xf32>
    %416 = vector.shape_cast %415 : vector<1x8x128xf32> to vector<8x128xf32>
    %417 = vector.extract_strided_slice %414 {offsets = [0, 0], sizes = [8, 128], strides = [1, 1]} : vector<8x512xf32> to vector<8x128xf32>
    %418 = arith.negf %417 : vector<8x128xf32>
    %419 = math.exp %418 : vector<8x128xf32>
    %cst_224 = arith.constant 1.000000e+00 : f32
    %420 = vector.broadcast %cst_224 : f32 to vector<8x128xf32>
    %421 = arith.addf %420, %419 : vector<8x128xf32>
    %422 = arith.divf %420, %421 : vector<8x128xf32>
    %423 = vector.extract_strided_slice %414 {offsets = [0, 128], sizes = [8, 128], strides = [1, 1]} : vector<8x512xf32> to vector<8x128xf32>
    %424 = arith.negf %423 : vector<8x128xf32>
    %425 = math.exp %424 : vector<8x128xf32>
    %cst_225 = arith.constant 1.000000e+00 : f32
    %426 = vector.broadcast %cst_225 : f32 to vector<8x128xf32>
    %427 = arith.addf %426, %425 : vector<8x128xf32>
    %428 = arith.divf %426, %427 : vector<8x128xf32>
    %429 = vector.extract_strided_slice %414 {offsets = [0, 256], sizes = [8, 128], strides = [1, 1]} : vector<8x512xf32> to vector<8x128xf32>
    %430 = math.tanh %429 : vector<8x128xf32>
    %431 = vector.extract_strided_slice %414 {offsets = [0, 384], sizes = [8, 128], strides = [1, 1]} : vector<8x512xf32> to vector<8x128xf32>
    %432 = arith.negf %431 : vector<8x128xf32>
    %433 = math.exp %432 : vector<8x128xf32>
    %cst_226 = arith.constant 1.000000e+00 : f32
    %434 = vector.broadcast %cst_226 : f32 to vector<8x128xf32>
    %435 = arith.addf %434, %433 : vector<8x128xf32>
    %436 = arith.divf %434, %435 : vector<8x128xf32>
    %437 = arith.mulf %428, %416 : vector<8x128xf32>
    %438 = arith.mulf %422, %430 : vector<8x128xf32>
    %439 = arith.addf %437, %438 : vector<8x128xf32>
    %440 = math.tanh %439 : vector<8x128xf32>
    %441 = arith.mulf %436, %440 : vector<8x128xf32>
    %c1_227 = arith.constant 1 : index
    %c0_228 = arith.constant 0 : index
    %c0_229 = arith.constant 0 : index
    %442 = vector.load %arg14[%c1_227, %c0_228, %c0_229] : memref<2x8x128xf32, #tpu.memory_space<vmem>>, vector<1x8x128xf32>
    %443 = vector.shape_cast %442 : vector<1x8x128xf32> to vector<8x128xf32>
    %444 = vector.shape_cast %441 : vector<8x128xf32> to vector<1x8x128xf32>
    tpu.vector_store %arg14[%c1_227, %c0_228, %c0_229], %444 {strides = array<i32>} : memref<2x8x128xf32, #tpu.memory_space<vmem>>, vector<1x8x128xf32>,
    %c1_230 = arith.constant 1 : index
    %c0_231 = arith.constant 0 : index
    %c0_232 = arith.constant 0 : index
    %445 = vector.load %arg15[%c1_230, %c0_231, %c0_232] : memref<2x8x128xf32, #tpu.memory_space<vmem>>, vector<1x8x128xf32>
    %446 = vector.shape_cast %445 : vector<1x8x128xf32> to vector<8x128xf32>
    %447 = vector.shape_cast %439 : vector<8x128xf32> to vector<1x8x128xf32>
    tpu.vector_store %arg15[%c1_230, %c0_231, %c0_232], %447 {strides = array<i32>} : memref<2x8x128xf32, #tpu.memory_space<vmem>>, vector<1x8x128xf32>,
    %448 = arith.index_cast %c4_i32 : i32 to index
    %c0_233 = arith.constant 0 : index
    %c0_234 = arith.constant 0 : index
    %449 = vector.load %arg8[%448, %c0_233, %c0_234] : memref<8x8x128xf32, #tpu.memory_space<vmem>>, vector<1x8x128xf32>
    %450 = vector.shape_cast %449 : vector<1x8x128xf32> to vector<8x128xf32>
    %451 = vector.shape_cast %441 : vector<8x128xf32> to vector<1x8x128xf32>
    tpu.vector_store %arg8[%448, %c0_233, %c0_234], %451 {strides = array<i32>} : memref<8x8x128xf32, #tpu.memory_space<vmem>>, vector<1x8x128xf32>,
    %c5_i32 = arith.constant 5 : i32
    %452 = arith.index_cast %c5_i32 : i32 to index
    %c0_235 = arith.constant 0 : index
    %c0_236 = arith.constant 0 : index
    %453 = vector.load %arg13[%452, %c0_235, %c0_236] : memref<8x8x512xf32, #tpu.memory_space<vmem>>, vector<1x8x512xf32>
    %454 = vector.shape_cast %453 : vector<1x8x512xf32> to vector<8x512xf32>
    %c0_237 = arith.constant 0 : index
    %c0_238 = arith.constant 0 : index
    %c0_239 = arith.constant 0 : index
    %455 = vector.load %arg14[%c0_237, %c0_238, %c0_239] : memref<2x8x128xf32, #tpu.memory_space<vmem>>, vector<1x8x128xf32>
    %456 = vector.shape_cast %455 : vector<1x8x128xf32> to vector<8x128xf32>
    %c0_240 = arith.constant 0 : index
    %c0_241 = arith.constant 0 : index
    %457 = vector.load %arg11[%c0_240, %c0_241] : memref<128x512xf32, #tpu.memory_space<vmem>>, vector<128x512xf32>
    %cst_242 = arith.constant dense<0.000000e+00> : vector<8x512xf32>
    %458 = tpu.matmul %456, %457, %cst_242 {dimension_numbers = #tpu.dot_dimension_numbers<[1], [0], [0], [1], [0, 0, 1, 1], [], []>} : vector<8x128xf32>, vector<128x512xf32>, vector<8x512xf32> -> vector<8x512xf32>
    %459 = arith.addf %454, %458 : vector<8x512xf32>
    %c0_243 = arith.constant 0 : index
    %c0_244 = arith.constant 0 : index
    %c0_245 = arith.constant 0 : index
    %460 = vector.load %arg15[%c0_243, %c0_244, %c0_245] : memref<2x8x128xf32, #tpu.memory_space<vmem>>, vector<1x8x128xf32>
    %461 = vector.shape_cast %460 : vector<1x8x128xf32> to vector<8x128xf32>
    %462 = vector.extract_strided_slice %459 {offsets = [0, 0], sizes = [8, 128], strides = [1, 1]} : vector<8x512xf32> to vector<8x128xf32>
    %463 = arith.negf %462 : vector<8x128xf32>
    %464 = math.exp %463 : vector<8x128xf32>
    %cst_246 = arith.constant 1.000000e+00 : f32
    %465 = vector.broadcast %cst_246 : f32 to vector<8x128xf32>
    %466 = arith.addf %465, %464 : vector<8x128xf32>
    %467 = arith.divf %465, %466 : vector<8x128xf32>
    %468 = vector.extract_strided_slice %459 {offsets = [0, 128], sizes = [8, 128], strides = [1, 1]} : vector<8x512xf32> to vector<8x128xf32>
    %469 = arith.negf %468 : vector<8x128xf32>
    %470 = math.exp %469 : vector<8x128xf32>
    %cst_247 = arith.constant 1.000000e+00 : f32
    %471 = vector.broadcast %cst_247 : f32 to vector<8x128xf32>
    %472 = arith.addf %471, %470 : vector<8x128xf32>
    %473 = arith.divf %471, %472 : vector<8x128xf32>
    %474 = vector.extract_strided_slice %459 {offsets = [0, 256], sizes = [8, 128], strides = [1, 1]} : vector<8x512xf32> to vector<8x128xf32>
    %475 = math.tanh %474 : vector<8x128xf32>
    %476 = vector.extract_strided_slice %459 {offsets = [0, 384], sizes = [8, 128], strides = [1, 1]} : vector<8x512xf32> to vector<8x128xf32>
    %477 = arith.negf %476 : vector<8x128xf32>
    %478 = math.exp %477 : vector<8x128xf32>
    %cst_248 = arith.constant 1.000000e+00 : f32
    %479 = vector.broadcast %cst_248 : f32 to vector<8x128xf32>
    %480 = arith.addf %479, %478 : vector<8x128xf32>
    %481 = arith.divf %479, %480 : vector<8x128xf32>
    %482 = arith.mulf %473, %461 : vector<8x128xf32>
    %483 = arith.mulf %467, %475 : vector<8x128xf32>
    %484 = arith.addf %482, %483 : vector<8x128xf32>
    %485 = math.tanh %484 : vector<8x128xf32>
    %486 = arith.mulf %481, %485 : vector<8x128xf32>
    %c0_249 = arith.constant 0 : index
    %c0_250 = arith.constant 0 : index
    %c0_251 = arith.constant 0 : index
    %487 = vector.load %arg14[%c0_249, %c0_250, %c0_251] : memref<2x8x128xf32, #tpu.memory_space<vmem>>, vector<1x8x128xf32>
    %488 = vector.shape_cast %487 : vector<1x8x128xf32> to vector<8x128xf32>
    %489 = vector.shape_cast %486 : vector<8x128xf32> to vector<1x8x128xf32>
    tpu.vector_store %arg14[%c0_249, %c0_250, %c0_251], %489 {strides = array<i32>} : memref<2x8x128xf32, #tpu.memory_space<vmem>>, vector<1x8x128xf32>,
    %c0_252 = arith.constant 0 : index
    %c0_253 = arith.constant 0 : index
    %c0_254 = arith.constant 0 : index
    %490 = vector.load %arg15[%c0_252, %c0_253, %c0_254] : memref<2x8x128xf32, #tpu.memory_space<vmem>>, vector<1x8x128xf32>
    %491 = vector.shape_cast %490 : vector<1x8x128xf32> to vector<8x128xf32>
    %492 = vector.shape_cast %484 : vector<8x128xf32> to vector<1x8x128xf32>
    tpu.vector_store %arg15[%c0_252, %c0_253, %c0_254], %492 {strides = array<i32>} : memref<2x8x128xf32, #tpu.memory_space<vmem>>, vector<1x8x128xf32>,
    %c0_255 = arith.constant 0 : index
    %c0_256 = arith.constant 0 : index
    %493 = vector.load %arg10[%c0_255, %c0_256] : memref<128x512xf32, #tpu.memory_space<vmem>>, vector<128x512xf32>
    %cst_257 = arith.constant dense<0.000000e+00> : vector<8x512xf32>
    %494 = tpu.matmul %486, %493, %cst_257 {dimension_numbers = #tpu.dot_dimension_numbers<[1], [0], [0], [1], [0, 0, 1, 1], [], []>} : vector<8x128xf32>, vector<128x512xf32>, vector<8x512xf32> -> vector<8x512xf32>
    %c1_258 = arith.constant 1 : index
    %c0_259 = arith.constant 0 : index
    %c0_260 = arith.constant 0 : index
    %495 = vector.load %arg14[%c1_258, %c0_259, %c0_260] : memref<2x8x128xf32, #tpu.memory_space<vmem>>, vector<1x8x128xf32>
    %496 = vector.shape_cast %495 : vector<1x8x128xf32> to vector<8x128xf32>
    %c0_261 = arith.constant 0 : index
    %c0_262 = arith.constant 0 : index
    %497 = vector.load %arg12[%c0_261, %c0_262] : memref<128x512xf32, #tpu.memory_space<vmem>>, vector<128x512xf32>
    %cst_263 = arith.constant dense<0.000000e+00> : vector<8x512xf32>
    %498 = tpu.matmul %496, %497, %cst_263 {dimension_numbers = #tpu.dot_dimension_numbers<[1], [0], [0], [1], [0, 0, 1, 1], [], []>} : vector<8x128xf32>, vector<128x512xf32>, vector<8x512xf32> -> vector<8x512xf32>
    %499 = arith.addf %494, %498 : vector<8x512xf32>
    %c0_264 = arith.constant 0 : index
    %c0_265 = arith.constant 0 : index
    %500 = vector.load %arg7[%c0_264, %c0_265] : memref<1x512xf32, #tpu.memory_space<vmem>>, vector<1x512xf32>
    %501 = vector.broadcast %500 : vector<1x512xf32> to vector<8x512xf32>
    %502 = arith.addf %499, %501 : vector<8x512xf32>
    %c1_266 = arith.constant 1 : index
    %c0_267 = arith.constant 0 : index
    %c0_268 = arith.constant 0 : index
    %503 = vector.load %arg15[%c1_266, %c0_267, %c0_268] : memref<2x8x128xf32, #tpu.memory_space<vmem>>, vector<1x8x128xf32>
    %504 = vector.shape_cast %503 : vector<1x8x128xf32> to vector<8x128xf32>
    %505 = vector.extract_strided_slice %502 {offsets = [0, 0], sizes = [8, 128], strides = [1, 1]} : vector<8x512xf32> to vector<8x128xf32>
    %506 = arith.negf %505 : vector<8x128xf32>
    %507 = math.exp %506 : vector<8x128xf32>
    %cst_269 = arith.constant 1.000000e+00 : f32
    %508 = vector.broadcast %cst_269 : f32 to vector<8x128xf32>
    %509 = arith.addf %508, %507 : vector<8x128xf32>
    %510 = arith.divf %508, %509 : vector<8x128xf32>
    %511 = vector.extract_strided_slice %502 {offsets = [0, 128], sizes = [8, 128], strides = [1, 1]} : vector<8x512xf32> to vector<8x128xf32>
    %512 = arith.negf %511 : vector<8x128xf32>
    %513 = math.exp %512 : vector<8x128xf32>
    %cst_270 = arith.constant 1.000000e+00 : f32
    %514 = vector.broadcast %cst_270 : f32 to vector<8x128xf32>
    %515 = arith.addf %514, %513 : vector<8x128xf32>
    %516 = arith.divf %514, %515 : vector<8x128xf32>
    %517 = vector.extract_strided_slice %502 {offsets = [0, 256], sizes = [8, 128], strides = [1, 1]} : vector<8x512xf32> to vector<8x128xf32>
    %518 = math.tanh %517 : vector<8x128xf32>
    %519 = vector.extract_strided_slice %502 {offsets = [0, 384], sizes = [8, 128], strides = [1, 1]} : vector<8x512xf32> to vector<8x128xf32>
    %520 = arith.negf %519 : vector<8x128xf32>
    %521 = math.exp %520 : vector<8x128xf32>
    %cst_271 = arith.constant 1.000000e+00 : f32
    %522 = vector.broadcast %cst_271 : f32 to vector<8x128xf32>
    %523 = arith.addf %522, %521 : vector<8x128xf32>
    %524 = arith.divf %522, %523 : vector<8x128xf32>
    %525 = arith.mulf %516, %504 : vector<8x128xf32>
    %526 = arith.mulf %510, %518 : vector<8x128xf32>
    %527 = arith.addf %525, %526 : vector<8x128xf32>
    %528 = math.tanh %527 : vector<8x128xf32>
    %529 = arith.mulf %524, %528 : vector<8x128xf32>
    %c1_272 = arith.constant 1 : index
    %c0_273 = arith.constant 0 : index
    %c0_274 = arith.constant 0 : index
    %530 = vector.load %arg14[%c1_272, %c0_273, %c0_274] : memref<2x8x128xf32, #tpu.memory_space<vmem>>, vector<1x8x128xf32>
    %531 = vector.shape_cast %530 : vector<1x8x128xf32> to vector<8x128xf32>
    %532 = vector.shape_cast %529 : vector<8x128xf32> to vector<1x8x128xf32>
    tpu.vector_store %arg14[%c1_272, %c0_273, %c0_274], %532 {strides = array<i32>} : memref<2x8x128xf32, #tpu.memory_space<vmem>>, vector<1x8x128xf32>,
    %c1_275 = arith.constant 1 : index
    %c0_276 = arith.constant 0 : index
    %c0_277 = arith.constant 0 : index
    %533 = vector.load %arg15[%c1_275, %c0_276, %c0_277] : memref<2x8x128xf32, #tpu.memory_space<vmem>>, vector<1x8x128xf32>
    %534 = vector.shape_cast %533 : vector<1x8x128xf32> to vector<8x128xf32>
    %535 = vector.shape_cast %527 : vector<8x128xf32> to vector<1x8x128xf32>
    tpu.vector_store %arg15[%c1_275, %c0_276, %c0_277], %535 {strides = array<i32>} : memref<2x8x128xf32, #tpu.memory_space<vmem>>, vector<1x8x128xf32>,
    %536 = arith.index_cast %c5_i32 : i32 to index
    %c0_278 = arith.constant 0 : index
    %c0_279 = arith.constant 0 : index
    %537 = vector.load %arg8[%536, %c0_278, %c0_279] : memref<8x8x128xf32, #tpu.memory_space<vmem>>, vector<1x8x128xf32>
    %538 = vector.shape_cast %537 : vector<1x8x128xf32> to vector<8x128xf32>
    %539 = vector.shape_cast %529 : vector<8x128xf32> to vector<1x8x128xf32>
    tpu.vector_store %arg8[%536, %c0_278, %c0_279], %539 {strides = array<i32>} : memref<8x8x128xf32, #tpu.memory_space<vmem>>, vector<1x8x128xf32>,
    %c6_i32 = arith.constant 6 : i32
    %540 = arith.index_cast %c6_i32 : i32 to index
    %c0_280 = arith.constant 0 : index
    %c0_281 = arith.constant 0 : index
    %541 = vector.load %arg13[%540, %c0_280, %c0_281] : memref<8x8x512xf32, #tpu.memory_space<vmem>>, vector<1x8x512xf32>
    %542 = vector.shape_cast %541 : vector<1x8x512xf32> to vector<8x512xf32>
    %c0_282 = arith.constant 0 : index
    %c0_283 = arith.constant 0 : index
    %c0_284 = arith.constant 0 : index
    %543 = vector.load %arg14[%c0_282, %c0_283, %c0_284] : memref<2x8x128xf32, #tpu.memory_space<vmem>>, vector<1x8x128xf32>
    %544 = vector.shape_cast %543 : vector<1x8x128xf32> to vector<8x128xf32>
    %c0_285 = arith.constant 0 : index
    %c0_286 = arith.constant 0 : index
    %545 = vector.load %arg11[%c0_285, %c0_286] : memref<128x512xf32, #tpu.memory_space<vmem>>, vector<128x512xf32>
    %cst_287 = arith.constant dense<0.000000e+00> : vector<8x512xf32>
    %546 = tpu.matmul %544, %545, %cst_287 {dimension_numbers = #tpu.dot_dimension_numbers<[1], [0], [0], [1], [0, 0, 1, 1], [], []>} : vector<8x128xf32>, vector<128x512xf32>, vector<8x512xf32> -> vector<8x512xf32>
    %547 = arith.addf %542, %546 : vector<8x512xf32>
    %c0_288 = arith.constant 0 : index
    %c0_289 = arith.constant 0 : index
    %c0_290 = arith.constant 0 : index
    %548 = vector.load %arg15[%c0_288, %c0_289, %c0_290] : memref<2x8x128xf32, #tpu.memory_space<vmem>>, vector<1x8x128xf32>
    %549 = vector.shape_cast %548 : vector<1x8x128xf32> to vector<8x128xf32>
    %550 = vector.extract_strided_slice %547 {offsets = [0, 0], sizes = [8, 128], strides = [1, 1]} : vector<8x512xf32> to vector<8x128xf32>
    %551 = arith.negf %550 : vector<8x128xf32>
    %552 = math.exp %551 : vector<8x128xf32>
    %cst_291 = arith.constant 1.000000e+00 : f32
    %553 = vector.broadcast %cst_291 : f32 to vector<8x128xf32>
    %554 = arith.addf %553, %552 : vector<8x128xf32>
    %555 = arith.divf %553, %554 : vector<8x128xf32>
    %556 = vector.extract_strided_slice %547 {offsets = [0, 128], sizes = [8, 128], strides = [1, 1]} : vector<8x512xf32> to vector<8x128xf32>
    %557 = arith.negf %556 : vector<8x128xf32>
    %558 = math.exp %557 : vector<8x128xf32>
    %cst_292 = arith.constant 1.000000e+00 : f32
    %559 = vector.broadcast %cst_292 : f32 to vector<8x128xf32>
    %560 = arith.addf %559, %558 : vector<8x128xf32>
    %561 = arith.divf %559, %560 : vector<8x128xf32>
    %562 = vector.extract_strided_slice %547 {offsets = [0, 256], sizes = [8, 128], strides = [1, 1]} : vector<8x512xf32> to vector<8x128xf32>
    %563 = math.tanh %562 : vector<8x128xf32>
    %564 = vector.extract_strided_slice %547 {offsets = [0, 384], sizes = [8, 128], strides = [1, 1]} : vector<8x512xf32> to vector<8x128xf32>
    %565 = arith.negf %564 : vector<8x128xf32>
    %566 = math.exp %565 : vector<8x128xf32>
    %cst_293 = arith.constant 1.000000e+00 : f32
    %567 = vector.broadcast %cst_293 : f32 to vector<8x128xf32>
    %568 = arith.addf %567, %566 : vector<8x128xf32>
    %569 = arith.divf %567, %568 : vector<8x128xf32>
    %570 = arith.mulf %561, %549 : vector<8x128xf32>
    %571 = arith.mulf %555, %563 : vector<8x128xf32>
    %572 = arith.addf %570, %571 : vector<8x128xf32>
    %573 = math.tanh %572 : vector<8x128xf32>
    %574 = arith.mulf %569, %573 : vector<8x128xf32>
    %c0_294 = arith.constant 0 : index
    %c0_295 = arith.constant 0 : index
    %c0_296 = arith.constant 0 : index
    %575 = vector.load %arg14[%c0_294, %c0_295, %c0_296] : memref<2x8x128xf32, #tpu.memory_space<vmem>>, vector<1x8x128xf32>
    %576 = vector.shape_cast %575 : vector<1x8x128xf32> to vector<8x128xf32>
    %577 = vector.shape_cast %574 : vector<8x128xf32> to vector<1x8x128xf32>
    tpu.vector_store %arg14[%c0_294, %c0_295, %c0_296], %577 {strides = array<i32>} : memref<2x8x128xf32, #tpu.memory_space<vmem>>, vector<1x8x128xf32>,
    %c0_297 = arith.constant 0 : index
    %c0_298 = arith.constant 0 : index
    %c0_299 = arith.constant 0 : index
    %578 = vector.load %arg15[%c0_297, %c0_298, %c0_299] : memref<2x8x128xf32, #tpu.memory_space<vmem>>, vector<1x8x128xf32>
    %579 = vector.shape_cast %578 : vector<1x8x128xf32> to vector<8x128xf32>
    %580 = vector.shape_cast %572 : vector<8x128xf32> to vector<1x8x128xf32>
    tpu.vector_store %arg15[%c0_297, %c0_298, %c0_299], %580 {strides = array<i32>} : memref<2x8x128xf32, #tpu.memory_space<vmem>>, vector<1x8x128xf32>,
    %c0_300 = arith.constant 0 : index
    %c0_301 = arith.constant 0 : index
    %581 = vector.load %arg10[%c0_300, %c0_301] : memref<128x512xf32, #tpu.memory_space<vmem>>, vector<128x512xf32>
    %cst_302 = arith.constant dense<0.000000e+00> : vector<8x512xf32>
    %582 = tpu.matmul %574, %581, %cst_302 {dimension_numbers = #tpu.dot_dimension_numbers<[1], [0], [0], [1], [0, 0, 1, 1], [], []>} : vector<8x128xf32>, vector<128x512xf32>, vector<8x512xf32> -> vector<8x512xf32>
    %c1_303 = arith.constant 1 : index
    %c0_304 = arith.constant 0 : index
    %c0_305 = arith.constant 0 : index
    %583 = vector.load %arg14[%c1_303, %c0_304, %c0_305] : memref<2x8x128xf32, #tpu.memory_space<vmem>>, vector<1x8x128xf32>
    %584 = vector.shape_cast %583 : vector<1x8x128xf32> to vector<8x128xf32>
    %c0_306 = arith.constant 0 : index
    %c0_307 = arith.constant 0 : index
    %585 = vector.load %arg12[%c0_306, %c0_307] : memref<128x512xf32, #tpu.memory_space<vmem>>, vector<128x512xf32>
    %cst_308 = arith.constant dense<0.000000e+00> : vector<8x512xf32>
    %586 = tpu.matmul %584, %585, %cst_308 {dimension_numbers = #tpu.dot_dimension_numbers<[1], [0], [0], [1], [0, 0, 1, 1], [], []>} : vector<8x128xf32>, vector<128x512xf32>, vector<8x512xf32> -> vector<8x512xf32>
    %587 = arith.addf %582, %586 : vector<8x512xf32>
    %c0_309 = arith.constant 0 : index
    %c0_310 = arith.constant 0 : index
    %588 = vector.load %arg7[%c0_309, %c0_310] : memref<1x512xf32, #tpu.memory_space<vmem>>, vector<1x512xf32>
    %589 = vector.broadcast %588 : vector<1x512xf32> to vector<8x512xf32>
    %590 = arith.addf %587, %589 : vector<8x512xf32>
    %c1_311 = arith.constant 1 : index
    %c0_312 = arith.constant 0 : index
    %c0_313 = arith.constant 0 : index
    %591 = vector.load %arg15[%c1_311, %c0_312, %c0_313] : memref<2x8x128xf32, #tpu.memory_space<vmem>>, vector<1x8x128xf32>
    %592 = vector.shape_cast %591 : vector<1x8x128xf32> to vector<8x128xf32>
    %593 = vector.extract_strided_slice %590 {offsets = [0, 0], sizes = [8, 128], strides = [1, 1]} : vector<8x512xf32> to vector<8x128xf32>
    %594 = arith.negf %593 : vector<8x128xf32>
    %595 = math.exp %594 : vector<8x128xf32>
    %cst_314 = arith.constant 1.000000e+00 : f32
    %596 = vector.broadcast %cst_314 : f32 to vector<8x128xf32>
    %597 = arith.addf %596, %595 : vector<8x128xf32>
    %598 = arith.divf %596, %597 : vector<8x128xf32>
    %599 = vector.extract_strided_slice %590 {offsets = [0, 128], sizes = [8, 128], strides = [1, 1]} : vector<8x512xf32> to vector<8x128xf32>
    %600 = arith.negf %599 : vector<8x128xf32>
    %601 = math.exp %600 : vector<8x128xf32>
    %cst_315 = arith.constant 1.000000e+00 : f32
    %602 = vector.broadcast %cst_315 : f32 to vector<8x128xf32>
    %603 = arith.addf %602, %601 : vector<8x128xf32>
    %604 = arith.divf %602, %603 : vector<8x128xf32>
    %605 = vector.extract_strided_slice %590 {offsets = [0, 256], sizes = [8, 128], strides = [1, 1]} : vector<8x512xf32> to vector<8x128xf32>
    %606 = math.tanh %605 : vector<8x128xf32>
    %607 = vector.extract_strided_slice %590 {offsets = [0, 384], sizes = [8, 128], strides = [1, 1]} : vector<8x512xf32> to vector<8x128xf32>
    %608 = arith.negf %607 : vector<8x128xf32>
    %609 = math.exp %608 : vector<8x128xf32>
    %cst_316 = arith.constant 1.000000e+00 : f32
    %610 = vector.broadcast %cst_316 : f32 to vector<8x128xf32>
    %611 = arith.addf %610, %609 : vector<8x128xf32>
    %612 = arith.divf %610, %611 : vector<8x128xf32>
    %613 = arith.mulf %604, %592 : vector<8x128xf32>
    %614 = arith.mulf %598, %606 : vector<8x128xf32>
    %615 = arith.addf %613, %614 : vector<8x128xf32>
    %616 = math.tanh %615 : vector<8x128xf32>
    %617 = arith.mulf %612, %616 : vector<8x128xf32>
    %c1_317 = arith.constant 1 : index
    %c0_318 = arith.constant 0 : index
    %c0_319 = arith.constant 0 : index
    %618 = vector.load %arg14[%c1_317, %c0_318, %c0_319] : memref<2x8x128xf32, #tpu.memory_space<vmem>>, vector<1x8x128xf32>
    %619 = vector.shape_cast %618 : vector<1x8x128xf32> to vector<8x128xf32>
    %620 = vector.shape_cast %617 : vector<8x128xf32> to vector<1x8x128xf32>
    tpu.vector_store %arg14[%c1_317, %c0_318, %c0_319], %620 {strides = array<i32>} : memref<2x8x128xf32, #tpu.memory_space<vmem>>, vector<1x8x128xf32>,
    %c1_320 = arith.constant 1 : index
    %c0_321 = arith.constant 0 : index
    %c0_322 = arith.constant 0 : index
    %621 = vector.load %arg15[%c1_320, %c0_321, %c0_322] : memref<2x8x128xf32, #tpu.memory_space<vmem>>, vector<1x8x128xf32>
    %622 = vector.shape_cast %621 : vector<1x8x128xf32> to vector<8x128xf32>
    %623 = vector.shape_cast %615 : vector<8x128xf32> to vector<1x8x128xf32>
    tpu.vector_store %arg15[%c1_320, %c0_321, %c0_322], %623 {strides = array<i32>} : memref<2x8x128xf32, #tpu.memory_space<vmem>>, vector<1x8x128xf32>,
    %624 = arith.index_cast %c6_i32 : i32 to index
    %c0_323 = arith.constant 0 : index
    %c0_324 = arith.constant 0 : index
    %625 = vector.load %arg8[%624, %c0_323, %c0_324] : memref<8x8x128xf32, #tpu.memory_space<vmem>>, vector<1x8x128xf32>
    %626 = vector.shape_cast %625 : vector<1x8x128xf32> to vector<8x128xf32>
    %627 = vector.shape_cast %617 : vector<8x128xf32> to vector<1x8x128xf32>
    tpu.vector_store %arg8[%624, %c0_323, %c0_324], %627 {strides = array<i32>} : memref<8x8x128xf32, #tpu.memory_space<vmem>>, vector<1x8x128xf32>,
    %c7_i32 = arith.constant 7 : i32
    %628 = arith.index_cast %c7_i32 : i32 to index
    %c0_325 = arith.constant 0 : index
    %c0_326 = arith.constant 0 : index
    %629 = vector.load %arg13[%628, %c0_325, %c0_326] : memref<8x8x512xf32, #tpu.memory_space<vmem>>, vector<1x8x512xf32>
    %630 = vector.shape_cast %629 : vector<1x8x512xf32> to vector<8x512xf32>
    %c0_327 = arith.constant 0 : index
    %c0_328 = arith.constant 0 : index
    %c0_329 = arith.constant 0 : index
    %631 = vector.load %arg14[%c0_327, %c0_328, %c0_329] : memref<2x8x128xf32, #tpu.memory_space<vmem>>, vector<1x8x128xf32>
    %632 = vector.shape_cast %631 : vector<1x8x128xf32> to vector<8x128xf32>
    %c0_330 = arith.constant 0 : index
    %c0_331 = arith.constant 0 : index
    %633 = vector.load %arg11[%c0_330, %c0_331] : memref<128x512xf32, #tpu.memory_space<vmem>>, vector<128x512xf32>
    %cst_332 = arith.constant dense<0.000000e+00> : vector<8x512xf32>
    %634 = tpu.matmul %632, %633, %cst_332 {dimension_numbers = #tpu.dot_dimension_numbers<[1], [0], [0], [1], [0, 0, 1, 1], [], []>} : vector<8x128xf32>, vector<128x512xf32>, vector<8x512xf32> -> vector<8x512xf32>
    %635 = arith.addf %630, %634 : vector<8x512xf32>
    %c0_333 = arith.constant 0 : index
    %c0_334 = arith.constant 0 : index
    %c0_335 = arith.constant 0 : index
    %636 = vector.load %arg15[%c0_333, %c0_334, %c0_335] : memref<2x8x128xf32, #tpu.memory_space<vmem>>, vector<1x8x128xf32>
    %637 = vector.shape_cast %636 : vector<1x8x128xf32> to vector<8x128xf32>
    %638 = vector.extract_strided_slice %635 {offsets = [0, 0], sizes = [8, 128], strides = [1, 1]} : vector<8x512xf32> to vector<8x128xf32>
    %639 = arith.negf %638 : vector<8x128xf32>
    %640 = math.exp %639 : vector<8x128xf32>
    %cst_336 = arith.constant 1.000000e+00 : f32
    %641 = vector.broadcast %cst_336 : f32 to vector<8x128xf32>
    %642 = arith.addf %641, %640 : vector<8x128xf32>
    %643 = arith.divf %641, %642 : vector<8x128xf32>
    %644 = vector.extract_strided_slice %635 {offsets = [0, 128], sizes = [8, 128], strides = [1, 1]} : vector<8x512xf32> to vector<8x128xf32>
    %645 = arith.negf %644 : vector<8x128xf32>
    %646 = math.exp %645 : vector<8x128xf32>
    %cst_337 = arith.constant 1.000000e+00 : f32
    %647 = vector.broadcast %cst_337 : f32 to vector<8x128xf32>
    %648 = arith.addf %647, %646 : vector<8x128xf32>
    %649 = arith.divf %647, %648 : vector<8x128xf32>
    %650 = vector.extract_strided_slice %635 {offsets = [0, 256], sizes = [8, 128], strides = [1, 1]} : vector<8x512xf32> to vector<8x128xf32>
    %651 = math.tanh %650 : vector<8x128xf32>
    %652 = vector.extract_strided_slice %635 {offsets = [0, 384], sizes = [8, 128], strides = [1, 1]} : vector<8x512xf32> to vector<8x128xf32>
    %653 = arith.negf %652 : vector<8x128xf32>
    %654 = math.exp %653 : vector<8x128xf32>
    %cst_338 = arith.constant 1.000000e+00 : f32
    %655 = vector.broadcast %cst_338 : f32 to vector<8x128xf32>
    %656 = arith.addf %655, %654 : vector<8x128xf32>
    %657 = arith.divf %655, %656 : vector<8x128xf32>
    %658 = arith.mulf %649, %637 : vector<8x128xf32>
    %659 = arith.mulf %643, %651 : vector<8x128xf32>
    %660 = arith.addf %658, %659 : vector<8x128xf32>
    %661 = math.tanh %660 : vector<8x128xf32>
    %662 = arith.mulf %657, %661 : vector<8x128xf32>
    %c0_339 = arith.constant 0 : index
    %c0_340 = arith.constant 0 : index
    %c0_341 = arith.constant 0 : index
    %663 = vector.load %arg14[%c0_339, %c0_340, %c0_341] : memref<2x8x128xf32, #tpu.memory_space<vmem>>, vector<1x8x128xf32>
    %664 = vector.shape_cast %663 : vector<1x8x128xf32> to vector<8x128xf32>
    %665 = vector.shape_cast %662 : vector<8x128xf32> to vector<1x8x128xf32>
    tpu.vector_store %arg14[%c0_339, %c0_340, %c0_341], %665 {strides = array<i32>} : memref<2x8x128xf32, #tpu.memory_space<vmem>>, vector<1x8x128xf32>,
    %c0_342 = arith.constant 0 : index
    %c0_343 = arith.constant 0 : index
    %c0_344 = arith.constant 0 : index
    %666 = vector.load %arg15[%c0_342, %c0_343, %c0_344] : memref<2x8x128xf32, #tpu.memory_space<vmem>>, vector<1x8x128xf32>
    %667 = vector.shape_cast %666 : vector<1x8x128xf32> to vector<8x128xf32>
    %668 = vector.shape_cast %660 : vector<8x128xf32> to vector<1x8x128xf32>
    tpu.vector_store %arg15[%c0_342, %c0_343, %c0_344], %668 {strides = array<i32>} : memref<2x8x128xf32, #tpu.memory_space<vmem>>, vector<1x8x128xf32>,
    %c0_345 = arith.constant 0 : index
    %c0_346 = arith.constant 0 : index
    %669 = vector.load %arg10[%c0_345, %c0_346] : memref<128x512xf32, #tpu.memory_space<vmem>>, vector<128x512xf32>
    %cst_347 = arith.constant dense<0.000000e+00> : vector<8x512xf32>
    %670 = tpu.matmul %662, %669, %cst_347 {dimension_numbers = #tpu.dot_dimension_numbers<[1], [0], [0], [1], [0, 0, 1, 1], [], []>} : vector<8x128xf32>, vector<128x512xf32>, vector<8x512xf32> -> vector<8x512xf32>
    %c1_348 = arith.constant 1 : index
    %c0_349 = arith.constant 0 : index
    %c0_350 = arith.constant 0 : index
    %671 = vector.load %arg14[%c1_348, %c0_349, %c0_350] : memref<2x8x128xf32, #tpu.memory_space<vmem>>, vector<1x8x128xf32>
    %672 = vector.shape_cast %671 : vector<1x8x128xf32> to vector<8x128xf32>
    %c0_351 = arith.constant 0 : index
    %c0_352 = arith.constant 0 : index
    %673 = vector.load %arg12[%c0_351, %c0_352] : memref<128x512xf32, #tpu.memory_space<vmem>>, vector<128x512xf32>
    %cst_353 = arith.constant dense<0.000000e+00> : vector<8x512xf32>
    %674 = tpu.matmul %672, %673, %cst_353 {dimension_numbers = #tpu.dot_dimension_numbers<[1], [0], [0], [1], [0, 0, 1, 1], [], []>} : vector<8x128xf32>, vector<128x512xf32>, vector<8x512xf32> -> vector<8x512xf32>
    %675 = arith.addf %670, %674 : vector<8x512xf32>
    %c0_354 = arith.constant 0 : index
    %c0_355 = arith.constant 0 : index
    %676 = vector.load %arg7[%c0_354, %c0_355] : memref<1x512xf32, #tpu.memory_space<vmem>>, vector<1x512xf32>
    %677 = vector.broadcast %676 : vector<1x512xf32> to vector<8x512xf32>
    %678 = arith.addf %675, %677 : vector<8x512xf32>
    %c1_356 = arith.constant 1 : index
    %c0_357 = arith.constant 0 : index
    %c0_358 = arith.constant 0 : index
    %679 = vector.load %arg15[%c1_356, %c0_357, %c0_358] : memref<2x8x128xf32, #tpu.memory_space<vmem>>, vector<1x8x128xf32>
    %680 = vector.shape_cast %679 : vector<1x8x128xf32> to vector<8x128xf32>
    %681 = vector.extract_strided_slice %678 {offsets = [0, 0], sizes = [8, 128], strides = [1, 1]} : vector<8x512xf32> to vector<8x128xf32>
    %682 = arith.negf %681 : vector<8x128xf32>
    %683 = math.exp %682 : vector<8x128xf32>
    %cst_359 = arith.constant 1.000000e+00 : f32
    %684 = vector.broadcast %cst_359 : f32 to vector<8x128xf32>
    %685 = arith.addf %684, %683 : vector<8x128xf32>
    %686 = arith.divf %684, %685 : vector<8x128xf32>
    %687 = vector.extract_strided_slice %678 {offsets = [0, 128], sizes = [8, 128], strides = [1, 1]} : vector<8x512xf32> to vector<8x128xf32>
    %688 = arith.negf %687 : vector<8x128xf32>
    %689 = math.exp %688 : vector<8x128xf32>
    %cst_360 = arith.constant 1.000000e+00 : f32
    %690 = vector.broadcast %cst_360 : f32 to vector<8x128xf32>
    %691 = arith.addf %690, %689 : vector<8x128xf32>
    %692 = arith.divf %690, %691 : vector<8x128xf32>
    %693 = vector.extract_strided_slice %678 {offsets = [0, 256], sizes = [8, 128], strides = [1, 1]} : vector<8x512xf32> to vector<8x128xf32>
    %694 = math.tanh %693 : vector<8x128xf32>
    %695 = vector.extract_strided_slice %678 {offsets = [0, 384], sizes = [8, 128], strides = [1, 1]} : vector<8x512xf32> to vector<8x128xf32>
    %696 = arith.negf %695 : vector<8x128xf32>
    %697 = math.exp %696 : vector<8x128xf32>
    %cst_361 = arith.constant 1.000000e+00 : f32
    %698 = vector.broadcast %cst_361 : f32 to vector<8x128xf32>
    %699 = arith.addf %698, %697 : vector<8x128xf32>
    %700 = arith.divf %698, %699 : vector<8x128xf32>
    %701 = arith.mulf %692, %680 : vector<8x128xf32>
    %702 = arith.mulf %686, %694 : vector<8x128xf32>
    %703 = arith.addf %701, %702 : vector<8x128xf32>
    %704 = math.tanh %703 : vector<8x128xf32>
    %705 = arith.mulf %700, %704 : vector<8x128xf32>
    %c1_362 = arith.constant 1 : index
    %c0_363 = arith.constant 0 : index
    %c0_364 = arith.constant 0 : index
    %706 = vector.load %arg14[%c1_362, %c0_363, %c0_364] : memref<2x8x128xf32, #tpu.memory_space<vmem>>, vector<1x8x128xf32>
    %707 = vector.shape_cast %706 : vector<1x8x128xf32> to vector<8x128xf32>
    %708 = vector.shape_cast %705 : vector<8x128xf32> to vector<1x8x128xf32>
    tpu.vector_store %arg14[%c1_362, %c0_363, %c0_364], %708 {strides = array<i32>} : memref<2x8x128xf32, #tpu.memory_space<vmem>>, vector<1x8x128xf32>,
    %c1_365 = arith.constant 1 : index
    %c0_366 = arith.constant 0 : index
    %c0_367 = arith.constant 0 : index
    %709 = vector.load %arg15[%c1_365, %c0_366, %c0_367] : memref<2x8x128xf32, #tpu.memory_space<vmem>>, vector<1x8x128xf32>
    %710 = vector.shape_cast %709 : vector<1x8x128xf32> to vector<8x128xf32>
    %711 = vector.shape_cast %703 : vector<8x128xf32> to vector<1x8x128xf32>
    tpu.vector_store %arg15[%c1_365, %c0_366, %c0_367], %711 {strides = array<i32>} : memref<2x8x128xf32, #tpu.memory_space<vmem>>, vector<1x8x128xf32>,
    %712 = arith.index_cast %c7_i32 : i32 to index
    %c0_368 = arith.constant 0 : index
    %c0_369 = arith.constant 0 : index
    %713 = vector.load %arg8[%712, %c0_368, %c0_369] : memref<8x8x128xf32, #tpu.memory_space<vmem>>, vector<1x8x128xf32>
    %714 = vector.shape_cast %713 : vector<1x8x128xf32> to vector<8x128xf32>
    %715 = vector.shape_cast %705 : vector<8x128xf32> to vector<1x8x128xf32>
    tpu.vector_store %arg8[%712, %c0_368, %c0_369], %715 {strides = array<i32>} : memref<8x8x128xf32, #tpu.memory_space<vmem>>, vector<1x8x128xf32>,
    %c8_i32 = arith.constant 8 : i32
    return
  }
  func.func @transform_0(%arg0: i32) -> (i32, i32, i32) {
    %c0_i32 = arith.constant 0 : i32
    %c0_i32_0 = arith.constant 0 : i32
    %c0_i32_1 = arith.constant 0 : i32
    return %arg0, %c0_i32, %c0_i32_0 : i32, i32, i32
  }
  func.func @transform_5(%arg0: i32) -> (i32, i32) {
    %c0_i32 = arith.constant 0 : i32
    %c0_i32_0 = arith.constant 0 : i32
    %c0_i32_1 = arith.constant 0 : i32
    return %c0_i32, %c0_i32_0 : i32, i32
  }
  func.func @transform_6(%arg0: i32) -> (i32, i32) {
    %c0_i32 = arith.constant 0 : i32
    %c0_i32_0 = arith.constant 0 : i32
    %c0_i32_1 = arith.constant 0 : i32
    return %c0_i32, %c0_i32_0 : i32, i32
  }
  func.func @transform_7(%arg0: i32) -> (i32, i32, i32) {
    %c0_i32 = arith.constant 0 : i32
    %c0_i32_0 = arith.constant 0 : i32
    %c0_i32_1 = arith.constant 0 : i32
    return %arg0, %c0_i32, %c0_i32_0 : i32, i32, i32
  }
}

</mosaic_0001>

<llo_original>
// kernel: tpu_custom_call.1
$region0: #{tpu_custom_call.1}
  #allocation0 [shape = 'u32[]', space=smem, size = 0x4, offset = 0x4, fixed_abs, tag = 'smem constant byte address 0x4 - core index']
  #allocation1 [shape = 'u32[144,128]{1,0:T(1,128)}', space=vmem, size = 0x12000, scoped, tag = 'internal scratch']
  #allocation2 [shape = 'f32[128,512]{1,0:T(8,128)}', space=vmem, size = 0x40000, scoped, tag = 'scratch operand']
  #allocation3 [shape = 'f32[128,512]{1,0:T(8,128)}', space=vmem, size = 0x40000, scoped, tag = 'scratch operand']
  #allocation4 [shape = 'f32[128,512]{1,0:T(8,128)}', space=vmem, size = 0x40000, scoped, tag = 'scratch operand']
  #allocation5 [shape = 'f32[128,512]{1,0:T(8,128)}', space=vmem, size = 0x40000, scoped, tag = 'scratch operand']
  #allocation6 [shape = 'f32[8,8,512]{2,1,0:T(8,128)}', space=vmem, size = 0x20000, scoped, tag = 'scratch operand']
  #allocation7 [shape = 'f32[2,8,128]{2,1,0:T(8,128)}', space=vmem, size = 0x2000, scoped, tag = 'scratch operand']
  #allocation8 [shape = 'f32[2,8,128]{2,1,0:T(8,128)}', space=vmem, size = 0x2000, scoped, tag = 'scratch operand']
  #allocation9 [shape = 's32[4]{0}', space=sflag, size = 0x10, scoped, tag = 'scratch operand']
  #allocation14 [shape = 's32[]', space=sflag, size = 0x4, offset = 0, fixed_abs, tag = 'sflag constant byte address 0x0 - dummy sync flag']
  #allocation15 [shape = 's32[]', space=sflag, size = 0x4, offset = 0, fixed_abs, tag = 'sflag constant byte address 0x0 - dummy sync flag']
  #allocation16 [shape = 'u32[]', space=smem, size = 0x4, offset = 0x44, fixed_abs, tag = 'smem constant byte address 0x44 - assertion arg 0']
  #allocation17 [shape = 'u32[]', space=smem, size = 0x4, offset = 0x48, fixed_abs, tag = 'smem constant byte address 0x48 - assertion arg 1']
  #allocation18 [shape = 's32[]', space=sflag, size = 0x4, offset = 0, fixed_abs, tag = 'sflag constant byte address 0x0 - dummy sync flag']
  #allocation19 [shape = 's32[]', space=sflag, size = 0x4, offset = 0, fixed_abs, tag = 'sflag constant byte address 0x0 - dummy sync flag']
  #allocation20 [shape = 's32[]', space=sflag, size = 0x4, offset = 0, fixed_abs, tag = 'sflag constant byte address 0x0 - dummy sync flag']
  #allocation21 [shape = 's32[]', space=sflag, size = 0x4, offset = 0, fixed_abs, tag = 'sflag constant byte address 0x0 - dummy sync flag']
  #allocation22 [shape = 's32[]', space=sflag, size = 0x4, offset = 0, fixed_abs, tag = 'sflag constant byte address 0x0 - dummy sync flag']
  #allocation23 [shape = 's32[]', space=sflag, size = 0x4, offset = 0, fixed_abs, tag = 'sflag constant byte address 0x0 - dummy sync flag']
  %s0 = inlined_call_operand.hbm [shape: f32[16,8,128], index: 0, kind: input, shape index: {}]
  %s1 = inlined_call_operand.hbm [shape: f32[128,512], index: 1, kind: input, shape index: {}]
  %s2 = inlined_call_operand.hbm [shape: f32[128,512], index: 2, kind: input, shape index: {}]
  %s3 = inlined_call_operand.hbm [shape: f32[128,512], index: 3, kind: input, shape index: {}]
  %s4 = inlined_call_operand.hbm [shape: f32[128,512], index: 4, kind: input, shape index: {}]
  %s5 = inlined_call_operand.vmem [shape: f32[1,512], index: 5, kind: input, shape index: {}]
  %s6 = inlined_call_operand.vmem [shape: f32[1,512], index: 6, kind: input, shape index: {}]
  %s7 = inlined_call_operand.hbm [shape: f32[16,8,128], index: 7, kind: output, shape index: {}]
  %s8 = sld [smem:[#allocation0]]
  $region69: #{tpu_custom_call.1} parent=0
    _
  %s10 = ssub.s32 1, %s8
  %s11 = scalar_select 0, %s10, %s8
  $region1: #{tpu_custom_call.1} parent=0
    #allocation10 [shape = 'u8[65536]{0}', space=vmem, size = 0x10000, scoped, tag = 'input window, operand 0']
    #allocation11 [shape = 's32[2]{0}', space=sflag, size = 0x8, scoped, tag = 'scoped memory for tpu_custom_call.1']
    #allocation12 [shape = 's32[2]{0}', space=sflag, size = 0x8, scoped, tag = 'scoped memory for tpu_custom_call.1']
    #allocation13 [shape = 'u8[65536]{0}', space=vmem, size = 0x10000, scoped, tag = 'output window, operand 0']
    %12 = vsyncpa [#allocation11], 0
    %s13 = scalar_lea.sflag [#allocation11], 1
    %14 = vsyncpa %s13, 0
    %15 = vsyncpa [#allocation12], 0
    %s16 = scalar_lea.sflag [#allocation12], 1
    %17 = vsyncpa %s16, 0
    loop: start=0, step=1, limit=4
    $region2: #{tpu_custom_call.1} parent=1 // loop_pre_header
      _
    $region3: #{tpu_custom_call.1} parent=1 // loop_header
      %s19 = sphi 0, %s23
      %p20 = scmp.ge.s32.totalorder %s19, 4
      %s29 = sphi 0, %s31
      %s32 = sphi 0, %s29
      %s33 = sphi 0, %s32
      %s49 = sphi 0, %s33
      %s53 = sphi 0, %s53
      %s55 = sphi 0, %s53
      %s56 = sphi 0, %s55
      %s70 = sphi 0, %s56
      %s74 = sphi 0, %s74
      %s76 = sphi 0, %s74
      %s77 = sphi 0, %s76
      %s91 = sphi 0, %s77
      %s97 = sphi 0, %s99
      %s100 = sphi 0, %s97
      %s101 = sphi 0, %s100
      %s117 = sphi 0, %s101
    $region4: #{tpu_custom_call.1} parent=1 // loop_header_branch
      %22 = sbr.rel (%p20) target = $region8
    $region5: #{tpu_custom_call.1} parent=1 // loop_body
      %s24 = ssub.s32 %s19, 1
      %s25 = ssub.s32 %s19, 2
      %s26 = sadd.s32 %s19, 1
      %s27 = ssub.s32 %s19, %s26
      %p28 = scmp.eq.s32.totalorder %s27, 0
      %s30 = sadd.s32 %s29, 1
      %s31 = scalar_select %p28, %s29, %s30
      %p34 = pneg %p28
      %p35 = scmp.eq.s32.totalorder %s19, 1
      %p36 = por %p34, %p35
      %p37 = scmp.ne.s32.totalorder %s29, %s32
      %p38 = scmp.eq.s32.totalorder %s19, 0
      %p39 = por %p37, %p38
      %p40 = scmp.ne.s32.totalorder %s29, %s32
      %p41 = scmp.eq.s32.totalorder %s24, 1
      %p42 = por %p40, %p41
      %p43 = scmp.ne.s32.totalorder %s32, %s33
      %p44 = scmp.eq.s32.totalorder %s24, 0
      %p45 = por %p43, %p44
      %p46 = scmp.ne.s32.totalorder %s32, %s33
      %p47 = scmp.eq.s32.totalorder %s25, 1
      %p48 = por %p46, %p47
      %p50 = scmp.ne.s32.totalorder %s33, %s49
      %p51 = scmp.eq.s32.totalorder %s25, 0
      %p52 = por %p50, %p51
      %s54 = sadd.s32 %s53, 1
      %p57 = scmp.eq.s32.totalorder %s19, 1
      %p58 = scmp.ne.s32.totalorder %s53, %s55
      %p59 = scmp.eq.s32.totalorder %s19, 0
      %p60 = por %p58, %p59
      %p61 = scmp.ne.s32.totalorder %s53, %s55
      %p62 = scmp.eq.s32.totalorder %s24, 1
      %p63 = por %p61, %p62
      %p64 = scmp.ne.s32.totalorder %s55, %s56
      %p65 = scmp.eq.s32.totalorder %s24, 0
      %p66 = por %p64, %p65
      %p67 = scmp.ne.s32.totalorder %s55, %s56
      %p68 = scmp.eq.s32.totalorder %s25, 1
      %p69 = por %p67, %p68
      %p71 = scmp.ne.s32.totalorder %s56, %s70
      %p72 = scmp.eq.s32.totalorder %s25, 0
      %p73 = por %p71, %p72
      %s75 = sadd.s32 %s74, 1
      %p78 = scmp.eq.s32.totalorder %s19, 1
      %p79 = scmp.ne.s32.totalorder %s74, %s76
      %p80 = scmp.eq.s32.totalorder %s19, 0
      %p81 = por %p79, %p80
      %p82 = scmp.ne.s32.totalorder %s74, %s76
      %p83 = scmp.eq.s32.totalorder %s24, 1
      %p84 = por %p82, %p83
      %p85 = scmp.ne.s32.totalorder %s76, %s77
      %p86 = scmp.eq.s32.totalorder %s24, 0
      %p87 = por %p85, %p86
      %p88 = scmp.ne.s32.totalorder %s76, %s77
      %p89 = scmp.eq.s32.totalorder %s25, 1
      %p90 = por %p88, %p89
      %p92 = scmp.ne.s32.totalorder %s77, %s91
      %p93 = scmp.eq.s32.totalorder %s25, 0
      %p94 = por %p92, %p93
      %s95 = ssub.s32 %s19, %s26
      %p96 = scmp.eq.s32.totalorder %s95, 0
      %s98 = sadd.s32 %s97, 1
      %s99 = scalar_select %p96, %s97, %s98
      %p102 = pneg %p96
      %p103 = scmp.eq.s32.totalorder %s19, 1
      %p104 = por %p102, %p103
      %p105 = scmp.ne.s32.totalorder %s97, %s100
      %p106 = scmp.eq.s32.totalorder %s19, 0
      %p107 = por %p105, %p106
      %p108 = scmp.ne.s32.totalorder %s97, %s100
      %p109 = scmp.eq.s32.totalorder %s24, 1
      %p110 = por %p108, %p109
      %p111 = scmp.ne.s32.totalorder %s100, %s101
      %p112 = scmp.eq.s32.totalorder %s24, 0
      %p113 = por %p111, %p112
      %p114 = scmp.ne.s32.totalorder %s100, %s101
      %p115 = scmp.eq.s32.totalorder %s25, 1
      %p116 = por %p114, %p115
      %p118 = scmp.ne.s32.totalorder %s101, %s117
      %p119 = scmp.eq.s32.totalorder %s25, 0
      %p120 = por %p118, %p119
      %p121 = scmp.le.s32.totalorder 1, %s19
      %p122 = scmp.lt.s32.totalorder %s19, 3
      %p123 = pnand %p121, %p122
      %p124 = pneg %p123
      // Predicated region
      $region9: #{tpu_custom_call.1} parent=5 // pred_check
        _
      $region10: #{tpu_custom_call.1} parent=5 // pred_check_branch
        %126 = sbr.rel (%p123) target = $region12
      $region11: #{tpu_custom_call.1} parent=5 // pred_region
        %s127 = ssub.s32 %s19, 1
        // Predicated region
        $region13: #{tpu_custom_call.1} parent=11 // pred_check
          %p128 = pneg %p66
        $region14: #{tpu_custom_call.1} parent=11 // pred_check_branch
          %130 = sbr.rel (%p128) target = $region16
        $region15: #{tpu_custom_call.1} parent=11 // pred_region
          _
        $region16: #{tpu_custom_call.1} parent=11 // pred_fallthru
          _
        // Predicated region
        $region17: #{tpu_custom_call.1} parent=11 // pred_check
          %p131 = pneg %p87
        $region18: #{tpu_custom_call.1} parent=11 // pred_check_branch
          %133 = sbr.rel (%p131) target = $region20
        $region19: #{tpu_custom_call.1} parent=11 // pred_region
          _
        $region20: #{tpu_custom_call.1} parent=11 // pred_fallthru
          _
      $region12: #{tpu_custom_call.1} parent=5 // pred_fallthru
        _
      %p134 = scmp.lt.s32.totalorder %s19, 2
      // Predicated region
      $region21: #{tpu_custom_call.1} parent=5 // pred_check
        %p135 = pneg %p134
      $region22: #{tpu_custom_call.1} parent=5 // pred_check_branch
        %137 = sbr.rel (%p135) target = $region24
      $region23: #{tpu_custom_call.1} parent=5 // pred_region
        // Predicated region
        $region25: #{tpu_custom_call.1} parent=23 // pred_check
          %p138 = pneg %p39
        $region26: #{tpu_custom_call.1} parent=23 // pred_check_branch
          %140 = sbr.rel (%p138) target = $region28
        $region27: #{tpu_custom_call.1} parent=23 // pred_region
          %s141 = sand.u32 %s29, 1
          %s142 = scalar_lea.sflag [#allocation11], %s141
          %s143 = sand.u32 %s29, 1
          %s144 = smul.addr %s143, 64
          %s145 = scalar_lea.vmem [#allocation10], %s144
          %s146 = smul.u32 8, %s19
          %s148 = ssub.s32 1024, 1024
          %149 = vsyncadd %s142, %s148
          %s150 = smul.addr %s146, 128
          %s151 = scalar_lea.hbm %s0, %s150
          %s152 = sshll.u32 %s145, 4
          %s153 = int_to_ptr.vmem [resolvable:$true] %s152
          %158 = dma.hbm_to_vmem [thread:$0]  %s151, 1024, %s153, %s142, 128, 128, 8
        $region28: #{tpu_custom_call.1} parent=23 // pred_fallthru
          _
      $region24: #{tpu_custom_call.1} parent=5 // pred_fallthru
        _
      %p159 = scmp.le.s32.totalorder 1, %s19
      %p160 = scmp.lt.s32.totalorder %s19, 3
      %p161 = pnand %p159, %p160
      %p162 = pneg %p161
      // Predicated region
      $region29: #{tpu_custom_call.1} parent=5 // pred_check
        _
      $region30: #{tpu_custom_call.1} parent=5 // pred_check_branch
        %164 = sbr.rel (%p161) target = $region32
      $region31: #{tpu_custom_call.1} parent=5 // pred_region
        %s165 = ssub.s32 %s19, 1
        %s166 = sand.u32 %s32, 1
        %s167 = scalar_lea.sflag [#allocation11], %s166
        %s168 = sand.u32 %s32, 1
        %s169 = smul.addr %s168, 64
        %s170 = scalar_lea.vmem [#allocation10], %s169
        // Predicated region
        $region33: #{tpu_custom_call.1} parent=31 // pred_check
          %p171 = pneg %p45
        $region34: #{tpu_custom_call.1} parent=31 // pred_check_branch
          %173 = sbr.rel (%p171) target = $region36
        $region35: #{tpu_custom_call.1} parent=31 // pred_region
          %174 = dma.done %s167, 1024
        $region36: #{tpu_custom_call.1} parent=31 // pred_fallthru
          _
        %s175 = sand.u32 %s32, 1
        %s176 = scalar_lea.sflag [#allocation11], %s175
        %s177 = sand.u32 %s32, 1
        %s178 = smul.addr %s177, 64
        %s179 = scalar_lea.vmem [#allocation10], %s178
        %p180 = pneg %p45
        %p181 = pneg %p42
        %p182 = pneg %p66
        %p183 = pneg %p63
        %p184 = pneg %p87
        %p185 = pneg %p84
        %p186 = pneg %p113
        %p187 = pneg %p110
        %s188 = sand.u32 %s100, 1
        %s189 = scalar_lea.sflag [#allocation12], %s188
        %s190 = sand.u32 %s100, 1
        %s191 = smul.addr %s190, 64
        %s192 = scalar_lea.vmem [#allocation13], %s191
        %s193 = smul.u32 8, %s24
        %s194 = smul.u32 8, %s24
        %p195 = scmp.eq.s32.totalorder %s24, 0
        // Predicated region
        $region37: #{tpu_custom_call.1} parent=31 // pred_check
          %p196 = pneg %p195
        $region38: #{tpu_custom_call.1} parent=31 // pred_check_branch
          %198 = sbr.rel (%p196) target = $region40
        $region39: #{tpu_custom_call.1} parent=31 // pred_region
          // Predicated region
          $region41: #{tpu_custom_call.1} parent=39 // pred_check
            _
          $region42: #{tpu_custom_call.1} parent=39 // pred_check_branch
            %200 = sbr.rel target = $region44
          $region43: #{tpu_custom_call.1} parent=39 // pred_region
            %201 = sst [smem:[#allocation16]] [#allocation15]
            %202 = sst [smem:[#allocation17]] [#allocation14]
          $region44: #{tpu_custom_call.1} parent=39 // pred_fallthru
            _
          %204 = shalt.err (0)
          %s206 = sshll.u32 [#allocation2], 4
          %s207 = int_to_ptr.vmem [resolvable:$true] %s206
          %209 = dma.hbm_to_vmem [thread:$0]  %s1, 8192, %s207, [#allocation9]
          %s210 = scalar_lea.sflag [#allocation9], 1
          // Predicated region
          $region45: #{tpu_custom_call.1} parent=39 // pred_check
            _
          $region46: #{tpu_custom_call.1} parent=39 // pred_check_branch
            %212 = sbr.rel target = $region48
          $region47: #{tpu_custom_call.1} parent=39 // pred_region
            %213 = sst [smem:[#allocation16]] [#allocation19]
            %214 = sst [smem:[#allocation17]] [#allocation18]
          $region48: #{tpu_custom_call.1} parent=39 // pred_fallthru
            _
          %216 = shalt.err (0)
          %s218 = sshll.u32 [#allocation4], 4
          %s219 = int_to_ptr.vmem [resolvable:$true] %s218
          %221 = dma.hbm_to_vmem [thread:$0]  %s3, 8192, %s219, %s210
          %s222 = scalar_lea.sflag [#allocation9], 2
          // Predicated region
          $region49: #{tpu_custom_call.1} parent=39 // pred_check
            _
          $region50: #{tpu_custom_call.1} parent=39 // pred_check_branch
            %224 = sbr.rel target = $region52
          $region51: #{tpu_custom_call.1} parent=39 // pred_region
            %225 = sst [smem:[#allocation16]] [#allocation21]
            %226 = sst [smem:[#allocation17]] [#allocation20]
          $region52: #{tpu_custom_call.1} parent=39 // pred_fallthru
            _
          %228 = shalt.err (0)
          %s230 = sshll.u32 [#allocation3], 4
          %s231 = int_to_ptr.vmem [resolvable:$true] %s230
          %233 = dma.hbm_to_vmem [thread:$0]  %s2, 8192, %s231, %s222
          %s234 = scalar_lea.sflag [#allocation9], 3
          // Predicated region
          $region53: #{tpu_custom_call.1} parent=39 // pred_check
            _
          $region54: #{tpu_custom_call.1} parent=39 // pred_check_branch
            %236 = sbr.rel target = $region56
          $region55: #{tpu_custom_call.1} parent=39 // pred_region
            %237 = sst [smem:[#allocation16]] [#allocation23]
            %238 = sst [smem:[#allocation17]] [#allocation22]
          $region56: #{tpu_custom_call.1} parent=39 // pred_fallthru
            _
          %240 = shalt.err (0)
          %s242 = sshll.u32 [#allocation5], 4
          %s243 = int_to_ptr.vmem [resolvable:$true] %s242
          %245 = dma.hbm_to_vmem [thread:$0]  %s4, 8192, %s243, %s234
          %s246 = smul.u32 8, 16
          %s247 = smul.u32 %s246, 4
          %s248 = sshll.u32 %s247, 4
          %249 = dma.done [#allocation9], %s248
          %s250 = sshll.u32 %s247, 4
          %251 = dma.done %s210, %s250
          %s252 = sshll.u32 %s247, 4
          %253 = dma.done %s222, %s252
          %s254 = sshll.u32 %s247, 4
          %255 = dma.done %s234, %s254
          %256 = vst [vmem:[#allocation7] sm:$0xff] 0.0
          %257 = vst [vmem:[#allocation7 + $0x8] sm:$0xff] 0.0
          %258 = vst [vmem:[#allocation8] sm:$0xff] 0.0
          %259 = vst [vmem:[#allocation8 + $0x8] sm:$0xff] 0.0
        $region40: #{tpu_custom_call.1} parent=31 // pred_fallthru
          _
        %v260 = vld [vmem:[%s170] sm:$0xff]
        %v261 = vld [vmem:[%s170 + $0x8] sm:$0xff]
        %v262 = vld [vmem:[%s170 + $0x10] sm:$0xff]
        %v263 = vld [vmem:[%s170 + $0x18] sm:$0xff]
        %v264 = vld [vmem:[%s170 + $0x20] sm:$0xff]
        %v265 = vld [vmem:[%s170 + $0x28] sm:$0xff]
        %v266 = vld [vmem:[%s170 + $0x30] sm:$0xff]
        %v267 = vld [vmem:[%s170 + $0x38] sm:$0xff]
        %v268 = vld [vmem:[#allocation2] sm:$0xff]
        %v269 = vld [vmem:[#allocation2 + $0x8] sm:$0xff]
        %v270 = vld [vmem:[#allocation2 + $0x10] sm:$0xff]
        %v271 = vld [vmem:[#allocation2 + $0x18] sm:$0xff]
        %v272 = vld [vmem:[#allocation2 + $0x20] sm:$0xff]
        %v273 = vld [vmem:[#allocation2 + $0x28] sm:$0xff]
        %v274 = vld [vmem:[#allocation2 + $0x30] sm:$0xff]
        %v275 = vld [vmem:[#allocation2 + $0x38] sm:$0xff]
        %v276 = vld [vmem:[#allocation2 + $0x40] sm:$0xff]
        %v277 = vld [vmem:[#allocation2 + $0x48] sm:$0xff]
        %v278 = vld [vmem:[#allocation2 + $0x50] sm:$0xff]
        %v279 = vld [vmem:[#allocation2 + $0x58] sm:$0xff]
        %v280 = vld [vmem:[#allocation2 + $0x60] sm:$0xff]
        %v281 = vld [vmem:[#allocation2 + $0x68] sm:$0xff]
        %v282 = vld [vmem:[#allocation2 + $0x70] sm:$0xff]
        %v283 = vld [vmem:[#allocation2 + $0x78] sm:$0xff]
        %v284 = vld [vmem:[#allocation2 + $0x80] sm:$0xff]
        %v285 = vld [vmem:[#allocation2 + $0x88] sm:$0xff]
        %v286 = vld [vmem:[#allocation2 + $0x90] sm:$0xff]
        %v287 = vld [vmem:[#allocation2 + $0x98] sm:$0xff]
        %v288 = vld [vmem:[#allocation2 + $0xa0] sm:$0xff]
        %v289 = vld [vmem:[#allocation2 + $0xa8] sm:$0xff]
        %v290 = vld [vmem:[#allocation2 + $0xb0] sm:$0xff]
        %v291 = vld [vmem:[#allocation2 + $0xb8] sm:$0xff]
        %v292 = vld [vmem:[#allocation2 + $0xc0] sm:$0xff]
        %v293 = vld [vmem:[#allocation2 + $0xc8] sm:$0xff]
        %v294 = vld [vmem:[#allocation2 + $0xd0] sm:$0xff]
        %v295 = vld [vmem:[#allocation2 + $0xd8] sm:$0xff]
        %v296 = vld [vmem:[#allocation2 + $0xe0] sm:$0xff]
        %v297 = vld [vmem:[#allocation2 + $0xe8] sm:$0xff]
        %v298 = vld [vmem:[#allocation2 + $0xf0] sm:$0xff]
        %v299 = vld [vmem:[#allocation2 + $0xf8] sm:$0xff]
        %v300 = vld [vmem:[#allocation2 + $0x100] sm:$0xff]
        %v301 = vld [vmem:[#allocation2 + $0x108] sm:$0xff]
        %v302 = vld [vmem:[#allocation2 + $0x110] sm:$0xff]
        %v303 = vld [vmem:[#allocation2 + $0x118] sm:$0xff]
        %v304 = vld [vmem:[#allocation2 + $0x120] sm:$0xff]
        %v305 = vld [vmem:[#allocation2 + $0x128] sm:$0xff]
        %v306 = vld [vmem:[#allocation2 + $0x130] sm:$0xff]
        %v307 = vld [vmem:[#allocation2 + $0x138] sm:$0xff]
        %v308 = vld [vmem:[#allocation2 + $0x140] sm:$0xff]
        %v309 = vld [vmem:[#allocation2 + $0x148] sm:$0xff]
        %v310 = vld [vmem:[#allocation2 + $0x150] sm:$0xff]
        %v311 = vld [vmem:[#allocation2 + $0x158] sm:$0xff]
        %v312 = vld [vmem:[#allocation2 + $0x160] sm:$0xff]
        %v313 = vld [vmem:[#allocation2 + $0x168] sm:$0xff]
        %v314 = vld [vmem:[#allocation2 + $0x170] sm:$0xff]
        %v315 = vld [vmem:[#allocation2 + $0x178] sm:$0xff]
        %v316 = vld [vmem:[#allocation2 + $0x180] sm:$0xff]
        %v317 = vld [vmem:[#allocation2 + $0x188] sm:$0xff]
        %v318 = vld [vmem:[#allocation2 + $0x190] sm:$0xff]
        %v319 = vld [vmem:[#allocation2 + $0x198] sm:$0xff]
        %v320 = vld [vmem:[#allocation2 + $0x1a0] sm:$0xff]
        %v321 = vld [vmem:[#allocation2 + $0x1a8] sm:$0xff]
        %v322 = vld [vmem:[#allocation2 + $0x1b0] sm:$0xff]
        %v323 = vld [vmem:[#allocation2 + $0x1b8] sm:$0xff]
        %v324 = vld [vmem:[#allocation2 + $0x1c0] sm:$0xff]
        %v325 = vld [vmem:[#allocation2 + $0x1c8] sm:$0xff]
        %v326 = vld [vmem:[#allocation2 + $0x1d0] sm:$0xff]
        %v327 = vld [vmem:[#allocation2 + $0x1d8] sm:$0xff]
        %v328 = vld [vmem:[#allocation2 + $0x1e0] sm:$0xff]
        %v329 = vld [vmem:[#allocation2 + $0x1e8] sm:$0xff]
        %v330 = vld [vmem:[#allocation2 + $0x1f0] sm:$0xff]
        %v331 = vld [vmem:[#allocation2 + $0x1f8] sm:$0xff]
        %v332 = vld [vmem:[%s5] sm:$0xf]
        %v334 = vlaneseq
        %v335 = vshrl.u32 %v334, 7
        %v336 = vsub.s32 0, %v335
        %v337 = vrot.slane %v332, %v336
        %v338 = vlaneseq
        %v339 = vshrl.u32 %v338, 7
        %v340 = vsub.s32 1, %v339
        %v341 = vrot.slane %v332, %v340
        %v342 = vlaneseq
        %v343 = vshrl.u32 %v342, 7
        %v344 = vsub.s32 2, %v343
        %v345 = vrot.slane %v332, %v344
        %v346 = vlaneseq
        %v347 = vshrl.u32 %v346, 7
        %v348 = vsub.s32 3, %v347
        %v349 = vrot.slane %v332, %v348
        %354 = vmatprep.subr.mxu0 %v329
        %355 = vmatpush1.msra.mxu0 %v328
        %356 = vmatprep.subr.mxu0 %v325
        %357 = vmatpush1.msra.mxu0 %v324
        %358 = vmatprep.subr.mxu0 %v321
        %359 = vmatpush1.msra.mxu0 %v320
        %360 = vmatprep.subr.mxu0 %v317
        %361 = vmatpush1.msra.mxu0 %v316
        %362 = vmatprep.subr.mxu0 %v313
        %363 = vmatpush1.msra.mxu0 %v312
        %364 = vmatprep.subr.mxu0 %v309
        %365 = vmatpush1.msra.mxu0 %v308
        %366 = vmatprep.subr.mxu0 %v305
        %367 = vmatpush1.msra.mxu0 %v304
        %368 = vmatprep.subr.mxu0 %v301
        %369 = vmatpush1.msra.mxu0 %v300
        %370 = vmatprep.subr.mxu0 %v297
        %371 = vmatpush1.msra.mxu0 %v296
        %372 = vmatprep.subr.mxu0 %v293
        %373 = vmatpush1.msra.mxu0 %v292
        %374 = vmatprep.subr.mxu0 %v289
        %375 = vmatpush1.msra.mxu0 %v288
        %376 = vmatprep.subr.mxu0 %v285
        %377 = vmatpush1.msra.mxu0 %v284
        %378 = vmatprep.subr.mxu0 %v281
        %379 = vmatpush1.msra.mxu0 %v280
        %380 = vmatprep.subr.mxu0 %v277
        %381 = vmatpush1.msra.mxu0 %v276
        %382 = vmatprep.subr.mxu0 %v273
        %383 = vmatpush1.msra.mxu0 %v272
        %384 = vmatprep.subr.mxu0 %v269
        %385 = vmatpush1.msra.mxu0 %v268
        %386 = vmatprep.subr.mxu0 0.0
        %387 = vmatpush2.msra.mxu0 0.0
        %388 = vmatprep.subr.mxu0 0.0
        %389 = vmatpush2.msra.mxu0 0.0
        %390 = vmatprep.subr.mxu0 0.0
        %391 = vmatpush2.msra.mxu0 0.0
        %392 = vmatprep.subr.mxu0 0.0
        %393 = vmatpush2.msra.mxu0 0.0
        %394 = vmatprep.subr.mxu0 0.0
        %395 = vmatpush2.msra.mxu0 0.0
        %396 = vmatprep.subr.mxu0 0.0
        %397 = vmatpush2.msra.mxu0 0.0
        %398 = vmatprep.subr.mxu0 0.0
        %399 = vmatpush2.msra.mxu0 0.0
        %400 = vmatprep.subr.mxu0 0.0
        %401 = vmatpush2.msra.mxu0 0.0
        %402 = vmatprep.subr.mxu0 0.0
        %403 = vmatpush2.msra.mxu0 0.0
        %404 = vmatprep.subr.mxu0 0.0
        %405 = vmatpush2.msra.mxu0 0.0
        %406 = vmatprep.subr.mxu0 0.0
        %407 = vmatpush2.msra.mxu0 0.0
        %408 = vmatprep.subr.mxu0 0.0
        %409 = vmatpush2.msra.mxu0 0.0
        %410 = vmatprep.subr.mxu0 0.0
        %411 = vmatpush2.msra.mxu0 0.0
        %412 = vmatprep.subr.mxu0 0.0
        %413 = vmatpush2.msra.mxu0 0.0
        %414 = vmatprep.subr.mxu0 0.0
        %415 = vmatpush2.msra.mxu0 0.0
        %416 = vmatprep.subr.mxu0 0.0
        %417 = vmatpush2.msra.mxu0 0.0
        %418 = vmatprep.mubr.f32.mxu0 0.0
        %419 = vmatmul.mubr.f32.gmra.mxu0 %v260
        %v420 = vpop.f32.mrf.mxu0
        %v421 = vadd.f32 %v337, %v420
        %v422 = vpop.f32.mrf.mxu0
        %v423 = vadd.f32 %v341, %v422
        %424 = vmatprep.mubr.f32.mxu0 0.0
        %425 = vmatmul.mubr.f32.gmra.mxu0 %v261
        %v426 = vpop.f32.mrf.mxu0
        %v427 = vadd.f32 %v337, %v426
        %v428 = vpop.f32.mrf.mxu0
        %v429 = vadd.f32 %v341, %v428
        %430 = vmatprep.mubr.f32.mxu0 0.0
        %431 = vmatmul.mubr.f32.gmra.mxu0 %v262
        %v432 = vpop.f32.mrf.mxu0
        %v433 = vadd.f32 %v337, %v432
        %v434 = vpop.f32.mrf.mxu0
        %v435 = vadd.f32 %v341, %v434
        %436 = vmatprep.mubr.f32.mxu0 0.0
        %437 = vmatmul.mubr.f32.gmra.mxu0 %v263
        %v438 = vpop.f32.mrf.mxu0
        %v439 = vadd.f32 %v337, %v438
        %v440 = vpop.f32.mrf.mxu0
        %v441 = vadd.f32 %v341, %v440
        %442 = vmatprep.mubr.f32.mxu0 0.0
        %443 = vmatmul.mubr.f32.gmra.mxu0 %v264
        %v444 = vpop.f32.mrf.mxu0
        %v445 = vadd.f32 %v337, %v444
        %v446 = vpop.f32.mrf.mxu0
        %v447 = vadd.f32 %v341, %v446
        %448 = vmatprep.mubr.f32.mxu0 0.0
        %449 = vmatmul.mubr.f32.gmra.mxu0 %v265
        %v450 = vpop.f32.mrf.mxu0
        %v451 = vadd.f32 %v337, %v450
        %v452 = vpop.f32.mrf.mxu0
        %v453 = vadd.f32 %v341, %v452
        %454 = vmatprep.mubr.f32.mxu0 0.0
        %455 = vmatmul.mubr.f32.gmra.mxu0 %v266
        %v456 = vpop.f32.mrf.mxu0
        %v457 = vadd.f32 %v337, %v456
        %v458 = vpop.f32.mrf.mxu0
        %v459 = vadd.f32 %v341, %v458
        %460 = vmatprep.mubr.f32.mxu0 0.0
        %461 = vmatmul.mubr.f32.gmra.mxu0 %v267
        %v462 = vpop.f32.mrf.mxu0
        %v463 = vadd.f32 %v337, %v462
        %v464 = vpop.f32.mrf.mxu0
        %v465 = vadd.f32 %v341, %v464
        %466 = vdwg.mxu0
        %467 = vmatprep.subr.mxu0 %v331
        %468 = vmatpush1.msra.mxu0 %v330
        %469 = vmatprep.subr.mxu0 %v327
        %470 = vmatpush1.msra.mxu0 %v326
        %471 = vmatprep.subr.mxu0 %v323
        %472 = vmatpush1.msra.mxu0 %v322
        %473 = vmatprep.subr.mxu0 %v319
        %474 = vmatpush1.msra.mxu0 %v318
        %475 = vmatprep.subr.mxu0 %v315
        %476 = vmatpush1.msra.mxu0 %v314
        %477 = vmatprep.subr.mxu0 %v311
        %478 = vmatpush1.msra.mxu0 %v310
        %479 = vmatprep.subr.mxu0 %v307
        %480 = vmatpush1.msra.mxu0 %v306
        %481 = vmatprep.subr.mxu0 %v303
        %482 = vmatpush1.msra.mxu0 %v302
        %483 = vmatprep.subr.mxu0 %v299
        %484 = vmatpush1.msra.mxu0 %v298
        %485 = vmatprep.subr.mxu0 %v295
        %486 = vmatpush1.msra.mxu0 %v294
        %487 = vmatprep.subr.mxu0 %v291
        %488 = vmatpush1.msra.mxu0 %v290
        %489 = vmatprep.subr.mxu0 %v287
        %490 = vmatpush1.msra.mxu0 %v286
        %491 = vmatprep.subr.mxu0 %v283
        %492 = vmatpush1.msra.mxu0 %v282
        %493 = vmatprep.subr.mxu0 %v279
        %494 = vmatpush1.msra.mxu0 %v278
        %495 = vmatprep.subr.mxu0 %v275
        %496 = vmatpush1.msra.mxu0 %v274
        %497 = vmatprep.subr.mxu0 %v271
        %498 = vmatpush1.msra.mxu0 %v270
        %499 = vmatprep.subr.mxu0 0.0
        %500 = vmatpush2.msra.mxu0 0.0
        %501 = vmatprep.subr.mxu0 0.0
        %502 = vmatpush2.msra.mxu0 0.0
        %503 = vmatprep.subr.mxu0 0.0
        %504 = vmatpush2.msra.mxu0 0.0
        %505 = vmatprep.subr.mxu0 0.0
        %506 = vmatpush2.msra.mxu0 0.0
        %507 = vmatprep.subr.mxu0 0.0
        %508 = vmatpush2.msra.mxu0 0.0
        %509 = vmatprep.subr.mxu0 0.0
        %510 = vmatpush2.msra.mxu0 0.0
        %511 = vmatprep.subr.mxu0 0.0
        %512 = vmatpush2.msra.mxu0 0.0
        %513 = vmatprep.subr.mxu0 0.0
        %514 = vmatpush2.msra.mxu0 0.0
        %515 = vmatprep.subr.mxu0 0.0
        %516 = vmatpush2.msra.mxu0 0.0
        %517 = vmatprep.subr.mxu0 0.0
        %518 = vmatpush2.msra.mxu0 0.0
        %519 = vmatprep.subr.mxu0 0.0
        %520 = vmatpush2.msra.mxu0 0.0
        %521 = vmatprep.subr.mxu0 0.0
        %522 = vmatpush2.msra.mxu0 0.0
        %523 = vmatprep.subr.mxu0 0.0
        %524 = vmatpush2.msra.mxu0 0.0
        %525 = vmatprep.subr.mxu0 0.0
        %526 = vmatpush2.msra.mxu0 0.0
        %527 = vmatprep.subr.mxu0 0.0
        %528 = vmatpush2.msra.mxu0 0.0
        %529 = vmatprep.subr.mxu0 0.0
        %530 = vmatpush2.msra.mxu0 0.0
        %531 = vmatprep.mubr.f32.mxu0 0.0
        %532 = vmatmul.mubr.f32.gmra.mxu0 %v260
        %v533 = vpop.f32.mrf.mxu0
        %v534 = vadd.f32 %v345, %v533
        %v535 = vpop.f32.mrf.mxu0
        %v536 = vadd.f32 %v349, %v535
        %537 = vmatprep.mubr.f32.mxu0 0.0
        %538 = vmatmul.mubr.f32.gmra.mxu0 %v261
        %v539 = vpop.f32.mrf.mxu0
        %v540 = vadd.f32 %v345, %v539
        %v541 = vpop.f32.mrf.mxu0
        %v542 = vadd.f32 %v349, %v541
        %543 = vmatprep.mubr.f32.mxu0 0.0
        %544 = vmatmul.mubr.f32.gmra.mxu0 %v262
        %v545 = vpop.f32.mrf.mxu0
        %v546 = vadd.f32 %v345, %v545
        %v547 = vpop.f32.mrf.mxu0
        %v548 = vadd.f32 %v349, %v547
        %549 = vmatprep.mubr.f32.mxu0 0.0
        %550 = vmatmul.mubr.f32.gmra.mxu0 %v263
        %v551 = vpop.f32.mrf.mxu0
        %v552 = vadd.f32 %v345, %v551
        %v553 = vpop.f32.mrf.mxu0
        %v554 = vadd.f32 %v349, %v553
        %555 = vmatprep.mubr.f32.mxu0 0.0
        %556 = vmatmul.mubr.f32.gmra.mxu0 %v264
        %v557 = vpop.f32.mrf.mxu0
        %v558 = vadd.f32 %v345, %v557
        %v559 = vpop.f32.mrf.mxu0
        %v560 = vadd.f32 %v349, %v559
        %561 = vmatprep.mubr.f32.mxu0 0.0
        %562 = vmatmul.mubr.f32.gmra.mxu0 %v265
        %v563 = vpop.f32.mrf.mxu0
        %v564 = vadd.f32 %v345, %v563
        %v565 = vpop.f32.mrf.mxu0
        %v566 = vadd.f32 %v349, %v565
        %567 = vmatprep.mubr.f32.mxu0 0.0
        %568 = vmatmul.mubr.f32.gmra.mxu0 %v266
        %v569 = vpop.f32.mrf.mxu0
        %v570 = vadd.f32 %v345, %v569
        %v571 = vpop.f32.mrf.mxu0
        %v572 = vadd.f32 %v349, %v571
        %573 = vmatprep.mubr.f32.mxu0 0.0
        %574 = vmatmul.mubr.f32.gmra.mxu0 %v267
        %v575 = vpop.f32.mrf.mxu0
        %v576 = vadd.f32 %v345, %v575
        %v577 = vpop.f32.mrf.mxu0
        %v578 = vadd.f32 %v349, %v577
        %579 = vdwg.mxu0
        %580 = vst [vmem:[#allocation6] sm:$0xff] %v421
        %581 = vst [vmem:[#allocation6 + $0x8] sm:$0xff] %v423
        %582 = vst [vmem:[#allocation6 + $0x10] sm:$0xff] %v534
        %583 = vst [vmem:[#allocation6 + $0x18] sm:$0xff] %v536
        %584 = vst [vmem:[#allocation6 + $0x20] sm:$0xff] %v427
        %585 = vst [vmem:[#allocation6 + $0x28] sm:$0xff] %v429
        %586 = vst [vmem:[#allocation6 + $0x30] sm:$0xff] %v540
        %587 = vst [vmem:[#allocation6 + $0x38] sm:$0xff] %v542
        %588 = vst [vmem:[#allocation6 + $0x40] sm:$0xff] %v433
        %589 = vst [vmem:[#allocation6 + $0x48] sm:$0xff] %v435
        %590 = vst [vmem:[#allocation6 + $0x50] sm:$0xff] %v546
        %591 = vst [vmem:[#allocation6 + $0x58] sm:$0xff] %v548
        %592 = vst [vmem:[#allocation6 + $0x60] sm:$0xff] %v439
        %593 = vst [vmem:[#allocation6 + $0x68] sm:$0xff] %v441
        %594 = vst [vmem:[#allocation6 + $0x70] sm:$0xff] %v552
        %595 = vst [vmem:[#allocation6 + $0x78] sm:$0xff] %v554
        %596 = vst [vmem:[#allocation6 + $0x80] sm:$0xff] %v445
        %597 = vst [vmem:[#allocation6 + $0x88] sm:$0xff] %v447
        %598 = vst [vmem:[#allocation6 + $0x90] sm:$0xff] %v558
        %599 = vst [vmem:[#allocation6 + $0x98] sm:$0xff] %v560
        %600 = vst [vmem:[#allocation6 + $0xa0] sm:$0xff] %v451
        %601 = vst [vmem:[#allocation6 + $0xa8] sm:$0xff] %v453
        %602 = vst [vmem:[#allocation6 + $0xb0] sm:$0xff] %v564
        %603 = vst [vmem:[#allocation6 + $0xb8] sm:$0xff] %v566
        %604 = vst [vmem:[#allocation6 + $0xc0] sm:$0xff] %v457
        %605 = vst [vmem:[#allocation6 + $0xc8] sm:$0xff] %v459
        %606 = vst [vmem:[#allocation6 + $0xd0] sm:$0xff] %v570
        %607 = vst [vmem:[#allocation6 + $0xd8] sm:$0xff] %v572
        %608 = vst [vmem:[#allocation6 + $0xe0] sm:$0xff] %v463
        %609 = vst [vmem:[#allocation6 + $0xe8] sm:$0xff] %v465
        %610 = vst [vmem:[#allocation6 + $0xf0] sm:$0xff] %v576
        %611 = vst [vmem:[#allocation6 + $0xf8] sm:$0xff] %v578
        %v612 = vld [vmem:[#allocation6] sm:$0xff]
        %v613 = vld [vmem:[#allocation6 + $0x8] sm:$0xff]
        %v614 = vld [vmem:[#allocation6 + $0x10] sm:$0xff]
        %v615 = vld [vmem:[#allocation6 + $0x18] sm:$0xff]
        %v616 = vld [vmem:[#allocation7] sm:$0xff]
        %v617 = vld [vmem:[#allocation4] sm:$0xff]
        %v618 = vld [vmem:[#allocation4 + $0x8] sm:$0xff]
        %v619 = vld [vmem:[#allocation4 + $0x10] sm:$0xff]
        %v620 = vld [vmem:[#allocation4 + $0x18] sm:$0xff]
        %v621 = vld [vmem:[#allocation4 + $0x20] sm:$0xff]
        %v622 = vld [vmem:[#allocation4 + $0x28] sm:$0xff]
        %v623 = vld [vmem:[#allocation4 + $0x30] sm:$0xff]
        %v624 = vld [vmem:[#allocation4 + $0x38] sm:$0xff]
        %v625 = vld [vmem:[#allocation4 + $0x40] sm:$0xff]
        %v626 = vld [vmem:[#allocation4 + $0x48] sm:$0xff]
        %v627 = vld [vmem:[#allocation4 + $0x50] sm:$0xff]
        %v628 = vld [vmem:[#allocation4 + $0x58] sm:$0xff]
        %v629 = vld [vmem:[#allocation4 + $0x60] sm:$0xff]
        %v630 = vld [vmem:[#allocation4 + $0x68] sm:$0xff]
        %v631 = vld [vmem:[#allocation4 + $0x70] sm:$0xff]
        %v632 = vld [vmem:[#allocation4 + $0x78] sm:$0xff]
        %v633 = vld [vmem:[#allocation4 + $0x80] sm:$0xff]
        %v634 = vld [vmem:[#allocation4 + $0x88] sm:$0xff]
        %v635 = vld [vmem:[#allocation4 + $0x90] sm:$0xff]
        %v636 = vld [vmem:[#allocation4 + $0x98] sm:$0xff]
        %v637 = vld [vmem:[#allocation4 + $0xa0] sm:$0xff]
        %v638 = vld [vmem:[#allocation4 + $0xa8] sm:$0xff]
        %v639 = vld [vmem:[#allocation4 + $0xb0] sm:$0xff]
        %v640 = vld [vmem:[#allocation4 + $0xb8] sm:$0xff]
        %v641 = vld [vmem:[#allocation4 + $0xc0] sm:$0xff]
        %v642 = vld [vmem:[#allocation4 + $0xc8] sm:$0xff]
        %v643 = vld [vmem:[#allocation4 + $0xd0] sm:$0xff]
        %v644 = vld [vmem:[#allocation4 + $0xd8] sm:$0xff]
        %v645 = vld [vmem:[#allocation4 + $0xe0] sm:$0xff]
        %v646 = vld [vmem:[#allocation4 + $0xe8] sm:$0xff]
        %v647 = vld [vmem:[#allocation4 + $0xf0] sm:$0xff]
        %v648 = vld [vmem:[#allocation4 + $0xf8] sm:$0xff]
        %v649 = vld [vmem:[#allocation4 + $0x100] sm:$0xff]
        %v650 = vld [vmem:[#allocation4 + $0x108] sm:$0xff]
        %v651 = vld [vmem:[#allocation4 + $0x110] sm:$0xff]
        %v652 = vld [vmem:[#allocation4 + $0x118] sm:$0xff]
        %v653 = vld [vmem:[#allocation4 + $0x120] sm:$0xff]
        %v654 = vld [vmem:[#allocation4 + $0x128] sm:$0xff]
        %v655 = vld [vmem:[#allocation4 + $0x130] sm:$0xff]
        %v656 = vld [vmem:[#allocation4 + $0x138] sm:$0xff]
        %v657 = vld [vmem:[#allocation4 + $0x140] sm:$0xff]
        %v658 = vld [vmem:[#allocation4 + $0x148] sm:$0xff]
        %v659 = vld [vmem:[#allocation4 + $0x150] sm:$0xff]
        %v660 = vld [vmem:[#allocation4 + $0x158] sm:$0xff]
        %v661 = vld [vmem:[#allocation4 + $0x160] sm:$0xff]
        %v662 = vld [vmem:[#allocation4 + $0x168] sm:$0xff]
        %v663 = vld [vmem:[#allocation4 + $0x170] sm:$0xff]
        %v664 = vld [vmem:[#allocation4 + $0x178] sm:$0xff]
        %v665 = vld [vmem:[#allocation4 + $0x180] sm:$0xff]
        %v666 = vld [vmem:[#allocation4 + $0x188] sm:$0xff]
        %v667 = vld [vmem:[#allocation4 + $0x190] sm:$0xff]
        %v668 = vld [vmem:[#allocation4 + $0x198] sm:$0xff]
        %v669 = vld [vmem:[#allocation4 + $0x1a0] sm:$0xff]
        %v670 = vld [vmem:[#allocation4 + $0x1a8] sm:$0xff]
        %v671 = vld [vmem:[#allocation4 + $0x1b0] sm:$0xff]
        %v672 = vld [vmem:[#allocation4 + $0x1b8] sm:$0xff]
        %v673 = vld [vmem:[#allocation4 + $0x1c0] sm:$0xff]
        %v674 = vld [vmem:[#allocation4 + $0x1c8] sm:$0xff]
        %v675 = vld [vmem:[#allocation4 + $0x1d0] sm:$0xff]
        %v676 = vld [vmem:[#allocation4 + $0x1d8] sm:$0xff]
        %v677 = vld [vmem:[#allocation4 + $0x1e0] sm:$0xff]
        %v678 = vld [vmem:[#allocation4 + $0x1e8] sm:$0xff]
        %v679 = vld [vmem:[#allocation4 + $0x1f0] sm:$0xff]
        %v680 = vld [vmem:[#allocation4 + $0x1f8] sm:$0xff]
        %681 = vmatprep.subr.mxu0 %v678
        %682 = vmatpush1.msra.mxu0 %v677
        %683 = vmatprep.subr.mxu0 %v674
        %684 = vmatpush1.msra.mxu0 %v673
        %685 = vmatprep.subr.mxu0 %v670
        %686 = vmatpush1.msra.mxu0 %v669
        %687 = vmatprep.subr.mxu0 %v666
        %688 = vmatpush1.msra.mxu0 %v665
        %689 = vmatprep.subr.mxu0 %v662
        %690 = vmatpush1.msra.mxu0 %v661
        %691 = vmatprep.subr.mxu0 %v658
        %692 = vmatpush1.msra.mxu0 %v657
        %693 = vmatprep.subr.mxu0 %v654
        %694 = vmatpush1.msra.mxu0 %v653
        %695 = vmatprep.subr.mxu0 %v650
        %696 = vmatpush1.msra.mxu0 %v649
        %697 = vmatprep.subr.mxu0 %v646
        %698 = vmatpush1.msra.mxu0 %v645
        %699 = vmatprep.subr.mxu0 %v642
        %700 = vmatpush1.msra.mxu0 %v641
        %701 = vmatprep.subr.mxu0 %v638
        %702 = vmatpush1.msra.mxu0 %v637
        %703 = vmatprep.subr.mxu0 %v634
        %704 = vmatpush1.msra.mxu0 %v633
        %705 = vmatprep.subr.mxu0 %v630
        %706 = vmatpush1.msra.mxu0 %v629
        %707 = vmatprep.subr.mxu0 %v626
        %708 = vmatpush1.msra.mxu0 %v625
        %709 = vmatprep.subr.mxu0 %v622
        %710 = vmatpush1.msra.mxu0 %v621
        %711 = vmatprep.subr.mxu0 %v618
        %712 = vmatpush1.msra.mxu0 %v617
        %713 = vmatprep.subr.mxu0 0.0
        %714 = vmatpush2.msra.mxu0 0.0
        %715 = vmatprep.subr.mxu0 0.0
        %716 = vmatpush2.msra.mxu0 0.0
        %717 = vmatprep.subr.mxu0 0.0
        %718 = vmatpush2.msra.mxu0 0.0
        %719 = vmatprep.subr.mxu0 0.0
        %720 = vmatpush2.msra.mxu0 0.0
        %721 = vmatprep.subr.mxu0 0.0
        %722 = vmatpush2.msra.mxu0 0.0
        %723 = vmatprep.subr.mxu0 0.0
        %724 = vmatpush2.msra.mxu0 0.0
        %725 = vmatprep.subr.mxu0 0.0
        %726 = vmatpush2.msra.mxu0 0.0
        %727 = vmatprep.subr.mxu0 0.0
        %728 = vmatpush2.msra.mxu0 0.0
        %729 = vmatprep.subr.mxu0 0.0
        %730 = vmatpush2.msra.mxu0 0.0
        %731 = vmatprep.subr.mxu0 0.0
        %732 = vmatpush2.msra.mxu0 0.0
        %733 = vmatprep.subr.mxu0 0.0
        %734 = vmatpush2.msra.mxu0 0.0
        %735 = vmatprep.subr.mxu0 0.0
        %736 = vmatpush2.msra.mxu0 0.0
        %737 = vmatprep.subr.mxu0 0.0
        %738 = vmatpush2.msra.mxu0 0.0
        %739 = vmatprep.subr.mxu0 0.0
        %740 = vmatpush2.msra.mxu0 0.0
        %741 = vmatprep.subr.mxu0 0.0
        %742 = vmatpush2.msra.mxu0 0.0
        %743 = vmatprep.subr.mxu0 0.0
        %744 = vmatpush2.msra.mxu0 0.0
        %745 = vmatprep.mubr.f32.mxu0 0.0
        %746 = vmatmul.mubr.f32.gmra.mxu0 %v616
        %v747 = vpop.f32.mrf.mxu0
        %v748 = vadd.f32 0.0, %v747
        %v749 = vpop.f32.mrf.mxu0
        %v750 = vadd.f32 0.0, %v749
        %751 = vdwg.mxu0
        %752 = vmatprep.subr.mxu0 %v680
        %753 = vmatpush1.msra.mxu0 %v679
        %754 = vmatprep.subr.mxu0 %v676
        %755 = vmatpush1.msra.mxu0 %v675
        %756 = vmatprep.subr.mxu0 %v672
        %757 = vmatpush1.msra.mxu0 %v671
        %758 = vmatprep.subr.mxu0 %v668
        %759 = vmatpush1.msra.mxu0 %v667
        %760 = vmatprep.subr.mxu0 %v664
        %761 = vmatpush1.msra.mxu0 %v663
        %762 = vmatprep.subr.mxu0 %v660
        %763 = vmatpush1.msra.mxu0 %v659
        %764 = vmatprep.subr.mxu0 %v656
        %765 = vmatpush1.msra.mxu0 %v655
        %766 = vmatprep.subr.mxu0 %v652
        %767 = vmatpush1.msra.mxu0 %v651
        %768 = vmatprep.subr.mxu0 %v648
        %769 = vmatpush1.msra.mxu0 %v647
        %770 = vmatprep.subr.mxu0 %v644
        %771 = vmatpush1.msra.mxu0 %v643
        %772 = vmatprep.subr.mxu0 %v640
        %773 = vmatpush1.msra.mxu0 %v639
        %774 = vmatprep.subr.mxu0 %v636
        %775 = vmatpush1.msra.mxu0 %v635
        %776 = vmatprep.subr.mxu0 %v632
        %777 = vmatpush1.msra.mxu0 %v631
        %778 = vmatprep.subr.mxu0 %v628
        %779 = vmatpush1.msra.mxu0 %v627
        %780 = vmatprep.subr.mxu0 %v624
        %781 = vmatpush1.msra.mxu0 %v623
        %782 = vmatprep.subr.mxu0 %v620
        %783 = vmatpush1.msra.mxu0 %v619
        %784 = vmatprep.subr.mxu0 0.0
        %785 = vmatpush2.msra.mxu0 0.0
        %786 = vmatprep.subr.mxu0 0.0
        %787 = vmatpush2.msra.mxu0 0.0
        %788 = vmatprep.subr.mxu0 0.0
        %789 = vmatpush2.msra.mxu0 0.0
        %790 = vmatprep.subr.mxu0 0.0
        %791 = vmatpush2.msra.mxu0 0.0
        %792 = vmatprep.subr.mxu0 0.0
        %793 = vmatpush2.msra.mxu0 0.0
        %794 = vmatprep.subr.mxu0 0.0
        %795 = vmatpush2.msra.mxu0 0.0
        %796 = vmatprep.subr.mxu0 0.0
        %797 = vmatpush2.msra.mxu0 0.0
        %798 = vmatprep.subr.mxu0 0.0
        %799 = vmatpush2.msra.mxu0 0.0
        %800 = vmatprep.subr.mxu0 0.0
        %801 = vmatpush2.msra.mxu0 0.0
        %802 = vmatprep.subr.mxu0 0.0
        %803 = vmatpush2.msra.mxu0 0.0
        %804 = vmatprep.subr.mxu0 0.0
        %805 = vmatpush2.msra.mxu0 0.0
        %806 = vmatprep.subr.mxu0 0.0
        %807 = vmatpush2.msra.mxu0 0.0
        %808 = vmatprep.subr.mxu0 0.0
        %809 = vmatpush2.msra.mxu0 0.0
        %810 = vmatprep.subr.mxu0 0.0
        %811 = vmatpush2.msra.mxu0 0.0
        %812 = vmatprep.subr.mxu0 0.0
        %813 = vmatpush2.msra.mxu0 0.0
        %814 = vmatprep.subr.mxu0 0.0
        %815 = vmatpush2.msra.mxu0 0.0
        %816 = vmatprep.mubr.f32.mxu0 0.0
        %817 = vmatmul.mubr.f32.gmra.mxu0 %v616
        %v818 = vpop.f32.mrf.mxu0
        %v819 = vadd.f32 0.0, %v818
        %v820 = vpop.f32.mrf.mxu0
        %v821 = vadd.f32 0.0, %v820
        %822 = vdwg.mxu0
        %v823 = vadd.f32 %v612, %v748
        %v824 = vadd.f32 %v613, %v750
        %v825 = vadd.f32 %v614, %v819
        %v826 = vadd.f32 %v615, %v821
        %v827 = vld [vmem:[#allocation8] sm:$0xff]
        %v828 = vxor.u32 %v823, 2147483648
        %v829 = vmul.f32 %v828, 1.442695
        %v830 = vpow.pop %v829
        %v831 = vadd.f32 %v830, 1.0
        %v832 = vrcp.pop %v831
        %v833 = vmul.f32 1.0, %v832
        %v834 = vxor.u32 %v824, 2147483648
        %v835 = vmul.f32 %v834, 1.442695
        %v836 = vpow.pop %v835
        %v837 = vadd.f32 %v836, 1.0
        %v838 = vrcp.pop %v837
        %v839 = vmul.f32 1.0, %v838
        %v840 = vtanh.pop %v825
        %v841 = vxor.u32 %v826, 2147483648
        %v842 = vmul.f32 %v841, 1.442695
        %v843 = vpow.pop %v842
        %v844 = vadd.f32 %v843, 1.0
        %v845 = vrcp.pop %v844
        %v846 = vmul.f32 1.0, %v845
        %v847 = vmul.f32 %v839, %v827
        %v848 = vmul.f32 %v833, %v840
        %v849 = vadd.f32 %v847, %v848
        %v850 = vtanh.pop %v849
        %v851 = vmul.f32 %v846, %v850
        %852 = vst [vmem:[#allocation7] sm:$0xff] %v851
        %853 = vst [vmem:[#allocation8] sm:$0xff] %v849
        %v854 = vld [vmem:[#allocation3] sm:$0xff]
        %v855 = vld [vmem:[#allocation3 + $0x8] sm:$0xff]
        %v856 = vld [vmem:[#allocation3 + $0x10] sm:$0xff]
        %v857 = vld [vmem:[#allocation3 + $0x18] sm:$0xff]
        %v858 = vld [vmem:[#allocation3 + $0x20] sm:$0xff]
        %v859 = vld [vmem:[#allocation3 + $0x28] sm:$0xff]
        %v860 = vld [vmem:[#allocation3 + $0x30] sm:$0xff]
        %v861 = vld [vmem:[#allocation3 + $0x38] sm:$0xff]
        %v862 = vld [vmem:[#allocation3 + $0x40] sm:$0xff]
        %v863 = vld [vmem:[#allocation3 + $0x48] sm:$0xff]
        %v864 = vld [vmem:[#allocation3 + $0x50] sm:$0xff]
        %v865 = vld [vmem:[#allocation3 + $0x58] sm:$0xff]
        %v866 = vld [vmem:[#allocation3 + $0x60] sm:$0xff]
        %v867 = vld [vmem:[#allocation3 + $0x68] sm:$0xff]
        %v868 = vld [vmem:[#allocation3 + $0x70] sm:$0xff]
        %v869 = vld [vmem:[#allocation3 + $0x78] sm:$0xff]
        %v870 = vld [vmem:[#allocation3 + $0x80] sm:$0xff]
        %v871 = vld [vmem:[#allocation3 + $0x88] sm:$0xff]
        %v872 = vld [vmem:[#allocation3 + $0x90] sm:$0xff]
        %v873 = vld [vmem:[#allocation3 + $0x98] sm:$0xff]
        %v874 = vld [vmem:[#allocation3 + $0xa0] sm:$0xff]
        %v875 = vld [vmem:[#allocation3 + $0xa8] sm:$0xff]
        %v876 = vld [vmem:[#allocation3 + $0xb0] sm:$0xff]
        %v877 = vld [vmem:[#allocation3 + $0xb8] sm:$0xff]
        %v878 = vld [vmem:[#allocation3 + $0xc0] sm:$0xff]
        %v879 = vld [vmem:[#allocation3 + $0xc8] sm:$0xff]
        %v880 = vld [vmem:[#allocation3 + $0xd0] sm:$0xff]
        %v881 = vld [vmem:[#allocation3 + $0xd8] sm:$0xff]
        %v882 = vld [vmem:[#allocation3 + $0xe0] sm:$0xff]
        %v883 = vld [vmem:[#allocation3 + $0xe8] sm:$0xff]
        %v884 = vld [vmem:[#allocation3 + $0xf0] sm:$0xff]
        %v885 = vld [vmem:[#allocation3 + $0xf8] sm:$0xff]
        %v886 = vld [vmem:[#allocation3 + $0x100] sm:$0xff]
        %v887 = vld [vmem:[#allocation3 + $0x108] sm:$0xff]
        %v888 = vld [vmem:[#allocation3 + $0x110] sm:$0xff]
        %v889 = vld [vmem:[#allocation3 + $0x118] sm:$0xff]
        %v890 = vld [vmem:[#allocation3 + $0x120] sm:$0xff]
        %v891 = vld [vmem:[#allocation3 + $0x128] sm:$0xff]
        %v892 = vld [vmem:[#allocation3 + $0x130] sm:$0xff]
        %v893 = vld [vmem:[#allocation3 + $0x138] sm:$0xff]
        %v894 = vld [vmem:[#allocation3 + $0x140] sm:$0xff]
        %v895 = vld [vmem:[#allocation3 + $0x148] sm:$0xff]
        %v896 = vld [vmem:[#allocation3 + $0x150] sm:$0xff]
        %v897 = vld [vmem:[#allocation3 + $0x158] sm:$0xff]
        %v898 = vld [vmem:[#allocation3 + $0x160] sm:$0xff]
        %v899 = vld [vmem:[#allocation3 + $0x168] sm:$0xff]
        %v900 = vld [vmem:[#allocation3 + $0x170] sm:$0xff]
        %v901 = vld [vmem:[#allocation3 + $0x178] sm:$0xff]
        %v902 = vld [vmem:[#allocation3 + $0x180] sm:$0xff]
        %v903 = vld [vmem:[#allocation3 + $0x188] sm:$0xff]
        %v904 = vld [vmem:[#allocation3 + $0x190] sm:$0xff]
        %v905 = vld [vmem:[#allocation3 + $0x198] sm:$0xff]
        %v906 = vld [vmem:[#allocation3 + $0x1a0] sm:$0xff]
        %v907 = vld [vmem:[#allocation3 + $0x1a8] sm:$0xff]
        %v908 = vld [vmem:[#allocation3 + $0x1b0] sm:$0xff]
        %v909 = vld [vmem:[#allocation3 + $0x1b8] sm:$0xff]
        %v910 = vld [vmem:[#allocation3 + $0x1c0] sm:$0xff]
        %v911 = vld [vmem:[#allocation3 + $0x1c8] sm:$0xff]
        %v912 = vld [vmem:[#allocation3 + $0x1d0] sm:$0xff]
        %v913 = vld [vmem:[#allocation3 + $0x1d8] sm:$0xff]
        %v914 = vld [vmem:[#allocation3 + $0x1e0] sm:$0xff]
        %v915 = vld [vmem:[#allocation3 + $0x1e8] sm:$0xff]
        %v916 = vld [vmem:[#allocation3 + $0x1f0] sm:$0xff]
        %v917 = vld [vmem:[#allocation3 + $0x1f8] sm:$0xff]
        %s918 = scalar_lea.vmem [#allocation7], 8
        %v919 = vld [vmem:[%s918] sm:$0xff]
        %v920 = vld [vmem:[#allocation5] sm:$0xff]
        %v921 = vld [vmem:[#allocation5 + $0x8] sm:$0xff]
        %v922 = vld [vmem:[#allocation5 + $0x10] sm:$0xff]
        %v923 = vld [vmem:[#allocation5 + $0x18] sm:$0xff]
        %v924 = vld [vmem:[#allocation5 + $0x20] sm:$0xff]
        %v925 = vld [vmem:[#allocation5 + $0x28] sm:$0xff]
        %v926 = vld [vmem:[#allocation5 + $0x30] sm:$0xff]
        %v927 = vld [vmem:[#allocation5 + $0x38] sm:$0xff]
        %v928 = vld [vmem:[#allocation5 + $0x40] sm:$0xff]
        %v929 = vld [vmem:[#allocation5 + $0x48] sm:$0xff]
        %v930 = vld [vmem:[#allocation5 + $0x50] sm:$0xff]
        %v931 = vld [vmem:[#allocation5 + $0x58] sm:$0xff]
        %v932 = vld [vmem:[#allocation5 + $0x60] sm:$0xff]
        %v933 = vld [vmem:[#allocation5 + $0x68] sm:$0xff]
        %v934 = vld [vmem:[#allocation5 + $0x70] sm:$0xff]
        %v935 = vld [vmem:[#allocation5 + $0x78] sm:$0xff]
        %v936 = vld [vmem:[#allocation5 + $0x80] sm:$0xff]
        %v937 = vld [vmem:[#allocation5 + $0x88] sm:$0xff]
        %v938 = vld [vmem:[#allocation5 + $0x90] sm:$0xff]
        %v939 = vld [vmem:[#allocation5 + $0x98] sm:$0xff]
        %v940 = vld [vmem:[#allocation5 + $0xa0] sm:$0xff]
        %v941 = vld [vmem:[#allocation5 + $0xa8] sm:$0xff]
        %v942 = vld [vmem:[#allocation5 + $0xb0] sm:$0xff]
        %v943 = vld [vmem:[#allocation5 + $0xb8] sm:$0xff]
        %v944 = vld [vmem:[#allocation5 + $0xc0] sm:$0xff]
        %v945 = vld [vmem:[#allocation5 + $0xc8] sm:$0xff]
        %v946 = vld [vmem:[#allocation5 + $0xd0] sm:$0xff]
        %v947 = vld [vmem:[#allocation5 + $0xd8] sm:$0xff]
        %v948 = vld [vmem:[#allocation5 + $0xe0] sm:$0xff]
        %v949 = vld [vmem:[#allocation5 + $0xe8] sm:$0xff]
        %v950 = vld [vmem:[#allocation5 + $0xf0] sm:$0xff]
        %v951 = vld [vmem:[#allocation5 + $0xf8] sm:$0xff]
        %v952 = vld [vmem:[#allocation5 + $0x100] sm:$0xff]
        %v953 = vld [vmem:[#allocation5 + $0x108] sm:$0xff]
        %v954 = vld [vmem:[#allocation5 + $0x110] sm:$0xff]
        %v955 = vld [vmem:[#allocation5 + $0x118] sm:$0xff]
        %v956 = vld [vmem:[#allocation5 + $0x120] sm:$0xff]
        %v957 = vld [vmem:[#allocation5 + $0x128] sm:$0xff]
        %v958 = vld [vmem:[#allocation5 + $0x130] sm:$0xff]
        %v959 = vld [vmem:[#allocation5 + $0x138] sm:$0xff]
        %v960 = vld [vmem:[#allocation5 + $0x140] sm:$0xff]
        %v961 = vld [vmem:[#allocation5 + $0x148] sm:$0xff]
        %v962 = vld [vmem:[#allocation5 + $0x150] sm:$0xff]
        %v963 = vld [vmem:[#allocation5 + $0x158] sm:$0xff]
        %v964 = vld [vmem:[#allocation5 + $0x160] sm:$0xff]
        %v965 = vld [vmem:[#allocation5 + $0x168] sm:$0xff]
        %v966 = vld [vmem:[#allocation5 + $0x170] sm:$0xff]
        %v967 = vld [vmem:[#allocation5 + $0x178] sm:$0xff]
        %v968 = vld [vmem:[#allocation5 + $0x180] sm:$0xff]
        %v969 = vld [vmem:[#allocation5 + $0x188] sm:$0xff]
        %v970 = vld [vmem:[#allocation5 + $0x190] sm:$0xff]
        %v971 = vld [vmem:[#allocation5 + $0x198] sm:$0xff]
        %v972 = vld [vmem:[#allocation5 + $0x1a0] sm:$0xff]
        %v973 = vld [vmem:[#allocation5 + $0x1a8] sm:$0xff]
        %v974 = vld [vmem:[#allocation5 + $0x1b0] sm:$0xff]
        %v975 = vld [vmem:[#allocation5 + $0x1b8] sm:$0xff]
        %v976 = vld [vmem:[#allocation5 + $0x1c0] sm:$0xff]
        %v977 = vld [vmem:[#allocation5 + $0x1c8] sm:$0xff]
        %v978 = vld [vmem:[#allocation5 + $0x1d0] sm:$0xff]
        %v979 = vld [vmem:[#allocation5 + $0x1d8] sm:$0xff]
        %v980 = vld [vmem:[#allocation5 + $0x1e0] sm:$0xff]
        %v981 = vld [vmem:[#allocation5 + $0x1e8] sm:$0xff]
        %v982 = vld [vmem:[#allocation5 + $0x1f0] sm:$0xff]
        %v983 = vld [vmem:[#allocation5 + $0x1f8] sm:$0xff]
        %984 = vmatprep.subr.mxu0 %v981
        %985 = vmatpush1.msra.mxu0 %v980
        %986 = vmatprep.subr.mxu0 %v977
        %987 = vmatpush1.msra.mxu0 %v976
        %988 = vmatprep.subr.mxu0 %v973
        %989 = vmatpush1.msra.mxu0 %v972
        %990 = vmatprep.subr.mxu0 %v969
        %991 = vmatpush1.msra.mxu0 %v968
        %992 = vmatprep.subr.mxu0 %v965
        %993 = vmatpush1.msra.mxu0 %v964
        %994 = vmatprep.subr.mxu0 %v961
        %995 = vmatpush1.msra.mxu0 %v960
        %996 = vmatprep.subr.mxu0 %v957
        %997 = vmatpush1.msra.mxu0 %v956
        %998 = vmatprep.subr.mxu0 %v953
        %999 = vmatpush1.msra.mxu0 %v952
        %1000 = vmatprep.subr.mxu0 %v949
        %1001 = vmatpush1.msra.mxu0 %v948
        %1002 = vmatprep.subr.mxu0 %v945
        %1003 = vmatpush1.msra.mxu0 %v944
        %1004 = vmatprep.subr.mxu0 %v941
        %1005 = vmatpush1.msra.mxu0 %v940
        %1006 = vmatprep.subr.mxu0 %v937
        %1007 = vmatpush1.msra.mxu0 %v936
        %1008 = vmatprep.subr.mxu0 %v933
        %1009 = vmatpush1.msra.mxu0 %v932
        %1010 = vmatprep.subr.mxu0 %v929
        %1011 = vmatpush1.msra.mxu0 %v928
        %1012 = vmatprep.subr.mxu0 %v925
        %1013 = vmatpush1.msra.mxu0 %v924
        %1014 = vmatprep.subr.mxu0 %v921
        %1015 = vmatpush1.msra.mxu0 %v920
        %1016 = vmatprep.subr.mxu0 0.0
        %1017 = vmatpush2.msra.mxu0 0.0
        %1018 = vmatprep.subr.mxu0 0.0
        %1019 = vmatpush2.msra.mxu0 0.0
        %1020 = vmatprep.subr.mxu0 0.0
        %1021 = vmatpush2.msra.mxu0 0.0
        %1022 = vmatprep.subr.mxu0 0.0
        %1023 = vmatpush2.msra.mxu0 0.0
        %1024 = vmatprep.subr.mxu0 0.0
        %1025 = vmatpush2.msra.mxu0 0.0
        %1026 = vmatprep.subr.mxu0 0.0
        %1027 = vmatpush2.msra.mxu0 0.0
        %1028 = vmatprep.subr.mxu0 0.0
        %1029 = vmatpush2.msra.mxu0 0.0
        %1030 = vmatprep.subr.mxu0 0.0
        %1031 = vmatpush2.msra.mxu0 0.0
        %1032 = vmatprep.subr.mxu0 0.0
        %1033 = vmatpush2.msra.mxu0 0.0
        %1034 = vmatprep.subr.mxu0 0.0
        %1035 = vmatpush2.msra.mxu0 0.0
        %1036 = vmatprep.subr.mxu0 0.0
        %1037 = vmatpush2.msra.mxu0 0.0
        %1038 = vmatprep.subr.mxu0 0.0
        %1039 = vmatpush2.msra.mxu0 0.0
        %1040 = vmatprep.subr.mxu0 0.0
        %1041 = vmatpush2.msra.mxu0 0.0
        %1042 = vmatprep.subr.mxu0 0.0
        %1043 = vmatpush2.msra.mxu0 0.0
        %1044 = vmatprep.subr.mxu0 0.0
        %1045 = vmatpush2.msra.mxu0 0.0
        %1046 = vmatprep.subr.mxu0 0.0
        %1047 = vmatpush2.msra.mxu0 0.0
        %1048 = vmatprep.mubr.f32.mxu0 0.0
        %1049 = vmatmul.mubr.f32.gmra.mxu0 %v919
        %v1050 = vpop.f32.mrf.mxu0
        %v1051 = vadd.f32 0.0, %v1050
        %v1052 = vpop.f32.mrf.mxu0
        %v1053 = vadd.f32 0.0, %v1052
        %1054 = vdwg.mxu0
        %1055 = vmatprep.subr.mxu0 %v983
        %1056 = vmatpush1.msra.mxu0 %v982
        %1057 = vmatprep.subr.mxu0 %v979
        %1058 = vmatpush1.msra.mxu0 %v978
        %1059 = vmatprep.subr.mxu0 %v975
        %1060 = vmatpush1.msra.mxu0 %v974
        %1061 = vmatprep.subr.mxu0 %v971
        %1062 = vmatpush1.msra.mxu0 %v970
        %1063 = vmatprep.subr.mxu0 %v967
        %1064 = vmatpush1.msra.mxu0 %v966
        %1065 = vmatprep.subr.mxu0 %v963
        %1066 = vmatpush1.msra.mxu0 %v962
        %1067 = vmatprep.subr.mxu0 %v959
        %1068 = vmatpush1.msra.mxu0 %v958
        %1069 = vmatprep.subr.mxu0 %v955
        %1070 = vmatpush1.msra.mxu0 %v954
        %1071 = vmatprep.subr.mxu0 %v951
        %1072 = vmatpush1.msra.mxu0 %v950
        %1073 = vmatprep.subr.mxu0 %v947
        %1074 = vmatpush1.msra.mxu0 %v946
        %1075 = vmatprep.subr.mxu0 %v943
        %1076 = vmatpush1.msra.mxu0 %v942
        %1077 = vmatprep.subr.mxu0 %v939
        %1078 = vmatpush1.msra.mxu0 %v938
        %1079 = vmatprep.subr.mxu0 %v935
        %1080 = vmatpush1.msra.mxu0 %v934
        %1081 = vmatprep.subr.mxu0 %v931
        %1082 = vmatpush1.msra.mxu0 %v930
        %1083 = vmatprep.subr.mxu0 %v927
        %1084 = vmatpush1.msra.mxu0 %v926
        %1085 = vmatprep.subr.mxu0 %v923
        %1086 = vmatpush1.msra.mxu0 %v922
        %1087 = vmatprep.subr.mxu0 0.0
        %1088 = vmatpush2.msra.mxu0 0.0
        %1089 = vmatprep.subr.mxu0 0.0
        %1090 = vmatpush2.msra.mxu0 0.0
        %1091 = vmatprep.subr.mxu0 0.0
        %1092 = vmatpush2.msra.mxu0 0.0
        %1093 = vmatprep.subr.mxu0 0.0
        %1094 = vmatpush2.msra.mxu0 0.0
        %1095 = vmatprep.subr.mxu0 0.0
        %1096 = vmatpush2.msra.mxu0 0.0
        %1097 = vmatprep.subr.mxu0 0.0
        %1098 = vmatpush2.msra.mxu0 0.0
        %1099 = vmatprep.subr.mxu0 0.0
        %1100 = vmatpush2.msra.mxu0 0.0
        %1101 = vmatprep.subr.mxu0 0.0
        %1102 = vmatpush2.msra.mxu0 0.0
        %1103 = vmatprep.subr.mxu0 0.0
        %1104 = vmatpush2.msra.mxu0 0.0
        %1105 = vmatprep.subr.mxu0 0.0
        %1106 = vmatpush2.msra.mxu0 0.0
        %1107 = vmatprep.subr.mxu0 0.0
        %1108 = vmatpush2.msra.mxu0 0.0
        %1109 = vmatprep.subr.mxu0 0.0
        %1110 = vmatpush2.msra.mxu0 0.0
        %1111 = vmatprep.subr.mxu0 0.0
        %1112 = vmatpush2.msra.mxu0 0.0
        %1113 = vmatprep.subr.mxu0 0.0
        %1114 = vmatpush2.msra.mxu0 0.0
        %1115 = vmatprep.subr.mxu0 0.0
        %1116 = vmatpush2.msra.mxu0 0.0
        %1117 = vmatprep.subr.mxu0 0.0
        %1118 = vmatpush2.msra.mxu0 0.0
        %1119 = vmatprep.mubr.f32.mxu0 0.0
        %1120 = vmatmul.mubr.f32.gmra.mxu0 %v919
        %v1121 = vpop.f32.mrf.mxu0
        %v1122 = vadd.f32 0.0, %v1121
        %v1123 = vpop.f32.mrf.mxu0
        %v1124 = vadd.f32 0.0, %v1123
        %1125 = vdwg.mxu0
        %1126 = vmatprep.subr.mxu0 %v915
        %1127 = vmatpush1.msra.mxu0 %v914
        %1128 = vmatprep.subr.mxu0 %v911
        %1129 = vmatpush1.msra.mxu0 %v910
        %1130 = vmatprep.subr.mxu0 %v907
        %1131 = vmatpush1.msra.mxu0 %v906
        %1132 = vmatprep.subr.mxu0 %v903
        %1133 = vmatpush1.msra.mxu0 %v902
        %1134 = vmatprep.subr.mxu0 %v899
        %1135 = vmatpush1.msra.mxu0 %v898
        %1136 = vmatprep.subr.mxu0 %v895
        %1137 = vmatpush1.msra.mxu0 %v894
        %1138 = vmatprep.subr.mxu0 %v891
        %1139 = vmatpush1.msra.mxu0 %v890
        %1140 = vmatprep.subr.mxu0 %v887
        %1141 = vmatpush1.msra.mxu0 %v886
        %1142 = vmatprep.subr.mxu0 %v883
        %1143 = vmatpush1.msra.mxu0 %v882
        %1144 = vmatprep.subr.mxu0 %v879
        %1145 = vmatpush1.msra.mxu0 %v878
        %1146 = vmatprep.subr.mxu0 %v875
        %1147 = vmatpush1.msra.mxu0 %v874
        %1148 = vmatprep.subr.mxu0 %v871
        %1149 = vmatpush1.msra.mxu0 %v870
        %1150 = vmatprep.subr.mxu0 %v867
        %1151 = vmatpush1.msra.mxu0 %v866
        %1152 = vmatprep.subr.mxu0 %v863
        %1153 = vmatpush1.msra.mxu0 %v862
        %1154 = vmatprep.subr.mxu0 %v859
        %1155 = vmatpush1.msra.mxu0 %v858
        %1156 = vmatprep.subr.mxu0 %v855
        %1157 = vmatpush1.msra.mxu0 %v854
        %1158 = vmatprep.subr.mxu0 0.0
        %1159 = vmatpush2.msra.mxu0 0.0
        %1160 = vmatprep.subr.mxu0 0.0
        %1161 = vmatpush2.msra.mxu0 0.0
        %1162 = vmatprep.subr.mxu0 0.0
        %1163 = vmatpush2.msra.mxu0 0.0
        %1164 = vmatprep.subr.mxu0 0.0
        %1165 = vmatpush2.msra.mxu0 0.0
        %1166 = vmatprep.subr.mxu0 0.0
        %1167 = vmatpush2.msra.mxu0 0.0
        %1168 = vmatprep.subr.mxu0 0.0
        %1169 = vmatpush2.msra.mxu0 0.0
        %1170 = vmatprep.subr.mxu0 0.0
        %1171 = vmatpush2.msra.mxu0 0.0
        %1172 = vmatprep.subr.mxu0 0.0
        %1173 = vmatpush2.msra.mxu0 0.0
        %1174 = vmatprep.subr.mxu0 0.0
        %1175 = vmatpush2.msra.mxu0 0.0
        %1176 = vmatprep.subr.mxu0 0.0
        %1177 = vmatpush2.msra.mxu0 0.0
        %1178 = vmatprep.subr.mxu0 0.0
        %1179 = vmatpush2.msra.mxu0 0.0
        %1180 = vmatprep.subr.mxu0 0.0
        %1181 = vmatpush2.msra.mxu0 0.0
        %1182 = vmatprep.subr.mxu0 0.0
        %1183 = vmatpush2.msra.mxu0 0.0
        %1184 = vmatprep.subr.mxu0 0.0
        %1185 = vmatpush2.msra.mxu0 0.0
        %1186 = vmatprep.subr.mxu0 0.0
        %1187 = vmatpush2.msra.mxu0 0.0
        %1188 = vmatprep.subr.mxu0 0.0
        %1189 = vmatpush2.msra.mxu0 0.0
        %1190 = vmatprep.mubr.f32.mxu0 0.0
        %1191 = vmatmul.mubr.f32.gmra.mxu0 %v851
        %v1192 = vpop.f32.mrf.mxu0
        %v1193 = vadd.f32 %v1051, %v1192
        %v1194 = vpop.f32.mrf.mxu0
        %v1195 = vadd.f32 %v1053, %v1194
        %1196 = vdwg.mxu0
        %1197 = vmatprep.subr.mxu0 %v917
        %1198 = vmatpush1.msra.mxu0 %v916
        %1199 = vmatprep.subr.mxu0 %v913
        %1200 = vmatpush1.msra.mxu0 %v912
        %1201 = vmatprep.subr.mxu0 %v909
        %1202 = vmatpush1.msra.mxu0 %v908
        %1203 = vmatprep.subr.mxu0 %v905
        %1204 = vmatpush1.msra.mxu0 %v904
        %1205 = vmatprep.subr.mxu0 %v901
        %1206 = vmatpush1.msra.mxu0 %v900
        %1207 = vmatprep.subr.mxu0 %v897
        %1208 = vmatpush1.msra.mxu0 %v896
        %1209 = vmatprep.subr.mxu0 %v893
        %1210 = vmatpush1.msra.mxu0 %v892
        %1211 = vmatprep.subr.mxu0 %v889
        %1212 = vmatpush1.msra.mxu0 %v888
        %1213 = vmatprep.subr.mxu0 %v885
        %1214 = vmatpush1.msra.mxu0 %v884
        %1215 = vmatprep.subr.mxu0 %v881
        %1216 = vmatpush1.msra.mxu0 %v880
        %1217 = vmatprep.subr.mxu0 %v877
        %1218 = vmatpush1.msra.mxu0 %v876
        %1219 = vmatprep.subr.mxu0 %v873
        %1220 = vmatpush1.msra.mxu0 %v872
        %1221 = vmatprep.subr.mxu0 %v869
        %1222 = vmatpush1.msra.mxu0 %v868
        %1223 = vmatprep.subr.mxu0 %v865
        %1224 = vmatpush1.msra.mxu0 %v864
        %1225 = vmatprep.subr.mxu0 %v861
        %1226 = vmatpush1.msra.mxu0 %v860
        %1227 = vmatprep.subr.mxu0 %v857
        %1228 = vmatpush1.msra.mxu0 %v856
        %1229 = vmatprep.subr.mxu0 0.0
        %1230 = vmatpush2.msra.mxu0 0.0
        %1231 = vmatprep.subr.mxu0 0.0
        %1232 = vmatpush2.msra.mxu0 0.0
        %1233 = vmatprep.subr.mxu0 0.0
        %1234 = vmatpush2.msra.mxu0 0.0
        %1235 = vmatprep.subr.mxu0 0.0
        %1236 = vmatpush2.msra.mxu0 0.0
        %1237 = vmatprep.subr.mxu0 0.0
        %1238 = vmatpush2.msra.mxu0 0.0
        %1239 = vmatprep.subr.mxu0 0.0
        %1240 = vmatpush2.msra.mxu0 0.0
        %1241 = vmatprep.subr.mxu0 0.0
        %1242 = vmatpush2.msra.mxu0 0.0
        %1243 = vmatprep.subr.mxu0 0.0
        %1244 = vmatpush2.msra.mxu0 0.0
        %1245 = vmatprep.subr.mxu0 0.0
        %1246 = vmatpush2.msra.mxu0 0.0
        %1247 = vmatprep.subr.mxu0 0.0
        %1248 = vmatpush2.msra.mxu0 0.0
        %1249 = vmatprep.subr.mxu0 0.0
        %1250 = vmatpush2.msra.mxu0 0.0
        %1251 = vmatprep.subr.mxu0 0.0
        %1252 = vmatpush2.msra.mxu0 0.0
        %1253 = vmatprep.subr.mxu0 0.0
        %1254 = vmatpush2.msra.mxu0 0.0
        %1255 = vmatprep.subr.mxu0 0.0
        %1256 = vmatpush2.msra.mxu0 0.0
        %1257 = vmatprep.subr.mxu0 0.0
        %1258 = vmatpush2.msra.mxu0 0.0
        %1259 = vmatprep.subr.mxu0 0.0
        %1260 = vmatpush2.msra.mxu0 0.0
        %1261 = vmatprep.mubr.f32.mxu0 0.0
        %1262 = vmatmul.mubr.f32.gmra.mxu0 %v851
        %v1263 = vpop.f32.mrf.mxu0
        %v1264 = vadd.f32 %v1122, %v1263
        %v1265 = vpop.f32.mrf.mxu0
        %v1266 = vadd.f32 %v1124, %v1265
        %1267 = vdwg.mxu0
        %v1268 = vld [vmem:[%s6] sm:$0xf]
        %v1270 = vlaneseq
        %v1271 = vshrl.u32 %v1270, 7
        %v1272 = vsub.s32 0, %v1271
        %v1273 = vrot.slane %v1268, %v1272
        %v1274 = vlaneseq
        %v1275 = vshrl.u32 %v1274, 7
        %v1276 = vsub.s32 1, %v1275
        %v1277 = vrot.slane %v1268, %v1276
        %v1278 = vlaneseq
        %v1279 = vshrl.u32 %v1278, 7
        %v1280 = vsub.s32 2, %v1279
        %v1281 = vrot.slane %v1268, %v1280
        %v1282 = vlaneseq
        %v1283 = vshrl.u32 %v1282, 7
        %v1284 = vsub.s32 3, %v1283
        %v1285 = vrot.slane %v1268, %v1284
        %v1290 = vadd.f32 %v1193, %v1273
        %v1291 = vadd.f32 %v1195, %v1277
        %v1292 = vadd.f32 %v1264, %v1281
        %v1293 = vadd.f32 %v1266, %v1285
        %s1294 = scalar_lea.vmem [#allocation8], 8
        %v1295 = vld [vmem:[%s1294] sm:$0xff]
        %v1296 = vxor.u32 %v1290, 2147483648
        %v1297 = vmul.f32 %v1296, 1.442695
        %v1298 = vpow.pop %v1297
        %v1299 = vadd.f32 %v1298, 1.0
        %v1300 = vrcp.pop %v1299
        %v1301 = vmul.f32 1.0, %v1300
        %v1302 = vxor.u32 %v1291, 2147483648
        %v1303 = vmul.f32 %v1302, 1.442695
        %v1304 = vpow.pop %v1303
        %v1305 = vadd.f32 %v1304, 1.0
        %v1306 = vrcp.pop %v1305
        %v1307 = vmul.f32 1.0, %v1306
        %v1308 = vtanh.pop %v1292
        %v1309 = vxor.u32 %v1293, 2147483648
        %v1310 = vmul.f32 %v1309, 1.442695
        %v1311 = vpow.pop %v1310
        %v1312 = vadd.f32 %v1311, 1.0
        %v1313 = vrcp.pop %v1312
        %v1314 = vmul.f32 1.0, %v1313
        %v1315 = vmul.f32 %v1307, %v1295
        %v1316 = vmul.f32 %v1301, %v1308
        %v1317 = vadd.f32 %v1315, %v1316
        %v1318 = vtanh.pop %v1317
        %v1319 = vmul.f32 %v1314, %v1318
        %1320 = vst [vmem:[%s918] sm:$0xff] %v1319
        %1321 = vst [vmem:[%s1294] sm:$0xff] %v1317
        %1322 = vst [vmem:[%s192] sm:$0xff] %v1319
        %s1323 = scalar_lea.vmem [#allocation6], 32
        %v1324 = vld [vmem:[%s1323] sm:$0xff]
        %v1325 = vld [vmem:[%s1323 + $0x8] sm:$0xff]
        %v1326 = vld [vmem:[%s1323 + $0x10] sm:$0xff]
        %v1327 = vld [vmem:[%s1323 + $0x18] sm:$0xff]
        %v1328 = vld [vmem:[#allocation7] sm:$0xff]
        %v1329 = vld [vmem:[#allocation4] sm:$0xff]
        %v1330 = vld [vmem:[#allocation4 + $0x8] sm:$0xff]
        %v1331 = vld [vmem:[#allocation4 + $0x10] sm:$0xff]
        %v1332 = vld [vmem:[#allocation4 + $0x18] sm:$0xff]
        %v1333 = vld [vmem:[#allocation4 + $0x20] sm:$0xff]
        %v1334 = vld [vmem:[#allocation4 + $0x28] sm:$0xff]
        %v1335 = vld [vmem:[#allocation4 + $0x30] sm:$0xff]
        %v1336 = vld [vmem:[#allocation4 + $0x38] sm:$0xff]
        %v1337 = vld [vmem:[#allocation4 + $0x40] sm:$0xff]
        %v1338 = vld [vmem:[#allocation4 + $0x48] sm:$0xff]
        %v1339 = vld [vmem:[#allocation4 + $0x50] sm:$0xff]
        %v1340 = vld [vmem:[#allocation4 + $0x58] sm:$0xff]
        %v1341 = vld [vmem:[#allocation4 + $0x60] sm:$0xff]
        %v1342 = vld [vmem:[#allocation4 + $0x68] sm:$0xff]
        %v1343 = vld [vmem:[#allocation4 + $0x70] sm:$0xff]
        %v1344 = vld [vmem:[#allocation4 + $0x78] sm:$0xff]
        %v1345 = vld [vmem:[#allocation4 + $0x80] sm:$0xff]
        %v1346 = vld [vmem:[#allocation4 + $0x88] sm:$0xff]
        %v1347 = vld [vmem:[#allocation4 + $0x90] sm:$0xff]
        %v1348 = vld [vmem:[#allocation4 + $0x98] sm:$0xff]
        %v1349 = vld [vmem:[#allocation4 + $0xa0] sm:$0xff]
        %v1350 = vld [vmem:[#allocation4 + $0xa8] sm:$0xff]
        %v1351 = vld [vmem:[#allocation4 + $0xb0] sm:$0xff]
        %v1352 = vld [vmem:[#allocation4 + $0xb8] sm:$0xff]
        %v1353 = vld [vmem:[#allocation4 + $0xc0] sm:$0xff]
        %v1354 = vld [vmem:[#allocation4 + $0xc8] sm:$0xff]
        %v1355 = vld [vmem:[#allocation4 + $0xd0] sm:$0xff]
        %v1356 = vld [vmem:[#allocation4 + $0xd8] sm:$0xff]
        %v1357 = vld [vmem:[#allocation4 + $0xe0] sm:$0xff]
        %v1358 = vld [vmem:[#allocation4 + $0xe8] sm:$0xff]
        %v1359 = vld [vmem:[#allocation4 + $0xf0] sm:$0xff]
        %v1360 = vld [vmem:[#allocation4 + $0xf8] sm:$0xff]
        %v1361 = vld [vmem:[#allocation4 + $0x100] sm:$0xff]
        %v1362 = vld [vmem:[#allocation4 + $0x108] sm:$0xff]
        %v1363 = vld [vmem:[#allocation4 + $0x110] sm:$0xff]
        %v1364 = vld [vmem:[#allocation4 + $0x118] sm:$0xff]
        %v1365 = vld [vmem:[#allocation4 + $0x120] sm:$0xff]
        %v1366 = vld [vmem:[#allocation4 + $0x128] sm:$0xff]
        %v1367 = vld [vmem:[#allocation4 + $0x130] sm:$0xff]
        %v1368 = vld [vmem:[#allocation4 + $0x138] sm:$0xff]
        %v1369 = vld [vmem:[#allocation4 + $0x140] sm:$0xff]
        %v1370 = vld [vmem:[#allocation4 + $0x148] sm:$0xff]
        %v1371 = vld [vmem:[#allocation4 + $0x150] sm:$0xff]
        %v1372 = vld [vmem:[#allocation4 + $0x158] sm:$0xff]
        %v1373 = vld [vmem:[#allocation4 + $0x160] sm:$0xff]
        %v1374 = vld [vmem:[#allocation4 + $0x168] sm:$0xff]
        %v1375 = vld [vmem:[#allocation4 + $0x170] sm:$0xff]
        %v1376 = vld [vmem:[#allocation4 + $0x178] sm:$0xff]
        %v1377 = vld [vmem:[#allocation4 + $0x180] sm:$0xff]
        %v1378 = vld [vmem:[#allocation4 + $0x188] sm:$0xff]
        %v1379 = vld [vmem:[#allocation4 + $0x190] sm:$0xff]
        %v1380 = vld [vmem:[#allocation4 + $0x198] sm:$0xff]
        %v1381 = vld [vmem:[#allocation4 + $0x1a0] sm:$0xff]
        %v1382 = vld [vmem:[#allocation4 + $0x1a8] sm:$0xff]
        %v1383 = vld [vmem:[#allocation4 + $0x1b0] sm:$0xff]
        %v1384 = vld [vmem:[#allocation4 + $0x1b8] sm:$0xff]
        %v1385 = vld [vmem:[#allocation4 + $0x1c0] sm:$0xff]
        %v1386 = vld [vmem:[#allocation4 + $0x1c8] sm:$0xff]
        %v1387 = vld [vmem:[#allocation4 + $0x1d0] sm:$0xff]
        %v1388 = vld [vmem:[#allocation4 + $0x1d8] sm:$0xff]
        %v1389 = vld [vmem:[#allocation4 + $0x1e0] sm:$0xff]
        %v1390 = vld [vmem:[#allocation4 + $0x1e8] sm:$0xff]
        %v1391 = vld [vmem:[#allocation4 + $0x1f0] sm:$0xff]
        %v1392 = vld [vmem:[#allocation4 + $0x1f8] sm:$0xff]
        %1393 = vmatprep.subr.mxu0 %v1390
        %1394 = vmatpush1.msra.mxu0 %v1389
        %1395 = vmatprep.subr.mxu0 %v1386
        %1396 = vmatpush1.msra.mxu0 %v1385
        %1397 = vmatprep.subr.mxu0 %v1382
        %1398 = vmatpush1.msra.mxu0 %v1381
        %1399 = vmatprep.subr.mxu0 %v1378
        %1400 = vmatpush1.msra.mxu0 %v1377
        %1401 = vmatprep.subr.mxu0 %v1374
        %1402 = vmatpush1.msra.mxu0 %v1373
        %1403 = vmatprep.subr.mxu0 %v1370
        %1404 = vmatpush1.msra.mxu0 %v1369
        %1405 = vmatprep.subr.mxu0 %v1366
        %1406 = vmatpush1.msra.mxu0 %v1365
        %1407 = vmatprep.subr.mxu0 %v1362
        %1408 = vmatpush1.msra.mxu0 %v1361
        %1409 = vmatprep.subr.mxu0 %v1358
        %1410 = vmatpush1.msra.mxu0 %v1357
        %1411 = vmatprep.subr.mxu0 %v1354
        %1412 = vmatpush1.msra.mxu0 %v1353
        %1413 = vmatprep.subr.mxu0 %v1350
        %1414 = vmatpush1.msra.mxu0 %v1349
        %1415 = vmatprep.subr.mxu0 %v1346
        %1416 = vmatpush1.msra.mxu0 %v1345
        %1417 = vmatprep.subr.mxu0 %v1342
        %1418 = vmatpush1.msra.mxu0 %v1341
        %1419 = vmatprep.subr.mxu0 %v1338
        %1420 = vmatpush1.msra.mxu0 %v1337
        %1421 = vmatprep.subr.mxu0 %v1334
        %1422 = vmatpush1.msra.mxu0 %v1333
        %1423 = vmatprep.subr.mxu0 %v1330
        %1424 = vmatpush1.msra.mxu0 %v1329
        %1425 = vmatprep.subr.mxu0 0.0
        %1426 = vmatpush2.msra.mxu0 0.0
        %1427 = vmatprep.subr.mxu0 0.0
        %1428 = vmatpush2.msra.mxu0 0.0
        %1429 = vmatprep.subr.mxu0 0.0
        %1430 = vmatpush2.msra.mxu0 0.0
        %1431 = vmatprep.subr.mxu0 0.0
        %1432 = vmatpush2.msra.mxu0 0.0
        %1433 = vmatprep.subr.mxu0 0.0
        %1434 = vmatpush2.msra.mxu0 0.0
        %1435 = vmatprep.subr.mxu0 0.0
        %1436 = vmatpush2.msra.mxu0 0.0
        %1437 = vmatprep.subr.mxu0 0.0
        %1438 = vmatpush2.msra.mxu0 0.0
        %1439 = vmatprep.subr.mxu0 0.0
        %1440 = vmatpush2.msra.mxu0 0.0
        %1441 = vmatprep.subr.mxu0 0.0
        %1442 = vmatpush2.msra.mxu0 0.0
        %1443 = vmatprep.subr.mxu0 0.0
        %1444 = vmatpush2.msra.mxu0 0.0
        %1445 = vmatprep.subr.mxu0 0.0
        %1446 = vmatpush2.msra.mxu0 0.0
        %1447 = vmatprep.subr.mxu0 0.0
        %1448 = vmatpush2.msra.mxu0 0.0
        %1449 = vmatprep.subr.mxu0 0.0
        %1450 = vmatpush2.msra.mxu0 0.0
        %1451 = vmatprep.subr.mxu0 0.0
        %1452 = vmatpush2.msra.mxu0 0.0
        %1453 = vmatprep.subr.mxu0 0.0
        %1454 = vmatpush2.msra.mxu0 0.0
        %1455 = vmatprep.subr.mxu0 0.0
        %1456 = vmatpush2.msra.mxu0 0.0
        %1457 = vmatprep.mubr.f32.mxu0 0.0
        %1458 = vmatmul.mubr.f32.gmra.mxu0 %v1328
        %v1459 = vpop.f32.mrf.mxu0
        %v1460 = vadd.f32 0.0, %v1459
        %v1461 = vpop.f32.mrf.mxu0
        %v1462 = vadd.f32 0.0, %v1461
        %1463 = vdwg.mxu0
        %1464 = vmatprep.subr.mxu0 %v1392
        %1465 = vmatpush1.msra.mxu0 %v1391
        %1466 = vmatprep.subr.mxu0 %v1388
        %1467 = vmatpush1.msra.mxu0 %v1387
        %1468 = vmatprep.subr.mxu0 %v1384
        %1469 = vmatpush1.msra.mxu0 %v1383
        %1470 = vmatprep.subr.mxu0 %v1380
        %1471 = vmatpush1.msra.mxu0 %v1379
        %1472 = vmatprep.subr.mxu0 %v1376
        %1473 = vmatpush1.msra.mxu0 %v1375
        %1474 = vmatprep.subr.mxu0 %v1372
        %1475 = vmatpush1.msra.mxu0 %v1371
        %1476 = vmatprep.subr.mxu0 %v1368
        %1477 = vmatpush1.msra.mxu0 %v1367
        %1478 = vmatprep.subr.mxu0 %v1364
        %1479 = vmatpush1.msra.mxu0 %v1363
        %1480 = vmatprep.subr.mxu0 %v1360
        %1481 = vmatpush1.msra.mxu0 %v1359
        %1482 = vmatprep.subr.mxu0 %v1356
        %1483 = vmatpush1.msra.mxu0 %v1355
        %1484 = vmatprep.subr.mxu0 %v1352
        %1485 = vmatpush1.msra.mxu0 %v1351
        %1486 = vmatprep.subr.mxu0 %v1348
        %1487 = vmatpush1.msra.mxu0 %v1347
        %1488 = vmatprep.subr.mxu0 %v1344
        %1489 = vmatpush1.msra.mxu0 %v1343
        %1490 = vmatprep.subr.mxu0 %v1340
        %1491 = vmatpush1.msra.mxu0 %v1339
        %1492 = vmatprep.subr.mxu0 %v1336
        %1493 = vmatpush1.msra.mxu0 %v1335
        %1494 = vmatprep.subr.mxu0 %v1332
        %1495 = vmatpush1.msra.mxu0 %v1331
        %1496 = vmatprep.subr.mxu0 0.0
        %1497 = vmatpush2.msra.mxu0 0.0
        %1498 = vmatprep.subr.mxu0 0.0
        %1499 = vmatpush2.msra.mxu0 0.0
        %1500 = vmatprep.subr.mxu0 0.0
        %1501 = vmatpush2.msra.mxu0 0.0
        %1502 = vmatprep.subr.mxu0 0.0
        %1503 = vmatpush2.msra.mxu0 0.0
        %1504 = vmatprep.subr.mxu0 0.0
        %1505 = vmatpush2.msra.mxu0 0.0
        %1506 = vmatprep.subr.mxu0 0.0
        %1507 = vmatpush2.msra.mxu0 0.0
        %1508 = vmatprep.subr.mxu0 0.0
        %1509 = vmatpush2.msra.mxu0 0.0
        %1510 = vmatprep.subr.mxu0 0.0
        %1511 = vmatpush2.msra.mxu0 0.0
        %1512 = vmatprep.subr.mxu0 0.0
        %1513 = vmatpush2.msra.mxu0 0.0
        %1514 = vmatprep.subr.mxu0 0.0
        %1515 = vmatpush2.msra.mxu0 0.0
        %1516 = vmatprep.subr.mxu0 0.0
        %1517 = vmatpush2.msra.mxu0 0.0
        %1518 = vmatprep.subr.mxu0 0.0
        %1519 = vmatpush2.msra.mxu0 0.0
        %1520 = vmatprep.subr.mxu0 0.0
        %1521 = vmatpush2.msra.mxu0 0.0
        %1522 = vmatprep.subr.mxu0 0.0
        %1523 = vmatpush2.msra.mxu0 0.0
        %1524 = vmatprep.subr.mxu0 0.0
        %1525 = vmatpush2.msra.mxu0 0.0
        %1526 = vmatprep.subr.mxu0 0.0
        %1527 = vmatpush2.msra.mxu0 0.0
        %1528 = vmatprep.mubr.f32.mxu0 0.0
        %1529 = vmatmul.mubr.f32.gmra.mxu0 %v1328
        %v1530 = vpop.f32.mrf.mxu0
        %v1531 = vadd.f32 0.0, %v1530
        %v1532 = vpop.f32.mrf.mxu0
        %v1533 = vadd.f32 0.0, %v1532
        %1534 = vdwg.mxu0
        %v1535 = vadd.f32 %v1324, %v1460
        %v1536 = vadd.f32 %v1325, %v1462
        %v1537 = vadd.f32 %v1326, %v1531
        %v1538 = vadd.f32 %v1327, %v1533
        %v1539 = vld [vmem:[#allocation8] sm:$0xff]
        %v1540 = vxor.u32 %v1535, 2147483648
        %v1541 = vmul.f32 %v1540, 1.442695
        %v1542 = vpow.pop %v1541
        %v1543 = vadd.f32 %v1542, 1.0
        %v1544 = vrcp.pop %v1543
        %v1545 = vmul.f32 1.0, %v1544
        %v1546 = vxor.u32 %v1536, 2147483648
        %v1547 = vmul.f32 %v1546, 1.442695
        %v1548 = vpow.pop %v1547
        %v1549 = vadd.f32 %v1548, 1.0
        %v1550 = vrcp.pop %v1549
        %v1551 = vmul.f32 1.0, %v1550
        %v1552 = vtanh.pop %v1537
        %v1553 = vxor.u32 %v1538, 2147483648
        %v1554 = vmul.f32 %v1553, 1.442695
        %v1555 = vpow.pop %v1554
        %v1556 = vadd.f32 %v1555, 1.0
        %v1557 = vrcp.pop %v1556
        %v1558 = vmul.f32 1.0, %v1557
        %v1559 = vmul.f32 %v1551, %v1539
        %v1560 = vmul.f32 %v1545, %v1552
        %v1561 = vadd.f32 %v1559, %v1560
        %v1562 = vtanh.pop %v1561
        %v1563 = vmul.f32 %v1558, %v1562
        %1564 = vst [vmem:[#allocation7] sm:$0xff] %v1563
        %1565 = vst [vmem:[#allocation8] sm:$0xff] %v1561
        %v1566 = vld [vmem:[#allocation3] sm:$0xff]
        %v1567 = vld [vmem:[#allocation3 + $0x8] sm:$0xff]
        %v1568 = vld [vmem:[#allocation3 + $0x10] sm:$0xff]
        %v1569 = vld [vmem:[#allocation3 + $0x18] sm:$0xff]
        %v1570 = vld [vmem:[#allocation3 + $0x20] sm:$0xff]
        %v1571 = vld [vmem:[#allocation3 + $0x28] sm:$0xff]
        %v1572 = vld [vmem:[#allocation3 + $0x30] sm:$0xff]
        %v1573 = vld [vmem:[#allocation3 + $0x38] sm:$0xff]
        %v1574 = vld [vmem:[#allocation3 + $0x40] sm:$0xff]
        %v1575 = vld [vmem:[#allocation3 + $0x48] sm:$0xff]
        %v1576 = vld [vmem:[#allocation3 + $0x50] sm:$0xff]
        %v1577 = vld [vmem:[#allocation3 + $0x58] sm:$0xff]
        %v1578 = vld [vmem:[#allocation3 + $0x60] sm:$0xff]
        %v1579 = vld [vmem:[#allocation3 + $0x68] sm:$0xff]
        %v1580 = vld [vmem:[#allocation3 + $0x70] sm:$0xff]
        %v1581 = vld [vmem:[#allocation3 + $0x78] sm:$0xff]
        %v1582 = vld [vmem:[#allocation3 + $0x80] sm:$0xff]
        %v1583 = vld [vmem:[#allocation3 + $0x88] sm:$0xff]
        %v1584 = vld [vmem:[#allocation3 + $0x90] sm:$0xff]
        %v1585 = vld [vmem:[#allocation3 + $0x98] sm:$0xff]
        %v1586 = vld [vmem:[#allocation3 + $0xa0] sm:$0xff]
        %v1587 = vld [vmem:[#allocation3 + $0xa8] sm:$0xff]
        %v1588 = vld [vmem:[#allocation3 + $0xb0] sm:$0xff]
        %v1589 = vld [vmem:[#allocation3 + $0xb8] sm:$0xff]
        %v1590 = vld [vmem:[#allocation3 + $0xc0] sm:$0xff]
        %v1591 = vld [vmem:[#allocation3 + $0xc8] sm:$0xff]
        %v1592 = vld [vmem:[#allocation3 + $0xd0] sm:$0xff]
        %v1593 = vld [vmem:[#allocation3 + $0xd8] sm:$0xff]
        %v1594 = vld [vmem:[#allocation3 + $0xe0] sm:$0xff]
        %v1595 = vld [vmem:[#allocation3 + $0xe8] sm:$0xff]
        %v1596 = vld [vmem:[#allocation3 + $0xf0] sm:$0xff]
        %v1597 = vld [vmem:[#allocation3 + $0xf8] sm:$0xff]
        %v1598 = vld [vmem:[#allocation3 + $0x100] sm:$0xff]
        %v1599 = vld [vmem:[#allocation3 + $0x108] sm:$0xff]
        %v1600 = vld [vmem:[#allocation3 + $0x110] sm:$0xff]
        %v1601 = vld [vmem:[#allocation3 + $0x118] sm:$0xff]
        %v1602 = vld [vmem:[#allocation3 + $0x120] sm:$0xff]
        %v1603 = vld [vmem:[#allocation3 + $0x128] sm:$0xff]
        %v1604 = vld [vmem:[#allocation3 + $0x130] sm:$0xff]
        %v1605 = vld [vmem:[#allocation3 + $0x138] sm:$0xff]
        %v1606 = vld [vmem:[#allocation3 + $0x140] sm:$0xff]
        %v1607 = vld [vmem:[#allocation3 + $0x148] sm:$0xff]
        %v1608 = vld [vmem:[#allocation3 + $0x150] sm:$0xff]
        %v1609 = vld [vmem:[#allocation3 + $0x158] sm:$0xff]
        %v1610 = vld [vmem:[#allocation3 + $0x160] sm:$0xff]
        %v1611 = vld [vmem:[#allocation3 + $0x168] sm:$0xff]
        %v1612 = vld [vmem:[#allocation3 + $0x170] sm:$0xff]
        %v1613 = vld [vmem:[#allocation3 + $0x178] sm:$0xff]
        %v1614 = vld [vmem:[#allocation3 + $0x180] sm:$0xff]
        %v1615 = vld [vmem:[#allocation3 + $0x188] sm:$0xff]
        %v1616 = vld [vmem:[#allocation3 + $0x190] sm:$0xff]
        %v1617 = vld [vmem:[#allocation3 + $0x198] sm:$0xff]
        %v1618 = vld [vmem:[#allocation3 + $0x1a0] sm:$0xff]
        %v1619 = vld [vmem:[#allocation3 + $0x1a8] sm:$0xff]
        %v1620 = vld [vmem:[#allocation3 + $0x1b0] sm:$0xff]
        %v1621 = vld [vmem:[#allocation3 + $0x1b8] sm:$0xff]
        %v1622 = vld [vmem:[#allocation3 + $0x1c0] sm:$0xff]
        %v1623 = vld [vmem:[#allocation3 + $0x1c8] sm:$0xff]
        %v1624 = vld [vmem:[#allocation3 + $0x1d0] sm:$0xff]
        %v1625 = vld [vmem:[#allocation3 + $0x1d8] sm:$0xff]
        %v1626 = vld [vmem:[#allocation3 + $0x1e0] sm:$0xff]
        %v1627 = vld [vmem:[#allocation3 + $0x1e8] sm:$0xff]
        %v1628 = vld [vmem:[#allocation3 + $0x1f0] sm:$0xff]
        %v1629 = vld [vmem:[#allocation3 + $0x1f8] sm:$0xff]
        %v1630 = vld [vmem:[%s918] sm:$0xff]
        %v1631 = vld [vmem:[#allocation5] sm:$0xff]
        %v1632 = vld [vmem:[#allocation5 + $0x8] sm:$0xff]
        %v1633 = vld [vmem:[#allocation5 + $0x10] sm:$0xff]
        %v1634 = vld [vmem:[#allocation5 + $0x18] sm:$0xff]
        %v1635 = vld [vmem:[#allocation5 + $0x20] sm:$0xff]
        %v1636 = vld [vmem:[#allocation5 + $0x28] sm:$0xff]
        %v1637 = vld [vmem:[#allocation5 + $0x30] sm:$0xff]
        %v1638 = vld [vmem:[#allocation5 + $0x38] sm:$0xff]
        %v1639 = vld [vmem:[#allocation5 + $0x40] sm:$0xff]
        %v1640 = vld [vmem:[#allocation5 + $0x48] sm:$0xff]
        %v1641 = vld [vmem:[#allocation5 + $0x50] sm:$0xff]
        %v1642 = vld [vmem:[#allocation5 + $0x58] sm:$0xff]
        %v1643 = vld [vmem:[#allocation5 + $0x60] sm:$0xff]
        %v1644 = vld [vmem:[#allocation5 + $0x68] sm:$0xff]
        %v1645 = vld [vmem:[#allocation5 + $0x70] sm:$0xff]
        %v1646 = vld [vmem:[#allocation5 + $0x78] sm:$0xff]
        %v1647 = vld [vmem:[#allocation5 + $0x80] sm:$0xff]
        %v1648 = vld [vmem:[#allocation5 + $0x88] sm:$0xff]
        %v1649 = vld [vmem:[#allocation5 + $0x90] sm:$0xff]
        %v1650 = vld [vmem:[#allocation5 + $0x98] sm:$0xff]
        %v1651 = vld [vmem:[#allocation5 + $0xa0] sm:$0xff]
        %v1652 = vld [vmem:[#allocation5 + $0xa8] sm:$0xff]
        %v1653 = vld [vmem:[#allocation5 + $0xb0] sm:$0xff]
        %v1654 = vld [vmem:[#allocation5 + $0xb8] sm:$0xff]
        %v1655 = vld [vmem:[#allocation5 + $0xc0] sm:$0xff]
        %v1656 = vld [vmem:[#allocation5 + $0xc8] sm:$0xff]
        %v1657 = vld [vmem:[#allocation5 + $0xd0] sm:$0xff]
        %v1658 = vld [vmem:[#allocation5 + $0xd8] sm:$0xff]
        %v1659 = vld [vmem:[#allocation5 + $0xe0] sm:$0xff]
        %v1660 = vld [vmem:[#allocation5 + $0xe8] sm:$0xff]
        %v1661 = vld [vmem:[#allocation5 + $0xf0] sm:$0xff]
        %v1662 = vld [vmem:[#allocation5 + $0xf8] sm:$0xff]
        %v1663 = vld [vmem:[#allocation5 + $0x100] sm:$0xff]
        %v1664 = vld [vmem:[#allocation5 + $0x108] sm:$0xff]
        %v1665 = vld [vmem:[#allocation5 + $0x110] sm:$0xff]
        %v1666 = vld [vmem:[#allocation5 + $0x118] sm:$0xff]
        %v1667 = vld [vmem:[#allocation5 + $0x120] sm:$0xff]
        %v1668 = vld [vmem:[#allocation5 + $0x128] sm:$0xff]
        %v1669 = vld [vmem:[#allocation5 + $0x130] sm:$0xff]
        %v1670 = vld [vmem:[#allocation5 + $0x138] sm:$0xff]
        %v1671 = vld [vmem:[#allocation5 + $0x140] sm:$0xff]
        %v1672 = vld [vmem:[#allocation5 + $0x148] sm:$0xff]
        %v1673 = vld [vmem:[#allocation5 + $0x150] sm:$0xff]
        %v1674 = vld [vmem:[#allocation5 + $0x158] sm:$0xff]
        %v1675 = vld [vmem:[#allocation5 + $0x160] sm:$0xff]
        %v1676 = vld [vmem:[#allocation5 + $0x168] sm:$0xff]
        %v1677 = vld [vmem:[#allocation5 + $0x170] sm:$0xff]
        %v1678 = vld [vmem:[#allocation5 + $0x178] sm:$0xff]
        %v1679 = vld [vmem:[#allocation5 + $0x180] sm:$0xff]
        %v1680 = vld [vmem:[#allocation5 + $0x188] sm:$0xff]
        %v1681 = vld [vmem:[#allocation5 + $0x190] sm:$0xff]
        %v1682 = vld [vmem:[#allocation5 + $0x198] sm:$0xff]
        %v1683 = vld [vmem:[#allocation5 + $0x1a0] sm:$0xff]
        %v1684 = vld [vmem:[#allocation5 + $0x1a8] sm:$0xff]
        %v1685 = vld [vmem:[#allocation5 + $0x1b0] sm:$0xff]
        %v1686 = vld [vmem:[#allocation5 + $0x1b8] sm:$0xff]
        %v1687 = vld [vmem:[#allocation5 + $0x1c0] sm:$0xff]
        %v1688 = vld [vmem:[#allocation5 + $0x1c8] sm:$0xff]
        %v1689 = vld [vmem:[#allocation5 + $0x1d0] sm:$0xff]
        %v1690 = vld [vmem:[#allocation5 + $0x1d8] sm:$0xff]
        %v1691 = vld [vmem:[#allocation5 + $0x1e0] sm:$0xff]
        %v1692 = vld [vmem:[#allocation5 + $0x1e8] sm:$0xff]
        %v1693 = vld [vmem:[#allocation5 + $0x1f0] sm:$0xff]
        %v1694 = vld [vmem:[#allocation5 + $0x1f8] sm:$0xff]
        %1695 = vmatprep.subr.mxu0 %v1692
        %1696 = vmatpush1.msra.mxu0 %v1691
        %1697 = vmatprep.subr.mxu0 %v1688
        %1698 = vmatpush1.msra.mxu0 %v1687
        %1699 = vmatprep.subr.mxu0 %v1684
        %1700 = vmatpush1.msra.mxu0 %v1683
        %1701 = vmatprep.subr.mxu0 %v1680
        %1702 = vmatpush1.msra.mxu0 %v1679
        %1703 = vmatprep.subr.mxu0 %v1676
        %1704 = vmatpush1.msra.mxu0 %v1675
        %1705 = vmatprep.subr.mxu0 %v1672
        %1706 = vmatpush1.msra.mxu0 %v1671
        %1707 = vmatprep.subr.mxu0 %v1668
        %1708 = vmatpush1.msra.mxu0 %v1667
        %1709 = vmatprep.subr.mxu0 %v1664
        %1710 = vmatpush1.msra.mxu0 %v1663
        %1711 = vmatprep.subr.mxu0 %v1660
        %1712 = vmatpush1.msra.mxu0 %v1659
        %1713 = vmatprep.subr.mxu0 %v1656
        %1714 = vmatpush1.msra.mxu0 %v1655
        %1715 = vmatprep.subr.mxu0 %v1652
        %1716 = vmatpush1.msra.mxu0 %v1651
        %1717 = vmatprep.subr.mxu0 %v1648
        %1718 = vmatpush1.msra.mxu0 %v1647
        %1719 = vmatprep.subr.mxu0 %v1644
        %1720 = vmatpush1.msra.mxu0 %v1643
        %1721 = vmatprep.subr.mxu0 %v1640
        %1722 = vmatpush1.msra.mxu0 %v1639
        %1723 = vmatprep.subr.mxu0 %v1636
        %1724 = vmatpush1.msra.mxu0 %v1635
        %1725 = vmatprep.subr.mxu0 %v1632
        %1726 = vmatpush1.msra.mxu0 %v1631
        %1727 = vmatprep.subr.mxu0 0.0
        %1728 = vmatpush2.msra.mxu0 0.0
        %1729 = vmatprep.subr.mxu0 0.0
        %1730 = vmatpush2.msra.mxu0 0.0
        %1731 = vmatprep.subr.mxu0 0.0
        %1732 = vmatpush2.msra.mxu0 0.0
        %1733 = vmatprep.subr.mxu0 0.0
        %1734 = vmatpush2.msra.mxu0 0.0
        %1735 = vmatprep.subr.mxu0 0.0
        %1736 = vmatpush2.msra.mxu0 0.0
        %1737 = vmatprep.subr.mxu0 0.0
        %1738 = vmatpush2.msra.mxu0 0.0
        %1739 = vmatprep.subr.mxu0 0.0
        %1740 = vmatpush2.msra.mxu0 0.0
        %1741 = vmatprep.subr.mxu0 0.0
        %1742 = vmatpush2.msra.mxu0 0.0
        %1743 = vmatprep.subr.mxu0 0.0
        %1744 = vmatpush2.msra.mxu0 0.0
        %1745 = vmatprep.subr.mxu0 0.0
        %1746 = vmatpush2.msra.mxu0 0.0
        %1747 = vmatprep.subr.mxu0 0.0
        %1748 = vmatpush2.msra.mxu0 0.0
        %1749 = vmatprep.subr.mxu0 0.0
        %1750 = vmatpush2.msra.mxu0 0.0
        %1751 = vmatprep.subr.mxu0 0.0
        %1752 = vmatpush2.msra.mxu0 0.0
        %1753 = vmatprep.subr.mxu0 0.0
        %1754 = vmatpush2.msra.mxu0 0.0
        %1755 = vmatprep.subr.mxu0 0.0
        %1756 = vmatpush2.msra.mxu0 0.0
        %1757 = vmatprep.subr.mxu0 0.0
        %1758 = vmatpush2.msra.mxu0 0.0
        %1759 = vmatprep.mubr.f32.mxu0 0.0
        %1760 = vmatmul.mubr.f32.gmra.mxu0 %v1630
        %v1761 = vpop.f32.mrf.mxu0
        %v1762 = vadd.f32 0.0, %v1761
        %v1763 = vpop.f32.mrf.mxu0
        %v1764 = vadd.f32 0.0, %v1763
        %1765 = vdwg.mxu0
        %1766 = vmatprep.subr.mxu0 %v1694
        %1767 = vmatpush1.msra.mxu0 %v1693
        %1768 = vmatprep.subr.mxu0 %v1690
        %1769 = vmatpush1.msra.mxu0 %v1689
        %1770 = vmatprep.subr.mxu0 %v1686
        %1771 = vmatpush1.msra.mxu0 %v1685
        %1772 = vmatprep.subr.mxu0 %v1682
        %1773 = vmatpush1.msra.mxu0 %v1681
        %1774 = vmatprep.subr.mxu0 %v1678
        %1775 = vmatpush1.msra.mxu0 %v1677
        %1776 = vmatprep.subr.mxu0 %v1674
        %1777 = vmatpush1.msra.mxu0 %v1673
        %1778 = vmatprep.subr.mxu0 %v1670
        %1779 = vmatpush1.msra.mxu0 %v1669
        %1780 = vmatprep.subr.mxu0 %v1666
        %1781 = vmatpush1.msra.mxu0 %v1665
        %1782 = vmatprep.subr.mxu0 %v1662
        %1783 = vmatpush1.msra.mxu0 %v1661
        %1784 = vmatprep.subr.mxu0 %v1658
        %1785 = vmatpush1.msra.mxu0 %v1657
        %1786 = vmatprep.subr.mxu0 %v1654
        %1787 = vmatpush1.msra.mxu0 %v1653
        %1788 = vmatprep.subr.mxu0 %v1650
        %1789 = vmatpush1.msra.mxu0 %v1649
        %1790 = vmatprep.subr.mxu0 %v1646
        %1791 = vmatpush1.msra.mxu0 %v1645
        %1792 = vmatprep.subr.mxu0 %v1642
        %1793 = vmatpush1.msra.mxu0 %v1641
        %1794 = vmatprep.subr.mxu0 %v1638
        %1795 = vmatpush1.msra.mxu0 %v1637
        %1796 = vmatprep.subr.mxu0 %v1634
        %1797 = vmatpush1.msra.mxu0 %v1633
        %1798 = vmatprep.subr.mxu0 0.0
        %1799 = vmatpush2.msra.mxu0 0.0
        %1800 = vmatprep.subr.mxu0 0.0
        %1801 = vmatpush2.msra.mxu0 0.0
        %1802 = vmatprep.subr.mxu0 0.0
        %1803 = vmatpush2.msra.mxu0 0.0
        %1804 = vmatprep.subr.mxu0 0.0
        %1805 = vmatpush2.msra.mxu0 0.0
        %1806 = vmatprep.subr.mxu0 0.0
        %1807 = vmatpush2.msra.mxu0 0.0
        %1808 = vmatprep.subr.mxu0 0.0
        %1809 = vmatpush2.msra.mxu0 0.0
        %1810 = vmatprep.subr.mxu0 0.0
        %1811 = vmatpush2.msra.mxu0 0.0
        %1812 = vmatprep.subr.mxu0 0.0
        %1813 = vmatpush2.msra.mxu0 0.0
        %1814 = vmatprep.subr.mxu0 0.0
        %1815 = vmatpush2.msra.mxu0 0.0
        %1816 = vmatprep.subr.mxu0 0.0
        %1817 = vmatpush2.msra.mxu0 0.0
        %1818 = vmatprep.subr.mxu0 0.0
        %1819 = vmatpush2.msra.mxu0 0.0
        %1820 = vmatprep.subr.mxu0 0.0
        %1821 = vmatpush2.msra.mxu0 0.0
        %1822 = vmatprep.subr.mxu0 0.0
        %1823 = vmatpush2.msra.mxu0 0.0
        %1824 = vmatprep.subr.mxu0 0.0
        %1825 = vmatpush2.msra.mxu0 0.0
        %1826 = vmatprep.subr.mxu0 0.0
        %1827 = vmatpush2.msra.mxu0 0.0
        %1828 = vmatprep.subr.mxu0 0.0
        %1829 = vmatpush2.msra.mxu0 0.0
        %1830 = vmatprep.mubr.f32.mxu0 0.0
        %1831 = vmatmul.mubr.f32.gmra.mxu0 %v1630
        %v1832 = vpop.f32.mrf.mxu0
        %v1833 = vadd.f32 0.0, %v1832
        %v1834 = vpop.f32.mrf.mxu0
        %v1835 = vadd.f32 0.0, %v1834
        %1836 = vdwg.mxu0
        %1837 = vmatprep.subr.mxu0 %v1627
        %1838 = vmatpush1.msra.mxu0 %v1626
        %1839 = vmatprep.subr.mxu0 %v1623
        %1840 = vmatpush1.msra.mxu0 %v1622
        %1841 = vmatprep.subr.mxu0 %v1619
        %1842 = vmatpush1.msra.mxu0 %v1618
        %1843 = vmatprep.subr.mxu0 %v1615
        %1844 = vmatpush1.msra.mxu0 %v1614
        %1845 = vmatprep.subr.mxu0 %v1611
        %1846 = vmatpush1.msra.mxu0 %v1610
        %1847 = vmatprep.subr.mxu0 %v1607
        %1848 = vmatpush1.msra.mxu0 %v1606
        %1849 = vmatprep.subr.mxu0 %v1603
        %1850 = vmatpush1.msra.mxu0 %v1602
        %1851 = vmatprep.subr.mxu0 %v1599
        %1852 = vmatpush1.msra.mxu0 %v1598
        %1853 = vmatprep.subr.mxu0 %v1595
        %1854 = vmatpush1.msra.mxu0 %v1594
        %1855 = vmatprep.subr.mxu0 %v1591
        %1856 = vmatpush1.msra.mxu0 %v1590
        %1857 = vmatprep.subr.mxu0 %v1587
        %1858 = vmatpush1.msra.mxu0 %v1586
        %1859 = vmatprep.subr.mxu0 %v1583
        %1860 = vmatpush1.msra.mxu0 %v1582
        %1861 = vmatprep.subr.mxu0 %v1579
        %1862 = vmatpush1.msra.mxu0 %v1578
        %1863 = vmatprep.subr.mxu0 %v1575
        %1864 = vmatpush1.msra.mxu0 %v1574
        %1865 = vmatprep.subr.mxu0 %v1571
        %1866 = vmatpush1.msra.mxu0 %v1570
        %1867 = vmatprep.subr.mxu0 %v1567
        %1868 = vmatpush1.msra.mxu0 %v1566
        %1869 = vmatprep.subr.mxu0 0.0
        %1870 = vmatpush2.msra.mxu0 0.0
        %1871 = vmatprep.subr.mxu0 0.0
        %1872 = vmatpush2.msra.mxu0 0.0
        %1873 = vmatprep.subr.mxu0 0.0
        %1874 = vmatpush2.msra.mxu0 0.0
        %1875 = vmatprep.subr.mxu0 0.0
        %1876 = vmatpush2.msra.mxu0 0.0
        %1877 = vmatprep.subr.mxu0 0.0
        %1878 = vmatpush2.msra.mxu0 0.0
        %1879 = vmatprep.subr.mxu0 0.0
        %1880 = vmatpush2.msra.mxu0 0.0
        %1881 = vmatprep.subr.mxu0 0.0
        %1882 = vmatpush2.msra.mxu0 0.0
        %1883 = vmatprep.subr.mxu0 0.0
        %1884 = vmatpush2.msra.mxu0 0.0
        %1885 = vmatprep.subr.mxu0 0.0
        %1886 = vmatpush2.msra.mxu0 0.0
        %1887 = vmatprep.subr.mxu0 0.0
        %1888 = vmatpush2.msra.mxu0 0.0
        %1889 = vmatprep.subr.mxu0 0.0
        %1890 = vmatpush2.msra.mxu0 0.0
        %1891 = vmatprep.subr.mxu0 0.0
        %1892 = vmatpush2.msra.mxu0 0.0
        %1893 = vmatprep.subr.mxu0 0.0
        %1894 = vmatpush2.msra.mxu0 0.0
        %1895 = vmatprep.subr.mxu0 0.0
        %1896 = vmatpush2.msra.mxu0 0.0
        %1897 = vmatprep.subr.mxu0 0.0
        %1898 = vmatpush2.msra.mxu0 0.0
        %1899 = vmatprep.subr.mxu0 0.0
        %1900 = vmatpush2.msra.mxu0 0.0
        %1901 = vmatprep.mubr.f32.mxu0 0.0
        %1902 = vmatmul.mubr.f32.gmra.mxu0 %v1563
        %v1903 = vpop.f32.mrf.mxu0
        %v1904 = vadd.f32 %v1762, %v1903
        %v1905 = vpop.f32.mrf.mxu0
        %v1906 = vadd.f32 %v1764, %v1905
        %1907 = vdwg.mxu0
        %1908 = vmatprep.subr.mxu0 %v1629
        %1909 = vmatpush1.msra.mxu0 %v1628
        %1910 = vmatprep.subr.mxu0 %v1625
        %1911 = vmatpush1.msra.mxu0 %v1624
        %1912 = vmatprep.subr.mxu0 %v1621
        %1913 = vmatpush1.msra.mxu0 %v1620
        %1914 = vmatprep.subr.mxu0 %v1617
        %1915 = vmatpush1.msra.mxu0 %v1616
        %1916 = vmatprep.subr.mxu0 %v1613
        %1917 = vmatpush1.msra.mxu0 %v1612
        %1918 = vmatprep.subr.mxu0 %v1609
        %1919 = vmatpush1.msra.mxu0 %v1608
        %1920 = vmatprep.subr.mxu0 %v1605
        %1921 = vmatpush1.msra.mxu0 %v1604
        %1922 = vmatprep.subr.mxu0 %v1601
        %1923 = vmatpush1.msra.mxu0 %v1600
        %1924 = vmatprep.subr.mxu0 %v1597
        %1925 = vmatpush1.msra.mxu0 %v1596
        %1926 = vmatprep.subr.mxu0 %v1593
        %1927 = vmatpush1.msra.mxu0 %v1592
        %1928 = vmatprep.subr.mxu0 %v1589
        %1929 = vmatpush1.msra.mxu0 %v1588
        %1930 = vmatprep.subr.mxu0 %v1585
        %1931 = vmatpush1.msra.mxu0 %v1584
        %1932 = vmatprep.subr.mxu0 %v1581
        %1933 = vmatpush1.msra.mxu0 %v1580
        %1934 = vmatprep.subr.mxu0 %v1577
        %1935 = vmatpush1.msra.mxu0 %v1576
        %1936 = vmatprep.subr.mxu0 %v1573
        %1937 = vmatpush1.msra.mxu0 %v1572
        %1938 = vmatprep.subr.mxu0 %v1569
        %1939 = vmatpush1.msra.mxu0 %v1568
        %1940 = vmatprep.subr.mxu0 0.0
        %1941 = vmatpush2.msra.mxu0 0.0
        %1942 = vmatprep.subr.mxu0 0.0
        %1943 = vmatpush2.msra.mxu0 0.0
        %1944 = vmatprep.subr.mxu0 0.0
        %1945 = vmatpush2.msra.mxu0 0.0
        %1946 = vmatprep.subr.mxu0 0.0
        %1947 = vmatpush2.msra.mxu0 0.0
        %1948 = vmatprep.subr.mxu0 0.0
        %1949 = vmatpush2.msra.mxu0 0.0
        %1950 = vmatprep.subr.mxu0 0.0
        %1951 = vmatpush2.msra.mxu0 0.0
        %1952 = vmatprep.subr.mxu0 0.0
        %1953 = vmatpush2.msra.mxu0 0.0
        %1954 = vmatprep.subr.mxu0 0.0
        %1955 = vmatpush2.msra.mxu0 0.0
        %1956 = vmatprep.subr.mxu0 0.0
        %1957 = vmatpush2.msra.mxu0 0.0
        %1958 = vmatprep.subr.mxu0 0.0
        %1959 = vmatpush2.msra.mxu0 0.0
        %1960 = vmatprep.subr.mxu0 0.0
        %1961 = vmatpush2.msra.mxu0 0.0
        %1962 = vmatprep.subr.mxu0 0.0
        %1963 = vmatpush2.msra.mxu0 0.0
        %1964 = vmatprep.subr.mxu0 0.0
        %1965 = vmatpush2.msra.mxu0 0.0
        %1966 = vmatprep.subr.mxu0 0.0
        %1967 = vmatpush2.msra.mxu0 0.0
        %1968 = vmatprep.subr.mxu0 0.0
        %1969 = vmatpush2.msra.mxu0 0.0
        %1970 = vmatprep.subr.mxu0 0.0
        %1971 = vmatpush2.msra.mxu0 0.0
        %1972 = vmatprep.mubr.f32.mxu0 0.0
        %1973 = vmatmul.mubr.f32.gmra.mxu0 %v1563
        %v1974 = vpop.f32.mrf.mxu0
        %v1975 = vadd.f32 %v1833, %v1974
        %v1976 = vpop.f32.mrf.mxu0
        %v1977 = vadd.f32 %v1835, %v1976
        %1978 = vdwg.mxu0
        %v1979 = vld [vmem:[%s6] sm:$0xf]
        %v1981 = vlaneseq
        %v1982 = vshrl.u32 %v1981, 7
        %v1983 = vsub.s32 0, %v1982
        %v1984 = vrot.slane %v1979, %v1983
        %v1985 = vlaneseq
        %v1986 = vshrl.u32 %v1985, 7
        %v1987 = vsub.s32 1, %v1986
        %v1988 = vrot.slane %v1979, %v1987
        %v1989 = vlaneseq
        %v1990 = vshrl.u32 %v1989, 7
        %v1991 = vsub.s32 2, %v1990
        %v1992 = vrot.slane %v1979, %v1991
        %v1993 = vlaneseq
        %v1994 = vshrl.u32 %v1993, 7
        %v1995 = vsub.s32 3, %v1994
        %v1996 = vrot.slane %v1979, %v1995
        %v2001 = vadd.f32 %v1904, %v1984
        %v2002 = vadd.f32 %v1906, %v1988
        %v2003 = vadd.f32 %v1975, %v1992
        %v2004 = vadd.f32 %v1977, %v1996
        %v2005 = vld [vmem:[%s1294] sm:$0xff]
        %v2006 = vxor.u32 %v2001, 2147483648
        %v2007 = vmul.f32 %v2006, 1.442695
        %v2008 = vpow.pop %v2007
        %v2009 = vadd.f32 %v2008, 1.0
        %v2010 = vrcp.pop %v2009
        %v2011 = vmul.f32 1.0, %v2010
        %v2012 = vxor.u32 %v2002, 2147483648
        %v2013 = vmul.f32 %v2012, 1.442695
        %v2014 = vpow.pop %v2013
        %v2015 = vadd.f32 %v2014, 1.0
        %v2016 = vrcp.pop %v2015
        %v2017 = vmul.f32 1.0, %v2016
        %v2018 = vtanh.pop %v2003
        %v2019 = vxor.u32 %v2004, 2147483648
        %v2020 = vmul.f32 %v2019, 1.442695
        %v2021 = vpow.pop %v2020
        %v2022 = vadd.f32 %v2021, 1.0
        %v2023 = vrcp.pop %v2022
        %v2024 = vmul.f32 1.0, %v2023
        %v2025 = vmul.f32 %v2017, %v2005
        %v2026 = vmul.f32 %v2011, %v2018
        %v2027 = vadd.f32 %v2025, %v2026
        %v2028 = vtanh.pop %v2027
        %v2029 = vmul.f32 %v2024, %v2028
        %2030 = vst [vmem:[%s918] sm:$0xff] %v2029
        %2031 = vst [vmem:[%s1294] sm:$0xff] %v2027
        %s2032 = scalar_lea.vmem %s192, 8 [#allocation13]
        %2033 = vst [vmem:[%s2032] sm:$0xff] %v2029
        %s2034 = scalar_lea.vmem [#allocation6], 64
        %v2035 = vld [vmem:[%s2034] sm:$0xff]
        %v2036 = vld [vmem:[%s2034 + $0x8] sm:$0xff]
        %v2037 = vld [vmem:[%s2034 + $0x10] sm:$0xff]
        %v2038 = vld [vmem:[%s2034 + $0x18] sm:$0xff]
        %v2039 = vld [vmem:[#allocation7] sm:$0xff]
        %v2040 = vld [vmem:[#allocation4] sm:$0xff]
        %v2041 = vld [vmem:[#allocation4 + $0x8] sm:$0xff]
        %v2042 = vld [vmem:[#allocation4 + $0x10] sm:$0xff]
        %v2043 = vld [vmem:[#allocation4 + $0x18] sm:$0xff]
        %v2044 = vld [vmem:[#allocation4 + $0x20] sm:$0xff]
        %v2045 = vld [vmem:[#allocation4 + $0x28] sm:$0xff]
        %v2046 = vld [vmem:[#allocation4 + $0x30] sm:$0xff]
        %v2047 = vld [vmem:[#allocation4 + $0x38] sm:$0xff]
        %v2048 = vld [vmem:[#allocation4 + $0x40] sm:$0xff]
        %v2049 = vld [vmem:[#allocation4 + $0x48] sm:$0xff]
        %v2050 = vld [vmem:[#allocation4 + $0x50] sm:$0xff]
        %v2051 = vld [vmem:[#allocation4 + $0x58] sm:$0xff]
        %v2052 = vld [vmem:[#allocation4 + $0x60] sm:$0xff]
        %v2053 = vld [vmem:[#allocation4 + $0x68] sm:$0xff]
        %v2054 = vld [vmem:[#allocation4 + $0x70] sm:$0xff]
        %v2055 = vld [vmem:[#allocation4 + $0x78] sm:$0xff]
        %v2056 = vld [vmem:[#allocation4 + $0x80] sm:$0xff]
        %v2057 = vld [vmem:[#allocation4 + $0x88] sm:$0xff]
        %v2058 = vld [vmem:[#allocation4 + $0x90] sm:$0xff]
        %v2059 = vld [vmem:[#allocation4 + $0x98] sm:$0xff]
        %v2060 = vld [vmem:[#allocation4 + $0xa0] sm:$0xff]
        %v2061 = vld [vmem:[#allocation4 + $0xa8] sm:$0xff]
        %v2062 = vld [vmem:[#allocation4 + $0xb0] sm:$0xff]
        %v2063 = vld [vmem:[#allocation4 + $0xb8] sm:$0xff]
        %v2064 = vld [vmem:[#allocation4 + $0xc0] sm:$0xff]
        %v2065 = vld [vmem:[#allocation4 + $0xc8] sm:$0xff]
        %v2066 = vld [vmem:[#allocation4 + $0xd0] sm:$0xff]
        %v2067 = vld [vmem:[#allocation4 + $0xd8] sm:$0xff]
        %v2068 = vld [vmem:[#allocation4 + $0xe0] sm:$0xff]
        %v2069 = vld [vmem:[#allocation4 + $0xe8] sm:$0xff]
        %v2070 = vld [vmem:[#allocation4 + $0xf0] sm:$0xff]
        %v2071 = vld [vmem:[#allocation4 + $0xf8] sm:$0xff]
        %v2072 = vld [vmem:[#allocation4 + $0x100] sm:$0xff]
        %v2073 = vld [vmem:[#allocation4 + $0x108] sm:$0xff]
        %v2074 = vld [vmem:[#allocation4 + $0x110] sm:$0xff]
        %v2075 = vld [vmem:[#allocation4 + $0x118] sm:$0xff]
        %v2076 = vld [vmem:[#allocation4 + $0x120] sm:$0xff]
        %v2077 = vld [vmem:[#allocation4 + $0x128] sm:$0xff]
        %v2078 = vld [vmem:[#allocation4 + $0x130] sm:$0xff]
        %v2079 = vld [vmem:[#allocation4 + $0x138] sm:$0xff]
        %v2080 = vld [vmem:[#allocation4 + $0x140] sm:$0xff]
        %v2081 = vld [vmem:[#allocation4 + $0x148] sm:$0xff]
        %v2082 = vld [vmem:[#allocation4 + $0x150] sm:$0xff]
        %v2083 = vld [vmem:[#allocation4 + $0x158] sm:$0xff]
        %v2084 = vld [vmem:[#allocation4 + $0x160] sm:$0xff]
        %v2085 = vld [vmem:[#allocation4 + $0x168] sm:$0xff]
        %v2086 = vld [vmem:[#allocation4 + $0x170] sm:$0xff]
        %v2087 = vld [vmem:[#allocation4 + $0x178] sm:$0xff]
        %v2088 = vld [vmem:[#allocation4 + $0x180] sm:$0xff]
        %v2089 = vld [vmem:[#allocation4 + $0x188] sm:$0xff]
        %v2090 = vld [vmem:[#allocation4 + $0x190] sm:$0xff]
        %v2091 = vld [vmem:[#allocation4 + $0x198] sm:$0xff]
        %v2092 = vld [vmem:[#allocation4 + $0x1a0] sm:$0xff]
        %v2093 = vld [vmem:[#allocation4 + $0x1a8] sm:$0xff]
        %v2094 = vld [vmem:[#allocation4 + $0x1b0] sm:$0xff]
        %v2095 = vld [vmem:[#allocation4 + $0x1b8] sm:$0xff]
        %v2096 = vld [vmem:[#allocation4 + $0x1c0] sm:$0xff]
        %v2097 = vld [vmem:[#allocation4 + $0x1c8] sm:$0xff]
        %v2098 = vld [vmem:[#allocation4 + $0x1d0] sm:$0xff]
        %v2099 = vld [vmem:[#allocation4 + $0x1d8] sm:$0xff]
        %v2100 = vld [vmem:[#allocation4 + $0x1e0] sm:$0xff]
        %v2101 = vld [vmem:[#allocation4 + $0x1e8] sm:$0xff]
        %v2102 = vld [vmem:[#allocation4 + $0x1f0] sm:$0xff]
        %v2103 = vld [vmem:[#allocation4 + $0x1f8] sm:$0xff]
        %2104 = vmatprep.subr.mxu0 %v2101
        %2105 = vmatpush1.msra.mxu0 %v2100
        %2106 = vmatprep.subr.mxu0 %v2097
        %2107 = vmatpush1.msra.mxu0 %v2096
        %2108 = vmatprep.subr.mxu0 %v2093
        %2109 = vmatpush1.msra.mxu0 %v2092
        %2110 = vmatprep.subr.mxu0 %v2089
        %2111 = vmatpush1.msra.mxu0 %v2088
        %2112 = vmatprep.subr.mxu0 %v2085
        %2113 = vmatpush1.msra.mxu0 %v2084
        %2114 = vmatprep.subr.mxu0 %v2081
        %2115 = vmatpush1.msra.mxu0 %v2080
        %2116 = vmatprep.subr.mxu0 %v2077
        %2117 = vmatpush1.msra.mxu0 %v2076
        %2118 = vmatprep.subr.mxu0 %v2073
        %2119 = vmatpush1.msra.mxu0 %v2072
        %2120 = vmatprep.subr.mxu0 %v2069
        %2121 = vmatpush1.msra.mxu0 %v2068
        %2122 = vmatprep.subr.mxu0 %v2065
        %2123 = vmatpush1.msra.mxu0 %v2064
        %2124 = vmatprep.subr.mxu0 %v2061
        %2125 = vmatpush1.msra.mxu0 %v2060
        %2126 = vmatprep.subr.mxu0 %v2057
        %2127 = vmatpush1.msra.mxu0 %v2056
        %2128 = vmatprep.subr.mxu0 %v2053
        %2129 = vmatpush1.msra.mxu0 %v2052
        %2130 = vmatprep.subr.mxu0 %v2049
        %2131 = vmatpush1.msra.mxu0 %v2048
        %2132 = vmatprep.subr.mxu0 %v2045
        %2133 = vmatpush1.msra.mxu0 %v2044
        %2134 = vmatprep.subr.mxu0 %v2041
        %2135 = vmatpush1.msra.mxu0 %v2040
        %2136 = vmatprep.subr.mxu0 0.0
        %2137 = vmatpush2.msra.mxu0 0.0
        %2138 = vmatprep.subr.mxu0 0.0
        %2139 = vmatpush2.msra.mxu0 0.0
        %2140 = vmatprep.subr.mxu0 0.0
        %2141 = vmatpush2.msra.mxu0 0.0
        %2142 = vmatprep.subr.mxu0 0.0
        %2143 = vmatpush2.msra.mxu0 0.0
        %2144 = vmatprep.subr.mxu0 0.0
        %2145 = vmatpush2.msra.mxu0 0.0
        %2146 = vmatprep.subr.mxu0 0.0
        %2147 = vmatpush2.msra.mxu0 0.0
        %2148 = vmatprep.subr.mxu0 0.0
        %2149 = vmatpush2.msra.mxu0 0.0
        %2150 = vmatprep.subr.mxu0 0.0
        %2151 = vmatpush2.msra.mxu0 0.0
        %2152 = vmatprep.subr.mxu0 0.0
        %2153 = vmatpush2.msra.mxu0 0.0
        %2154 = vmatprep.subr.mxu0 0.0
        %2155 = vmatpush2.msra.mxu0 0.0
        %2156 = vmatprep.subr.mxu0 0.0
        %2157 = vmatpush2.msra.mxu0 0.0
        %2158 = vmatprep.subr.mxu0 0.0
        %2159 = vmatpush2.msra.mxu0 0.0
        %2160 = vmatprep.subr.mxu0 0.0
        %2161 = vmatpush2.msra.mxu0 0.0
        %2162 = vmatprep.subr.mxu0 0.0
        %2163 = vmatpush2.msra.mxu0 0.0
        %2164 = vmatprep.subr.mxu0 0.0
        %2165 = vmatpush2.msra.mxu0 0.0
        %2166 = vmatprep.subr.mxu0 0.0
        %2167 = vmatpush2.msra.mxu0 0.0
        %2168 = vmatprep.mubr.f32.mxu0 0.0
        %2169 = vmatmul.mubr.f32.gmra.mxu0 %v2039
        %v2170 = vpop.f32.mrf.mxu0
        %v2171 = vadd.f32 0.0, %v2170
        %v2172 = vpop.f32.mrf.mxu0
        %v2173 = vadd.f32 0.0, %v2172
        %2174 = vdwg.mxu0
        %2175 = vmatprep.subr.mxu0 %v2103
        %2176 = vmatpush1.msra.mxu0 %v2102
        %2177 = vmatprep.subr.mxu0 %v2099
        %2178 = vmatpush1.msra.mxu0 %v2098
        %2179 = vmatprep.subr.mxu0 %v2095
        %2180 = vmatpush1.msra.mxu0 %v2094
        %2181 = vmatprep.subr.mxu0 %v2091
        %2182 = vmatpush1.msra.mxu0 %v2090
        %2183 = vmatprep.subr.mxu0 %v2087
        %2184 = vmatpush1.msra.mxu0 %v2086
        %2185 = vmatprep.subr.mxu0 %v2083
        %2186 = vmatpush1.msra.mxu0 %v2082
        %2187 = vmatprep.subr.mxu0 %v2079
        %2188 = vmatpush1.msra.mxu0 %v2078
        %2189 = vmatprep.subr.mxu0 %v2075
        %2190 = vmatpush1.msra.mxu0 %v2074
        %2191 = vmatprep.subr.mxu0 %v2071
        %2192 = vmatpush1.msra.mxu0 %v2070
        %2193 = vmatprep.subr.mxu0 %v2067
        %2194 = vmatpush1.msra.mxu0 %v2066
        %2195 = vmatprep.subr.mxu0 %v2063
        %2196 = vmatpush1.msra.mxu0 %v2062
        %2197 = vmatprep.subr.mxu0 %v2059
        %2198 = vmatpush1.msra.mxu0 %v2058
        %2199 = vmatprep.subr.mxu0 %v2055
        %2200 = vmatpush1.msra.mxu0 %v2054
        %2201 = vmatprep.subr.mxu0 %v2051
        %2202 = vmatpush1.msra.mxu0 %v2050
        %2203 = vmatprep.subr.mxu0 %v2047
        %2204 = vmatpush1.msra.mxu0 %v2046
        %2205 = vmatprep.subr.mxu0 %v2043
        %2206 = vmatpush1.msra.mxu0 %v2042
        %2207 = vmatprep.subr.mxu0 0.0
        %2208 = vmatpush2.msra.mxu0 0.0
        %2209 = vmatprep.subr.mxu0 0.0
        %2210 = vmatpush2.msra.mxu0 0.0
        %2211 = vmatprep.subr.mxu0 0.0
        %2212 = vmatpush2.msra.mxu0 0.0
        %2213 = vmatprep.subr.mxu0 0.0
        %2214 = vmatpush2.msra.mxu0 0.0
        %2215 = vmatprep.subr.mxu0 0.0
        %2216 = vmatpush2.msra.mxu0 0.0
        %2217 = vmatprep.subr.mxu0 0.0
        %2218 = vmatpush2.msra.mxu0 0.0
        %2219 = vmatprep.subr.mxu0 0.0
        %2220 = vmatpush2.msra.mxu0 0.0
        %2221 = vmatprep.subr.mxu0 0.0
        %2222 = vmatpush2.msra.mxu0 0.0
        %2223 = vmatprep.subr.mxu0 0.0
        %2224 = vmatpush2.msra.mxu0 0.0
        %2225 = vmatprep.subr.mxu0 0.0
        %2226 = vmatpush2.msra.mxu0 0.0
        %2227 = vmatprep.subr.mxu0 0.0
        %2228 = vmatpush2.msra.mxu0 0.0
        %2229 = vmatprep.subr.mxu0 0.0
        %2230 = vmatpush2.msra.mxu0 0.0
        %2231 = vmatprep.subr.mxu0 0.0
        %2232 = vmatpush2.msra.mxu0 0.0
        %2233 = vmatprep.subr.mxu0 0.0
        %2234 = vmatpush2.msra.mxu0 0.0
        %2235 = vmatprep.subr.mxu0 0.0
        %2236 = vmatpush2.msra.mxu0 0.0
        %2237 = vmatprep.subr.mxu0 0.0
        %2238 = vmatpush2.msra.mxu0 0.0
        %2239 = vmatprep.mubr.f32.mxu0 0.0
        %2240 = vmatmul.mubr.f32.gmra.mxu0 %v2039
        %v2241 = vpop.f32.mrf.mxu0
        %v2242 = vadd.f32 0.0, %v2241
        %v2243 = vpop.f32.mrf.mxu0
        %v2244 = vadd.f32 0.0, %v2243
        %2245 = vdwg.mxu0
        %v2246 = vadd.f32 %v2035, %v2171
        %v2247 = vadd.f32 %v2036, %v2173
        %v2248 = vadd.f32 %v2037, %v2242
        %v2249 = vadd.f32 %v2038, %v2244
        %v2250 = vld [vmem:[#allocation8] sm:$0xff]
        %v2251 = vxor.u32 %v2246, 2147483648
        %v2252 = vmul.f32 %v2251, 1.442695
        %v2253 = vpow.pop %v2252
        %v2254 = vadd.f32 %v2253, 1.0
        %v2255 = vrcp.pop %v2254
        %v2256 = vmul.f32 1.0, %v2255
        %v2257 = vxor.u32 %v2247, 2147483648
        %v2258 = vmul.f32 %v2257, 1.442695
        %v2259 = vpow.pop %v2258
        %v2260 = vadd.f32 %v2259, 1.0
        %v2261 = vrcp.pop %v2260
        %v2262 = vmul.f32 1.0, %v2261
        %v2263 = vtanh.pop %v2248
        %v2264 = vxor.u32 %v2249, 2147483648
        %v2265 = vmul.f32 %v2264, 1.442695
        %v2266 = vpow.pop %v2265
        %v2267 = vadd.f32 %v2266, 1.0
        %v2268 = vrcp.pop %v2267
        %v2269 = vmul.f32 1.0, %v2268
        %v2270 = vmul.f32 %v2262, %v2250
        %v2271 = vmul.f32 %v2256, %v2263
        %v2272 = vadd.f32 %v2270, %v2271
        %v2273 = vtanh.pop %v2272
        %v2274 = vmul.f32 %v2269, %v2273
        %2275 = vst [vmem:[#allocation7] sm:$0xff] %v2274
        %2276 = vst [vmem:[#allocation8] sm:$0xff] %v2272
        %v2277 = vld [vmem:[#allocation3] sm:$0xff]
        %v2278 = vld [vmem:[#allocation3 + $0x8] sm:$0xff]
        %v2279 = vld [vmem:[#allocation3 + $0x10] sm:$0xff]
        %v2280 = vld [vmem:[#allocation3 + $0x18] sm:$0xff]
        %v2281 = vld [vmem:[#allocation3 + $0x20] sm:$0xff]
        %v2282 = vld [vmem:[#allocation3 + $0x28] sm:$0xff]
        %v2283 = vld [vmem:[#allocation3 + $0x30] sm:$0xff]
        %v2284 = vld [vmem:[#allocation3 + $0x38] sm:$0xff]
        %v2285 = vld [vmem:[#allocation3 + $0x40] sm:$0xff]
        %v2286 = vld [vmem:[#allocation3 + $0x48] sm:$0xff]
        %v2287 = vld [vmem:[#allocation3 + $0x50] sm:$0xff]
        %v2288 = vld [vmem:[#allocation3 + $0x58] sm:$0xff]
        %v2289 = vld [vmem:[#allocation3 + $0x60] sm:$0xff]
        %v2290 = vld [vmem:[#allocation3 + $0x68] sm:$0xff]
        %v2291 = vld [vmem:[#allocation3 + $0x70] sm:$0xff]
        %v2292 = vld [vmem:[#allocation3 + $0x78] sm:$0xff]
        %v2293 = vld [vmem:[#allocation3 + $0x80] sm:$0xff]
        %v2294 = vld [vmem:[#allocation3 + $0x88] sm:$0xff]
        %v2295 = vld [vmem:[#allocation3 + $0x90] sm:$0xff]
        %v2296 = vld [vmem:[#allocation3 + $0x98] sm:$0xff]
        %v2297 = vld [vmem:[#allocation3 + $0xa0] sm:$0xff]
        %v2298 = vld [vmem:[#allocation3 + $0xa8] sm:$0xff]
        %v2299 = vld [vmem:[#allocation3 + $0xb0] sm:$0xff]
        %v2300 = vld [vmem:[#allocation3 + $0xb8] sm:$0xff]
        %v2301 = vld [vmem:[#allocation3 + $0xc0] sm:$0xff]
        %v2302 = vld [vmem:[#allocation3 + $0xc8] sm:$0xff]
        %v2303 = vld [vmem:[#allocation3 + $0xd0] sm:$0xff]
        %v2304 = vld [vmem:[#allocation3 + $0xd8] sm:$0xff]
        %v2305 = vld [vmem:[#allocation3 + $0xe0] sm:$0xff]
        %v2306 = vld [vmem:[#allocation3 + $0xe8] sm:$0xff]
        %v2307 = vld [vmem:[#allocation3 + $0xf0] sm:$0xff]
        %v2308 = vld [vmem:[#allocation3 + $0xf8] sm:$0xff]
        %v2309 = vld [vmem:[#allocation3 + $0x100] sm:$0xff]
        %v2310 = vld [vmem:[#allocation3 + $0x108] sm:$0xff]
        %v2311 = vld [vmem:[#allocation3 + $0x110] sm:$0xff]
        %v2312 = vld [vmem:[#allocation3 + $0x118] sm:$0xff]
        %v2313 = vld [vmem:[#allocation3 + $0x120] sm:$0xff]
        %v2314 = vld [vmem:[#allocation3 + $0x128] sm:$0xff]
        %v2315 = vld [vmem:[#allocation3 + $0x130] sm:$0xff]
        %v2316 = vld [vmem:[#allocation3 + $0x138] sm:$0xff]
        %v2317 = vld [vmem:[#allocation3 + $0x140] sm:$0xff]
        %v2318 = vld [vmem:[#allocation3 + $0x148] sm:$0xff]
        %v2319 = vld [vmem:[#allocation3 + $0x150] sm:$0xff]
        %v2320 = vld [vmem:[#allocation3 + $0x158] sm:$0xff]
        %v2321 = vld [vmem:[#allocation3 + $0x160] sm:$0xff]
        %v2322 = vld [vmem:[#allocation3 + $0x168] sm:$0xff]
        %v2323 = vld [vmem:[#allocation3 + $0x170] sm:$0xff]
        %v2324 = vld [vmem:[#allocation3 + $0x178] sm:$0xff]
        %v2325 = vld [vmem:[#allocation3 + $0x180] sm:$0xff]
        %v2326 = vld [vmem:[#allocation3 + $0x188] sm:$0xff]
        %v2327 = vld [vmem:[#allocation3 + $0x190] sm:$0xff]
        %v2328 = vld [vmem:[#allocation3 + $0x198] sm:$0xff]
        %v2329 = vld [vmem:[#allocation3 + $0x1a0] sm:$0xff]
        %v2330 = vld [vmem:[#allocation3 + $0x1a8] sm:$0xff]
        %v2331 = vld [vmem:[#allocation3 + $0x1b0] sm:$0xff]
        %v2332 = vld [vmem:[#allocation3 + $0x1b8] sm:$0xff]
        %v2333 = vld [vmem:[#allocation3 + $0x1c0] sm:$0xff]
        %v2334 = vld [vmem:[#allocation3 + $0x1c8] sm:$0xff]
        %v2335 = vld [vmem:[#allocation3 + $0x1d0] sm:$0xff]
        %v2336 = vld [vmem:[#allocation3 + $0x1d8] sm:$0xff]
        %v2337 = vld [vmem:[#allocation3 + $0x1e0] sm:$0xff]
        %v2338 = vld [vmem:[#allocation3 + $0x1e8] sm:$0xff]
        %v2339 = vld [vmem:[#allocation3 + $0x1f0] sm:$0xff]
        %v2340 = vld [vmem:[#allocation3 + $0x1f8] sm:$0xff]
        %v2341 = vld [vmem:[%s918] sm:$0xff]
        %v2342 = vld [vmem:[#allocation5] sm:$0xff]
        %v2343 = vld [vmem:[#allocation5 + $0x8] sm:$0xff]
        %v2344 = vld [vmem:[#allocation5 + $0x10] sm:$0xff]
        %v2345 = vld [vmem:[#allocation5 + $0x18] sm:$0xff]
        %v2346 = vld [vmem:[#allocation5 + $0x20] sm:$0xff]
        %v2347 = vld [vmem:[#allocation5 + $0x28] sm:$0xff]
        %v2348 = vld [vmem:[#allocation5 + $0x30] sm:$0xff]
        %v2349 = vld [vmem:[#allocation5 + $0x38] sm:$0xff]
        %v2350 = vld [vmem:[#allocation5 + $0x40] sm:$0xff]
        %v2351 = vld [vmem:[#allocation5 + $0x48] sm:$0xff]
        %v2352 = vld [vmem:[#allocation5 + $0x50] sm:$0xff]
        %v2353 = vld [vmem:[#allocation5 + $0x58] sm:$0xff]
        %v2354 = vld [vmem:[#allocation5 + $0x60] sm:$0xff]
        %v2355 = vld [vmem:[#allocation5 + $0x68] sm:$0xff]
        %v2356 = vld [vmem:[#allocation5 + $0x70] sm:$0xff]
        %v2357 = vld [vmem:[#allocation5 + $0x78] sm:$0xff]
        %v2358 = vld [vmem:[#allocation5 + $0x80] sm:$0xff]
        %v2359 = vld [vmem:[#allocation5 + $0x88] sm:$0xff]
        %v2360 = vld [vmem:[#allocation5 + $0x90] sm:$0xff]
        %v2361 = vld [vmem:[#allocation5 + $0x98] sm:$0xff]
        %v2362 = vld [vmem:[#allocation5 + $0xa0] sm:$0xff]
        %v2363 = vld [vmem:[#allocation5 + $0xa8] sm:$0xff]
        %v2364 = vld [vmem:[#allocation5 + $0xb0] sm:$0xff]
        %v2365 = vld [vmem:[#allocation5 + $0xb8] sm:$0xff]
        %v2366 = vld [vmem:[#allocation5 + $0xc0] sm:$0xff]
        %v2367 = vld [vmem:[#allocation5 + $0xc8] sm:$0xff]
        %v2368 = vld [vmem:[#allocation5 + $0xd0] sm:$0xff]
        %v2369 = vld [vmem:[#allocation5 + $0xd8] sm:$0xff]
        %v2370 = vld [vmem:[#allocation5 + $0xe0] sm:$0xff]
        %v2371 = vld [vmem:[#allocation5 + $0xe8] sm:$0xff]
        %v2372 = vld [vmem:[#allocation5 + $0xf0] sm:$0xff]
        %v2373 = vld [vmem:[#allocation5 + $0xf8] sm:$0xff]
        %v2374 = vld [vmem:[#allocation5 + $0x100] sm:$0xff]
        %v2375 = vld [vmem:[#allocation5 + $0x108] sm:$0xff]
        %v2376 = vld [vmem:[#allocation5 + $0x110] sm:$0xff]
        %v2377 = vld [vmem:[#allocation5 + $0x118] sm:$0xff]
        %v2378 = vld [vmem:[#allocation5 + $0x120] sm:$0xff]
        %v2379 = vld [vmem:[#allocation5 + $0x128] sm:$0xff]
        %v2380 = vld [vmem:[#allocation5 + $0x130] sm:$0xff]
        %v2381 = vld [vmem:[#allocation5 + $0x138] sm:$0xff]
        %v2382 = vld [vmem:[#allocation5 + $0x140] sm:$0xff]
        %v2383 = vld [vmem:[#allocation5 + $0x148] sm:$0xff]
        %v2384 = vld [vmem:[#allocation5 + $0x150] sm:$0xff]
        %v2385 = vld [vmem:[#allocation5 + $0x158] sm:$0xff]
        %v2386 = vld [vmem:[#allocation5 + $0x160] sm:$0xff]
        %v2387 = vld [vmem:[#allocation5 + $0x168] sm:$0xff]
        %v2388 = vld [vmem:[#allocation5 + $0x170] sm:$0xff]
        %v2389 = vld [vmem:[#allocation5 + $0x178] sm:$0xff]
        %v2390 = vld [vmem:[#allocation5 + $0x180] sm:$0xff]
        %v2391 = vld [vmem:[#allocation5 + $0x188] sm:$0xff]
        %v2392 = vld [vmem:[#allocation5 + $0x190] sm:$0xff]
        %v2393 = vld [vmem:[#allocation5 + $0x198] sm:$0xff]
        %v2394 = vld [vmem:[#allocation5 + $0x1a0] sm:$0xff]
        %v2395 = vld [vmem:[#allocation5 + $0x1a8] sm:$0xff]
        %v2396 = vld [vmem:[#allocation5 + $0x1b0] sm:$0xff]
        %v2397 = vld [vmem:[#allocation5 + $0x1b8] sm:$0xff]
        %v2398 = vld [vmem:[#allocation5 + $0x1c0] sm:$0xff]
        %v2399 = vld [vmem:[#allocation5 + $0x1c8] sm:$0xff]
        %v2400 = vld [vmem:[#allocation5 + $0x1d0] sm:$0xff]
        %v2401 = vld [vmem:[#allocation5 + $0x1d8] sm:$0xff]
        %v2402 = vld [vmem:[#allocation5 + $0x1e0] sm:$0xff]
        %v2403 = vld [vmem:[#allocation5 + $0x1e8] sm:$0xff]
        %v2404 = vld [vmem:[#allocation5 + $0x1f0] sm:$0xff]
        %v2405 = vld [vmem:[#allocation5 + $0x1f8] sm:$0xff]
        %2406 = vmatprep.subr.mxu0 %v2403
        %2407 = vmatpush1.msra.mxu0 %v2402
        %2408 = vmatprep.subr.mxu0 %v2399
        %2409 = vmatpush1.msra.mxu0 %v2398
        %2410 = vmatprep.subr.mxu0 %v2395
        %2411 = vmatpush1.msra.mxu0 %v2394
        %2412 = vmatprep.subr.mxu0 %v2391
        %2413 = vmatpush1.msra.mxu0 %v2390
        %2414 = vmatprep.subr.mxu0 %v2387
        %2415 = vmatpush1.msra.mxu0 %v2386
        %2416 = vmatprep.subr.mxu0 %v2383
        %2417 = vmatpush1.msra.mxu0 %v2382
        %2418 = vmatprep.subr.mxu0 %v2379
        %2419 = vmatpush1.msra.mxu0 %v2378
        %2420 = vmatprep.subr.mxu0 %v2375
        %2421 = vmatpush1.msra.mxu0 %v2374
        %2422 = vmatprep.subr.mxu0 %v2371
        %2423 = vmatpush1.msra.mxu0 %v2370
        %2424 = vmatprep.subr.mxu0 %v2367
        %2425 = vmatpush1.msra.mxu0 %v2366
        %2426 = vmatprep.subr.mxu0 %v2363
        %2427 = vmatpush1.msra.mxu0 %v2362
        %2428 = vmatprep.subr.mxu0 %v2359
        %2429 = vmatpush1.msra.mxu0 %v2358
        %2430 = vmatprep.subr.mxu0 %v2355
        %2431 = vmatpush1.msra.mxu0 %v2354
        %2432 = vmatprep.subr.mxu0 %v2351
        %2433 = vmatpush1.msra.mxu0 %v2350
        %2434 = vmatprep.subr.mxu0 %v2347
        %2435 = vmatpush1.msra.mxu0 %v2346
        %2436 = vmatprep.subr.mxu0 %v2343
        %2437 = vmatpush1.msra.mxu0 %v2342
        %2438 = vmatprep.subr.mxu0 0.0
        %2439 = vmatpush2.msra.mxu0 0.0
        %2440 = vmatprep.subr.mxu0 0.0
        %2441 = vmatpush2.msra.mxu0 0.0
        %2442 = vmatprep.subr.mxu0 0.0
        %2443 = vmatpush2.msra.mxu0 0.0
        %2444 = vmatprep.subr.mxu0 0.0
        %2445 = vmatpush2.msra.mxu0 0.0
        %2446 = vmatprep.subr.mxu0 0.0
        %2447 = vmatpush2.msra.mxu0 0.0
        %2448 = vmatprep.subr.mxu0 0.0
        %2449 = vmatpush2.msra.mxu0 0.0
        %2450 = vmatprep.subr.mxu0 0.0
        %2451 = vmatpush2.msra.mxu0 0.0
        %2452 = vmatprep.subr.mxu0 0.0
        %2453 = vmatpush2.msra.mxu0 0.0
        %2454 = vmatprep.subr.mxu0 0.0
        %2455 = vmatpush2.msra.mxu0 0.0
        %2456 = vmatprep.subr.mxu0 0.0
        %2457 = vmatpush2.msra.mxu0 0.0
        %2458 = vmatprep.subr.mxu0 0.0
        %2459 = vmatpush2.msra.mxu0 0.0
        %2460 = vmatprep.subr.mxu0 0.0
        %2461 = vmatpush2.msra.mxu0 0.0
        %2462 = vmatprep.subr.mxu0 0.0
        %2463 = vmatpush2.msra.mxu0 0.0
        %2464 = vmatprep.subr.mxu0 0.0
        %2465 = vmatpush2.msra.mxu0 0.0
        %2466 = vmatprep.subr.mxu0 0.0
        %2467 = vmatpush2.msra.mxu0 0.0
        %2468 = vmatprep.subr.mxu0 0.0
        %2469 = vmatpush2.msra.mxu0 0.0
        %2470 = vmatprep.mubr.f32.mxu0 0.0
        %2471 = vmatmul.mubr.f32.gmra.mxu0 %v2341
        %v2472 = vpop.f32.mrf.mxu0
        %v2473 = vadd.f32 0.0, %v2472
        %v2474 = vpop.f32.mrf.mxu0
        %v2475 = vadd.f32 0.0, %v2474
        %2476 = vdwg.mxu0
        %2477 = vmatprep.subr.mxu0 %v2405
        %2478 = vmatpush1.msra.mxu0 %v2404
        %2479 = vmatprep.subr.mxu0 %v2401
        %2480 = vmatpush1.msra.mxu0 %v2400
        %2481 = vmatprep.subr.mxu0 %v2397
        %2482 = vmatpush1.msra.mxu0 %v2396
        %2483 = vmatprep.subr.mxu0 %v2393
        %2484 = vmatpush1.msra.mxu0 %v2392
        %2485 = vmatprep.subr.mxu0 %v2389
        %2486 = vmatpush1.msra.mxu0 %v2388
        %2487 = vmatprep.subr.mxu0 %v2385
        %2488 = vmatpush1.msra.mxu0 %v2384
        %2489 = vmatprep.subr.mxu0 %v2381
        %2490 = vmatpush1.msra.mxu0 %v2380
        %2491 = vmatprep.subr.mxu0 %v2377
        %2492 = vmatpush1.msra.mxu0 %v2376
        %2493 = vmatprep.subr.mxu0 %v2373
        %2494 = vmatpush1.msra.mxu0 %v2372
        %2495 = vmatprep.subr.mxu0 %v2369
        %2496 = vmatpush1.msra.mxu0 %v2368
        %2497 = vmatprep.subr.mxu0 %v2365
        %2498 = vmatpush1.msra.mxu0 %v2364
        %2499 = vmatprep.subr.mxu0 %v2361
        %2500 = vmatpush1.msra.mxu0 %v2360
        %2501 = vmatprep.subr.mxu0 %v2357
        %2502 = vmatpush1.msra.mxu0 %v2356
        %2503 = vmatprep.subr.mxu0 %v2353
        %2504 = vmatpush1.msra.mxu0 %v2352
        %2505 = vmatprep.subr.mxu0 %v2349
        %2506 = vmatpush1.msra.mxu0 %v2348
        %2507 = vmatprep.subr.mxu0 %v2345
        %2508 = vmatpush1.msra.mxu0 %v2344
        %2509 = vmatprep.subr.mxu0 0.0
        %2510 = vmatpush2.msra.mxu0 0.0
        %2511 = vmatprep.subr.mxu0 0.0
        %2512 = vmatpush2.msra.mxu0 0.0
        %2513 = vmatprep.subr.mxu0 0.0
        %2514 = vmatpush2.msra.mxu0 0.0
        %2515 = vmatprep.subr.mxu0 0.0
        %2516 = vmatpush2.msra.mxu0 0.0
        %2517 = vmatprep.subr.mxu0 0.0
        %2518 = vmatpush2.msra.mxu0 0.0
        %2519 = vmatprep.subr.mxu0 0.0
        %2520 = vmatpush2.msra.mxu0 0.0
        %2521 = vmatprep.subr.mxu0 0.0
        %2522 = vmatpush2.msra.mxu0 0.0
        %2523 = vmatprep.subr.mxu0 0.0
        %2524 = vmatpush2.msra.mxu0 0.0
        %2525 = vmatprep.subr.mxu0 0.0
        %2526 = vmatpush2.msra.mxu0 0.0
        %2527 = vmatprep.subr.mxu0 0.0
        %2528 = vmatpush2.msra.mxu0 0.0
        %2529 = vmatprep.subr.mxu0 0.0
        %2530 = vmatpush2.msra.mxu0 0.0
        %2531 = vmatprep.subr.mxu0 0.0
        %2532 = vmatpush2.msra.mxu0 0.0
        %2533 = vmatprep.subr.mxu0 0.0
        %2534 = vmatpush2.msra.mxu0 0.0
        %2535 = vmatprep.subr.mxu0 0.0
        %2536 = vmatpush2.msra.mxu0 0.0
        %2537 = vmatprep.subr.mxu0 0.0
        %2538 = vmatpush2.msra.mxu0 0.0
        %2539 = vmatprep.subr.mxu0 0.0
        %2540 = vmatpush2.msra.mxu0 0.0
        %2541 = vmatprep.mubr.f32.mxu0 0.0
        %2542 = vmatmul.mubr.f32.gmra.mxu0 %v2341
        %v2543 = vpop.f32.mrf.mxu0
        %v2544 = vadd.f32 0.0, %v2543
        %v2545 = vpop.f32.mrf.mxu0
        %v2546 = vadd.f32 0.0, %v2545
        %2547 = vdwg.mxu0
        %2548 = vmatprep.subr.mxu0 %v2338
        %2549 = vmatpush1.msra.mxu0 %v2337
        %2550 = vmatprep.subr.mxu0 %v2334
        %2551 = vmatpush1.msra.mxu0 %v2333
        %2552 = vmatprep.subr.mxu0 %v2330
        %2553 = vmatpush1.msra.mxu0 %v2329
        %2554 = vmatprep.subr.mxu0 %v2326
        %2555 = vmatpush1.msra.mxu0 %v2325
        %2556 = vmatprep.subr.mxu0 %v2322
        %2557 = vmatpush1.msra.mxu0 %v2321
        %2558 = vmatprep.subr.mxu0 %v2318
        %2559 = vmatpush1.msra.mxu0 %v2317
        %2560 = vmatprep.subr.mxu0 %v2314
        %2561 = vmatpush1.msra.mxu0 %v2313
        %2562 = vmatprep.subr.mxu0 %v2310
        %2563 = vmatpush1.msra.mxu0 %v2309
        %2564 = vmatprep.subr.mxu0 %v2306
        %2565 = vmatpush1.msra.mxu0 %v2305
        %2566 = vmatprep.subr.mxu0 %v2302
        %2567 = vmatpush1.msra.mxu0 %v2301
        %2568 = vmatprep.subr.mxu0 %v2298
        %2569 = vmatpush1.msra.mxu0 %v2297
        %2570 = vmatprep.subr.mxu0 %v2294
        %2571 = vmatpush1.msra.mxu0 %v2293
        %2572 = vmatprep.subr.mxu0 %v2290
        %2573 = vmatpush1.msra.mxu0 %v2289
        %2574 = vmatprep.subr.mxu0 %v2286
        %2575 = vmatpush1.msra.mxu0 %v2285
        %2576 = vmatprep.subr.mxu0 %v2282
        %2577 = vmatpush1.msra.mxu0 %v2281
        %2578 = vmatprep.subr.mxu0 %v2278
        %2579 = vmatpush1.msra.mxu0 %v2277
        %2580 = vmatprep.subr.mxu0 0.0
        %2581 = vmatpush2.msra.mxu0 0.0
        %2582 = vmatprep.subr.mxu0 0.0
        %2583 = vmatpush2.msra.mxu0 0.0
        %2584 = vmatprep.subr.mxu0 0.0
        %2585 = vmatpush2.msra.mxu0 0.0
        %2586 = vmatprep.subr.mxu0 0.0
        %2587 = vmatpush2.msra.mxu0 0.0
        %2588 = vmatprep.subr.mxu0 0.0
        %2589 = vmatpush2.msra.mxu0 0.0
        %2590 = vmatprep.subr.mxu0 0.0
        %2591 = vmatpush2.msra.mxu0 0.0
        %2592 = vmatprep.subr.mxu0 0.0
        %2593 = vmatpush2.msra.mxu0 0.0
        %2594 = vmatprep.subr.mxu0 0.0
        %2595 = vmatpush2.msra.mxu0 0.0
        %2596 = vmatprep.subr.mxu0 0.0
        %2597 = vmatpush2.msra.mxu0 0.0
        %2598 = vmatprep.subr.mxu0 0.0
        %2599 = vmatpush2.msra.mxu0 0.0
        %2600 = vmatprep.subr.mxu0 0.0
        %2601 = vmatpush2.msra.mxu0 0.0
        %2602 = vmatprep.subr.mxu0 0.0
        %2603 = vmatpush2.msra.mxu0 0.0
        %2604 = vmatprep.subr.mxu0 0.0
        %2605 = vmatpush2.msra.mxu0 0.0
        %2606 = vmatprep.subr.mxu0 0.0
        %2607 = vmatpush2.msra.mxu0 0.0
        %2608 = vmatprep.subr.mxu0 0.0
        %2609 = vmatpush2.msra.mxu0 0.0
        %2610 = vmatprep.subr.mxu0 0.0
        %2611 = vmatpush2.msra.mxu0 0.0
        %2612 = vmatprep.mubr.f32.mxu0 0.0
        %2613 = vmatmul.mubr.f32.gmra.mxu0 %v2274
        %v2614 = vpop.f32.mrf.mxu0
        %v2615 = vadd.f32 %v2473, %v2614
        %v2616 = vpop.f32.mrf.mxu0
        %v2617 = vadd.f32 %v2475, %v2616
        %2618 = vdwg.mxu0
        %2619 = vmatprep.subr.mxu0 %v2340
        %2620 = vmatpush1.msra.mxu0 %v2339
        %2621 = vmatprep.subr.mxu0 %v2336
        %2622 = vmatpush1.msra.mxu0 %v2335
        %2623 = vmatprep.subr.mxu0 %v2332
        %2624 = vmatpush1.msra.mxu0 %v2331
        %2625 = vmatprep.subr.mxu0 %v2328
        %2626 = vmatpush1.msra.mxu0 %v2327
        %2627 = vmatprep.subr.mxu0 %v2324
        %2628 = vmatpush1.msra.mxu0 %v2323
        %2629 = vmatprep.subr.mxu0 %v2320
        %2630 = vmatpush1.msra.mxu0 %v2319
        %2631 = vmatprep.subr.mxu0 %v2316
        %2632 = vmatpush1.msra.mxu0 %v2315
        %2633 = vmatprep.subr.mxu0 %v2312
        %2634 = vmatpush1.msra.mxu0 %v2311
        %2635 = vmatprep.subr.mxu0 %v2308
        %2636 = vmatpush1.msra.mxu0 %v2307
        %2637 = vmatprep.subr.mxu0 %v2304
        %2638 = vmatpush1.msra.mxu0 %v2303
        %2639 = vmatprep.subr.mxu0 %v2300
        %2640 = vmatpush1.msra.mxu0 %v2299
        %2641 = vmatprep.subr.mxu0 %v2296
        %2642 = vmatpush1.msra.mxu0 %v2295
        %2643 = vmatprep.subr.mxu0 %v2292
        %2644 = vmatpush1.msra.mxu0 %v2291
        %2645 = vmatprep.subr.mxu0 %v2288
        %2646 = vmatpush1.msra.mxu0 %v2287
        %2647 = vmatprep.subr.mxu0 %v2284
        %2648 = vmatpush1.msra.mxu0 %v2283
        %2649 = vmatprep.subr.mxu0 %v2280
        %2650 = vmatpush1.msra.mxu0 %v2279
        %2651 = vmatprep.subr.mxu0 0.0
        %2652 = vmatpush2.msra.mxu0 0.0
        %2653 = vmatprep.subr.mxu0 0.0
        %2654 = vmatpush2.msra.mxu0 0.0
        %2655 = vmatprep.subr.mxu0 0.0
        %2656 = vmatpush2.msra.mxu0 0.0
        %2657 = vmatprep.subr.mxu0 0.0
        %2658 = vmatpush2.msra.mxu0 0.0
        %2659 = vmatprep.subr.mxu0 0.0
        %2660 = vmatpush2.msra.mxu0 0.0
        %2661 = vmatprep.subr.mxu0 0.0
        %2662 = vmatpush2.msra.mxu0 0.0
        %2663 = vmatprep.subr.mxu0 0.0
        %2664 = vmatpush2.msra.mxu0 0.0
        %2665 = vmatprep.subr.mxu0 0.0
        %2666 = vmatpush2.msra.mxu0 0.0
        %2667 = vmatprep.subr.mxu0 0.0
        %2668 = vmatpush2.msra.mxu0 0.0
        %2669 = vmatprep.subr.mxu0 0.0
        %2670 = vmatpush2.msra.mxu0 0.0
        %2671 = vmatprep.subr.mxu0 0.0
        %2672 = vmatpush2.msra.mxu0 0.0
        %2673 = vmatprep.subr.mxu0 0.0
        %2674 = vmatpush2.msra.mxu0 0.0
        %2675 = vmatprep.subr.mxu0 0.0
        %2676 = vmatpush2.msra.mxu0 0.0
        %2677 = vmatprep.subr.mxu0 0.0
        %2678 = vmatpush2.msra.mxu0 0.0
        %2679 = vmatprep.subr.mxu0 0.0
        %2680 = vmatpush2.msra.mxu0 0.0
        %2681 = vmatprep.subr.mxu0 0.0
        %2682 = vmatpush2.msra.mxu0 0.0
        %2683 = vmatprep.mubr.f32.mxu0 0.0
        %2684 = vmatmul.mubr.f32.gmra.mxu0 %v2274
        %v2685 = vpop.f32.mrf.mxu0
        %v2686 = vadd.f32 %v2544, %v2685
        %v2687 = vpop.f32.mrf.mxu0
        %v2688 = vadd.f32 %v2546, %v2687
        %2689 = vdwg.mxu0
        %v2690 = vld [vmem:[%s6] sm:$0xf]
        %v2692 = vlaneseq
        %v2693 = vshrl.u32 %v2692, 7
        %v2694 = vsub.s32 0, %v2693
        %v2695 = vrot.slane %v2690, %v2694
        %v2696 = vlaneseq
        %v2697 = vshrl.u32 %v2696, 7
        %v2698 = vsub.s32 1, %v2697
        %v2699 = vrot.slane %v2690, %v2698
        %v2700 = vlaneseq
        %v2701 = vshrl.u32 %v2700, 7
        %v2702 = vsub.s32 2, %v2701
        %v2703 = vrot.slane %v2690, %v2702
        %v2704 = vlaneseq
        %v2705 = vshrl.u32 %v2704, 7
        %v2706 = vsub.s32 3, %v2705
        %v2707 = vrot.slane %v2690, %v2706
        %v2712 = vadd.f32 %v2615, %v2695
        %v2713 = vadd.f32 %v2617, %v2699
        %v2714 = vadd.f32 %v2686, %v2703
        %v2715 = vadd.f32 %v2688, %v2707
        %v2716 = vld [vmem:[%s1294] sm:$0xff]
        %v2717 = vxor.u32 %v2712, 2147483648
        %v2718 = vmul.f32 %v2717, 1.442695
        %v2719 = vpow.pop %v2718
        %v2720 = vadd.f32 %v2719, 1.0
        %v2721 = vrcp.pop %v2720
        %v2722 = vmul.f32 1.0, %v2721
        %v2723 = vxor.u32 %v2713, 2147483648
        %v2724 = vmul.f32 %v2723, 1.442695
        %v2725 = vpow.pop %v2724
        %v2726 = vadd.f32 %v2725, 1.0
        %v2727 = vrcp.pop %v2726
        %v2728 = vmul.f32 1.0, %v2727
        %v2729 = vtanh.pop %v2714
        %v2730 = vxor.u32 %v2715, 2147483648
        %v2731 = vmul.f32 %v2730, 1.442695
        %v2732 = vpow.pop %v2731
        %v2733 = vadd.f32 %v2732, 1.0
        %v2734 = vrcp.pop %v2733
        %v2735 = vmul.f32 1.0, %v2734
        %v2736 = vmul.f32 %v2728, %v2716
        %v2737 = vmul.f32 %v2722, %v2729
        %v2738 = vadd.f32 %v2736, %v2737
        %v2739 = vtanh.pop %v2738
        %v2740 = vmul.f32 %v2735, %v2739
        %2741 = vst [vmem:[%s918] sm:$0xff] %v2740
        %2742 = vst [vmem:[%s1294] sm:$0xff] %v2738
        %s2743 = scalar_lea.vmem %s192, 16 [#allocation13]
        %2744 = vst [vmem:[%s2743] sm:$0xff] %v2740
        %s2745 = scalar_lea.vmem [#allocation6], 96
        %v2746 = vld [vmem:[%s2745] sm:$0xff]
        %v2747 = vld [vmem:[%s2745 + $0x8] sm:$0xff]
        %v2748 = vld [vmem:[%s2745 + $0x10] sm:$0xff]
        %v2749 = vld [vmem:[%s2745 + $0x18] sm:$0xff]
        %v2750 = vld [vmem:[#allocation7] sm:$0xff]
        %v2751 = vld [vmem:[#allocation4] sm:$0xff]
        %v2752 = vld [vmem:[#allocation4 + $0x8] sm:$0xff]
        %v2753 = vld [vmem:[#allocation4 + $0x10] sm:$0xff]
        %v2754 = vld [vmem:[#allocation4 + $0x18] sm:$0xff]
        %v2755 = vld [vmem:[#allocation4 + $0x20] sm:$0xff]
        %v2756 = vld [vmem:[#allocation4 + $0x28] sm:$0xff]
        %v2757 = vld [vmem:[#allocation4 + $0x30] sm:$0xff]
        %v2758 = vld [vmem:[#allocation4 + $0x38] sm:$0xff]
        %v2759 = vld [vmem:[#allocation4 + $0x40] sm:$0xff]
        %v2760 = vld [vmem:[#allocation4 + $0x48] sm:$0xff]
        %v2761 = vld [vmem:[#allocation4 + $0x50] sm:$0xff]
        %v2762 = vld [vmem:[#allocation4 + $0x58] sm:$0xff]
        %v2763 = vld [vmem:[#allocation4 + $0x60] sm:$0xff]
        %v2764 = vld [vmem:[#allocation4 + $0x68] sm:$0xff]
        %v2765 = vld [vmem:[#allocation4 + $0x70] sm:$0xff]
        %v2766 = vld [vmem:[#allocation4 + $0x78] sm:$0xff]
        %v2767 = vld [vmem:[#allocation4 + $0x80] sm:$0xff]
        %v2768 = vld [vmem:[#allocation4 + $0x88] sm:$0xff]
        %v2769 = vld [vmem:[#allocation4 + $0x90] sm:$0xff]
        %v2770 = vld [vmem:[#allocation4 + $0x98] sm:$0xff]
        %v2771 = vld [vmem:[#allocation4 + $0xa0] sm:$0xff]
        %v2772 = vld [vmem:[#allocation4 + $0xa8] sm:$0xff]
        %v2773 = vld [vmem:[#allocation4 + $0xb0] sm:$0xff]
        %v2774 = vld [vmem:[#allocation4 + $0xb8] sm:$0xff]
        %v2775 = vld [vmem:[#allocation4 + $0xc0] sm:$0xff]
        %v2776 = vld [vmem:[#allocation4 + $0xc8] sm:$0xff]
        %v2777 = vld [vmem:[#allocation4 + $0xd0] sm:$0xff]
        %v2778 = vld [vmem:[#allocation4 + $0xd8] sm:$0xff]
        %v2779 = vld [vmem:[#allocation4 + $0xe0] sm:$0xff]
        %v2780 = vld [vmem:[#allocation4 + $0xe8] sm:$0xff]
        %v2781 = vld [vmem:[#allocation4 + $0xf0] sm:$0xff]
        %v2782 = vld [vmem:[#allocation4 + $0xf8] sm:$0xff]
        %v2783 = vld [vmem:[#allocation4 + $0x100] sm:$0xff]
        %v2784 = vld [vmem:[#allocation4 + $0x108] sm:$0xff]
        %v2785 = vld [vmem:[#allocation4 + $0x110] sm:$0xff]
        %v2786 = vld [vmem:[#allocation4 + $0x118] sm:$0xff]
        %v2787 = vld [vmem:[#allocation4 + $0x120] sm:$0xff]
        %v2788 = vld [vmem:[#allocation4 + $0x128] sm:$0xff]
        %v2789 = vld [vmem:[#allocation4 + $0x130] sm:$0xff]
        %v2790 = vld [vmem:[#allocation4 + $0x138] sm:$0xff]
        %v2791 = vld [vmem:[#allocation4 + $0x140] sm:$0xff]
        %v2792 = vld [vmem:[#allocation4 + $0x148] sm:$0xff]
        %v2793 = vld [vmem:[#allocation4 + $0x150] sm:$0xff]
        %v2794 = vld [vmem:[#allocation4 + $0x158] sm:$0xff]
        %v2795 = vld [vmem:[#allocation4 + $0x160] sm:$0xff]
        %v2796 = vld [vmem:[#allocation4 + $0x168] sm:$0xff]
        %v2797 = vld [vmem:[#allocation4 + $0x170] sm:$0xff]
        %v2798 = vld [vmem:[#allocation4 + $0x178] sm:$0xff]
        %v2799 = vld [vmem:[#allocation4 + $0x180] sm:$0xff]
        %v2800 = vld [vmem:[#allocation4 + $0x188] sm:$0xff]
        %v2801 = vld [vmem:[#allocation4 + $0x190] sm:$0xff]
        %v2802 = vld [vmem:[#allocation4 + $0x198] sm:$0xff]
        %v2803 = vld [vmem:[#allocation4 + $0x1a0] sm:$0xff]
        %v2804 = vld [vmem:[#allocation4 + $0x1a8] sm:$0xff]
        %v2805 = vld [vmem:[#allocation4 + $0x1b0] sm:$0xff]
        %v2806 = vld [vmem:[#allocation4 + $0x1b8] sm:$0xff]
        %v2807 = vld [vmem:[#allocation4 + $0x1c0] sm:$0xff]
        %v2808 = vld [vmem:[#allocation4 + $0x1c8] sm:$0xff]
        %v2809 = vld [vmem:[#allocation4 + $0x1d0] sm:$0xff]
        %v2810 = vld [vmem:[#allocation4 + $0x1d8] sm:$0xff]
        %v2811 = vld [vmem:[#allocation4 + $0x1e0] sm:$0xff]
        %v2812 = vld [vmem:[#allocation4 + $0x1e8] sm:$0xff]
        %v2813 = vld [vmem:[#allocation4 + $0x1f0] sm:$0xff]
        %v2814 = vld [vmem:[#allocation4 + $0x1f8] sm:$0xff]
        %2815 = vmatprep.subr.mxu0 %v2812
        %2816 = vmatpush1.msra.mxu0 %v2811
        %2817 = vmatprep.subr.mxu0 %v2808
        %2818 = vmatpush1.msra.mxu0 %v2807
        %2819 = vmatprep.subr.mxu0 %v2804
        %2820 = vmatpush1.msra.mxu0 %v2803
        %2821 = vmatprep.subr.mxu0 %v2800
        %2822 = vmatpush1.msra.mxu0 %v2799
        %2823 = vmatprep.subr.mxu0 %v2796
        %2824 = vmatpush1.msra.mxu0 %v2795
        %2825 = vmatprep.subr.mxu0 %v2792
        %2826 = vmatpush1.msra.mxu0 %v2791
        %2827 = vmatprep.subr.mxu0 %v2788
        %2828 = vmatpush1.msra.mxu0 %v2787
        %2829 = vmatprep.subr.mxu0 %v2784
        %2830 = vmatpush1.msra.mxu0 %v2783
        %2831 = vmatprep.subr.mxu0 %v2780
        %2832 = vmatpush1.msra.mxu0 %v2779
        %2833 = vmatprep.subr.mxu0 %v2776
        %2834 = vmatpush1.msra.mxu0 %v2775
        %2835 = vmatprep.subr.mxu0 %v2772
        %2836 = vmatpush1.msra.mxu0 %v2771
        %2837 = vmatprep.subr.mxu0 %v2768
        %2838 = vmatpush1.msra.mxu0 %v2767
        %2839 = vmatprep.subr.mxu0 %v2764
        %2840 = vmatpush1.msra.mxu0 %v2763
        %2841 = vmatprep.subr.mxu0 %v2760
        %2842 = vmatpush1.msra.mxu0 %v2759
        %2843 = vmatprep.subr.mxu0 %v2756
        %2844 = vmatpush1.msra.mxu0 %v2755
        %2845 = vmatprep.subr.mxu0 %v2752
        %2846 = vmatpush1.msra.mxu0 %v2751
        %2847 = vmatprep.subr.mxu0 0.0
        %2848 = vmatpush2.msra.mxu0 0.0
        %2849 = vmatprep.subr.mxu0 0.0
        %2850 = vmatpush2.msra.mxu0 0.0
        %2851 = vmatprep.subr.mxu0 0.0
        %2852 = vmatpush2.msra.mxu0 0.0
        %2853 = vmatprep.subr.mxu0 0.0
        %2854 = vmatpush2.msra.mxu0 0.0
        %2855 = vmatprep.subr.mxu0 0.0
        %2856 = vmatpush2.msra.mxu0 0.0
        %2857 = vmatprep.subr.mxu0 0.0
        %2858 = vmatpush2.msra.mxu0 0.0
        %2859 = vmatprep.subr.mxu0 0.0
        %2860 = vmatpush2.msra.mxu0 0.0
        %2861 = vmatprep.subr.mxu0 0.0
        %2862 = vmatpush2.msra.mxu0 0.0
        %2863 = vmatprep.subr.mxu0 0.0
        %2864 = vmatpush2.msra.mxu0 0.0
        %2865 = vmatprep.subr.mxu0 0.0
        %2866 = vmatpush2.msra.mxu0 0.0
        %2867 = vmatprep.subr.mxu0 0.0
        %2868 = vmatpush2.msra.mxu0 0.0
        %2869 = vmatprep.subr.mxu0 0.0
        %2870 = vmatpush2.msra.mxu0 0.0
        %2871 = vmatprep.subr.mxu0 0.0
        %2872 = vmatpush2.msra.mxu0 0.0
        %2873 = vmatprep.subr.mxu0 0.0
        %2874 = vmatpush2.msra.mxu0 0.0
        %2875 = vmatprep.subr.mxu0 0.0
        %2876 = vmatpush2.msra.mxu0 0.0
        %2877 = vmatprep.subr.mxu0 0.0
        %2878 = vmatpush2.msra.mxu0 0.0
        %2879 = vmatprep.mubr.f32.mxu0 0.0
        %2880 = vmatmul.mubr.f32.gmra.mxu0 %v2750
        %v2881 = vpop.f32.mrf.mxu0
        %v2882 = vadd.f32 0.0, %v2881
        %v2883 = vpop.f32.mrf.mxu0
        %v2884 = vadd.f32 0.0, %v2883
        %2885 = vdwg.mxu0
        %2886 = vmatprep.subr.mxu0 %v2814
        %2887 = vmatpush1.msra.mxu0 %v2813
        %2888 = vmatprep.subr.mxu0 %v2810
        %2889 = vmatpush1.msra.mxu0 %v2809
        %2890 = vmatprep.subr.mxu0 %v2806
        %2891 = vmatpush1.msra.mxu0 %v2805
        %2892 = vmatprep.subr.mxu0 %v2802
        %2893 = vmatpush1.msra.mxu0 %v2801
        %2894 = vmatprep.subr.mxu0 %v2798
        %2895 = vmatpush1.msra.mxu0 %v2797
        %2896 = vmatprep.subr.mxu0 %v2794
        %2897 = vmatpush1.msra.mxu0 %v2793
        %2898 = vmatprep.subr.mxu0 %v2790
        %2899 = vmatpush1.msra.mxu0 %v2789
        %2900 = vmatprep.subr.mxu0 %v2786
        %2901 = vmatpush1.msra.mxu0 %v2785
        %2902 = vmatprep.subr.mxu0 %v2782
        %2903 = vmatpush1.msra.mxu0 %v2781
        %2904 = vmatprep.subr.mxu0 %v2778
        %2905 = vmatpush1.msra.mxu0 %v2777
        %2906 = vmatprep.subr.mxu0 %v2774
        %2907 = vmatpush1.msra.mxu0 %v2773
        %2908 = vmatprep.subr.mxu0 %v2770
        %2909 = vmatpush1.msra.mxu0 %v2769
        %2910 = vmatprep.subr.mxu0 %v2766
        %2911 = vmatpush1.msra.mxu0 %v2765
        %2912 = vmatprep.subr.mxu0 %v2762
        %2913 = vmatpush1.msra.mxu0 %v2761
        %2914 = vmatprep.subr.mxu0 %v2758
        %2915 = vmatpush1.msra.mxu0 %v2757
        %2916 = vmatprep.subr.mxu0 %v2754
        %2917 = vmatpush1.msra.mxu0 %v2753
        %2918 = vmatprep.subr.mxu0 0.0
        %2919 = vmatpush2.msra.mxu0 0.0
        %2920 = vmatprep.subr.mxu0 0.0
        %2921 = vmatpush2.msra.mxu0 0.0
        %2922 = vmatprep.subr.mxu0 0.0
        %2923 = vmatpush2.msra.mxu0 0.0
        %2924 = vmatprep.subr.mxu0 0.0
        %2925 = vmatpush2.msra.mxu0 0.0
        %2926 = vmatprep.subr.mxu0 0.0
        %2927 = vmatpush2.msra.mxu0 0.0
        %2928 = vmatprep.subr.mxu0 0.0
        %2929 = vmatpush2.msra.mxu0 0.0
        %2930 = vmatprep.subr.mxu0 0.0
        %2931 = vmatpush2.msra.mxu0 0.0
        %2932 = vmatprep.subr.mxu0 0.0
        %2933 = vmatpush2.msra.mxu0 0.0
        %2934 = vmatprep.subr.mxu0 0.0
        %2935 = vmatpush2.msra.mxu0 0.0
        %2936 = vmatprep.subr.mxu0 0.0
        %2937 = vmatpush2.msra.mxu0 0.0
        %2938 = vmatprep.subr.mxu0 0.0
        %2939 = vmatpush2.msra.mxu0 0.0
        %2940 = vmatprep.subr.mxu0 0.0
        %2941 = vmatpush2.msra.mxu0 0.0
        %2942 = vmatprep.subr.mxu0 0.0
        %2943 = vmatpush2.msra.mxu0 0.0
        %2944 = vmatprep.subr.mxu0 0.0
        %2945 = vmatpush2.msra.mxu0 0.0
        %2946 = vmatprep.subr.mxu0 0.0
        %2947 = vmatpush2.msra.mxu0 0.0
        %2948 = vmatprep.subr.mxu0 0.0
        %2949 = vmatpush2.msra.mxu0 0.0
        %2950 = vmatprep.mubr.f32.mxu0 0.0
        %2951 = vmatmul.mubr.f32.gmra.mxu0 %v2750
        %v2952 = vpop.f32.mrf.mxu0
        %v2953 = vadd.f32 0.0, %v2952
        %v2954 = vpop.f32.mrf.mxu0
        %v2955 = vadd.f32 0.0, %v2954
        %2956 = vdwg.mxu0
        %v2957 = vadd.f32 %v2746, %v2882
        %v2958 = vadd.f32 %v2747, %v2884
        %v2959 = vadd.f32 %v2748, %v2953
        %v2960 = vadd.f32 %v2749, %v2955
        %v2961 = vld [vmem:[#allocation8] sm:$0xff]
        %v2962 = vxor.u32 %v2957, 2147483648
        %v2963 = vmul.f32 %v2962, 1.442695
        %v2964 = vpow.pop %v2963
        %v2965 = vadd.f32 %v2964, 1.0
        %v2966 = vrcp.pop %v2965
        %v2967 = vmul.f32 1.0, %v2966
        %v2968 = vxor.u32 %v2958, 2147483648
        %v2969 = vmul.f32 %v2968, 1.442695
        %v2970 = vpow.pop %v2969
        %v2971 = vadd.f32 %v2970, 1.0
        %v2972 = vrcp.pop %v2971
        %v2973 = vmul.f32 1.0, %v2972
        %v2974 = vtanh.pop %v2959
        %v2975 = vxor.u32 %v2960, 2147483648
        %v2976 = vmul.f32 %v2975, 1.442695
        %v2977 = vpow.pop %v2976
        %v2978 = vadd.f32 %v2977, 1.0
        %v2979 = vrcp.pop %v2978
        %v2980 = vmul.f32 1.0, %v2979
        %v2981 = vmul.f32 %v2973, %v2961
        %v2982 = vmul.f32 %v2967, %v2974
        %v2983 = vadd.f32 %v2981, %v2982
        %v2984 = vtanh.pop %v2983
        %v2985 = vmul.f32 %v2980, %v2984
        %2986 = vst [vmem:[#allocation7] sm:$0xff] %v2985
        %2987 = vst [vmem:[#allocation8] sm:$0xff] %v2983
        %v2988 = vld [vmem:[#allocation3] sm:$0xff]
        %v2989 = vld [vmem:[#allocation3 + $0x8] sm:$0xff]
        %v2990 = vld [vmem:[#allocation3 + $0x10] sm:$0xff]
        %v2991 = vld [vmem:[#allocation3 + $0x18] sm:$0xff]
        %v2992 = vld [vmem:[#allocation3 + $0x20] sm:$0xff]
        %v2993 = vld [vmem:[#allocation3 + $0x28] sm:$0xff]
        %v2994 = vld [vmem:[#allocation3 + $0x30] sm:$0xff]
        %v2995 = vld [vmem:[#allocation3 + $0x38] sm:$0xff]
        %v2996 = vld [vmem:[#allocation3 + $0x40] sm:$0xff]
        %v2997 = vld [vmem:[#allocation3 + $0x48] sm:$0xff]
        %v2998 = vld [vmem:[#allocation3 + $0x50] sm:$0xff]
        %v2999 = vld [vmem:[#allocation3 + $0x58] sm:$0xff]
        %v3000 = vld [vmem:[#allocation3 + $0x60] sm:$0xff]
        %v3001 = vld [vmem:[#allocation3 + $0x68] sm:$0xff]
        %v3002 = vld [vmem:[#allocation3 + $0x70] sm:$0xff]
        %v3003 = vld [vmem:[#allocation3 + $0x78] sm:$0xff]
        %v3004 = vld [vmem:[#allocation3 + $0x80] sm:$0xff]
        %v3005 = vld [vmem:[#allocation3 + $0x88] sm:$0xff]
        %v3006 = vld [vmem:[#allocation3 + $0x90] sm:$0xff]
        %v3007 = vld [vmem:[#allocation3 + $0x98] sm:$0xff]
        %v3008 = vld [vmem:[#allocation3 + $0xa0] sm:$0xff]
        %v3009 = vld [vmem:[#allocation3 + $0xa8] sm:$0xff]
        %v3010 = vld [vmem:[#allocation3 + $0xb0] sm:$0xff]
        %v3011 = vld [vmem:[#allocation3 + $0xb8] sm:$0xff]
        %v3012 = vld [vmem:[#allocation3 + $0xc0] sm:$0xff]
        %v3013 = vld [vmem:[#allocation3 + $0xc8] sm:$0xff]
        %v3014 = vld [vmem:[#allocation3 + $0xd0] sm:$0xff]
        %v3015 = vld [vmem:[#allocation3 + $0xd8] sm:$0xff]
        %v3016 = vld [vmem:[#allocation3 + $0xe0] sm:$0xff]
        %v3017 = vld [vmem:[#allocation3 + $0xe8] sm:$0xff]
        %v3018 = vld [vmem:[#allocation3 + $0xf0] sm:$0xff]
        %v3019 = vld [vmem:[#allocation3 + $0xf8] sm:$0xff]
        %v3020 = vld [vmem:[#allocation3 + $0x100] sm:$0xff]
        %v3021 = vld [vmem:[#allocation3 + $0x108] sm:$0xff]
        %v3022 = vld [vmem:[#allocation3 + $0x110] sm:$0xff]
        %v3023 = vld [vmem:[#allocation3 + $0x118] sm:$0xff]
        %v3024 = vld [vmem:[#allocation3 + $0x120] sm:$0xff]
        %v3025 = vld [vmem:[#allocation3 + $0x128] sm:$0xff]
        %v3026 = vld [vmem:[#allocation3 + $0x130] sm:$0xff]
        %v3027 = vld [vmem:[#allocation3 + $0x138] sm:$0xff]
        %v3028 = vld [vmem:[#allocation3 + $0x140] sm:$0xff]
        %v3029 = vld [vmem:[#allocation3 + $0x148] sm:$0xff]
        %v3030 = vld [vmem:[#allocation3 + $0x150] sm:$0xff]
        %v3031 = vld [vmem:[#allocation3 + $0x158] sm:$0xff]
        %v3032 = vld [vmem:[#allocation3 + $0x160] sm:$0xff]
        %v3033 = vld [vmem:[#allocation3 + $0x168] sm:$0xff]
        %v3034 = vld [vmem:[#allocation3 + $0x170] sm:$0xff]
        %v3035 = vld [vmem:[#allocation3 + $0x178] sm:$0xff]
        %v3036 = vld [vmem:[#allocation3 + $0x180] sm:$0xff]
        %v3037 = vld [vmem:[#allocation3 + $0x188] sm:$0xff]
        %v3038 = vld [vmem:[#allocation3 + $0x190] sm:$0xff]
        %v3039 = vld [vmem:[#allocation3 + $0x198] sm:$0xff]
        %v3040 = vld [vmem:[#allocation3 + $0x1a0] sm:$0xff]
        %v3041 = vld [vmem:[#allocation3 + $0x1a8] sm:$0xff]
        %v3042 = vld [vmem:[#allocation3 + $0x1b0] sm:$0xff]
        %v3043 = vld [vmem:[#allocation3 + $0x1b8] sm:$0xff]
        %v3044 = vld [vmem:[#allocation3 + $0x1c0] sm:$0xff]
        %v3045 = vld [vmem:[#allocation3 + $0x1c8] sm:$0xff]
        %v3046 = vld [vmem:[#allocation3 + $0x1d0] sm:$0xff]
        %v3047 = vld [vmem:[#allocation3 + $0x1d8] sm:$0xff]
        %v3048 = vld [vmem:[#allocation3 + $0x1e0] sm:$0xff]
        %v3049 = vld [vmem:[#allocation3 + $0x1e8] sm:$0xff]
        %v3050 = vld [vmem:[#allocation3 + $0x1f0] sm:$0xff]
        %v3051 = vld [vmem:[#allocation3 + $0x1f8] sm:$0xff]
        %v3052 = vld [vmem:[%s918] sm:$0xff]
        %v3053 = vld [vmem:[#allocation5] sm:$0xff]
        %v3054 = vld [vmem:[#allocation5 + $0x8] sm:$0xff]
        %v3055 = vld [vmem:[#allocation5 + $0x10] sm:$0xff]
        %v3056 = vld [vmem:[#allocation5 + $0x18] sm:$0xff]
        %v3057 = vld [vmem:[#allocation5 + $0x20] sm:$0xff]
        %v3058 = vld [vmem:[#allocation5 + $0x28] sm:$0xff]
        %v3059 = vld [vmem:[#allocation5 + $0x30] sm:$0xff]
        %v3060 = vld [vmem:[#allocation5 + $0x38] sm:$0xff]
        %v3061 = vld [vmem:[#allocation5 + $0x40] sm:$0xff]
        %v3062 = vld [vmem:[#allocation5 + $0x48] sm:$0xff]
        %v3063 = vld [vmem:[#allocation5 + $0x50] sm:$0xff]
        %v3064 = vld [vmem:[#allocation5 + $0x58] sm:$0xff]
        %v3065 = vld [vmem:[#allocation5 + $0x60] sm:$0xff]
        %v3066 = vld [vmem:[#allocation5 + $0x68] sm:$0xff]
        %v3067 = vld [vmem:[#allocation5 + $0x70] sm:$0xff]
        %v3068 = vld [vmem:[#allocation5 + $0x78] sm:$0xff]
        %v3069 = vld [vmem:[#allocation5 + $0x80] sm:$0xff]
        %v3070 = vld [vmem:[#allocation5 + $0x88] sm:$0xff]
        %v3071 = vld [vmem:[#allocation5 + $0x90] sm:$0xff]
        %v3072 = vld [vmem:[#allocation5 + $0x98] sm:$0xff]
        %v3073 = vld [vmem:[#allocation5 + $0xa0] sm:$0xff]
        %v3074 = vld [vmem:[#allocation5 + $0xa8] sm:$0xff]
        %v3075 = vld [vmem:[#allocation5 + $0xb0] sm:$0xff]
        %v3076 = vld [vmem:[#allocation5 + $0xb8] sm:$0xff]
        %v3077 = vld [vmem:[#allocation5 + $0xc0] sm:$0xff]
        %v3078 = vld [vmem:[#allocation5 + $0xc8] sm:$0xff]
        %v3079 = vld [vmem:[#allocation5 + $0xd0] sm:$0xff]
        %v3080 = vld [vmem:[#allocation5 + $0xd8] sm:$0xff]
        %v3081 = vld [vmem:[#allocation5 + $0xe0] sm:$0xff]
        %v3082 = vld [vmem:[#allocation5 + $0xe8] sm:$0xff]
        %v3083 = vld [vmem:[#allocation5 + $0xf0] sm:$0xff]
        %v3084 = vld [vmem:[#allocation5 + $0xf8] sm:$0xff]
        %v3085 = vld [vmem:[#allocation5 + $0x100] sm:$0xff]
        %v3086 = vld [vmem:[#allocation5 + $0x108] sm:$0xff]
        %v3087 = vld [vmem:[#allocation5 + $0x110] sm:$0xff]
        %v3088 = vld [vmem:[#allocation5 + $0x118] sm:$0xff]
        %v3089 = vld [vmem:[#allocation5 + $0x120] sm:$0xff]
        %v3090 = vld [vmem:[#allocation5 + $0x128] sm:$0xff]
        %v3091 = vld [vmem:[#allocation5 + $0x130] sm:$0xff]
        %v3092 = vld [vmem:[#allocation5 + $0x138] sm:$0xff]
        %v3093 = vld [vmem:[#allocation5 + $0x140] sm:$0xff]
        %v3094 = vld [vmem:[#allocation5 + $0x148] sm:$0xff]
        %v3095 = vld [vmem:[#allocation5 + $0x150] sm:$0xff]
        %v3096 = vld [vmem:[#allocation5 + $0x158] sm:$0xff]
        %v3097 = vld [vmem:[#allocation5 + $0x160] sm:$0xff]
        %v3098 = vld [vmem:[#allocation5 + $0x168] sm:$0xff]
        %v3099 = vld [vmem:[#allocation5 + $0x170] sm:$0xff]
        %v3100 = vld [vmem:[#allocation5 + $0x178] sm:$0xff]
        %v3101 = vld [vmem:[#allocation5 + $0x180] sm:$0xff]
        %v3102 = vld [vmem:[#allocation5 + $0x188] sm:$0xff]
        %v3103 = vld [vmem:[#allocation5 + $0x190] sm:$0xff]
        %v3104 = vld [vmem:[#allocation5 + $0x198] sm:$0xff]
        %v3105 = vld [vmem:[#allocation5 + $0x1a0] sm:$0xff]
        %v3106 = vld [vmem:[#allocation5 + $0x1a8] sm:$0xff]
        %v3107 = vld [vmem:[#allocation5 + $0x1b0] sm:$0xff]
        %v3108 = vld [vmem:[#allocation5 + $0x1b8] sm:$0xff]
        %v3109 = vld [vmem:[#allocation5 + $0x1c0] sm:$0xff]
        %v3110 = vld [vmem:[#allocation5 + $0x1c8] sm:$0xff]
        %v3111 = vld [vmem:[#allocation5 + $0x1d0] sm:$0xff]
        %v3112 = vld [vmem:[#allocation5 + $0x1d8] sm:$0xff]
        %v3113 = vld [vmem:[#allocation5 + $0x1e0] sm:$0xff]
        %v3114 = vld [vmem:[#allocation5 + $0x1e8] sm:$0xff]
        %v3115 = vld [vmem:[#allocation5 + $0x1f0] sm:$0xff]
        %v3116 = vld [vmem:[#allocation5 + $0x1f8] sm:$0xff]
        %3117 = vmatprep.subr.mxu0 %v3114
        %3118 = vmatpush1.msra.mxu0 %v3113
        %3119 = vmatprep.subr.mxu0 %v3110
        %3120 = vmatpush1.msra.mxu0 %v3109
        %3121 = vmatprep.subr.mxu0 %v3106
        %3122 = vmatpush1.msra.mxu0 %v3105
        %3123 = vmatprep.subr.mxu0 %v3102
        %3124 = vmatpush1.msra.mxu0 %v3101
        %3125 = vmatprep.subr.mxu0 %v3098
        %3126 = vmatpush1.msra.mxu0 %v3097
        %3127 = vmatprep.subr.mxu0 %v3094
        %3128 = vmatpush1.msra.mxu0 %v3093
        %3129 = vmatprep.subr.mxu0 %v3090
        %3130 = vmatpush1.msra.mxu0 %v3089
        %3131 = vmatprep.subr.mxu0 %v3086
        %3132 = vmatpush1.msra.mxu0 %v3085
        %3133 = vmatprep.subr.mxu0 %v3082
        %3134 = vmatpush1.msra.mxu0 %v3081
        %3135 = vmatprep.subr.mxu0 %v3078
        %3136 = vmatpush1.msra.mxu0 %v3077
        %3137 = vmatprep.subr.mxu0 %v3074
        %3138 = vmatpush1.msra.mxu0 %v3073
        %3139 = vmatprep.subr.mxu0 %v3070
        %3140 = vmatpush1.msra.mxu0 %v3069
        %3141 = vmatprep.subr.mxu0 %v3066
        %3142 = vmatpush1.msra.mxu0 %v3065
        %3143 = vmatprep.subr.mxu0 %v3062
        %3144 = vmatpush1.msra.mxu0 %v3061
        %3145 = vmatprep.subr.mxu0 %v3058
        %3146 = vmatpush1.msra.mxu0 %v3057
        %3147 = vmatprep.subr.mxu0 %v3054
        %3148 = vmatpush1.msra.mxu0 %v3053
        %3149 = vmatprep.subr.mxu0 0.0
        %3150 = vmatpush2.msra.mxu0 0.0
        %3151 = vmatprep.subr.mxu0 0.0
        %3152 = vmatpush2.msra.mxu0 0.0
        %3153 = vmatprep.subr.mxu0 0.0
        %3154 = vmatpush2.msra.mxu0 0.0
        %3155 = vmatprep.subr.mxu0 0.0
        %3156 = vmatpush2.msra.mxu0 0.0
        %3157 = vmatprep.subr.mxu0 0.0
        %3158 = vmatpush2.msra.mxu0 0.0
        %3159 = vmatprep.subr.mxu0 0.0
        %3160 = vmatpush2.msra.mxu0 0.0
        %3161 = vmatprep.subr.mxu0 0.0
        %3162 = vmatpush2.msra.mxu0 0.0
        %3163 = vmatprep.subr.mxu0 0.0
        %3164 = vmatpush2.msra.mxu0 0.0
        %3165 = vmatprep.subr.mxu0 0.0
        %3166 = vmatpush2.msra.mxu0 0.0
        %3167 = vmatprep.subr.mxu0 0.0
        %3168 = vmatpush2.msra.mxu0 0.0
        %3169 = vmatprep.subr.mxu0 0.0
        %3170 = vmatpush2.msra.mxu0 0.0
        %3171 = vmatprep.subr.mxu0 0.0
        %3172 = vmatpush2.msra.mxu0 0.0
        %3173 = vmatprep.subr.mxu0 0.0
        %3174 = vmatpush2.msra.mxu0 0.0
        %3175 = vmatprep.subr.mxu0 0.0
        %3176 = vmatpush2.msra.mxu0 0.0
        %3177 = vmatprep.subr.mxu0 0.0
        %3178 = vmatpush2.msra.mxu0 0.0
        %3179 = vmatprep.subr.mxu0 0.0
        %3180 = vmatpush2.msra.mxu0 0.0
        %3181 = vmatprep.mubr.f32.mxu0 0.0
        %3182 = vmatmul.mubr.f32.gmra.mxu0 %v3052
        %v3183 = vpop.f32.mrf.mxu0
        %v3184 = vadd.f32 0.0, %v3183
        %v3185 = vpop.f32.mrf.mxu0
        %v3186 = vadd.f32 0.0, %v3185
        %3187 = vdwg.mxu0
        %3188 = vmatprep.subr.mxu0 %v3116
        %3189 = vmatpush1.msra.mxu0 %v3115
        %3190 = vmatprep.subr.mxu0 %v3112
        %3191 = vmatpush1.msra.mxu0 %v3111
        %3192 = vmatprep.subr.mxu0 %v3108
        %3193 = vmatpush1.msra.mxu0 %v3107
        %3194 = vmatprep.subr.mxu0 %v3104
        %3195 = vmatpush1.msra.mxu0 %v3103
        %3196 = vmatprep.subr.mxu0 %v3100
        %3197 = vmatpush1.msra.mxu0 %v3099
        %3198 = vmatprep.subr.mxu0 %v3096
        %3199 = vmatpush1.msra.mxu0 %v3095
        %3200 = vmatprep.subr.mxu0 %v3092
        %3201 = vmatpush1.msra.mxu0 %v3091
        %3202 = vmatprep.subr.mxu0 %v3088
        %3203 = vmatpush1.msra.mxu0 %v3087
        %3204 = vmatprep.subr.mxu0 %v3084
        %3205 = vmatpush1.msra.mxu0 %v3083
        %3206 = vmatprep.subr.mxu0 %v3080
        %3207 = vmatpush1.msra.mxu0 %v3079
        %3208 = vmatprep.subr.mxu0 %v3076
        %3209 = vmatpush1.msra.mxu0 %v3075
        %3210 = vmatprep.subr.mxu0 %v3072
        %3211 = vmatpush1.msra.mxu0 %v3071
        %3212 = vmatprep.subr.mxu0 %v3068
        %3213 = vmatpush1.msra.mxu0 %v3067
        %3214 = vmatprep.subr.mxu0 %v3064
        %3215 = vmatpush1.msra.mxu0 %v3063
        %3216 = vmatprep.subr.mxu0 %v3060
        %3217 = vmatpush1.msra.mxu0 %v3059
        %3218 = vmatprep.subr.mxu0 %v3056
        %3219 = vmatpush1.msra.mxu0 %v3055
        %3220 = vmatprep.subr.mxu0 0.0
        %3221 = vmatpush2.msra.mxu0 0.0
        %3222 = vmatprep.subr.mxu0 0.0
        %3223 = vmatpush2.msra.mxu0 0.0
        %3224 = vmatprep.subr.mxu0 0.0
        %3225 = vmatpush2.msra.mxu0 0.0
        %3226 = vmatprep.subr.mxu0 0.0
        %3227 = vmatpush2.msra.mxu0 0.0
        %3228 = vmatprep.subr.mxu0 0.0
        %3229 = vmatpush2.msra.mxu0 0.0
        %3230 = vmatprep.subr.mxu0 0.0
        %3231 = vmatpush2.msra.mxu0 0.0
        %3232 = vmatprep.subr.mxu0 0.0
        %3233 = vmatpush2.msra.mxu0 0.0
        %3234 = vmatprep.subr.mxu0 0.0
        %3235 = vmatpush2.msra.mxu0 0.0
        %3236 = vmatprep.subr.mxu0 0.0
        %3237 = vmatpush2.msra.mxu0 0.0
        %3238 = vmatprep.subr.mxu0 0.0
        %3239 = vmatpush2.msra.mxu0 0.0
        %3240 = vmatprep.subr.mxu0 0.0
        %3241 = vmatpush2.msra.mxu0 0.0
        %3242 = vmatprep.subr.mxu0 0.0
        %3243 = vmatpush2.msra.mxu0 0.0
        %3244 = vmatprep.subr.mxu0 0.0
        %3245 = vmatpush2.msra.mxu0 0.0
        %3246 = vmatprep.subr.mxu0 0.0
        %3247 = vmatpush2.msra.mxu0 0.0
        %3248 = vmatprep.subr.mxu0 0.0
        %3249 = vmatpush2.msra.mxu0 0.0
        %3250 = vmatprep.subr.mxu0 0.0
        %3251 = vmatpush2.msra.mxu0 0.0
        %3252 = vmatprep.mubr.f32.mxu0 0.0
        %3253 = vmatmul.mubr.f32.gmra.mxu0 %v3052
        %v3254 = vpop.f32.mrf.mxu0
        %v3255 = vadd.f32 0.0, %v3254
        %v3256 = vpop.f32.mrf.mxu0
        %v3257 = vadd.f32 0.0, %v3256
        %3258 = vdwg.mxu0
        %3259 = vmatprep.subr.mxu0 %v3049
        %3260 = vmatpush1.msra.mxu0 %v3048
        %3261 = vmatprep.subr.mxu0 %v3045
        %3262 = vmatpush1.msra.mxu0 %v3044
        %3263 = vmatprep.subr.mxu0 %v3041
        %3264 = vmatpush1.msra.mxu0 %v3040
        %3265 = vmatprep.subr.mxu0 %v3037
        %3266 = vmatpush1.msra.mxu0 %v3036
        %3267 = vmatprep.subr.mxu0 %v3033
        %3268 = vmatpush1.msra.mxu0 %v3032
        %3269 = vmatprep.subr.mxu0 %v3029
        %3270 = vmatpush1.msra.mxu0 %v3028
        %3271 = vmatprep.subr.mxu0 %v3025
        %3272 = vmatpush1.msra.mxu0 %v3024
        %3273 = vmatprep.subr.mxu0 %v3021
        %3274 = vmatpush1.msra.mxu0 %v3020
        %3275 = vmatprep.subr.mxu0 %v3017
        %3276 = vmatpush1.msra.mxu0 %v3016
        %3277 = vmatprep.subr.mxu0 %v3013
        %3278 = vmatpush1.msra.mxu0 %v3012
        %3279 = vmatprep.subr.mxu0 %v3009
        %3280 = vmatpush1.msra.mxu0 %v3008
        %3281 = vmatprep.subr.mxu0 %v3005
        %3282 = vmatpush1.msra.mxu0 %v3004
        %3283 = vmatprep.subr.mxu0 %v3001
        %3284 = vmatpush1.msra.mxu0 %v3000
        %3285 = vmatprep.subr.mxu0 %v2997
        %3286 = vmatpush1.msra.mxu0 %v2996
        %3287 = vmatprep.subr.mxu0 %v2993
        %3288 = vmatpush1.msra.mxu0 %v2992
        %3289 = vmatprep.subr.mxu0 %v2989
        %3290 = vmatpush1.msra.mxu0 %v2988
        %3291 = vmatprep.subr.mxu0 0.0
        %3292 = vmatpush2.msra.mxu0 0.0
        %3293 = vmatprep.subr.mxu0 0.0
        %3294 = vmatpush2.msra.mxu0 0.0
        %3295 = vmatprep.subr.mxu0 0.0
        %3296 = vmatpush2.msra.mxu0 0.0
        %3297 = vmatprep.subr.mxu0 0.0
        %3298 = vmatpush2.msra.mxu0 0.0
        %3299 = vmatprep.subr.mxu0 0.0
        %3300 = vmatpush2.msra.mxu0 0.0
        %3301 = vmatprep.subr.mxu0 0.0
        %3302 = vmatpush2.msra.mxu0 0.0
        %3303 = vmatprep.subr.mxu0 0.0
        %3304 = vmatpush2.msra.mxu0 0.0
        %3305 = vmatprep.subr.mxu0 0.0
        %3306 = vmatpush2.msra.mxu0 0.0
        %3307 = vmatprep.subr.mxu0 0.0
        %3308 = vmatpush2.msra.mxu0 0.0
        %3309 = vmatprep.subr.mxu0 0.0
        %3310 = vmatpush2.msra.mxu0 0.0
        %3311 = vmatprep.subr.mxu0 0.0
        %3312 = vmatpush2.msra.mxu0 0.0
        %3313 = vmatprep.subr.mxu0 0.0
        %3314 = vmatpush2.msra.mxu0 0.0
        %3315 = vmatprep.subr.mxu0 0.0
        %3316 = vmatpush2.msra.mxu0 0.0
        %3317 = vmatprep.subr.mxu0 0.0
        %3318 = vmatpush2.msra.mxu0 0.0
        %3319 = vmatprep.subr.mxu0 0.0
        %3320 = vmatpush2.msra.mxu0 0.0
        %3321 = vmatprep.subr.mxu0 0.0
        %3322 = vmatpush2.msra.mxu0 0.0
        %3323 = vmatprep.mubr.f32.mxu0 0.0
        %3324 = vmatmul.mubr.f32.gmra.mxu0 %v2985
        %v3325 = vpop.f32.mrf.mxu0
        %v3326 = vadd.f32 %v3184, %v3325
        %v3327 = vpop.f32.mrf.mxu0
        %v3328 = vadd.f32 %v3186, %v3327
        %3329 = vdwg.mxu0
        %3330 = vmatprep.subr.mxu0 %v3051
        %3331 = vmatpush1.msra.mxu0 %v3050
        %3332 = vmatprep.subr.mxu0 %v3047
        %3333 = vmatpush1.msra.mxu0 %v3046
        %3334 = vmatprep.subr.mxu0 %v3043
        %3335 = vmatpush1.msra.mxu0 %v3042
        %3336 = vmatprep.subr.mxu0 %v3039
        %3337 = vmatpush1.msra.mxu0 %v3038
        %3338 = vmatprep.subr.mxu0 %v3035
        %3339 = vmatpush1.msra.mxu0 %v3034
        %3340 = vmatprep.subr.mxu0 %v3031
        %3341 = vmatpush1.msra.mxu0 %v3030
        %3342 = vmatprep.subr.mxu0 %v3027
        %3343 = vmatpush1.msra.mxu0 %v3026
        %3344 = vmatprep.subr.mxu0 %v3023
        %3345 = vmatpush1.msra.mxu0 %v3022
        %3346 = vmatprep.subr.mxu0 %v3019
        %3347 = vmatpush1.msra.mxu0 %v3018
        %3348 = vmatprep.subr.mxu0 %v3015
        %3349 = vmatpush1.msra.mxu0 %v3014
        %3350 = vmatprep.subr.mxu0 %v3011
        %3351 = vmatpush1.msra.mxu0 %v3010
        %3352 = vmatprep.subr.mxu0 %v3007
        %3353 = vmatpush1.msra.mxu0 %v3006
        %3354 = vmatprep.subr.mxu0 %v3003
        %3355 = vmatpush1.msra.mxu0 %v3002
        %3356 = vmatprep.subr.mxu0 %v2999
        %3357 = vmatpush1.msra.mxu0 %v2998
        %3358 = vmatprep.subr.mxu0 %v2995
        %3359 = vmatpush1.msra.mxu0 %v2994
        %3360 = vmatprep.subr.mxu0 %v2991
        %3361 = vmatpush1.msra.mxu0 %v2990
        %3362 = vmatprep.subr.mxu0 0.0
        %3363 = vmatpush2.msra.mxu0 0.0
        %3364 = vmatprep.subr.mxu0 0.0
        %3365 = vmatpush2.msra.mxu0 0.0
        %3366 = vmatprep.subr.mxu0 0.0
        %3367 = vmatpush2.msra.mxu0 0.0
        %3368 = vmatprep.subr.mxu0 0.0
        %3369 = vmatpush2.msra.mxu0 0.0
        %3370 = vmatprep.subr.mxu0 0.0
        %3371 = vmatpush2.msra.mxu0 0.0
        %3372 = vmatprep.subr.mxu0 0.0
        %3373 = vmatpush2.msra.mxu0 0.0
        %3374 = vmatprep.subr.mxu0 0.0
        %3375 = vmatpush2.msra.mxu0 0.0
        %3376 = vmatprep.subr.mxu0 0.0
        %3377 = vmatpush2.msra.mxu0 0.0
        %3378 = vmatprep.subr.mxu0 0.0
        %3379 = vmatpush2.msra.mxu0 0.0
        %3380 = vmatprep.subr.mxu0 0.0
        %3381 = vmatpush2.msra.mxu0 0.0
        %3382 = vmatprep.subr.mxu0 0.0
        %3383 = vmatpush2.msra.mxu0 0.0
        %3384 = vmatprep.subr.mxu0 0.0
        %3385 = vmatpush2.msra.mxu0 0.0
        %3386 = vmatprep.subr.mxu0 0.0
        %3387 = vmatpush2.msra.mxu0 0.0
        %3388 = vmatprep.subr.mxu0 0.0
        %3389 = vmatpush2.msra.mxu0 0.0
        %3390 = vmatprep.subr.mxu0 0.0
        %3391 = vmatpush2.msra.mxu0 0.0
        %3392 = vmatprep.subr.mxu0 0.0
        %3393 = vmatpush2.msra.mxu0 0.0
        %3394 = vmatprep.mubr.f32.mxu0 0.0
        %3395 = vmatmul.mubr.f32.gmra.mxu0 %v2985
        %v3396 = vpop.f32.mrf.mxu0
        %v3397 = vadd.f32 %v3255, %v3396
        %v3398 = vpop.f32.mrf.mxu0
        %v3399 = vadd.f32 %v3257, %v3398
        %3400 = vdwg.mxu0
        %v3401 = vld [vmem:[%s6] sm:$0xf]
        %v3403 = vlaneseq
        %v3404 = vshrl.u32 %v3403, 7
        %v3405 = vsub.s32 0, %v3404
        %v3406 = vrot.slane %v3401, %v3405
        %v3407 = vlaneseq
        %v3408 = vshrl.u32 %v3407, 7
        %v3409 = vsub.s32 1, %v3408
        %v3410 = vrot.slane %v3401, %v3409
        %v3411 = vlaneseq
        %v3412 = vshrl.u32 %v3411, 7
        %v3413 = vsub.s32 2, %v3412
        %v3414 = vrot.slane %v3401, %v3413
        %v3415 = vlaneseq
        %v3416 = vshrl.u32 %v3415, 7
        %v3417 = vsub.s32 3, %v3416
        %v3418 = vrot.slane %v3401, %v3417
        %v3423 = vadd.f32 %v3326, %v3406
        %v3424 = vadd.f32 %v3328, %v3410
        %v3425 = vadd.f32 %v3397, %v3414
        %v3426 = vadd.f32 %v3399, %v3418
        %v3427 = vld [vmem:[%s1294] sm:$0xff]
        %v3428 = vxor.u32 %v3423, 2147483648
        %v3429 = vmul.f32 %v3428, 1.442695
        %v3430 = vpow.pop %v3429
        %v3431 = vadd.f32 %v3430, 1.0
        %v3432 = vrcp.pop %v3431
        %v3433 = vmul.f32 1.0, %v3432
        %v3434 = vxor.u32 %v3424, 2147483648
        %v3435 = vmul.f32 %v3434, 1.442695
        %v3436 = vpow.pop %v3435
        %v3437 = vadd.f32 %v3436, 1.0
        %v3438 = vrcp.pop %v3437
        %v3439 = vmul.f32 1.0, %v3438
        %v3440 = vtanh.pop %v3425
        %v3441 = vxor.u32 %v3426, 2147483648
        %v3442 = vmul.f32 %v3441, 1.442695
        %v3443 = vpow.pop %v3442
        %v3444 = vadd.f32 %v3443, 1.0
        %v3445 = vrcp.pop %v3444
        %v3446 = vmul.f32 1.0, %v3445
        %v3447 = vmul.f32 %v3439, %v3427
        %v3448 = vmul.f32 %v3433, %v3440
        %v3449 = vadd.f32 %v3447, %v3448
        %v3450 = vtanh.pop %v3449
        %v3451 = vmul.f32 %v3446, %v3450
        %3452 = vst [vmem:[%s918] sm:$0xff] %v3451
        %3453 = vst [vmem:[%s1294] sm:$0xff] %v3449
        %s3454 = scalar_lea.vmem %s192, 24 [#allocation13]
        %3455 = vst [vmem:[%s3454] sm:$0xff] %v3451
        %s3456 = scalar_lea.vmem [#allocation6], 128
        %v3457 = vld [vmem:[%s3456] sm:$0xff]
        %v3458 = vld [vmem:[%s3456 + $0x8] sm:$0xff]
        %v3459 = vld [vmem:[%s3456 + $0x10] sm:$0xff]
        %v3460 = vld [vmem:[%s3456 + $0x18] sm:$0xff]
        %v3461 = vld [vmem:[#allocation7] sm:$0xff]
        %v3462 = vld [vmem:[#allocation4] sm:$0xff]
        %v3463 = vld [vmem:[#allocation4 + $0x8] sm:$0xff]
        %v3464 = vld [vmem:[#allocation4 + $0x10] sm:$0xff]
        %v3465 = vld [vmem:[#allocation4 + $0x18] sm:$0xff]
        %v3466 = vld [vmem:[#allocation4 + $0x20] sm:$0xff]
        %v3467 = vld [vmem:[#allocation4 + $0x28] sm:$0xff]
        %v3468 = vld [vmem:[#allocation4 + $0x30] sm:$0xff]
        %v3469 = vld [vmem:[#allocation4 + $0x38] sm:$0xff]
        %v3470 = vld [vmem:[#allocation4 + $0x40] sm:$0xff]
        %v3471 = vld [vmem:[#allocation4 + $0x48] sm:$0xff]
        %v3472 = vld [vmem:[#allocation4 + $0x50] sm:$0xff]
        %v3473 = vld [vmem:[#allocation4 + $0x58] sm:$0xff]
        %v3474 = vld [vmem:[#allocation4 + $0x60] sm:$0xff]
        %v3475 = vld [vmem:[#allocation4 + $0x68] sm:$0xff]
        %v3476 = vld [vmem:[#allocation4 + $0x70] sm:$0xff]
        %v3477 = vld [vmem:[#allocation4 + $0x78] sm:$0xff]
        %v3478 = vld [vmem:[#allocation4 + $0x80] sm:$0xff]
        %v3479 = vld [vmem:[#allocation4 + $0x88] sm:$0xff]
        %v3480 = vld [vmem:[#allocation4 + $0x90] sm:$0xff]
        %v3481 = vld [vmem:[#allocation4 + $0x98] sm:$0xff]
        %v3482 = vld [vmem:[#allocation4 + $0xa0] sm:$0xff]
        %v3483 = vld [vmem:[#allocation4 + $0xa8] sm:$0xff]
        %v3484 = vld [vmem:[#allocation4 + $0xb0] sm:$0xff]
        %v3485 = vld [vmem:[#allocation4 + $0xb8] sm:$0xff]
        %v3486 = vld [vmem:[#allocation4 + $0xc0] sm:$0xff]
        %v3487 = vld [vmem:[#allocation4 + $0xc8] sm:$0xff]
        %v3488 = vld [vmem:[#allocation4 + $0xd0] sm:$0xff]
        %v3489 = vld [vmem:[#allocation4 + $0xd8] sm:$0xff]
        %v3490 = vld [vmem:[#allocation4 + $0xe0] sm:$0xff]
        %v3491 = vld [vmem:[#allocation4 + $0xe8] sm:$0xff]
        %v3492 = vld [vmem:[#allocation4 + $0xf0] sm:$0xff]
        %v3493 = vld [vmem:[#allocation4 + $0xf8] sm:$0xff]
        %v3494 = vld [vmem:[#allocation4 + $0x100] sm:$0xff]
        %v3495 = vld [vmem:[#allocation4 + $0x108] sm:$0xff]
        %v3496 = vld [vmem:[#allocation4 + $0x110] sm:$0xff]
        %v3497 = vld [vmem:[#allocation4 + $0x118] sm:$0xff]
        %v3498 = vld [vmem:[#allocation4 + $0x120] sm:$0xff]
        %v3499 = vld [vmem:[#allocation4 + $0x128] sm:$0xff]
        %v3500 = vld [vmem:[#allocation4 + $0x130] sm:$0xff]
        %v3501 = vld [vmem:[#allocation4 + $0x138] sm:$0xff]
        %v3502 = vld [vmem:[#allocation4 + $0x140] sm:$0xff]
        %v3503 = vld [vmem:[#allocation4 + $0x148] sm:$0xff]
        %v3504 = vld [vmem:[#allocation4 + $0x150] sm:$0xff]
        %v3505 = vld [vmem:[#allocation4 + $0x158] sm:$0xff]
        %v3506 = vld [vmem:[#allocation4 + $0x160] sm:$0xff]
        %v3507 = vld [vmem:[#allocation4 + $0x168] sm:$0xff]
        %v3508 = vld [vmem:[#allocation4 + $0x170] sm:$0xff]
        %v3509 = vld [vmem:[#allocation4 + $0x178] sm:$0xff]
        %v3510 = vld [vmem:[#allocation4 + $0x180] sm:$0xff]
        %v3511 = vld [vmem:[#allocation4 + $0x188] sm:$0xff]
        %v3512 = vld [vmem:[#allocation4 + $0x190] sm:$0xff]
        %v3513 = vld [vmem:[#allocation4 + $0x198] sm:$0xff]
        %v3514 = vld [vmem:[#allocation4 + $0x1a0] sm:$0xff]
        %v3515 = vld [vmem:[#allocation4 + $0x1a8] sm:$0xff]
        %v3516 = vld [vmem:[#allocation4 + $0x1b0] sm:$0xff]
        %v3517 = vld [vmem:[#allocation4 + $0x1b8] sm:$0xff]
        %v3518 = vld [vmem:[#allocation4 + $0x1c0] sm:$0xff]
        %v3519 = vld [vmem:[#allocation4 + $0x1c8] sm:$0xff]
        %v3520 = vld [vmem:[#allocation4 + $0x1d0] sm:$0xff]
        %v3521 = vld [vmem:[#allocation4 + $0x1d8] sm:$0xff]
        %v3522 = vld [vmem:[#allocation4 + $0x1e0] sm:$0xff]
        %v3523 = vld [vmem:[#allocation4 + $0x1e8] sm:$0xff]
        %v3524 = vld [vmem:[#allocation4 + $0x1f0] sm:$0xff]
        %v3525 = vld [vmem:[#allocation4 + $0x1f8] sm:$0xff]
        %3526 = vmatprep.subr.mxu0 %v3523
        %3527 = vmatpush1.msra.mxu0 %v3522
        %3528 = vmatprep.subr.mxu0 %v3519
        %3529 = vmatpush1.msra.mxu0 %v3518
        %3530 = vmatprep.subr.mxu0 %v3515
        %3531 = vmatpush1.msra.mxu0 %v3514
        %3532 = vmatprep.subr.mxu0 %v3511
        %3533 = vmatpush1.msra.mxu0 %v3510
        %3534 = vmatprep.subr.mxu0 %v3507
        %3535 = vmatpush1.msra.mxu0 %v3506
        %3536 = vmatprep.subr.mxu0 %v3503
        %3537 = vmatpush1.msra.mxu0 %v3502
        %3538 = vmatprep.subr.mxu0 %v3499
        %3539 = vmatpush1.msra.mxu0 %v3498
        %3540 = vmatprep.subr.mxu0 %v3495
        %3541 = vmatpush1.msra.mxu0 %v3494
        %3542 = vmatprep.subr.mxu0 %v3491
        %3543 = vmatpush1.msra.mxu0 %v3490
        %3544 = vmatprep.subr.mxu0 %v3487
        %3545 = vmatpush1.msra.mxu0 %v3486
        %3546 = vmatprep.subr.mxu0 %v3483
        %3547 = vmatpush1.msra.mxu0 %v3482
        %3548 = vmatprep.subr.mxu0 %v3479
        %3549 = vmatpush1.msra.mxu0 %v3478
        %3550 = vmatprep.subr.mxu0 %v3475
        %3551 = vmatpush1.msra.mxu0 %v3474
        %3552 = vmatprep.subr.mxu0 %v3471
        %3553 = vmatpush1.msra.mxu0 %v3470
        %3554 = vmatprep.subr.mxu0 %v3467
        %3555 = vmatpush1.msra.mxu0 %v3466
        %3556 = vmatprep.subr.mxu0 %v3463
        %3557 = vmatpush1.msra.mxu0 %v3462
        %3558 = vmatprep.subr.mxu0 0.0
        %3559 = vmatpush2.msra.mxu0 0.0
        %3560 = vmatprep.subr.mxu0 0.0
        %3561 = vmatpush2.msra.mxu0 0.0
        %3562 = vmatprep.subr.mxu0 0.0
        %3563 = vmatpush2.msra.mxu0 0.0
        %3564 = vmatprep.subr.mxu0 0.0
        %3565 = vmatpush2.msra.mxu0 0.0
        %3566 = vmatprep.subr.mxu0 0.0
        %3567 = vmatpush2.msra.mxu0 0.0
        %3568 = vmatprep.subr.mxu0 0.0
        %3569 = vmatpush2.msra.mxu0 0.0
        %3570 = vmatprep.subr.mxu0 0.0
        %3571 = vmatpush2.msra.mxu0 0.0
        %3572 = vmatprep.subr.mxu0 0.0
        %3573 = vmatpush2.msra.mxu0 0.0
        %3574 = vmatprep.subr.mxu0 0.0
        %3575 = vmatpush2.msra.mxu0 0.0
        %3576 = vmatprep.subr.mxu0 0.0
        %3577 = vmatpush2.msra.mxu0 0.0
        %3578 = vmatprep.subr.mxu0 0.0
        %3579 = vmatpush2.msra.mxu0 0.0
        %3580 = vmatprep.subr.mxu0 0.0
        %3581 = vmatpush2.msra.mxu0 0.0
        %3582 = vmatprep.subr.mxu0 0.0
        %3583 = vmatpush2.msra.mxu0 0.0
        %3584 = vmatprep.subr.mxu0 0.0
        %3585 = vmatpush2.msra.mxu0 0.0
        %3586 = vmatprep.subr.mxu0 0.0
        %3587 = vmatpush2.msra.mxu0 0.0
        %3588 = vmatprep.subr.mxu0 0.0
        %3589 = vmatpush2.msra.mxu0 0.0
        %3590 = vmatprep.mubr.f32.mxu0 0.0
        %3591 = vmatmul.mubr.f32.gmra.mxu0 %v3461
        %v3592 = vpop.f32.mrf.mxu0
        %v3593 = vadd.f32 0.0, %v3592
        %v3594 = vpop.f32.mrf.mxu0
        %v3595 = vadd.f32 0.0, %v3594
        %3596 = vdwg.mxu0
        %3597 = vmatprep.subr.mxu0 %v3525
        %3598 = vmatpush1.msra.mxu0 %v3524
        %3599 = vmatprep.subr.mxu0 %v3521
        %3600 = vmatpush1.msra.mxu0 %v3520
        %3601 = vmatprep.subr.mxu0 %v3517
        %3602 = vmatpush1.msra.mxu0 %v3516
        %3603 = vmatprep.subr.mxu0 %v3513
        %3604 = vmatpush1.msra.mxu0 %v3512
        %3605 = vmatprep.subr.mxu0 %v3509
        %3606 = vmatpush1.msra.mxu0 %v3508
        %3607 = vmatprep.subr.mxu0 %v3505
        %3608 = vmatpush1.msra.mxu0 %v3504
        %3609 = vmatprep.subr.mxu0 %v3501
        %3610 = vmatpush1.msra.mxu0 %v3500
        %3611 = vmatprep.subr.mxu0 %v3497
        %3612 = vmatpush1.msra.mxu0 %v3496
        %3613 = vmatprep.subr.mxu0 %v3493
        %3614 = vmatpush1.msra.mxu0 %v3492
        %3615 = vmatprep.subr.mxu0 %v3489
        %3616 = vmatpush1.msra.mxu0 %v3488
        %3617 = vmatprep.subr.mxu0 %v3485
        %3618 = vmatpush1.msra.mxu0 %v3484
        %3619 = vmatprep.subr.mxu0 %v3481
        %3620 = vmatpush1.msra.mxu0 %v3480
        %3621 = vmatprep.subr.mxu0 %v3477
        %3622 = vmatpush1.msra.mxu0 %v3476
        %3623 = vmatprep.subr.mxu0 %v3473
        %3624 = vmatpush1.msra.mxu0 %v3472
        %3625 = vmatprep.subr.mxu0 %v3469
        %3626 = vmatpush1.msra.mxu0 %v3468
        %3627 = vmatprep.subr.mxu0 %v3465
        %3628 = vmatpush1.msra.mxu0 %v3464
        %3629 = vmatprep.subr.mxu0 0.0
        %3630 = vmatpush2.msra.mxu0 0.0
        %3631 = vmatprep.subr.mxu0 0.0
        %3632 = vmatpush2.msra.mxu0 0.0
        %3633 = vmatprep.subr.mxu0 0.0
        %3634 = vmatpush2.msra.mxu0 0.0
        %3635 = vmatprep.subr.mxu0 0.0
        %3636 = vmatpush2.msra.mxu0 0.0
        %3637 = vmatprep.subr.mxu0 0.0
        %3638 = vmatpush2.msra.mxu0 0.0
        %3639 = vmatprep.subr.mxu0 0.0
        %3640 = vmatpush2.msra.mxu0 0.0
        %3641 = vmatprep.subr.mxu0 0.0
        %3642 = vmatpush2.msra.mxu0 0.0
        %3643 = vmatprep.subr.mxu0 0.0
        %3644 = vmatpush2.msra.mxu0 0.0
        %3645 = vmatprep.subr.mxu0 0.0
        %3646 = vmatpush2.msra.mxu0 0.0
        %3647 = vmatprep.subr.mxu0 0.0
        %3648 = vmatpush2.msra.mxu0 0.0
        %3649 = vmatprep.subr.mxu0 0.0
        %3650 = vmatpush2.msra.mxu0 0.0
        %3651 = vmatprep.subr.mxu0 0.0
        %3652 = vmatpush2.msra.mxu0 0.0
        %3653 = vmatprep.subr.mxu0 0.0
        %3654 = vmatpush2.msra.mxu0 0.0
        %3655 = vmatprep.subr.mxu0 0.0
        %3656 = vmatpush2.msra.mxu0 0.0
        %3657 = vmatprep.subr.mxu0 0.0
        %3658 = vmatpush2.msra.mxu0 0.0
        %3659 = vmatprep.subr.mxu0 0.0
        %3660 = vmatpush2.msra.mxu0 0.0
        %3661 = vmatprep.mubr.f32.mxu0 0.0
        %3662 = vmatmul.mubr.f32.gmra.mxu0 %v3461
        %v3663 = vpop.f32.mrf.mxu0
        %v3664 = vadd.f32 0.0, %v3663
        %v3665 = vpop.f32.mrf.mxu0
        %v3666 = vadd.f32 0.0, %v3665
        %3667 = vdwg.mxu0
        %v3668 = vadd.f32 %v3457, %v3593
        %v3669 = vadd.f32 %v3458, %v3595
        %v3670 = vadd.f32 %v3459, %v3664
        %v3671 = vadd.f32 %v3460, %v3666
        %v3672 = vld [vmem:[#allocation8] sm:$0xff]
        %v3673 = vxor.u32 %v3668, 2147483648
        %v3674 = vmul.f32 %v3673, 1.442695
        %v3675 = vpow.pop %v3674
        %v3676 = vadd.f32 %v3675, 1.0
        %v3677 = vrcp.pop %v3676
        %v3678 = vmul.f32 1.0, %v3677
        %v3679 = vxor.u32 %v3669, 2147483648
        %v3680 = vmul.f32 %v3679, 1.442695
        %v3681 = vpow.pop %v3680
        %v3682 = vadd.f32 %v3681, 1.0
        %v3683 = vrcp.pop %v3682
        %v3684 = vmul.f32 1.0, %v3683
        %v3685 = vtanh.pop %v3670
        %v3686 = vxor.u32 %v3671, 2147483648
        %v3687 = vmul.f32 %v3686, 1.442695
        %v3688 = vpow.pop %v3687
        %v3689 = vadd.f32 %v3688, 1.0
        %v3690 = vrcp.pop %v3689
        %v3691 = vmul.f32 1.0, %v3690
        %v3692 = vmul.f32 %v3684, %v3672
        %v3693 = vmul.f32 %v3678, %v3685
        %v3694 = vadd.f32 %v3692, %v3693
        %v3695 = vtanh.pop %v3694
        %v3696 = vmul.f32 %v3691, %v3695
        %3697 = vst [vmem:[#allocation7] sm:$0xff] %v3696
        %3698 = vst [vmem:[#allocation8] sm:$0xff] %v3694
        %v3699 = vld [vmem:[#allocation3] sm:$0xff]
        %v3700 = vld [vmem:[#allocation3 + $0x8] sm:$0xff]
        %v3701 = vld [vmem:[#allocation3 + $0x10] sm:$0xff]
        %v3702 = vld [vmem:[#allocation3 + $0x18] sm:$0xff]
        %v3703 = vld [vmem:[#allocation3 + $0x20] sm:$0xff]
        %v3704 = vld [vmem:[#allocation3 + $0x28] sm:$0xff]
        %v3705 = vld [vmem:[#allocation3 + $0x30] sm:$0xff]
        %v3706 = vld [vmem:[#allocation3 + $0x38] sm:$0xff]
        %v3707 = vld [vmem:[#allocation3 + $0x40] sm:$0xff]
        %v3708 = vld [vmem:[#allocation3 + $0x48] sm:$0xff]
        %v3709 = vld [vmem:[#allocation3 + $0x50] sm:$0xff]
        %v3710 = vld [vmem:[#allocation3 + $0x58] sm:$0xff]
        %v3711 = vld [vmem:[#allocation3 + $0x60] sm:$0xff]
        %v3712 = vld [vmem:[#allocation3 + $0x68] sm:$0xff]
        %v3713 = vld [vmem:[#allocation3 + $0x70] sm:$0xff]
        %v3714 = vld [vmem:[#allocation3 + $0x78] sm:$0xff]
        %v3715 = vld [vmem:[#allocation3 + $0x80] sm:$0xff]
        %v3716 = vld [vmem:[#allocation3 + $0x88] sm:$0xff]
        %v3717 = vld [vmem:[#allocation3 + $0x90] sm:$0xff]
        %v3718 = vld [vmem:[#allocation3 + $0x98] sm:$0xff]
        %v3719 = vld [vmem:[#allocation3 + $0xa0] sm:$0xff]
        %v3720 = vld [vmem:[#allocation3 + $0xa8] sm:$0xff]
        %v3721 = vld [vmem:[#allocation3 + $0xb0] sm:$0xff]
        %v3722 = vld [vmem:[#allocation3 + $0xb8] sm:$0xff]
        %v3723 = vld [vmem:[#allocation3 + $0xc0] sm:$0xff]
        %v3724 = vld [vmem:[#allocation3 + $0xc8] sm:$0xff]
        %v3725 = vld [vmem:[#allocation3 + $0xd0] sm:$0xff]
        %v3726 = vld [vmem:[#allocation3 + $0xd8] sm:$0xff]
        %v3727 = vld [vmem:[#allocation3 + $0xe0] sm:$0xff]
        %v3728 = vld [vmem:[#allocation3 + $0xe8] sm:$0xff]
        %v3729 = vld [vmem:[#allocation3 + $0xf0] sm:$0xff]
        %v3730 = vld [vmem:[#allocation3 + $0xf8] sm:$0xff]
        %v3731 = vld [vmem:[#allocation3 + $0x100] sm:$0xff]
        %v3732 = vld [vmem:[#allocation3 + $0x108] sm:$0xff]
        %v3733 = vld [vmem:[#allocation3 + $0x110] sm:$0xff]
        %v3734 = vld [vmem:[#allocation3 + $0x118] sm:$0xff]
        %v3735 = vld [vmem:[#allocation3 + $0x120] sm:$0xff]
        %v3736 = vld [vmem:[#allocation3 + $0x128] sm:$0xff]
        %v3737 = vld [vmem:[#allocation3 + $0x130] sm:$0xff]
        %v3738 = vld [vmem:[#allocation3 + $0x138] sm:$0xff]
        %v3739 = vld [vmem:[#allocation3 + $0x140] sm:$0xff]
        %v3740 = vld [vmem:[#allocation3 + $0x148] sm:$0xff]
        %v3741 = vld [vmem:[#allocation3 + $0x150] sm:$0xff]
        %v3742 = vld [vmem:[#allocation3 + $0x158] sm:$0xff]
        %v3743 = vld [vmem:[#allocation3 + $0x160] sm:$0xff]
        %v3744 = vld [vmem:[#allocation3 + $0x168] sm:$0xff]
        %v3745 = vld [vmem:[#allocation3 + $0x170] sm:$0xff]
        %v3746 = vld [vmem:[#allocation3 + $0x178] sm:$0xff]
        %v3747 = vld [vmem:[#allocation3 + $0x180] sm:$0xff]
        %v3748 = vld [vmem:[#allocation3 + $0x188] sm:$0xff]
        %v3749 = vld [vmem:[#allocation3 + $0x190] sm:$0xff]
        %v3750 = vld [vmem:[#allocation3 + $0x198] sm:$0xff]
        %v3751 = vld [vmem:[#allocation3 + $0x1a0] sm:$0xff]
        %v3752 = vld [vmem:[#allocation3 + $0x1a8] sm:$0xff]
        %v3753 = vld [vmem:[#allocation3 + $0x1b0] sm:$0xff]
        %v3754 = vld [vmem:[#allocation3 + $0x1b8] sm:$0xff]
        %v3755 = vld [vmem:[#allocation3 + $0x1c0] sm:$0xff]
        %v3756 = vld [vmem:[#allocation3 + $0x1c8] sm:$0xff]
        %v3757 = vld [vmem:[#allocation3 + $0x1d0] sm:$0xff]
        %v3758 = vld [vmem:[#allocation3 + $0x1d8] sm:$0xff]
        %v3759 = vld [vmem:[#allocation3 + $0x1e0] sm:$0xff]
        %v3760 = vld [vmem:[#allocation3 + $0x1e8] sm:$0xff]
        %v3761 = vld [vmem:[#allocation3 + $0x1f0] sm:$0xff]
        %v3762 = vld [vmem:[#allocation3 + $0x1f8] sm:$0xff]
        %v3763 = vld [vmem:[%s918] sm:$0xff]
        %v3764 = vld [vmem:[#allocation5] sm:$0xff]
        %v3765 = vld [vmem:[#allocation5 + $0x8] sm:$0xff]
        %v3766 = vld [vmem:[#allocation5 + $0x10] sm:$0xff]
        %v3767 = vld [vmem:[#allocation5 + $0x18] sm:$0xff]
        %v3768 = vld [vmem:[#allocation5 + $0x20] sm:$0xff]
        %v3769 = vld [vmem:[#allocation5 + $0x28] sm:$0xff]
        %v3770 = vld [vmem:[#allocation5 + $0x30] sm:$0xff]
        %v3771 = vld [vmem:[#allocation5 + $0x38] sm:$0xff]
        %v3772 = vld [vmem:[#allocation5 + $0x40] sm:$0xff]
        %v3773 = vld [vmem:[#allocation5 + $0x48] sm:$0xff]
        %v3774 = vld [vmem:[#allocation5 + $0x50] sm:$0xff]
        %v3775 = vld [vmem:[#allocation5 + $0x58] sm:$0xff]
        %v3776 = vld [vmem:[#allocation5 + $0x60] sm:$0xff]
        %v3777 = vld [vmem:[#allocation5 + $0x68] sm:$0xff]
        %v3778 = vld [vmem:[#allocation5 + $0x70] sm:$0xff]
        %v3779 = vld [vmem:[#allocation5 + $0x78] sm:$0xff]
        %v3780 = vld [vmem:[#allocation5 + $0x80] sm:$0xff]
        %v3781 = vld [vmem:[#allocation5 + $0x88] sm:$0xff]
        %v3782 = vld [vmem:[#allocation5 + $0x90] sm:$0xff]
        %v3783 = vld [vmem:[#allocation5 + $0x98] sm:$0xff]
        %v3784 = vld [vmem:[#allocation5 + $0xa0] sm:$0xff]
        %v3785 = vld [vmem:[#allocation5 + $0xa8] sm:$0xff]
        %v3786 = vld [vmem:[#allocation5 + $0xb0] sm:$0xff]
        %v3787 = vld [vmem:[#allocation5 + $0xb8] sm:$0xff]
        %v3788 = vld [vmem:[#allocation5 + $0xc0] sm:$0xff]
        %v3789 = vld [vmem:[#allocation5 + $0xc8] sm:$0xff]
        %v3790 = vld [vmem:[#allocation5 + $0xd0] sm:$0xff]
        %v3791 = vld [vmem:[#allocation5 + $0xd8] sm:$0xff]
        %v3792 = vld [vmem:[#allocation5 + $0xe0] sm:$0xff]
        %v3793 = vld [vmem:[#allocation5 + $0xe8] sm:$0xff]
        %v3794 = vld [vmem:[#allocation5 + $0xf0] sm:$0xff]
        %v3795 = vld [vmem:[#allocation5 + $0xf8] sm:$0xff]
        %v3796 = vld [vmem:[#allocation5 + $0x100] sm:$0xff]
        %v3797 = vld [vmem:[#allocation5 + $0x108] sm:$0xff]
        %v3798 = vld [vmem:[#allocation5 + $0x110] sm:$0xff]
        %v3799 = vld [vmem:[#allocation5 + $0x118] sm:$0xff]
        %v3800 = vld [vmem:[#allocation5 + $0x120] sm:$0xff]
        %v3801 = vld [vmem:[#allocation5 + $0x128] sm:$0xff]
        %v3802 = vld [vmem:[#allocation5 + $0x130] sm:$0xff]
        %v3803 = vld [vmem:[#allocation5 + $0x138] sm:$0xff]
        %v3804 = vld [vmem:[#allocation5 + $0x140] sm:$0xff]
        %v3805 = vld [vmem:[#allocation5 + $0x148] sm:$0xff]
        %v3806 = vld [vmem:[#allocation5 + $0x150] sm:$0xff]
        %v3807 = vld [vmem:[#allocation5 + $0x158] sm:$0xff]
        %v3808 = vld [vmem:[#allocation5 + $0x160] sm:$0xff]
        %v3809 = vld [vmem:[#allocation5 + $0x168] sm:$0xff]
        %v3810 = vld [vmem:[#allocation5 + $0x170] sm:$0xff]
        %v3811 = vld [vmem:[#allocation5 + $0x178] sm:$0xff]
        %v3812 = vld [vmem:[#allocation5 + $0x180] sm:$0xff]
        %v3813 = vld [vmem:[#allocation5 + $0x188] sm:$0xff]
        %v3814 = vld [vmem:[#allocation5 + $0x190] sm:$0xff]
        %v3815 = vld [vmem:[#allocation5 + $0x198] sm:$0xff]
        %v3816 = vld [vmem:[#allocation5 + $0x1a0] sm:$0xff]
        %v3817 = vld [vmem:[#allocation5 + $0x1a8] sm:$0xff]
        %v3818 = vld [vmem:[#allocation5 + $0x1b0] sm:$0xff]
        %v3819 = vld [vmem:[#allocation5 + $0x1b8] sm:$0xff]
        %v3820 = vld [vmem:[#allocation5 + $0x1c0] sm:$0xff]
        %v3821 = vld [vmem:[#allocation5 + $0x1c8] sm:$0xff]
        %v3822 = vld [vmem:[#allocation5 + $0x1d0] sm:$0xff]
        %v3823 = vld [vmem:[#allocation5 + $0x1d8] sm:$0xff]
        %v3824 = vld [vmem:[#allocation5 + $0x1e0] sm:$0xff]
        %v3825 = vld [vmem:[#allocation5 + $0x1e8] sm:$0xff]
        %v3826 = vld [vmem:[#allocation5 + $0x1f0] sm:$0xff]
        %v3827 = vld [vmem:[#allocation5 + $0x1f8] sm:$0xff]
        %3828 = vmatprep.subr.mxu0 %v3825
        %3829 = vmatpush1.msra.mxu0 %v3824
        %3830 = vmatprep.subr.mxu0 %v3821
        %3831 = vmatpush1.msra.mxu0 %v3820
        %3832 = vmatprep.subr.mxu0 %v3817
        %3833 = vmatpush1.msra.mxu0 %v3816
        %3834 = vmatprep.subr.mxu0 %v3813
        %3835 = vmatpush1.msra.mxu0 %v3812
        %3836 = vmatprep.subr.mxu0 %v3809
        %3837 = vmatpush1.msra.mxu0 %v3808
        %3838 = vmatprep.subr.mxu0 %v3805
        %3839 = vmatpush1.msra.mxu0 %v3804
        %3840 = vmatprep.subr.mxu0 %v3801
        %3841 = vmatpush1.msra.mxu0 %v3800
        %3842 = vmatprep.subr.mxu0 %v3797
        %3843 = vmatpush1.msra.mxu0 %v3796
        %3844 = vmatprep.subr.mxu0 %v3793
        %3845 = vmatpush1.msra.mxu0 %v3792
        %3846 = vmatprep.subr.mxu0 %v3789
        %3847 = vmatpush1.msra.mxu0 %v3788
        %3848 = vmatprep.subr.mxu0 %v3785
        %3849 = vmatpush1.msra.mxu0 %v3784
        %3850 = vmatprep.subr.mxu0 %v3781
        %3851 = vmatpush1.msra.mxu0 %v3780
        %3852 = vmatprep.subr.mxu0 %v3777
        %3853 = vmatpush1.msra.mxu0 %v3776
        %3854 = vmatprep.subr.mxu0 %v3773
        %3855 = vmatpush1.msra.mxu0 %v3772
        %3856 = vmatprep.subr.mxu0 %v3769
        %3857 = vmatpush1.msra.mxu0 %v3768
        %3858 = vmatprep.subr.mxu0 %v3765
        %3859 = vmatpush1.msra.mxu0 %v3764
        %3860 = vmatprep.subr.mxu0 0.0
        %3861 = vmatpush2.msra.mxu0 0.0
        %3862 = vmatprep.subr.mxu0 0.0
        %3863 = vmatpush2.msra.mxu0 0.0
        %3864 = vmatprep.subr.mxu0 0.0
        %3865 = vmatpush2.msra.mxu0 0.0
        %3866 = vmatprep.subr.mxu0 0.0
        %3867 = vmatpush2.msra.mxu0 0.0
        %3868 = vmatprep.subr.mxu0 0.0
        %3869 = vmatpush2.msra.mxu0 0.0
        %3870 = vmatprep.subr.mxu0 0.0
        %3871 = vmatpush2.msra.mxu0 0.0
        %3872 = vmatprep.subr.mxu0 0.0
        %3873 = vmatpush2.msra.mxu0 0.0
        %3874 = vmatprep.subr.mxu0 0.0
        %3875 = vmatpush2.msra.mxu0 0.0
        %3876 = vmatprep.subr.mxu0 0.0
        %3877 = vmatpush2.msra.mxu0 0.0
        %3878 = vmatprep.subr.mxu0 0.0
        %3879 = vmatpush2.msra.mxu0 0.0
        %3880 = vmatprep.subr.mxu0 0.0
        %3881 = vmatpush2.msra.mxu0 0.0
        %3882 = vmatprep.subr.mxu0 0.0
        %3883 = vmatpush2.msra.mxu0 0.0
        %3884 = vmatprep.subr.mxu0 0.0
        %3885 = vmatpush2.msra.mxu0 0.0
        %3886 = vmatprep.subr.mxu0 0.0
        %3887 = vmatpush2.msra.mxu0 0.0
        %3888 = vmatprep.subr.mxu0 0.0
        %3889 = vmatpush2.msra.mxu0 0.0
        %3890 = vmatprep.subr.mxu0 0.0
        %3891 = vmatpush2.msra.mxu0 0.0
        %3892 = vmatprep.mubr.f32.mxu0 0.0
        %3893 = vmatmul.mubr.f32.gmra.mxu0 %v3763
        %v3894 = vpop.f32.mrf.mxu0
        %v3895 = vadd.f32 0.0, %v3894
        %v3896 = vpop.f32.mrf.mxu0
        %v3897 = vadd.f32 0.0, %v3896
        %3898 = vdwg.mxu0
        %3899 = vmatprep.subr.mxu0 %v3827
        %3900 = vmatpush1.msra.mxu0 %v3826
        %3901 = vmatprep.subr.mxu0 %v3823
        %3902 = vmatpush1.msra.mxu0 %v3822
        %3903 = vmatprep.subr.mxu0 %v3819
        %3904 = vmatpush1.msra.mxu0 %v3818
        %3905 = vmatprep.subr.mxu0 %v3815
        %3906 = vmatpush1.msra.mxu0 %v3814
        %3907 = vmatprep.subr.mxu0 %v3811
        %3908 = vmatpush1.msra.mxu0 %v3810
        %3909 = vmatprep.subr.mxu0 %v3807
        %3910 = vmatpush1.msra.mxu0 %v3806
        %3911 = vmatprep.subr.mxu0 %v3803
        %3912 = vmatpush1.msra.mxu0 %v3802
        %3913 = vmatprep.subr.mxu0 %v3799
        %3914 = vmatpush1.msra.mxu0 %v3798
        %3915 = vmatprep.subr.mxu0 %v3795
        %3916 = vmatpush1.msra.mxu0 %v3794
        %3917 = vmatprep.subr.mxu0 %v3791
        %3918 = vmatpush1.msra.mxu0 %v3790
        %3919 = vmatprep.subr.mxu0 %v3787
        %3920 = vmatpush1.msra.mxu0 %v3786
        %3921 = vmatprep.subr.mxu0 %v3783
        %3922 = vmatpush1.msra.mxu0 %v3782
        %3923 = vmatprep.subr.mxu0 %v3779
        %3924 = vmatpush1.msra.mxu0 %v3778
        %3925 = vmatprep.subr.mxu0 %v3775
        %3926 = vmatpush1.msra.mxu0 %v3774
        %3927 = vmatprep.subr.mxu0 %v3771
        %3928 = vmatpush1.msra.mxu0 %v3770
        %3929 = vmatprep.subr.mxu0 %v3767
        %3930 = vmatpush1.msra.mxu0 %v3766
        %3931 = vmatprep.subr.mxu0 0.0
        %3932 = vmatpush2.msra.mxu0 0.0
        %3933 = vmatprep.subr.mxu0 0.0
        %3934 = vmatpush2.msra.mxu0 0.0
        %3935 = vmatprep.subr.mxu0 0.0
        %3936 = vmatpush2.msra.mxu0 0.0
        %3937 = vmatprep.subr.mxu0 0.0
        %3938 = vmatpush2.msra.mxu0 0.0
        %3939 = vmatprep.subr.mxu0 0.0
        %3940 = vmatpush2.msra.mxu0 0.0
        %3941 = vmatprep.subr.mxu0 0.0
        %3942 = vmatpush2.msra.mxu0 0.0
        %3943 = vmatprep.subr.mxu0 0.0
        %3944 = vmatpush2.msra.mxu0 0.0
        %3945 = vmatprep.subr.mxu0 0.0
        %3946 = vmatpush2.msra.mxu0 0.0
        %3947 = vmatprep.subr.mxu0 0.0
        %3948 = vmatpush2.msra.mxu0 0.0
        %3949 = vmatprep.subr.mxu0 0.0
        %3950 = vmatpush2.msra.mxu0 0.0
        %3951 = vmatprep.subr.mxu0 0.0
        %3952 = vmatpush2.msra.mxu0 0.0
        %3953 = vmatprep.subr.mxu0 0.0
        %3954 = vmatpush2.msra.mxu0 0.0
        %3955 = vmatprep.subr.mxu0 0.0
        %3956 = vmatpush2.msra.mxu0 0.0
        %3957 = vmatprep.subr.mxu0 0.0
        %3958 = vmatpush2.msra.mxu0 0.0
        %3959 = vmatprep.subr.mxu0 0.0
        %3960 = vmatpush2.msra.mxu0 0.0
        %3961 = vmatprep.subr.mxu0 0.0
        %3962 = vmatpush2.msra.mxu0 0.0
        %3963 = vmatprep.mubr.f32.mxu0 0.0
        %3964 = vmatmul.mubr.f32.gmra.mxu0 %v3763
        %v3965 = vpop.f32.mrf.mxu0
        %v3966 = vadd.f32 0.0, %v3965
        %v3967 = vpop.f32.mrf.mxu0
        %v3968 = vadd.f32 0.0, %v3967
        %3969 = vdwg.mxu0
        %3970 = vmatprep.subr.mxu0 %v3760
        %3971 = vmatpush1.msra.mxu0 %v3759
        %3972 = vmatprep.subr.mxu0 %v3756
        %3973 = vmatpush1.msra.mxu0 %v3755
        %3974 = vmatprep.subr.mxu0 %v3752
        %3975 = vmatpush1.msra.mxu0 %v3751
        %3976 = vmatprep.subr.mxu0 %v3748
        %3977 = vmatpush1.msra.mxu0 %v3747
        %3978 = vmatprep.subr.mxu0 %v3744
        %3979 = vmatpush1.msra.mxu0 %v3743
        %3980 = vmatprep.subr.mxu0 %v3740
        %3981 = vmatpush1.msra.mxu0 %v3739
        %3982 = vmatprep.subr.mxu0 %v3736
        %3983 = vmatpush1.msra.mxu0 %v3735
        %3984 = vmatprep.subr.mxu0 %v3732
        %3985 = vmatpush1.msra.mxu0 %v3731
        %3986 = vmatprep.subr.mxu0 %v3728
        %3987 = vmatpush1.msra.mxu0 %v3727
        %3988 = vmatprep.subr.mxu0 %v3724
        %3989 = vmatpush1.msra.mxu0 %v3723
        %3990 = vmatprep.subr.mxu0 %v3720
        %3991 = vmatpush1.msra.mxu0 %v3719
        %3992 = vmatprep.subr.mxu0 %v3716
        %3993 = vmatpush1.msra.mxu0 %v3715
        %3994 = vmatprep.subr.mxu0 %v3712
        %3995 = vmatpush1.msra.mxu0 %v3711
        %3996 = vmatprep.subr.mxu0 %v3708
        %3997 = vmatpush1.msra.mxu0 %v3707
        %3998 = vmatprep.subr.mxu0 %v3704
        %3999 = vmatpush1.msra.mxu0 %v3703
        %4000 = vmatprep.subr.mxu0 %v3700
        %4001 = vmatpush1.msra.mxu0 %v3699
        %4002 = vmatprep.subr.mxu0 0.0
        %4003 = vmatpush2.msra.mxu0 0.0
        %4004 = vmatprep.subr.mxu0 0.0
        %4005 = vmatpush2.msra.mxu0 0.0
        %4006 = vmatprep.subr.mxu0 0.0
        %4007 = vmatpush2.msra.mxu0 0.0
        %4008 = vmatprep.subr.mxu0 0.0
        %4009 = vmatpush2.msra.mxu0 0.0
        %4010 = vmatprep.subr.mxu0 0.0
        %4011 = vmatpush2.msra.mxu0 0.0
        %4012 = vmatprep.subr.mxu0 0.0
        %4013 = vmatpush2.msra.mxu0 0.0
        %4014 = vmatprep.subr.mxu0 0.0
        %4015 = vmatpush2.msra.mxu0 0.0
        %4016 = vmatprep.subr.mxu0 0.0
        %4017 = vmatpush2.msra.mxu0 0.0
        %4018 = vmatprep.subr.mxu0 0.0
        %4019 = vmatpush2.msra.mxu0 0.0
        %4020 = vmatprep.subr.mxu0 0.0
        %4021 = vmatpush2.msra.mxu0 0.0
        %4022 = vmatprep.subr.mxu0 0.0
        %4023 = vmatpush2.msra.mxu0 0.0
        %4024 = vmatprep.subr.mxu0 0.0
        %4025 = vmatpush2.msra.mxu0 0.0
        %4026 = vmatprep.subr.mxu0 0.0
        %4027 = vmatpush2.msra.mxu0 0.0
        %4028 = vmatprep.subr.mxu0 0.0
        %4029 = vmatpush2.msra.mxu0 0.0
        %4030 = vmatprep.subr.mxu0 0.0
        %4031 = vmatpush2.msra.mxu0 0.0
        %4032 = vmatprep.subr.mxu0 0.0
        %4033 = vmatpush2.msra.mxu0 0.0
        %4034 = vmatprep.mubr.f32.mxu0 0.0
        %4035 = vmatmul.mubr.f32.gmra.mxu0 %v3696
        %v4036 = vpop.f32.mrf.mxu0
        %v4037 = vadd.f32 %v3895, %v4036
        %v4038 = vpop.f32.mrf.mxu0
        %v4039 = vadd.f32 %v3897, %v4038
        %4040 = vdwg.mxu0
        %4041 = vmatprep.subr.mxu0 %v3762
        %4042 = vmatpush1.msra.mxu0 %v3761
        %4043 = vmatprep.subr.mxu0 %v3758
        %4044 = vmatpush1.msra.mxu0 %v3757
        %4045 = vmatprep.subr.mxu0 %v3754
        %4046 = vmatpush1.msra.mxu0 %v3753
        %4047 = vmatprep.subr.mxu0 %v3750
        %4048 = vmatpush1.msra.mxu0 %v3749
        %4049 = vmatprep.subr.mxu0 %v3746
        %4050 = vmatpush1.msra.mxu0 %v3745
        %4051 = vmatprep.subr.mxu0 %v3742
        %4052 = vmatpush1.msra.mxu0 %v3741
        %4053 = vmatprep.subr.mxu0 %v3738
        %4054 = vmatpush1.msra.mxu0 %v3737
        %4055 = vmatprep.subr.mxu0 %v3734
        %4056 = vmatpush1.msra.mxu0 %v3733
        %4057 = vmatprep.subr.mxu0 %v3730
        %4058 = vmatpush1.msra.mxu0 %v3729
        %4059 = vmatprep.subr.mxu0 %v3726
        %4060 = vmatpush1.msra.mxu0 %v3725
        %4061 = vmatprep.subr.mxu0 %v3722
        %4062 = vmatpush1.msra.mxu0 %v3721
        %4063 = vmatprep.subr.mxu0 %v3718
        %4064 = vmatpush1.msra.mxu0 %v3717
        %4065 = vmatprep.subr.mxu0 %v3714
        %4066 = vmatpush1.msra.mxu0 %v3713
        %4067 = vmatprep.subr.mxu0 %v3710
        %4068 = vmatpush1.msra.mxu0 %v3709
        %4069 = vmatprep.subr.mxu0 %v3706
        %4070 = vmatpush1.msra.mxu0 %v3705
        %4071 = vmatprep.subr.mxu0 %v3702
        %4072 = vmatpush1.msra.mxu0 %v3701
        %4073 = vmatprep.subr.mxu0 0.0
        %4074 = vmatpush2.msra.mxu0 0.0
        %4075 = vmatprep.subr.mxu0 0.0
        %4076 = vmatpush2.msra.mxu0 0.0
        %4077 = vmatprep.subr.mxu0 0.0
        %4078 = vmatpush2.msra.mxu0 0.0
        %4079 = vmatprep.subr.mxu0 0.0
        %4080 = vmatpush2.msra.mxu0 0.0
        %4081 = vmatprep.subr.mxu0 0.0
        %4082 = vmatpush2.msra.mxu0 0.0
        %4083 = vmatprep.subr.mxu0 0.0
        %4084 = vmatpush2.msra.mxu0 0.0
        %4085 = vmatprep.subr.mxu0 0.0
        %4086 = vmatpush2.msra.mxu0 0.0
        %4087 = vmatprep.subr.mxu0 0.0
        %4088 = vmatpush2.msra.mxu0 0.0
        %4089 = vmatprep.subr.mxu0 0.0
        %4090 = vmatpush2.msra.mxu0 0.0
        %4091 = vmatprep.subr.mxu0 0.0
        %4092 = vmatpush2.msra.mxu0 0.0
        %4093 = vmatprep.subr.mxu0 0.0
        %4094 = vmatpush2.msra.mxu0 0.0
        %4095 = vmatprep.subr.mxu0 0.0
        %4096 = vmatpush2.msra.mxu0 0.0
        %4097 = vmatprep.subr.mxu0 0.0
        %4098 = vmatpush2.msra.mxu0 0.0
        %4099 = vmatprep.subr.mxu0 0.0
        %4100 = vmatpush2.msra.mxu0 0.0
        %4101 = vmatprep.subr.mxu0 0.0
        %4102 = vmatpush2.msra.mxu0 0.0
        %4103 = vmatprep.subr.mxu0 0.0
        %4104 = vmatpush2.msra.mxu0 0.0
        %4105 = vmatprep.mubr.f32.mxu0 0.0
        %4106 = vmatmul.mubr.f32.gmra.mxu0 %v3696
        %v4107 = vpop.f32.mrf.mxu0
        %v4108 = vadd.f32 %v3966, %v4107
        %v4109 = vpop.f32.mrf.mxu0
        %v4110 = vadd.f32 %v3968, %v4109
        %4111 = vdwg.mxu0
        %v4112 = vld [vmem:[%s6] sm:$0xf]
        %v4114 = vlaneseq
        %v4115 = vshrl.u32 %v4114, 7
        %v4116 = vsub.s32 0, %v4115
        %v4117 = vrot.slane %v4112, %v4116
        %v4118 = vlaneseq
        %v4119 = vshrl.u32 %v4118, 7
        %v4120 = vsub.s32 1, %v4119
        %v4121 = vrot.slane %v4112, %v4120
        %v4122 = vlaneseq
        %v4123 = vshrl.u32 %v4122, 7
        %v4124 = vsub.s32 2, %v4123
        %v4125 = vrot.slane %v4112, %v4124
        %v4126 = vlaneseq
        %v4127 = vshrl.u32 %v4126, 7
        %v4128 = vsub.s32 3, %v4127
        %v4129 = vrot.slane %v4112, %v4128
        %v4134 = vadd.f32 %v4037, %v4117
        %v4135 = vadd.f32 %v4039, %v4121
        %v4136 = vadd.f32 %v4108, %v4125
        %v4137 = vadd.f32 %v4110, %v4129
        %v4138 = vld [vmem:[%s1294] sm:$0xff]
        %v4139 = vxor.u32 %v4134, 2147483648
        %v4140 = vmul.f32 %v4139, 1.442695
        %v4141 = vpow.pop %v4140
        %v4142 = vadd.f32 %v4141, 1.0
        %v4143 = vrcp.pop %v4142
        %v4144 = vmul.f32 1.0, %v4143
        %v4145 = vxor.u32 %v4135, 2147483648
        %v4146 = vmul.f32 %v4145, 1.442695
        %v4147 = vpow.pop %v4146
        %v4148 = vadd.f32 %v4147, 1.0
        %v4149 = vrcp.pop %v4148
        %v4150 = vmul.f32 1.0, %v4149
        %v4151 = vtanh.pop %v4136
        %v4152 = vxor.u32 %v4137, 2147483648
        %v4153 = vmul.f32 %v4152, 1.442695
        %v4154 = vpow.pop %v4153
        %v4155 = vadd.f32 %v4154, 1.0
        %v4156 = vrcp.pop %v4155
        %v4157 = vmul.f32 1.0, %v4156
        %v4158 = vmul.f32 %v4150, %v4138
        %v4159 = vmul.f32 %v4144, %v4151
        %v4160 = vadd.f32 %v4158, %v4159
        %v4161 = vtanh.pop %v4160
        %v4162 = vmul.f32 %v4157, %v4161
        %4163 = vst [vmem:[%s918] sm:$0xff] %v4162
        %4164 = vst [vmem:[%s1294] sm:$0xff] %v4160
        %s4165 = scalar_lea.vmem %s192, 32 [#allocation13]
        %4166 = vst [vmem:[%s4165] sm:$0xff] %v4162
        %s4167 = scalar_lea.vmem [#allocation6], 160
        %v4168 = vld [vmem:[%s4167] sm:$0xff]
        %v4169 = vld [vmem:[%s4167 + $0x8] sm:$0xff]
        %v4170 = vld [vmem:[%s4167 + $0x10] sm:$0xff]
        %v4171 = vld [vmem:[%s4167 + $0x18] sm:$0xff]
        %v4172 = vld [vmem:[#allocation7] sm:$0xff]
        %v4173 = vld [vmem:[#allocation4] sm:$0xff]
        %v4174 = vld [vmem:[#allocation4 + $0x8] sm:$0xff]
        %v4175 = vld [vmem:[#allocation4 + $0x10] sm:$0xff]
        %v4176 = vld [vmem:[#allocation4 + $0x18] sm:$0xff]
        %v4177 = vld [vmem:[#allocation4 + $0x20] sm:$0xff]
        %v4178 = vld [vmem:[#allocation4 + $0x28] sm:$0xff]
        %v4179 = vld [vmem:[#allocation4 + $0x30] sm:$0xff]
        %v4180 = vld [vmem:[#allocation4 + $0x38] sm:$0xff]
        %v4181 = vld [vmem:[#allocation4 + $0x40] sm:$0xff]
        %v4182 = vld [vmem:[#allocation4 + $0x48] sm:$0xff]
        %v4183 = vld [vmem:[#allocation4 + $0x50] sm:$0xff]
        %v4184 = vld [vmem:[#allocation4 + $0x58] sm:$0xff]
        %v4185 = vld [vmem:[#allocation4 + $0x60] sm:$0xff]
        %v4186 = vld [vmem:[#allocation4 + $0x68] sm:$0xff]
        %v4187 = vld [vmem:[#allocation4 + $0x70] sm:$0xff]
        %v4188 = vld [vmem:[#allocation4 + $0x78] sm:$0xff]
        %v4189 = vld [vmem:[#allocation4 + $0x80] sm:$0xff]
        %v4190 = vld [vmem:[#allocation4 + $0x88] sm:$0xff]
        %v4191 = vld [vmem:[#allocation4 + $0x90] sm:$0xff]
        %v4192 = vld [vmem:[#allocation4 + $0x98] sm:$0xff]
        %v4193 = vld [vmem:[#allocation4 + $0xa0] sm:$0xff]
        %v4194 = vld [vmem:[#allocation4 + $0xa8] sm:$0xff]
        %v4195 = vld [vmem:[#allocation4 + $0xb0] sm:$0xff]
        %v4196 = vld [vmem:[#allocation4 + $0xb8] sm:$0xff]
        %v4197 = vld [vmem:[#allocation4 + $0xc0] sm:$0xff]
        %v4198 = vld [vmem:[#allocation4 + $0xc8] sm:$0xff]
        %v4199 = vld [vmem:[#allocation4 + $0xd0] sm:$0xff]
        %v4200 = vld [vmem:[#allocation4 + $0xd8] sm:$0xff]
        %v4201 = vld [vmem:[#allocation4 + $0xe0] sm:$0xff]
        %v4202 = vld [vmem:[#allocation4 + $0xe8] sm:$0xff]
        %v4203 = vld [vmem:[#allocation4 + $0xf0] sm:$0xff]
        %v4204 = vld [vmem:[#allocation4 + $0xf8] sm:$0xff]
        %v4205 = vld [vmem:[#allocation4 + $0x100] sm:$0xff]
        %v4206 = vld [vmem:[#allocation4 + $0x108] sm:$0xff]
        %v4207 = vld [vmem:[#allocation4 + $0x110] sm:$0xff]
        %v4208 = vld [vmem:[#allocation4 + $0x118] sm:$0xff]
        %v4209 = vld [vmem:[#allocation4 + $0x120] sm:$0xff]
        %v4210 = vld [vmem:[#allocation4 + $0x128] sm:$0xff]
        %v4211 = vld [vmem:[#allocation4 + $0x130] sm:$0xff]
        %v4212 = vld [vmem:[#allocation4 + $0x138] sm:$0xff]
        %v4213 = vld [vmem:[#allocation4 + $0x140] sm:$0xff]
        %v4214 = vld [vmem:[#allocation4 + $0x148] sm:$0xff]
        %v4215 = vld [vmem:[#allocation4 + $0x150] sm:$0xff]
        %v4216 = vld [vmem:[#allocation4 + $0x158] sm:$0xff]
        %v4217 = vld [vmem:[#allocation4 + $0x160] sm:$0xff]
        %v4218 = vld [vmem:[#allocation4 + $0x168] sm:$0xff]
        %v4219 = vld [vmem:[#allocation4 + $0x170] sm:$0xff]
        %v4220 = vld [vmem:[#allocation4 + $0x178] sm:$0xff]
        %v4221 = vld [vmem:[#allocation4 + $0x180] sm:$0xff]
        %v4222 = vld [vmem:[#allocation4 + $0x188] sm:$0xff]
        %v4223 = vld [vmem:[#allocation4 + $0x190] sm:$0xff]
        %v4224 = vld [vmem:[#allocation4 + $0x198] sm:$0xff]
        %v4225 = vld [vmem:[#allocation4 + $0x1a0] sm:$0xff]
        %v4226 = vld [vmem:[#allocation4 + $0x1a8] sm:$0xff]
        %v4227 = vld [vmem:[#allocation4 + $0x1b0] sm:$0xff]
        %v4228 = vld [vmem:[#allocation4 + $0x1b8] sm:$0xff]
        %v4229 = vld [vmem:[#allocation4 + $0x1c0] sm:$0xff]
        %v4230 = vld [vmem:[#allocation4 + $0x1c8] sm:$0xff]
        %v4231 = vld [vmem:[#allocation4 + $0x1d0] sm:$0xff]
        %v4232 = vld [vmem:[#allocation4 + $0x1d8] sm:$0xff]
        %v4233 = vld [vmem:[#allocation4 + $0x1e0] sm:$0xff]
        %v4234 = vld [vmem:[#allocation4 + $0x1e8] sm:$0xff]
        %v4235 = vld [vmem:[#allocation4 + $0x1f0] sm:$0xff]
        %v4236 = vld [vmem:[#allocation4 + $0x1f8] sm:$0xff]
        %4237 = vmatprep.subr.mxu0 %v4234
        %4238 = vmatpush1.msra.mxu0 %v4233
        %4239 = vmatprep.subr.mxu0 %v4230
        %4240 = vmatpush1.msra.mxu0 %v4229
        %4241 = vmatprep.subr.mxu0 %v4226
        %4242 = vmatpush1.msra.mxu0 %v4225
        %4243 = vmatprep.subr.mxu0 %v4222
        %4244 = vmatpush1.msra.mxu0 %v4221
        %4245 = vmatprep.subr.mxu0 %v4218
        %4246 = vmatpush1.msra.mxu0 %v4217
        %4247 = vmatprep.subr.mxu0 %v4214
        %4248 = vmatpush1.msra.mxu0 %v4213
        %4249 = vmatprep.subr.mxu0 %v4210
        %4250 = vmatpush1.msra.mxu0 %v4209
        %4251 = vmatprep.subr.mxu0 %v4206
        %4252 = vmatpush1.msra.mxu0 %v4205
        %4253 = vmatprep.subr.mxu0 %v4202
        %4254 = vmatpush1.msra.mxu0 %v4201
        %4255 = vmatprep.subr.mxu0 %v4198
        %4256 = vmatpush1.msra.mxu0 %v4197
        %4257 = vmatprep.subr.mxu0 %v4194
        %4258 = vmatpush1.msra.mxu0 %v4193
        %4259 = vmatprep.subr.mxu0 %v4190
        %4260 = vmatpush1.msra.mxu0 %v4189
        %4261 = vmatprep.subr.mxu0 %v4186
        %4262 = vmatpush1.msra.mxu0 %v4185
        %4263 = vmatprep.subr.mxu0 %v4182
        %4264 = vmatpush1.msra.mxu0 %v4181
        %4265 = vmatprep.subr.mxu0 %v4178
        %4266 = vmatpush1.msra.mxu0 %v4177
        %4267 = vmatprep.subr.mxu0 %v4174
        %4268 = vmatpush1.msra.mxu0 %v4173
        %4269 = vmatprep.subr.mxu0 0.0
        %4270 = vmatpush2.msra.mxu0 0.0
        %4271 = vmatprep.subr.mxu0 0.0
        %4272 = vmatpush2.msra.mxu0 0.0
        %4273 = vmatprep.subr.mxu0 0.0
        %4274 = vmatpush2.msra.mxu0 0.0
        %4275 = vmatprep.subr.mxu0 0.0
        %4276 = vmatpush2.msra.mxu0 0.0
        %4277 = vmatprep.subr.mxu0 0.0
        %4278 = vmatpush2.msra.mxu0 0.0
        %4279 = vmatprep.subr.mxu0 0.0
        %4280 = vmatpush2.msra.mxu0 0.0
        %4281 = vmatprep.subr.mxu0 0.0
        %4282 = vmatpush2.msra.mxu0 0.0
        %4283 = vmatprep.subr.mxu0 0.0
        %4284 = vmatpush2.msra.mxu0 0.0
        %4285 = vmatprep.subr.mxu0 0.0
        %4286 = vmatpush2.msra.mxu0 0.0
        %4287 = vmatprep.subr.mxu0 0.0
        %4288 = vmatpush2.msra.mxu0 0.0
        %4289 = vmatprep.subr.mxu0 0.0
        %4290 = vmatpush2.msra.mxu0 0.0
        %4291 = vmatprep.subr.mxu0 0.0
        %4292 = vmatpush2.msra.mxu0 0.0
        %4293 = vmatprep.subr.mxu0 0.0
        %4294 = vmatpush2.msra.mxu0 0.0
        %4295 = vmatprep.subr.mxu0 0.0
        %4296 = vmatpush2.msra.mxu0 0.0
        %4297 = vmatprep.subr.mxu0 0.0
        %4298 = vmatpush2.msra.mxu0 0.0
        %4299 = vmatprep.subr.mxu0 0.0
        %4300 = vmatpush2.msra.mxu0 0.0
        %4301 = vmatprep.mubr.f32.mxu0 0.0
        %4302 = vmatmul.mubr.f32.gmra.mxu0 %v4172
        %v4303 = vpop.f32.mrf.mxu0
        %v4304 = vadd.f32 0.0, %v4303
        %v4305 = vpop.f32.mrf.mxu0
        %v4306 = vadd.f32 0.0, %v4305
        %4307 = vdwg.mxu0
        %4308 = vmatprep.subr.mxu0 %v4236
        %4309 = vmatpush1.msra.mxu0 %v4235
        %4310 = vmatprep.subr.mxu0 %v4232
        %4311 = vmatpush1.msra.mxu0 %v4231
        %4312 = vmatprep.subr.mxu0 %v4228
        %4313 = vmatpush1.msra.mxu0 %v4227
        %4314 = vmatprep.subr.mxu0 %v4224
        %4315 = vmatpush1.msra.mxu0 %v4223
        %4316 = vmatprep.subr.mxu0 %v4220
        %4317 = vmatpush1.msra.mxu0 %v4219
        %4318 = vmatprep.subr.mxu0 %v4216
        %4319 = vmatpush1.msra.mxu0 %v4215
        %4320 = vmatprep.subr.mxu0 %v4212
        %4321 = vmatpush1.msra.mxu0 %v4211
        %4322 = vmatprep.subr.mxu0 %v4208
        %4323 = vmatpush1.msra.mxu0 %v4207
        %4324 = vmatprep.subr.mxu0 %v4204
        %4325 = vmatpush1.msra.mxu0 %v4203
        %4326 = vmatprep.subr.mxu0 %v4200
        %4327 = vmatpush1.msra.mxu0 %v4199
        %4328 = vmatprep.subr.mxu0 %v4196
        %4329 = vmatpush1.msra.mxu0 %v4195
        %4330 = vmatprep.subr.mxu0 %v4192
        %4331 = vmatpush1.msra.mxu0 %v4191
        %4332 = vmatprep.subr.mxu0 %v4188
        %4333 = vmatpush1.msra.mxu0 %v4187
        %4334 = vmatprep.subr.mxu0 %v4184
        %4335 = vmatpush1.msra.mxu0 %v4183
        %4336 = vmatprep.subr.mxu0 %v4180
        %4337 = vmatpush1.msra.mxu0 %v4179
        %4338 = vmatprep.subr.mxu0 %v4176
        %4339 = vmatpush1.msra.mxu0 %v4175
        %4340 = vmatprep.subr.mxu0 0.0
        %4341 = vmatpush2.msra.mxu0 0.0
        %4342 = vmatprep.subr.mxu0 0.0
        %4343 = vmatpush2.msra.mxu0 0.0
        %4344 = vmatprep.subr.mxu0 0.0
        %4345 = vmatpush2.msra.mxu0 0.0
        %4346 = vmatprep.subr.mxu0 0.0
        %4347 = vmatpush2.msra.mxu0 0.0
        %4348 = vmatprep.subr.mxu0 0.0
        %4349 = vmatpush2.msra.mxu0 0.0
        %4350 = vmatprep.subr.mxu0 0.0
        %4351 = vmatpush2.msra.mxu0 0.0
        %4352 = vmatprep.subr.mxu0 0.0
        %4353 = vmatpush2.msra.mxu0 0.0
        %4354 = vmatprep.subr.mxu0 0.0
        %4355 = vmatpush2.msra.mxu0 0.0
        %4356 = vmatprep.subr.mxu0 0.0
        %4357 = vmatpush2.msra.mxu0 0.0
        %4358 = vmatprep.subr.mxu0 0.0
        %4359 = vmatpush2.msra.mxu0 0.0
        %4360 = vmatprep.subr.mxu0 0.0
        %4361 = vmatpush2.msra.mxu0 0.0
        %4362 = vmatprep.subr.mxu0 0.0
        %4363 = vmatpush2.msra.mxu0 0.0
        %4364 = vmatprep.subr.mxu0 0.0
        %4365 = vmatpush2.msra.mxu0 0.0
        %4366 = vmatprep.subr.mxu0 0.0
        %4367 = vmatpush2.msra.mxu0 0.0
        %4368 = vmatprep.subr.mxu0 0.0
        %4369 = vmatpush2.msra.mxu0 0.0
        %4370 = vmatprep.subr.mxu0 0.0
        %4371 = vmatpush2.msra.mxu0 0.0
        %4372 = vmatprep.mubr.f32.mxu0 0.0
        %4373 = vmatmul.mubr.f32.gmra.mxu0 %v4172
        %v4374 = vpop.f32.mrf.mxu0
        %v4375 = vadd.f32 0.0, %v4374
        %v4376 = vpop.f32.mrf.mxu0
        %v4377 = vadd.f32 0.0, %v4376
        %4378 = vdwg.mxu0
        %v4379 = vadd.f32 %v4168, %v4304
        %v4380 = vadd.f32 %v4169, %v4306
        %v4381 = vadd.f32 %v4170, %v4375
        %v4382 = vadd.f32 %v4171, %v4377
        %v4383 = vld [vmem:[#allocation8] sm:$0xff]
        %v4384 = vxor.u32 %v4379, 2147483648
        %v4385 = vmul.f32 %v4384, 1.442695
        %v4386 = vpow.pop %v4385
        %v4387 = vadd.f32 %v4386, 1.0
        %v4388 = vrcp.pop %v4387
        %v4389 = vmul.f32 1.0, %v4388
        %v4390 = vxor.u32 %v4380, 2147483648
        %v4391 = vmul.f32 %v4390, 1.442695
        %v4392 = vpow.pop %v4391
        %v4393 = vadd.f32 %v4392, 1.0
        %v4394 = vrcp.pop %v4393
        %v4395 = vmul.f32 1.0, %v4394
        %v4396 = vtanh.pop %v4381
        %v4397 = vxor.u32 %v4382, 2147483648
        %v4398 = vmul.f32 %v4397, 1.442695
        %v4399 = vpow.pop %v4398
        %v4400 = vadd.f32 %v4399, 1.0
        %v4401 = vrcp.pop %v4400
        %v4402 = vmul.f32 1.0, %v4401
        %v4403 = vmul.f32 %v4395, %v4383
        %v4404 = vmul.f32 %v4389, %v4396
        %v4405 = vadd.f32 %v4403, %v4404
        %v4406 = vtanh.pop %v4405
        %v4407 = vmul.f32 %v4402, %v4406
        %4408 = vst [vmem:[#allocation7] sm:$0xff] %v4407
        %4409 = vst [vmem:[#allocation8] sm:$0xff] %v4405
        %v4410 = vld [vmem:[#allocation3] sm:$0xff]
        %v4411 = vld [vmem:[#allocation3 + $0x8] sm:$0xff]
        %v4412 = vld [vmem:[#allocation3 + $0x10] sm:$0xff]
        %v4413 = vld [vmem:[#allocation3 + $0x18] sm:$0xff]
        %v4414 = vld [vmem:[#allocation3 + $0x20] sm:$0xff]
        %v4415 = vld [vmem:[#allocation3 + $0x28] sm:$0xff]
        %v4416 = vld [vmem:[#allocation3 + $0x30] sm:$0xff]
        %v4417 = vld [vmem:[#allocation3 + $0x38] sm:$0xff]
        %v4418 = vld [vmem:[#allocation3 + $0x40] sm:$0xff]
        %v4419 = vld [vmem:[#allocation3 + $0x48] sm:$0xff]
        %v4420 = vld [vmem:[#allocation3 + $0x50] sm:$0xff]
        %v4421 = vld [vmem:[#allocation3 + $0x58] sm:$0xff]
        %v4422 = vld [vmem:[#allocation3 + $0x60] sm:$0xff]
        %v4423 = vld [vmem:[#allocation3 + $0x68] sm:$0xff]
        %v4424 = vld [vmem:[#allocation3 + $0x70] sm:$0xff]
        %v4425 = vld [vmem:[#allocation3 + $0x78] sm:$0xff]
        %v4426 = vld [vmem:[#allocation3 + $0x80] sm:$0xff]
        %v4427 = vld [vmem:[#allocation3 + $0x88] sm:$0xff]
        %v4428 = vld [vmem:[#allocation3 + $0x90] sm:$0xff]
        %v4429 = vld [vmem:[#allocation3 + $0x98] sm:$0xff]
        %v4430 = vld [vmem:[#allocation3 + $0xa0] sm:$0xff]
        %v4431 = vld [vmem:[#allocation3 + $0xa8] sm:$0xff]
        %v4432 = vld [vmem:[#allocation3 + $0xb0] sm:$0xff]
        %v4433 = vld [vmem:[#allocation3 + $0xb8] sm:$0xff]
        %v4434 = vld [vmem:[#allocation3 + $0xc0] sm:$0xff]
        %v4435 = vld [vmem:[#allocation3 + $0xc8] sm:$0xff]
        %v4436 = vld [vmem:[#allocation3 + $0xd0] sm:$0xff]
        %v4437 = vld [vmem:[#allocation3 + $0xd8] sm:$0xff]
        %v4438 = vld [vmem:[#allocation3 + $0xe0] sm:$0xff]
        %v4439 = vld [vmem:[#allocation3 + $0xe8] sm:$0xff]
        %v4440 = vld [vmem:[#allocation3 + $0xf0] sm:$0xff]
        %v4441 = vld [vmem:[#allocation3 + $0xf8] sm:$0xff]
        %v4442 = vld [vmem:[#allocation3 + $0x100] sm:$0xff]
        %v4443 = vld [vmem:[#allocation3 + $0x108] sm:$0xff]
        %v4444 = vld [vmem:[#allocation3 + $0x110] sm:$0xff]
        %v4445 = vld [vmem:[#allocation3 + $0x118] sm:$0xff]
        %v4446 = vld [vmem:[#allocation3 + $0x120] sm:$0xff]
        %v4447 = vld [vmem:[#allocation3 + $0x128] sm:$0xff]
        %v4448 = vld [vmem:[#allocation3 + $0x130] sm:$0xff]
        %v4449 = vld [vmem:[#allocation3 + $0x138] sm:$0xff]
        %v4450 = vld [vmem:[#allocation3 + $0x140] sm:$0xff]
        %v4451 = vld [vmem:[#allocation3 + $0x148] sm:$0xff]
        %v4452 = vld [vmem:[#allocation3 + $0x150] sm:$0xff]
        %v4453 = vld [vmem:[#allocation3 + $0x158] sm:$0xff]
        %v4454 = vld [vmem:[#allocation3 + $0x160] sm:$0xff]
        %v4455 = vld [vmem:[#allocation3 + $0x168] sm:$0xff]
        %v4456 = vld [vmem:[#allocation3 + $0x170] sm:$0xff]
        %v4457 = vld [vmem:[#allocation3 + $0x178] sm:$0xff]
        %v4458 = vld [vmem:[#allocation3 + $0x180] sm:$0xff]
        %v4459 = vld [vmem:[#allocation3 + $0x188] sm:$0xff]
        %v4460 = vld [vmem:[#allocation3 + $0x190] sm:$0xff]
        %v4461 = vld [vmem:[#allocation3 + $0x198] sm:$0xff]
        %v4462 = vld [vmem:[#allocation3 + $0x1a0] sm:$0xff]
        %v4463 = vld [vmem:[#allocation3 + $0x1a8] sm:$0xff]
        %v4464 = vld [vmem:[#allocation3 + $0x1b0] sm:$0xff]
        %v4465 = vld [vmem:[#allocation3 + $0x1b8] sm:$0xff]
        %v4466 = vld [vmem:[#allocation3 + $0x1c0] sm:$0xff]
        %v4467 = vld [vmem:[#allocation3 + $0x1c8] sm:$0xff]
        %v4468 = vld [vmem:[#allocation3 + $0x1d0] sm:$0xff]
        %v4469 = vld [vmem:[#allocation3 + $0x1d8] sm:$0xff]
        %v4470 = vld [vmem:[#allocation3 + $0x1e0] sm:$0xff]
        %v4471 = vld [vmem:[#allocation3 + $0x1e8] sm:$0xff]
        %v4472 = vld [vmem:[#allocation3 + $0x1f0] sm:$0xff]
        %v4473 = vld [vmem:[#allocation3 + $0x1f8] sm:$0xff]
        %v4474 = vld [vmem:[%s918] sm:$0xff]
        %v4475 = vld [vmem:[#allocation5] sm:$0xff]
        %v4476 = vld [vmem:[#allocation5 + $0x8] sm:$0xff]
        %v4477 = vld [vmem:[#allocation5 + $0x10] sm:$0xff]
        %v4478 = vld [vmem:[#allocation5 + $0x18] sm:$0xff]
        %v4479 = vld [vmem:[#allocation5 + $0x20] sm:$0xff]
        %v4480 = vld [vmem:[#allocation5 + $0x28] sm:$0xff]
        %v4481 = vld [vmem:[#allocation5 + $0x30] sm:$0xff]
        %v4482 = vld [vmem:[#allocation5 + $0x38] sm:$0xff]
        %v4483 = vld [vmem:[#allocation5 + $0x40] sm:$0xff]
        %v4484 = vld [vmem:[#allocation5 + $0x48] sm:$0xff]
        %v4485 = vld [vmem:[#allocation5 + $0x50] sm:$0xff]
        %v4486 = vld [vmem:[#allocation5 + $0x58] sm:$0xff]
        %v4487 = vld [vmem:[#allocation5 + $0x60] sm:$0xff]
        %v4488 = vld [vmem:[#allocation5 + $0x68] sm:$0xff]
        %v4489 = vld [vmem:[#allocation5 + $0x70] sm:$0xff]
        %v4490 = vld [vmem:[#allocation5 + $0x78] sm:$0xff]
        %v4491 = vld [vmem:[#allocation5 + $0x80] sm:$0xff]
        %v4492 = vld [vmem:[#allocation5 + $0x88] sm:$0xff]
        %v4493 = vld [vmem:[#allocation5 + $0x90] sm:$0xff]
        %v4494 = vld [vmem:[#allocation5 + $0x98] sm:$0xff]
        %v4495 = vld [vmem:[#allocation5 + $0xa0] sm:$0xff]
        %v4496 = vld [vmem:[#allocation5 + $0xa8] sm:$0xff]
        %v4497 = vld [vmem:[#allocation5 + $0xb0] sm:$0xff]
        %v4498 = vld [vmem:[#allocation5 + $0xb8] sm:$0xff]
        %v4499 = vld [vmem:[#allocation5 + $0xc0] sm:$0xff]
        %v4500 = vld [vmem:[#allocation5 + $0xc8] sm:$0xff]
        %v4501 = vld [vmem:[#allocation5 + $0xd0] sm:$0xff]
        %v4502 = vld [vmem:[#allocation5 + $0xd8] sm:$0xff]
        %v4503 = vld [vmem:[#allocation5 + $0xe0] sm:$0xff]
        %v4504 = vld [vmem:[#allocation5 + $0xe8] sm:$0xff]
        %v4505 = vld [vmem:[#allocation5 + $0xf0] sm:$0xff]
        %v4506 = vld [vmem:[#allocation5 + $0xf8] sm:$0xff]
        %v4507 = vld [vmem:[#allocation5 + $0x100] sm:$0xff]
        %v4508 = vld [vmem:[#allocation5 + $0x108] sm:$0xff]
        %v4509 = vld [vmem:[#allocation5 + $0x110] sm:$0xff]
        %v4510 = vld [vmem:[#allocation5 + $0x118] sm:$0xff]
        %v4511 = vld [vmem:[#allocation5 + $0x120] sm:$0xff]
        %v4512 = vld [vmem:[#allocation5 + $0x128] sm:$0xff]
        %v4513 = vld [vmem:[#allocation5 + $0x130] sm:$0xff]
        %v4514 = vld [vmem:[#allocation5 + $0x138] sm:$0xff]
        %v4515 = vld [vmem:[#allocation5 + $0x140] sm:$0xff]
        %v4516 = vld [vmem:[#allocation5 + $0x148] sm:$0xff]
        %v4517 = vld [vmem:[#allocation5 + $0x150] sm:$0xff]
        %v4518 = vld [vmem:[#allocation5 + $0x158] sm:$0xff]
        %v4519 = vld [vmem:[#allocation5 + $0x160] sm:$0xff]
        %v4520 = vld [vmem:[#allocation5 + $0x168] sm:$0xff]
        %v4521 = vld [vmem:[#allocation5 + $0x170] sm:$0xff]
        %v4522 = vld [vmem:[#allocation5 + $0x178] sm:$0xff]
        %v4523 = vld [vmem:[#allocation5 + $0x180] sm:$0xff]
        %v4524 = vld [vmem:[#allocation5 + $0x188] sm:$0xff]
        %v4525 = vld [vmem:[#allocation5 + $0x190] sm:$0xff]
        %v4526 = vld [vmem:[#allocation5 + $0x198] sm:$0xff]
        %v4527 = vld [vmem:[#allocation5 + $0x1a0] sm:$0xff]
        %v4528 = vld [vmem:[#allocation5 + $0x1a8] sm:$0xff]
        %v4529 = vld [vmem:[#allocation5 + $0x1b0] sm:$0xff]
        %v4530 = vld [vmem:[#allocation5 + $0x1b8] sm:$0xff]
        %v4531 = vld [vmem:[#allocation5 + $0x1c0] sm:$0xff]
        %v4532 = vld [vmem:[#allocation5 + $0x1c8] sm:$0xff]
        %v4533 = vld [vmem:[#allocation5 + $0x1d0] sm:$0xff]
        %v4534 = vld [vmem:[#allocation5 + $0x1d8] sm:$0xff]
        %v4535 = vld [vmem:[#allocation5 + $0x1e0] sm:$0xff]
        %v4536 = vld [vmem:[#allocation5 + $0x1e8] sm:$0xff]
        %v4537 = vld [vmem:[#allocation5 + $0x1f0] sm:$0xff]
        %v4538 = vld [vmem:[#allocation5 + $0x1f8] sm:$0xff]
        %4539 = vmatprep.subr.mxu0 %v4536
        %4540 = vmatpush1.msra.mxu0 %v4535
        %4541 = vmatprep.subr.mxu0 %v4532
        %4542 = vmatpush1.msra.mxu0 %v4531
        %4543 = vmatprep.subr.mxu0 %v4528
        %4544 = vmatpush1.msra.mxu0 %v4527
        %4545 = vmatprep.subr.mxu0 %v4524
        %4546 = vmatpush1.msra.mxu0 %v4523
        %4547 = vmatprep.subr.mxu0 %v4520
        %4548 = vmatpush1.msra.mxu0 %v4519
        %4549 = vmatprep.subr.mxu0 %v4516
        %4550 = vmatpush1.msra.mxu0 %v4515
        %4551 = vmatprep.subr.mxu0 %v4512
        %4552 = vmatpush1.msra.mxu0 %v4511
        %4553 = vmatprep.subr.mxu0 %v4508
        %4554 = vmatpush1.msra.mxu0 %v4507
        %4555 = vmatprep.subr.mxu0 %v4504
        %4556 = vmatpush1.msra.mxu0 %v4503
        %4557 = vmatprep.subr.mxu0 %v4500
        %4558 = vmatpush1.msra.mxu0 %v4499
        %4559 = vmatprep.subr.mxu0 %v4496
        %4560 = vmatpush1.msra.mxu0 %v4495
        %4561 = vmatprep.subr.mxu0 %v4492
        %4562 = vmatpush1.msra.mxu0 %v4491
        %4563 = vmatprep.subr.mxu0 %v4488
        %4564 = vmatpush1.msra.mxu0 %v4487
        %4565 = vmatprep.subr.mxu0 %v4484
        %4566 = vmatpush1.msra.mxu0 %v4483
        %4567 = vmatprep.subr.mxu0 %v4480
        %4568 = vmatpush1.msra.mxu0 %v4479
        %4569 = vmatprep.subr.mxu0 %v4476
        %4570 = vmatpush1.msra.mxu0 %v4475
        %4571 = vmatprep.subr.mxu0 0.0
        %4572 = vmatpush2.msra.mxu0 0.0
        %4573 = vmatprep.subr.mxu0 0.0
        %4574 = vmatpush2.msra.mxu0 0.0
        %4575 = vmatprep.subr.mxu0 0.0
        %4576 = vmatpush2.msra.mxu0 0.0
        %4577 = vmatprep.subr.mxu0 0.0
        %4578 = vmatpush2.msra.mxu0 0.0
        %4579 = vmatprep.subr.mxu0 0.0
        %4580 = vmatpush2.msra.mxu0 0.0
        %4581 = vmatprep.subr.mxu0 0.0
        %4582 = vmatpush2.msra.mxu0 0.0
        %4583 = vmatprep.subr.mxu0 0.0
        %4584 = vmatpush2.msra.mxu0 0.0
        %4585 = vmatprep.subr.mxu0 0.0
        %4586 = vmatpush2.msra.mxu0 0.0
        %4587 = vmatprep.subr.mxu0 0.0
        %4588 = vmatpush2.msra.mxu0 0.0
        %4589 = vmatprep.subr.mxu0 0.0
        %4590 = vmatpush2.msra.mxu0 0.0
        %4591 = vmatprep.subr.mxu0 0.0
        %4592 = vmatpush2.msra.mxu0 0.0
        %4593 = vmatprep.subr.mxu0 0.0
        %4594 = vmatpush2.msra.mxu0 0.0
        %4595 = vmatprep.subr.mxu0 0.0
        %4596 = vmatpush2.msra.mxu0 0.0
        %4597 = vmatprep.subr.mxu0 0.0
        %4598 = vmatpush2.msra.mxu0 0.0
        %4599 = vmatprep.subr.mxu0 0.0
        %4600 = vmatpush2.msra.mxu0 0.0
        %4601 = vmatprep.subr.mxu0 0.0
        %4602 = vmatpush2.msra.mxu0 0.0
        %4603 = vmatprep.mubr.f32.mxu0 0.0
        %4604 = vmatmul.mubr.f32.gmra.mxu0 %v4474
        %v4605 = vpop.f32.mrf.mxu0
        %v4606 = vadd.f32 0.0, %v4605
        %v4607 = vpop.f32.mrf.mxu0
        %v4608 = vadd.f32 0.0, %v4607
        %4609 = vdwg.mxu0
        %4610 = vmatprep.subr.mxu0 %v4538
        %4611 = vmatpush1.msra.mxu0 %v4537
        %4612 = vmatprep.subr.mxu0 %v4534
        %4613 = vmatpush1.msra.mxu0 %v4533
        %4614 = vmatprep.subr.mxu0 %v4530
        %4615 = vmatpush1.msra.mxu0 %v4529
        %4616 = vmatprep.subr.mxu0 %v4526
        %4617 = vmatpush1.msra.mxu0 %v4525
        %4618 = vmatprep.subr.mxu0 %v4522
        %4619 = vmatpush1.msra.mxu0 %v4521
        %4620 = vmatprep.subr.mxu0 %v4518
        %4621 = vmatpush1.msra.mxu0 %v4517
        %4622 = vmatprep.subr.mxu0 %v4514
        %4623 = vmatpush1.msra.mxu0 %v4513
        %4624 = vmatprep.subr.mxu0 %v4510
        %4625 = vmatpush1.msra.mxu0 %v4509
        %4626 = vmatprep.subr.mxu0 %v4506
        %4627 = vmatpush1.msra.mxu0 %v4505
        %4628 = vmatprep.subr.mxu0 %v4502
        %4629 = vmatpush1.msra.mxu0 %v4501
        %4630 = vmatprep.subr.mxu0 %v4498
        %4631 = vmatpush1.msra.mxu0 %v4497
        %4632 = vmatprep.subr.mxu0 %v4494
        %4633 = vmatpush1.msra.mxu0 %v4493
        %4634 = vmatprep.subr.mxu0 %v4490
        %4635 = vmatpush1.msra.mxu0 %v4489
        %4636 = vmatprep.subr.mxu0 %v4486
        %4637 = vmatpush1.msra.mxu0 %v4485
        %4638 = vmatprep.subr.mxu0 %v4482
        %4639 = vmatpush1.msra.mxu0 %v4481
        %4640 = vmatprep.subr.mxu0 %v4478
        %4641 = vmatpush1.msra.mxu0 %v4477
        %4642 = vmatprep.subr.mxu0 0.0
        %4643 = vmatpush2.msra.mxu0 0.0
        %4644 = vmatprep.subr.mxu0 0.0
        %4645 = vmatpush2.msra.mxu0 0.0
        %4646 = vmatprep.subr.mxu0 0.0
        %4647 = vmatpush2.msra.mxu0 0.0
        %4648 = vmatprep.subr.mxu0 0.0
        %4649 = vmatpush2.msra.mxu0 0.0
        %4650 = vmatprep.subr.mxu0 0.0
        %4651 = vmatpush2.msra.mxu0 0.0
        %4652 = vmatprep.subr.mxu0 0.0
        %4653 = vmatpush2.msra.mxu0 0.0
        %4654 = vmatprep.subr.mxu0 0.0
        %4655 = vmatpush2.msra.mxu0 0.0
        %4656 = vmatprep.subr.mxu0 0.0
        %4657 = vmatpush2.msra.mxu0 0.0
        %4658 = vmatprep.subr.mxu0 0.0
        %4659 = vmatpush2.msra.mxu0 0.0
        %4660 = vmatprep.subr.mxu0 0.0
        %4661 = vmatpush2.msra.mxu0 0.0
        %4662 = vmatprep.subr.mxu0 0.0
        %4663 = vmatpush2.msra.mxu0 0.0
        %4664 = vmatprep.subr.mxu0 0.0
        %4665 = vmatpush2.msra.mxu0 0.0
        %4666 = vmatprep.subr.mxu0 0.0
        %4667 = vmatpush2.msra.mxu0 0.0
        %4668 = vmatprep.subr.mxu0 0.0
        %4669 = vmatpush2.msra.mxu0 0.0
        %4670 = vmatprep.subr.mxu0 0.0
        %4671 = vmatpush2.msra.mxu0 0.0
        %4672 = vmatprep.subr.mxu0 0.0
        %4673 = vmatpush2.msra.mxu0 0.0
        %4674 = vmatprep.mubr.f32.mxu0 0.0
        %4675 = vmatmul.mubr.f32.gmra.mxu0 %v4474
        %v4676 = vpop.f32.mrf.mxu0
        %v4677 = vadd.f32 0.0, %v4676
        %v4678 = vpop.f32.mrf.mxu0
        %v4679 = vadd.f32 0.0, %v4678
        %4680 = vdwg.mxu0
        %4681 = vmatprep.subr.mxu0 %v4471
        %4682 = vmatpush1.msra.mxu0 %v4470
        %4683 = vmatprep.subr.mxu0 %v4467
        %4684 = vmatpush1.msra.mxu0 %v4466
        %4685 = vmatprep.subr.mxu0 %v4463
        %4686 = vmatpush1.msra.mxu0 %v4462
        %4687 = vmatprep.subr.mxu0 %v4459
        %4688 = vmatpush1.msra.mxu0 %v4458
        %4689 = vmatprep.subr.mxu0 %v4455
        %4690 = vmatpush1.msra.mxu0 %v4454
        %4691 = vmatprep.subr.mxu0 %v4451
        %4692 = vmatpush1.msra.mxu0 %v4450
        %4693 = vmatprep.subr.mxu0 %v4447
        %4694 = vmatpush1.msra.mxu0 %v4446
        %4695 = vmatprep.subr.mxu0 %v4443
        %4696 = vmatpush1.msra.mxu0 %v4442
        %4697 = vmatprep.subr.mxu0 %v4439
        %4698 = vmatpush1.msra.mxu0 %v4438
        %4699 = vmatprep.subr.mxu0 %v4435
        %4700 = vmatpush1.msra.mxu0 %v4434
        %4701 = vmatprep.subr.mxu0 %v4431
        %4702 = vmatpush1.msra.mxu0 %v4430
        %4703 = vmatprep.subr.mxu0 %v4427
        %4704 = vmatpush1.msra.mxu0 %v4426
        %4705 = vmatprep.subr.mxu0 %v4423
        %4706 = vmatpush1.msra.mxu0 %v4422
        %4707 = vmatprep.subr.mxu0 %v4419
        %4708 = vmatpush1.msra.mxu0 %v4418
        %4709 = vmatprep.subr.mxu0 %v4415
        %4710 = vmatpush1.msra.mxu0 %v4414
        %4711 = vmatprep.subr.mxu0 %v4411
        %4712 = vmatpush1.msra.mxu0 %v4410
        %4713 = vmatprep.subr.mxu0 0.0
        %4714 = vmatpush2.msra.mxu0 0.0
        %4715 = vmatprep.subr.mxu0 0.0
        %4716 = vmatpush2.msra.mxu0 0.0
        %4717 = vmatprep.subr.mxu0 0.0
        %4718 = vmatpush2.msra.mxu0 0.0
        %4719 = vmatprep.subr.mxu0 0.0
        %4720 = vmatpush2.msra.mxu0 0.0
        %4721 = vmatprep.subr.mxu0 0.0
        %4722 = vmatpush2.msra.mxu0 0.0
        %4723 = vmatprep.subr.mxu0 0.0
        %4724 = vmatpush2.msra.mxu0 0.0
        %4725 = vmatprep.subr.mxu0 0.0
        %4726 = vmatpush2.msra.mxu0 0.0
        %4727 = vmatprep.subr.mxu0 0.0
        %4728 = vmatpush2.msra.mxu0 0.0
        %4729 = vmatprep.subr.mxu0 0.0
        %4730 = vmatpush2.msra.mxu0 0.0
        %4731 = vmatprep.subr.mxu0 0.0
        %4732 = vmatpush2.msra.mxu0 0.0
        %4733 = vmatprep.subr.mxu0 0.0
        %4734 = vmatpush2.msra.mxu0 0.0
        %4735 = vmatprep.subr.mxu0 0.0
        %4736 = vmatpush2.msra.mxu0 0.0
        %4737 = vmatprep.subr.mxu0 0.0
        %4738 = vmatpush2.msra.mxu0 0.0
        %4739 = vmatprep.subr.mxu0 0.0
        %4740 = vmatpush2.msra.mxu0 0.0
        %4741 = vmatprep.subr.mxu0 0.0
        %4742 = vmatpush2.msra.mxu0 0.0
        %4743 = vmatprep.subr.mxu0 0.0
        %4744 = vmatpush2.msra.mxu0 0.0
        %4745 = vmatprep.mubr.f32.mxu0 0.0
        %4746 = vmatmul.mubr.f32.gmra.mxu0 %v4407
        %v4747 = vpop.f32.mrf.mxu0
        %v4748 = vadd.f32 %v4606, %v4747
        %v4749 = vpop.f32.mrf.mxu0
        %v4750 = vadd.f32 %v4608, %v4749
        %4751 = vdwg.mxu0
        %4752 = vmatprep.subr.mxu0 %v4473
        %4753 = vmatpush1.msra.mxu0 %v4472
        %4754 = vmatprep.subr.mxu0 %v4469
        %4755 = vmatpush1.msra.mxu0 %v4468
        %4756 = vmatprep.subr.mxu0 %v4465
        %4757 = vmatpush1.msra.mxu0 %v4464
        %4758 = vmatprep.subr.mxu0 %v4461
        %4759 = vmatpush1.msra.mxu0 %v4460
        %4760 = vmatprep.subr.mxu0 %v4457
        %4761 = vmatpush1.msra.mxu0 %v4456
        %4762 = vmatprep.subr.mxu0 %v4453
        %4763 = vmatpush1.msra.mxu0 %v4452
        %4764 = vmatprep.subr.mxu0 %v4449
        %4765 = vmatpush1.msra.mxu0 %v4448
        %4766 = vmatprep.subr.mxu0 %v4445
        %4767 = vmatpush1.msra.mxu0 %v4444
        %4768 = vmatprep.subr.mxu0 %v4441
        %4769 = vmatpush1.msra.mxu0 %v4440
        %4770 = vmatprep.subr.mxu0 %v4437
        %4771 = vmatpush1.msra.mxu0 %v4436
        %4772 = vmatprep.subr.mxu0 %v4433
        %4773 = vmatpush1.msra.mxu0 %v4432
        %4774 = vmatprep.subr.mxu0 %v4429
        %4775 = vmatpush1.msra.mxu0 %v4428
        %4776 = vmatprep.subr.mxu0 %v4425
        %4777 = vmatpush1.msra.mxu0 %v4424
        %4778 = vmatprep.subr.mxu0 %v4421
        %4779 = vmatpush1.msra.mxu0 %v4420
        %4780 = vmatprep.subr.mxu0 %v4417
        %4781 = vmatpush1.msra.mxu0 %v4416
        %4782 = vmatprep.subr.mxu0 %v4413
        %4783 = vmatpush1.msra.mxu0 %v4412
        %4784 = vmatprep.subr.mxu0 0.0
        %4785 = vmatpush2.msra.mxu0 0.0
        %4786 = vmatprep.subr.mxu0 0.0
        %4787 = vmatpush2.msra.mxu0 0.0
        %4788 = vmatprep.subr.mxu0 0.0
        %4789 = vmatpush2.msra.mxu0 0.0
        %4790 = vmatprep.subr.mxu0 0.0
        %4791 = vmatpush2.msra.mxu0 0.0
        %4792 = vmatprep.subr.mxu0 0.0
        %4793 = vmatpush2.msra.mxu0 0.0
        %4794 = vmatprep.subr.mxu0 0.0
        %4795 = vmatpush2.msra.mxu0 0.0
        %4796 = vmatprep.subr.mxu0 0.0
        %4797 = vmatpush2.msra.mxu0 0.0
        %4798 = vmatprep.subr.mxu0 0.0
        %4799 = vmatpush2.msra.mxu0 0.0
        %4800 = vmatprep.subr.mxu0 0.0
        %4801 = vmatpush2.msra.mxu0 0.0
        %4802 = vmatprep.subr.mxu0 0.0
        %4803 = vmatpush2.msra.mxu0 0.0
        %4804 = vmatprep.subr.mxu0 0.0
        %4805 = vmatpush2.msra.mxu0 0.0
        %4806 = vmatprep.subr.mxu0 0.0
        %4807 = vmatpush2.msra.mxu0 0.0
        %4808 = vmatprep.subr.mxu0 0.0
        %4809 = vmatpush2.msra.mxu0 0.0
        %4810 = vmatprep.subr.mxu0 0.0
        %4811 = vmatpush2.msra.mxu0 0.0
        %4812 = vmatprep.subr.mxu0 0.0
        %4813 = vmatpush2.msra.mxu0 0.0
        %4814 = vmatprep.subr.mxu0 0.0
        %4815 = vmatpush2.msra.mxu0 0.0
        %4816 = vmatprep.mubr.f32.mxu0 0.0
        %4817 = vmatmul.mubr.f32.gmra.mxu0 %v4407
        %v4818 = vpop.f32.mrf.mxu0
        %v4819 = vadd.f32 %v4677, %v4818
        %v4820 = vpop.f32.mrf.mxu0
        %v4821 = vadd.f32 %v4679, %v4820
        %4822 = vdwg.mxu0
        %v4823 = vld [vmem:[%s6] sm:$0xf]
        %v4825 = vlaneseq
        %v4826 = vshrl.u32 %v4825, 7
        %v4827 = vsub.s32 0, %v4826
        %v4828 = vrot.slane %v4823, %v4827
        %v4829 = vlaneseq
        %v4830 = vshrl.u32 %v4829, 7
        %v4831 = vsub.s32 1, %v4830
        %v4832 = vrot.slane %v4823, %v4831
        %v4833 = vlaneseq
        %v4834 = vshrl.u32 %v4833, 7
        %v4835 = vsub.s32 2, %v4834
        %v4836 = vrot.slane %v4823, %v4835
        %v4837 = vlaneseq
        %v4838 = vshrl.u32 %v4837, 7
        %v4839 = vsub.s32 3, %v4838
        %v4840 = vrot.slane %v4823, %v4839
        %v4845 = vadd.f32 %v4748, %v4828
        %v4846 = vadd.f32 %v4750, %v4832
        %v4847 = vadd.f32 %v4819, %v4836
        %v4848 = vadd.f32 %v4821, %v4840
        %v4849 = vld [vmem:[%s1294] sm:$0xff]
        %v4850 = vxor.u32 %v4845, 2147483648
        %v4851 = vmul.f32 %v4850, 1.442695
        %v4852 = vpow.pop %v4851
        %v4853 = vadd.f32 %v4852, 1.0
        %v4854 = vrcp.pop %v4853
        %v4855 = vmul.f32 1.0, %v4854
        %v4856 = vxor.u32 %v4846, 2147483648
        %v4857 = vmul.f32 %v4856, 1.442695
        %v4858 = vpow.pop %v4857
        %v4859 = vadd.f32 %v4858, 1.0
        %v4860 = vrcp.pop %v4859
        %v4861 = vmul.f32 1.0, %v4860
        %v4862 = vtanh.pop %v4847
        %v4863 = vxor.u32 %v4848, 2147483648
        %v4864 = vmul.f32 %v4863, 1.442695
        %v4865 = vpow.pop %v4864
        %v4866 = vadd.f32 %v4865, 1.0
        %v4867 = vrcp.pop %v4866
        %v4868 = vmul.f32 1.0, %v4867
        %v4869 = vmul.f32 %v4861, %v4849
        %v4870 = vmul.f32 %v4855, %v4862
        %v4871 = vadd.f32 %v4869, %v4870
        %v4872 = vtanh.pop %v4871
        %v4873 = vmul.f32 %v4868, %v4872
        %4874 = vst [vmem:[%s918] sm:$0xff] %v4873
        %4875 = vst [vmem:[%s1294] sm:$0xff] %v4871
        %s4876 = scalar_lea.vmem %s192, 40 [#allocation13]
        %4877 = vst [vmem:[%s4876] sm:$0xff] %v4873
        %s4878 = scalar_lea.vmem [#allocation6], 192
        %v4879 = vld [vmem:[%s4878] sm:$0xff]
        %v4880 = vld [vmem:[%s4878 + $0x8] sm:$0xff]
        %v4881 = vld [vmem:[%s4878 + $0x10] sm:$0xff]
        %v4882 = vld [vmem:[%s4878 + $0x18] sm:$0xff]
        %v4883 = vld [vmem:[#allocation7] sm:$0xff]
        %v4884 = vld [vmem:[#allocation4] sm:$0xff]
        %v4885 = vld [vmem:[#allocation4 + $0x8] sm:$0xff]
        %v4886 = vld [vmem:[#allocation4 + $0x10] sm:$0xff]
        %v4887 = vld [vmem:[#allocation4 + $0x18] sm:$0xff]
        %v4888 = vld [vmem:[#allocation4 + $0x20] sm:$0xff]
        %v4889 = vld [vmem:[#allocation4 + $0x28] sm:$0xff]
        %v4890 = vld [vmem:[#allocation4 + $0x30] sm:$0xff]
        %v4891 = vld [vmem:[#allocation4 + $0x38] sm:$0xff]
        %v4892 = vld [vmem:[#allocation4 + $0x40] sm:$0xff]
        %v4893 = vld [vmem:[#allocation4 + $0x48] sm:$0xff]
        %v4894 = vld [vmem:[#allocation4 + $0x50] sm:$0xff]
        %v4895 = vld [vmem:[#allocation4 + $0x58] sm:$0xff]
        %v4896 = vld [vmem:[#allocation4 + $0x60] sm:$0xff]
        %v4897 = vld [vmem:[#allocation4 + $0x68] sm:$0xff]
        %v4898 = vld [vmem:[#allocation4 + $0x70] sm:$0xff]
        %v4899 = vld [vmem:[#allocation4 + $0x78] sm:$0xff]
        %v4900 = vld [vmem:[#allocation4 + $0x80] sm:$0xff]
        %v4901 = vld [vmem:[#allocation4 + $0x88] sm:$0xff]
        %v4902 = vld [vmem:[#allocation4 + $0x90] sm:$0xff]
        %v4903 = vld [vmem:[#allocation4 + $0x98] sm:$0xff]
        %v4904 = vld [vmem:[#allocation4 + $0xa0] sm:$0xff]
        %v4905 = vld [vmem:[#allocation4 + $0xa8] sm:$0xff]
        %v4906 = vld [vmem:[#allocation4 + $0xb0] sm:$0xff]
        %v4907 = vld [vmem:[#allocation4 + $0xb8] sm:$0xff]
        %v4908 = vld [vmem:[#allocation4 + $0xc0] sm:$0xff]
        %v4909 = vld [vmem:[#allocation4 + $0xc8] sm:$0xff]
        %v4910 = vld [vmem:[#allocation4 + $0xd0] sm:$0xff]
        %v4911 = vld [vmem:[#allocation4 + $0xd8] sm:$0xff]
        %v4912 = vld [vmem:[#allocation4 + $0xe0] sm:$0xff]
        %v4913 = vld [vmem:[#allocation4 + $0xe8] sm:$0xff]
        %v4914 = vld [vmem:[#allocation4 + $0xf0] sm:$0xff]
        %v4915 = vld [vmem:[#allocation4 + $0xf8] sm:$0xff]
        %v4916 = vld [vmem:[#allocation4 + $0x100] sm:$0xff]
        %v4917 = vld [vmem:[#allocation4 + $0x108] sm:$0xff]
        %v4918 = vld [vmem:[#allocation4 + $0x110] sm:$0xff]
        %v4919 = vld [vmem:[#allocation4 + $0x118] sm:$0xff]
        %v4920 = vld [vmem:[#allocation4 + $0x120] sm:$0xff]
        %v4921 = vld [vmem:[#allocation4 + $0x128] sm:$0xff]
        %v4922 = vld [vmem:[#allocation4 + $0x130] sm:$0xff]
        %v4923 = vld [vmem:[#allocation4 + $0x138] sm:$0xff]
        %v4924 = vld [vmem:[#allocation4 + $0x140] sm:$0xff]
        %v4925 = vld [vmem:[#allocation4 + $0x148] sm:$0xff]
        %v4926 = vld [vmem:[#allocation4 + $0x150] sm:$0xff]
        %v4927 = vld [vmem:[#allocation4 + $0x158] sm:$0xff]
        %v4928 = vld [vmem:[#allocation4 + $0x160] sm:$0xff]
        %v4929 = vld [vmem:[#allocation4 + $0x168] sm:$0xff]
        %v4930 = vld [vmem:[#allocation4 + $0x170] sm:$0xff]
        %v4931 = vld [vmem:[#allocation4 + $0x178] sm:$0xff]
        %v4932 = vld [vmem:[#allocation4 + $0x180] sm:$0xff]
        %v4933 = vld [vmem:[#allocation4 + $0x188] sm:$0xff]
        %v4934 = vld [vmem:[#allocation4 + $0x190] sm:$0xff]
        %v4935 = vld [vmem:[#allocation4 + $0x198] sm:$0xff]
        %v4936 = vld [vmem:[#allocation4 + $0x1a0] sm:$0xff]
        %v4937 = vld [vmem:[#allocation4 + $0x1a8] sm:$0xff]
        %v4938 = vld [vmem:[#allocation4 + $0x1b0] sm:$0xff]
        %v4939 = vld [vmem:[#allocation4 + $0x1b8] sm:$0xff]
        %v4940 = vld [vmem:[#allocation4 + $0x1c0] sm:$0xff]
        %v4941 = vld [vmem:[#allocation4 + $0x1c8] sm:$0xff]
        %v4942 = vld [vmem:[#allocation4 + $0x1d0] sm:$0xff]
        %v4943 = vld [vmem:[#allocation4 + $0x1d8] sm:$0xff]
        %v4944 = vld [vmem:[#allocation4 + $0x1e0] sm:$0xff]
        %v4945 = vld [vmem:[#allocation4 + $0x1e8] sm:$0xff]
        %v4946 = vld [vmem:[#allocation4 + $0x1f0] sm:$0xff]
        %v4947 = vld [vmem:[#allocation4 + $0x1f8] sm:$0xff]
        %4948 = vmatprep.subr.mxu0 %v4945
        %4949 = vmatpush1.msra.mxu0 %v4944
        %4950 = vmatprep.subr.mxu0 %v4941
        %4951 = vmatpush1.msra.mxu0 %v4940
        %4952 = vmatprep.subr.mxu0 %v4937
        %4953 = vmatpush1.msra.mxu0 %v4936
        %4954 = vmatprep.subr.mxu0 %v4933
        %4955 = vmatpush1.msra.mxu0 %v4932
        %4956 = vmatprep.subr.mxu0 %v4929
        %4957 = vmatpush1.msra.mxu0 %v4928
        %4958 = vmatprep.subr.mxu0 %v4925
        %4959 = vmatpush1.msra.mxu0 %v4924
        %4960 = vmatprep.subr.mxu0 %v4921
        %4961 = vmatpush1.msra.mxu0 %v4920
        %4962 = vmatprep.subr.mxu0 %v4917
        %4963 = vmatpush1.msra.mxu0 %v4916
        %4964 = vmatprep.subr.mxu0 %v4913
        %4965 = vmatpush1.msra.mxu0 %v4912
        %4966 = vmatprep.subr.mxu0 %v4909
        %4967 = vmatpush1.msra.mxu0 %v4908
        %4968 = vmatprep.subr.mxu0 %v4905
        %4969 = vmatpush1.msra.mxu0 %v4904
        %4970 = vmatprep.subr.mxu0 %v4901
        %4971 = vmatpush1.msra.mxu0 %v4900
        %4972 = vmatprep.subr.mxu0 %v4897
        %4973 = vmatpush1.msra.mxu0 %v4896
        %4974 = vmatprep.subr.mxu0 %v4893
        %4975 = vmatpush1.msra.mxu0 %v4892
        %4976 = vmatprep.subr.mxu0 %v4889
        %4977 = vmatpush1.msra.mxu0 %v4888
        %4978 = vmatprep.subr.mxu0 %v4885
        %4979 = vmatpush1.msra.mxu0 %v4884
        %4980 = vmatprep.subr.mxu0 0.0
        %4981 = vmatpush2.msra.mxu0 0.0
        %4982 = vmatprep.subr.mxu0 0.0
        %4983 = vmatpush2.msra.mxu0 0.0
        %4984 = vmatprep.subr.mxu0 0.0
        %4985 = vmatpush2.msra.mxu0 0.0
        %4986 = vmatprep.subr.mxu0 0.0
        %4987 = vmatpush2.msra.mxu0 0.0
        %4988 = vmatprep.subr.mxu0 0.0
        %4989 = vmatpush2.msra.mxu0 0.0
        %4990 = vmatprep.subr.mxu0 0.0
        %4991 = vmatpush2.msra.mxu0 0.0
        %4992 = vmatprep.subr.mxu0 0.0
        %4993 = vmatpush2.msra.mxu0 0.0
        %4994 = vmatprep.subr.mxu0 0.0
        %4995 = vmatpush2.msra.mxu0 0.0
        %4996 = vmatprep.subr.mxu0 0.0
        %4997 = vmatpush2.msra.mxu0 0.0
        %4998 = vmatprep.subr.mxu0 0.0
        %4999 = vmatpush2.msra.mxu0 0.0
        %5000 = vmatprep.subr.mxu0 0.0
        %5001 = vmatpush2.msra.mxu0 0.0
        %5002 = vmatprep.subr.mxu0 0.0
        %5003 = vmatpush2.msra.mxu0 0.0
        %5004 = vmatprep.subr.mxu0 0.0
        %5005 = vmatpush2.msra.mxu0 0.0
        %5006 = vmatprep.subr.mxu0 0.0
        %5007 = vmatpush2.msra.mxu0 0.0
        %5008 = vmatprep.subr.mxu0 0.0
        %5009 = vmatpush2.msra.mxu0 0.0
        %5010 = vmatprep.subr.mxu0 0.0
        %5011 = vmatpush2.msra.mxu0 0.0
        %5012 = vmatprep.mubr.f32.mxu0 0.0
        %5013 = vmatmul.mubr.f32.gmra.mxu0 %v4883
        %v5014 = vpop.f32.mrf.mxu0
        %v5015 = vadd.f32 0.0, %v5014
        %v5016 = vpop.f32.mrf.mxu0
        %v5017 = vadd.f32 0.0, %v5016
        %5018 = vdwg.mxu0
        %5019 = vmatprep.subr.mxu0 %v4947
        %5020 = vmatpush1.msra.mxu0 %v4946
        %5021 = vmatprep.subr.mxu0 %v4943
        %5022 = vmatpush1.msra.mxu0 %v4942
        %5023 = vmatprep.subr.mxu0 %v4939
        %5024 = vmatpush1.msra.mxu0 %v4938
        %5025 = vmatprep.subr.mxu0 %v4935
        %5026 = vmatpush1.msra.mxu0 %v4934
        %5027 = vmatprep.subr.mxu0 %v4931
        %5028 = vmatpush1.msra.mxu0 %v4930
        %5029 = vmatprep.subr.mxu0 %v4927
        %5030 = vmatpush1.msra.mxu0 %v4926
        %5031 = vmatprep.subr.mxu0 %v4923
        %5032 = vmatpush1.msra.mxu0 %v4922
        %5033 = vmatprep.subr.mxu0 %v4919
        %5034 = vmatpush1.msra.mxu0 %v4918
        %5035 = vmatprep.subr.mxu0 %v4915
        %5036 = vmatpush1.msra.mxu0 %v4914
        %5037 = vmatprep.subr.mxu0 %v4911
        %5038 = vmatpush1.msra.mxu0 %v4910
        %5039 = vmatprep.subr.mxu0 %v4907
        %5040 = vmatpush1.msra.mxu0 %v4906
        %5041 = vmatprep.subr.mxu0 %v4903
        %5042 = vmatpush1.msra.mxu0 %v4902
        %5043 = vmatprep.subr.mxu0 %v4899
        %5044 = vmatpush1.msra.mxu0 %v4898
        %5045 = vmatprep.subr.mxu0 %v4895
        %5046 = vmatpush1.msra.mxu0 %v4894
        %5047 = vmatprep.subr.mxu0 %v4891
        %5048 = vmatpush1.msra.mxu0 %v4890
        %5049 = vmatprep.subr.mxu0 %v4887
        %5050 = vmatpush1.msra.mxu0 %v4886
        %5051 = vmatprep.subr.mxu0 0.0
        %5052 = vmatpush2.msra.mxu0 0.0
        %5053 = vmatprep.subr.mxu0 0.0
        %5054 = vmatpush2.msra.mxu0 0.0
        %5055 = vmatprep.subr.mxu0 0.0
        %5056 = vmatpush2.msra.mxu0 0.0
        %5057 = vmatprep.subr.mxu0 0.0
        %5058 = vmatpush2.msra.mxu0 0.0
        %5059 = vmatprep.subr.mxu0 0.0
        %5060 = vmatpush2.msra.mxu0 0.0
        %5061 = vmatprep.subr.mxu0 0.0
        %5062 = vmatpush2.msra.mxu0 0.0
        %5063 = vmatprep.subr.mxu0 0.0
        %5064 = vmatpush2.msra.mxu0 0.0
        %5065 = vmatprep.subr.mxu0 0.0
        %5066 = vmatpush2.msra.mxu0 0.0
        %5067 = vmatprep.subr.mxu0 0.0
        %5068 = vmatpush2.msra.mxu0 0.0
        %5069 = vmatprep.subr.mxu0 0.0
        %5070 = vmatpush2.msra.mxu0 0.0
        %5071 = vmatprep.subr.mxu0 0.0
        %5072 = vmatpush2.msra.mxu0 0.0
        %5073 = vmatprep.subr.mxu0 0.0
        %5074 = vmatpush2.msra.mxu0 0.0
        %5075 = vmatprep.subr.mxu0 0.0
        %5076 = vmatpush2.msra.mxu0 0.0
        %5077 = vmatprep.subr.mxu0 0.0
        %5078 = vmatpush2.msra.mxu0 0.0
        %5079 = vmatprep.subr.mxu0 0.0
        %5080 = vmatpush2.msra.mxu0 0.0
        %5081 = vmatprep.subr.mxu0 0.0
        %5082 = vmatpush2.msra.mxu0 0.0
        %5083 = vmatprep.mubr.f32.mxu0 0.0
        %5084 = vmatmul.mubr.f32.gmra.mxu0 %v4883
        %v5085 = vpop.f32.mrf.mxu0
        %v5086 = vadd.f32 0.0, %v5085
        %v5087 = vpop.f32.mrf.mxu0
        %v5088 = vadd.f32 0.0, %v5087
        %5089 = vdwg.mxu0
        %v5090 = vadd.f32 %v4879, %v5015
        %v5091 = vadd.f32 %v4880, %v5017
        %v5092 = vadd.f32 %v4881, %v5086
        %v5093 = vadd.f32 %v4882, %v5088
        %v5094 = vld [vmem:[#allocation8] sm:$0xff]
        %v5095 = vxor.u32 %v5090, 2147483648
        %v5096 = vmul.f32 %v5095, 1.442695
        %v5097 = vpow.pop %v5096
        %v5098 = vadd.f32 %v5097, 1.0
        %v5099 = vrcp.pop %v5098
        %v5100 = vmul.f32 1.0, %v5099
        %v5101 = vxor.u32 %v5091, 2147483648
        %v5102 = vmul.f32 %v5101, 1.442695
        %v5103 = vpow.pop %v5102
        %v5104 = vadd.f32 %v5103, 1.0
        %v5105 = vrcp.pop %v5104
        %v5106 = vmul.f32 1.0, %v5105
        %v5107 = vtanh.pop %v5092
        %v5108 = vxor.u32 %v5093, 2147483648
        %v5109 = vmul.f32 %v5108, 1.442695
        %v5110 = vpow.pop %v5109
        %v5111 = vadd.f32 %v5110, 1.0
        %v5112 = vrcp.pop %v5111
        %v5113 = vmul.f32 1.0, %v5112
        %v5114 = vmul.f32 %v5106, %v5094
        %v5115 = vmul.f32 %v5100, %v5107
        %v5116 = vadd.f32 %v5114, %v5115
        %v5117 = vtanh.pop %v5116
        %v5118 = vmul.f32 %v5113, %v5117
        %5119 = vst [vmem:[#allocation7] sm:$0xff] %v5118
        %5120 = vst [vmem:[#allocation8] sm:$0xff] %v5116
        %v5121 = vld [vmem:[#allocation3] sm:$0xff]
        %v5122 = vld [vmem:[#allocation3 + $0x8] sm:$0xff]
        %v5123 = vld [vmem:[#allocation3 + $0x10] sm:$0xff]
        %v5124 = vld [vmem:[#allocation3 + $0x18] sm:$0xff]
        %v5125 = vld [vmem:[#allocation3 + $0x20] sm:$0xff]
        %v5126 = vld [vmem:[#allocation3 + $0x28] sm:$0xff]
        %v5127 = vld [vmem:[#allocation3 + $0x30] sm:$0xff]
        %v5128 = vld [vmem:[#allocation3 + $0x38] sm:$0xff]
        %v5129 = vld [vmem:[#allocation3 + $0x40] sm:$0xff]
        %v5130 = vld [vmem:[#allocation3 + $0x48] sm:$0xff]
        %v5131 = vld [vmem:[#allocation3 + $0x50] sm:$0xff]
        %v5132 = vld [vmem:[#allocation3 + $0x58] sm:$0xff]
        %v5133 = vld [vmem:[#allocation3 + $0x60] sm:$0xff]
        %v5134 = vld [vmem:[#allocation3 + $0x68] sm:$0xff]
        %v5135 = vld [vmem:[#allocation3 + $0x70] sm:$0xff]
        %v5136 = vld [vmem:[#allocation3 + $0x78] sm:$0xff]
        %v5137 = vld [vmem:[#allocation3 + $0x80] sm:$0xff]
        %v5138 = vld [vmem:[#allocation3 + $0x88] sm:$0xff]
        %v5139 = vld [vmem:[#allocation3 + $0x90] sm:$0xff]
        %v5140 = vld [vmem:[#allocation3 + $0x98] sm:$0xff]
        %v5141 = vld [vmem:[#allocation3 + $0xa0] sm:$0xff]
        %v5142 = vld [vmem:[#allocation3 + $0xa8] sm:$0xff]
        %v5143 = vld [vmem:[#allocation3 + $0xb0] sm:$0xff]
        %v5144 = vld [vmem:[#allocation3 + $0xb8] sm:$0xff]
        %v5145 = vld [vmem:[#allocation3 + $0xc0] sm:$0xff]
        %v5146 = vld [vmem:[#allocation3 + $0xc8] sm:$0xff]
        %v5147 = vld [vmem:[#allocation3 + $0xd0] sm:$0xff]
        %v5148 = vld [vmem:[#allocation3 + $0xd8] sm:$0xff]
        %v5149 = vld [vmem:[#allocation3 + $0xe0] sm:$0xff]
        %v5150 = vld [vmem:[#allocation3 + $0xe8] sm:$0xff]
        %v5151 = vld [vmem:[#allocation3 + $0xf0] sm:$0xff]
        %v5152 = vld [vmem:[#allocation3 + $0xf8] sm:$0xff]
        %v5153 = vld [vmem:[#allocation3 + $0x100] sm:$0xff]
        %v5154 = vld [vmem:[#allocation3 + $0x108] sm:$0xff]
        %v5155 = vld [vmem:[#allocation3 + $0x110] sm:$0xff]
        %v5156 = vld [vmem:[#allocation3 + $0x118] sm:$0xff]
        %v5157 = vld [vmem:[#allocation3 + $0x120] sm:$0xff]
        %v5158 = vld [vmem:[#allocation3 + $0x128] sm:$0xff]
        %v5159 = vld [vmem:[#allocation3 + $0x130] sm:$0xff]
        %v5160 = vld [vmem:[#allocation3 + $0x138] sm:$0xff]
        %v5161 = vld [vmem:[#allocation3 + $0x140] sm:$0xff]
        %v5162 = vld [vmem:[#allocation3 + $0x148] sm:$0xff]
        %v5163 = vld [vmem:[#allocation3 + $0x150] sm:$0xff]
        %v5164 = vld [vmem:[#allocation3 + $0x158] sm:$0xff]
        %v5165 = vld [vmem:[#allocation3 + $0x160] sm:$0xff]
        %v5166 = vld [vmem:[#allocation3 + $0x168] sm:$0xff]
        %v5167 = vld [vmem:[#allocation3 + $0x170] sm:$0xff]
        %v5168 = vld [vmem:[#allocation3 + $0x178] sm:$0xff]
        %v5169 = vld [vmem:[#allocation3 + $0x180] sm:$0xff]
        %v5170 = vld [vmem:[#allocation3 + $0x188] sm:$0xff]
        %v5171 = vld [vmem:[#allocation3 + $0x190] sm:$0xff]
        %v5172 = vld [vmem:[#allocation3 + $0x198] sm:$0xff]
        %v5173 = vld [vmem:[#allocation3 + $0x1a0] sm:$0xff]
        %v5174 = vld [vmem:[#allocation3 + $0x1a8] sm:$0xff]
        %v5175 = vld [vmem:[#allocation3 + $0x1b0] sm:$0xff]
        %v5176 = vld [vmem:[#allocation3 + $0x1b8] sm:$0xff]
        %v5177 = vld [vmem:[#allocation3 + $0x1c0] sm:$0xff]
        %v5178 = vld [vmem:[#allocation3 + $0x1c8] sm:$0xff]
        %v5179 = vld [vmem:[#allocation3 + $0x1d0] sm:$0xff]
        %v5180 = vld [vmem:[#allocation3 + $0x1d8] sm:$0xff]
        %v5181 = vld [vmem:[#allocation3 + $0x1e0] sm:$0xff]
        %v5182 = vld [vmem:[#allocation3 + $0x1e8] sm:$0xff]
        %v5183 = vld [vmem:[#allocation3 + $0x1f0] sm:$0xff]
        %v5184 = vld [vmem:[#allocation3 + $0x1f8] sm:$0xff]
        %v5185 = vld [vmem:[%s918] sm:$0xff]
        %v5186 = vld [vmem:[#allocation5] sm:$0xff]
        %v5187 = vld [vmem:[#allocation5 + $0x8] sm:$0xff]
        %v5188 = vld [vmem:[#allocation5 + $0x10] sm:$0xff]
        %v5189 = vld [vmem:[#allocation5 + $0x18] sm:$0xff]
        %v5190 = vld [vmem:[#allocation5 + $0x20] sm:$0xff]
        %v5191 = vld [vmem:[#allocation5 + $0x28] sm:$0xff]
        %v5192 = vld [vmem:[#allocation5 + $0x30] sm:$0xff]
        %v5193 = vld [vmem:[#allocation5 + $0x38] sm:$0xff]
        %v5194 = vld [vmem:[#allocation5 + $0x40] sm:$0xff]
        %v5195 = vld [vmem:[#allocation5 + $0x48] sm:$0xff]
        %v5196 = vld [vmem:[#allocation5 + $0x50] sm:$0xff]
        %v5197 = vld [vmem:[#allocation5 + $0x58] sm:$0xff]
        %v5198 = vld [vmem:[#allocation5 + $0x60] sm:$0xff]
        %v5199 = vld [vmem:[#allocation5 + $0x68] sm:$0xff]
        %v5200 = vld [vmem:[#allocation5 + $0x70] sm:$0xff]
        %v5201 = vld [vmem:[#allocation5 + $0x78] sm:$0xff]
        %v5202 = vld [vmem:[#allocation5 + $0x80] sm:$0xff]
        %v5203 = vld [vmem:[#allocation5 + $0x88] sm:$0xff]
        %v5204 = vld [vmem:[#allocation5 + $0x90] sm:$0xff]
        %v5205 = vld [vmem:[#allocation5 + $0x98] sm:$0xff]
        %v5206 = vld [vmem:[#allocation5 + $0xa0] sm:$0xff]
        %v5207 = vld [vmem:[#allocation5 + $0xa8] sm:$0xff]
        %v5208 = vld [vmem:[#allocation5 + $0xb0] sm:$0xff]
        %v5209 = vld [vmem:[#allocation5 + $0xb8] sm:$0xff]
        %v5210 = vld [vmem:[#allocation5 + $0xc0] sm:$0xff]
        %v5211 = vld [vmem:[#allocation5 + $0xc8] sm:$0xff]
        %v5212 = vld [vmem:[#allocation5 + $0xd0] sm:$0xff]
        %v5213 = vld [vmem:[#allocation5 + $0xd8] sm:$0xff]
        %v5214 = vld [vmem:[#allocation5 + $0xe0] sm:$0xff]
        %v5215 = vld [vmem:[#allocation5 + $0xe8] sm:$0xff]
        %v5216 = vld [vmem:[#allocation5 + $0xf0] sm:$0xff]
        %v5217 = vld [vmem:[#allocation5 + $0xf8] sm:$0xff]
        %v5218 = vld [vmem:[#allocation5 + $0x100] sm:$0xff]
        %v5219 = vld [vmem:[#allocation5 + $0x108] sm:$0xff]
        %v5220 = vld [vmem:[#allocation5 + $0x110] sm:$0xff]
        %v5221 = vld [vmem:[#allocation5 + $0x118] sm:$0xff]
        %v5222 = vld [vmem:[#allocation5 + $0x120] sm:$0xff]
        %v5223 = vld [vmem:[#allocation5 + $0x128] sm:$0xff]
        %v5224 = vld [vmem:[#allocation5 + $0x130] sm:$0xff]
        %v5225 = vld [vmem:[#allocation5 + $0x138] sm:$0xff]
        %v5226 = vld [vmem:[#allocation5 + $0x140] sm:$0xff]
        %v5227 = vld [vmem:[#allocation5 + $0x148] sm:$0xff]
        %v5228 = vld [vmem:[#allocation5 + $0x150] sm:$0xff]
        %v5229 = vld [vmem:[#allocation5 + $0x158] sm:$0xff]
        %v5230 = vld [vmem:[#allocation5 + $0x160] sm:$0xff]
        %v5231 = vld [vmem:[#allocation5 + $0x168] sm:$0xff]
        %v5232 = vld [vmem:[#allocation5 + $0x170] sm:$0xff]
        %v5233 = vld [vmem:[#allocation5 + $0x178] sm:$0xff]
        %v5234 = vld [vmem:[#allocation5 + $0x180] sm:$0xff]
        %v5235 = vld [vmem:[#allocation5 + $0x188] sm:$0xff]
        %v5236 = vld [vmem:[#allocation5 + $0x190] sm:$0xff]
        %v5237 = vld [vmem:[#allocation5 + $0x198] sm:$0xff]
        %v5238 = vld [vmem:[#allocation5 + $0x1a0] sm:$0xff]
        %v5239 = vld [vmem:[#allocation5 + $0x1a8] sm:$0xff]
        %v5240 = vld [vmem:[#allocation5 + $0x1b0] sm:$0xff]
        %v5241 = vld [vmem:[#allocation5 + $0x1b8] sm:$0xff]
        %v5242 = vld [vmem:[#allocation5 + $0x1c0] sm:$0xff]
        %v5243 = vld [vmem:[#allocation5 + $0x1c8] sm:$0xff]
        %v5244 = vld [vmem:[#allocation5 + $0x1d0] sm:$0xff]
        %v5245 = vld [vmem:[#allocation5 + $0x1d8] sm:$0xff]
        %v5246 = vld [vmem:[#allocation5 + $0x1e0] sm:$0xff]
        %v5247 = vld [vmem:[#allocation5 + $0x1e8] sm:$0xff]
        %v5248 = vld [vmem:[#allocation5 + $0x1f0] sm:$0xff]
        %v5249 = vld [vmem:[#allocation5 + $0x1f8] sm:$0xff]
        %5250 = vmatprep.subr.mxu0 %v5247
        %5251 = vmatpush1.msra.mxu0 %v5246
        %5252 = vmatprep.subr.mxu0 %v5243
        %5253 = vmatpush1.msra.mxu0 %v5242
        %5254 = vmatprep.subr.mxu0 %v5239
        %5255 = vmatpush1.msra.mxu0 %v5238
        %5256 = vmatprep.subr.mxu0 %v5235
        %5257 = vmatpush1.msra.mxu0 %v5234
        %5258 = vmatprep.subr.mxu0 %v5231
        %5259 = vmatpush1.msra.mxu0 %v5230
        %5260 = vmatprep.subr.mxu0 %v5227
        %5261 = vmatpush1.msra.mxu0 %v5226
        %5262 = vmatprep.subr.mxu0 %v5223
        %5263 = vmatpush1.msra.mxu0 %v5222
        %5264 = vmatprep.subr.mxu0 %v5219
        %5265 = vmatpush1.msra.mxu0 %v5218
        %5266 = vmatprep.subr.mxu0 %v5215
        %5267 = vmatpush1.msra.mxu0 %v5214
        %5268 = vmatprep.subr.mxu0 %v5211
        %5269 = vmatpush1.msra.mxu0 %v5210
        %5270 = vmatprep.subr.mxu0 %v5207
        %5271 = vmatpush1.msra.mxu0 %v5206
        %5272 = vmatprep.subr.mxu0 %v5203
        %5273 = vmatpush1.msra.mxu0 %v5202
        %5274 = vmatprep.subr.mxu0 %v5199
        %5275 = vmatpush1.msra.mxu0 %v5198
        %5276 = vmatprep.subr.mxu0 %v5195
        %5277 = vmatpush1.msra.mxu0 %v5194
        %5278 = vmatprep.subr.mxu0 %v5191
        %5279 = vmatpush1.msra.mxu0 %v5190
        %5280 = vmatprep.subr.mxu0 %v5187
        %5281 = vmatpush1.msra.mxu0 %v5186
        %5282 = vmatprep.subr.mxu0 0.0
        %5283 = vmatpush2.msra.mxu0 0.0
        %5284 = vmatprep.subr.mxu0 0.0
        %5285 = vmatpush2.msra.mxu0 0.0
        %5286 = vmatprep.subr.mxu0 0.0
        %5287 = vmatpush2.msra.mxu0 0.0
        %5288 = vmatprep.subr.mxu0 0.0
        %5289 = vmatpush2.msra.mxu0 0.0
        %5290 = vmatprep.subr.mxu0 0.0
        %5291 = vmatpush2.msra.mxu0 0.0
        %5292 = vmatprep.subr.mxu0 0.0
        %5293 = vmatpush2.msra.mxu0 0.0
        %5294 = vmatprep.subr.mxu0 0.0
        %5295 = vmatpush2.msra.mxu0 0.0
        %5296 = vmatprep.subr.mxu0 0.0
        %5297 = vmatpush2.msra.mxu0 0.0
        %5298 = vmatprep.subr.mxu0 0.0
        %5299 = vmatpush2.msra.mxu0 0.0
        %5300 = vmatprep.subr.mxu0 0.0
        %5301 = vmatpush2.msra.mxu0 0.0
        %5302 = vmatprep.subr.mxu0 0.0
        %5303 = vmatpush2.msra.mxu0 0.0
        %5304 = vmatprep.subr.mxu0 0.0
        %5305 = vmatpush2.msra.mxu0 0.0
        %5306 = vmatprep.subr.mxu0 0.0
        %5307 = vmatpush2.msra.mxu0 0.0
        %5308 = vmatprep.subr.mxu0 0.0
        %5309 = vmatpush2.msra.mxu0 0.0
        %5310 = vmatprep.subr.mxu0 0.0
        %5311 = vmatpush2.msra.mxu0 0.0
        %5312 = vmatprep.subr.mxu0 0.0
        %5313 = vmatpush2.msra.mxu0 0.0
        %5314 = vmatprep.mubr.f32.mxu0 0.0
        %5315 = vmatmul.mubr.f32.gmra.mxu0 %v5185
        %v5316 = vpop.f32.mrf.mxu0
        %v5317 = vadd.f32 0.0, %v5316
        %v5318 = vpop.f32.mrf.mxu0
        %v5319 = vadd.f32 0.0, %v5318
        %5320 = vdwg.mxu0
        %5321 = vmatprep.subr.mxu0 %v5249
        %5322 = vmatpush1.msra.mxu0 %v5248
        %5323 = vmatprep.subr.mxu0 %v5245
        %5324 = vmatpush1.msra.mxu0 %v5244
        %5325 = vmatprep.subr.mxu0 %v5241
        %5326 = vmatpush1.msra.mxu0 %v5240
        %5327 = vmatprep.subr.mxu0 %v5237
        %5328 = vmatpush1.msra.mxu0 %v5236
        %5329 = vmatprep.subr.mxu0 %v5233
        %5330 = vmatpush1.msra.mxu0 %v5232
        %5331 = vmatprep.subr.mxu0 %v5229
        %5332 = vmatpush1.msra.mxu0 %v5228
        %5333 = vmatprep.subr.mxu0 %v5225
        %5334 = vmatpush1.msra.mxu0 %v5224
        %5335 = vmatprep.subr.mxu0 %v5221
        %5336 = vmatpush1.msra.mxu0 %v5220
        %5337 = vmatprep.subr.mxu0 %v5217
        %5338 = vmatpush1.msra.mxu0 %v5216
        %5339 = vmatprep.subr.mxu0 %v5213
        %5340 = vmatpush1.msra.mxu0 %v5212
        %5341 = vmatprep.subr.mxu0 %v5209
        %5342 = vmatpush1.msra.mxu0 %v5208
        %5343 = vmatprep.subr.mxu0 %v5205
        %5344 = vmatpush1.msra.mxu0 %v5204
        %5345 = vmatprep.subr.mxu0 %v5201
        %5346 = vmatpush1.msra.mxu0 %v5200
        %5347 = vmatprep.subr.mxu0 %v5197
        %5348 = vmatpush1.msra.mxu0 %v5196
        %5349 = vmatprep.subr.mxu0 %v5193
        %5350 = vmatpush1.msra.mxu0 %v5192
        %5351 = vmatprep.subr.mxu0 %v5189
        %5352 = vmatpush1.msra.mxu0 %v5188
        %5353 = vmatprep.subr.mxu0 0.0
        %5354 = vmatpush2.msra.mxu0 0.0
        %5355 = vmatprep.subr.mxu0 0.0
        %5356 = vmatpush2.msra.mxu0 0.0
        %5357 = vmatprep.subr.mxu0 0.0
        %5358 = vmatpush2.msra.mxu0 0.0
        %5359 = vmatprep.subr.mxu0 0.0
        %5360 = vmatpush2.msra.mxu0 0.0
        %5361 = vmatprep.subr.mxu0 0.0
        %5362 = vmatpush2.msra.mxu0 0.0
        %5363 = vmatprep.subr.mxu0 0.0
        %5364 = vmatpush2.msra.mxu0 0.0
        %5365 = vmatprep.subr.mxu0 0.0
        %5366 = vmatpush2.msra.mxu0 0.0
        %5367 = vmatprep.subr.mxu0 0.0
        %5368 = vmatpush2.msra.mxu0 0.0
        %5369 = vmatprep.subr.mxu0 0.0
        %5370 = vmatpush2.msra.mxu0 0.0
        %5371 = vmatprep.subr.mxu0 0.0
        %5372 = vmatpush2.msra.mxu0 0.0
        %5373 = vmatprep.subr.mxu0 0.0
        %5374 = vmatpush2.msra.mxu0 0.0
        %5375 = vmatprep.subr.mxu0 0.0
        %5376 = vmatpush2.msra.mxu0 0.0
        %5377 = vmatprep.subr.mxu0 0.0
        %5378 = vmatpush2.msra.mxu0 0.0
        %5379 = vmatprep.subr.mxu0 0.0
        %5380 = vmatpush2.msra.mxu0 0.0
        %5381 = vmatprep.subr.mxu0 0.0
        %5382 = vmatpush2.msra.mxu0 0.0
        %5383 = vmatprep.subr.mxu0 0.0
        %5384 = vmatpush2.msra.mxu0 0.0
        %5385 = vmatprep.mubr.f32.mxu0 0.0
        %5386 = vmatmul.mubr.f32.gmra.mxu0 %v5185
        %v5387 = vpop.f32.mrf.mxu0
        %v5388 = vadd.f32 0.0, %v5387
        %v5389 = vpop.f32.mrf.mxu0
        %v5390 = vadd.f32 0.0, %v5389
        %5391 = vdwg.mxu0
        %5392 = vmatprep.subr.mxu0 %v5182
        %5393 = vmatpush1.msra.mxu0 %v5181
        %5394 = vmatprep.subr.mxu0 %v5178
        %5395 = vmatpush1.msra.mxu0 %v5177
        %5396 = vmatprep.subr.mxu0 %v5174
        %5397 = vmatpush1.msra.mxu0 %v5173
        %5398 = vmatprep.subr.mxu0 %v5170
        %5399 = vmatpush1.msra.mxu0 %v5169
        %5400 = vmatprep.subr.mxu0 %v5166
        %5401 = vmatpush1.msra.mxu0 %v5165
        %5402 = vmatprep.subr.mxu0 %v5162
        %5403 = vmatpush1.msra.mxu0 %v5161
        %5404 = vmatprep.subr.mxu0 %v5158
        %5405 = vmatpush1.msra.mxu0 %v5157
        %5406 = vmatprep.subr.mxu0 %v5154
        %5407 = vmatpush1.msra.mxu0 %v5153
        %5408 = vmatprep.subr.mxu0 %v5150
        %5409 = vmatpush1.msra.mxu0 %v5149
        %5410 = vmatprep.subr.mxu0 %v5146
        %5411 = vmatpush1.msra.mxu0 %v5145
        %5412 = vmatprep.subr.mxu0 %v5142
        %5413 = vmatpush1.msra.mxu0 %v5141
        %5414 = vmatprep.subr.mxu0 %v5138
        %5415 = vmatpush1.msra.mxu0 %v5137
        %5416 = vmatprep.subr.mxu0 %v5134
        %5417 = vmatpush1.msra.mxu0 %v5133
        %5418 = vmatprep.subr.mxu0 %v5130
        %5419 = vmatpush1.msra.mxu0 %v5129
        %5420 = vmatprep.subr.mxu0 %v5126
        %5421 = vmatpush1.msra.mxu0 %v5125
        %5422 = vmatprep.subr.mxu0 %v5122
        %5423 = vmatpush1.msra.mxu0 %v5121
        %5424 = vmatprep.subr.mxu0 0.0
        %5425 = vmatpush2.msra.mxu0 0.0
        %5426 = vmatprep.subr.mxu0 0.0
        %5427 = vmatpush2.msra.mxu0 0.0
        %5428 = vmatprep.subr.mxu0 0.0
        %5429 = vmatpush2.msra.mxu0 0.0
        %5430 = vmatprep.subr.mxu0 0.0
        %5431 = vmatpush2.msra.mxu0 0.0
        %5432 = vmatprep.subr.mxu0 0.0
        %5433 = vmatpush2.msra.mxu0 0.0
        %5434 = vmatprep.subr.mxu0 0.0
        %5435 = vmatpush2.msra.mxu0 0.0
        %5436 = vmatprep.subr.mxu0 0.0
        %5437 = vmatpush2.msra.mxu0 0.0
        %5438 = vmatprep.subr.mxu0 0.0
        %5439 = vmatpush2.msra.mxu0 0.0
        %5440 = vmatprep.subr.mxu0 0.0
        %5441 = vmatpush2.msra.mxu0 0.0
        %5442 = vmatprep.subr.mxu0 0.0
        %5443 = vmatpush2.msra.mxu0 0.0
        %5444 = vmatprep.subr.mxu0 0.0
        %5445 = vmatpush2.msra.mxu0 0.0
        %5446 = vmatprep.subr.mxu0 0.0
        %5447 = vmatpush2.msra.mxu0 0.0
        %5448 = vmatprep.subr.mxu0 0.0
        %5449 = vmatpush2.msra.mxu0 0.0
        %5450 = vmatprep.subr.mxu0 0.0
        %5451 = vmatpush2.msra.mxu0 0.0
        %5452 = vmatprep.subr.mxu0 0.0
        %5453 = vmatpush2.msra.mxu0 0.0
        %5454 = vmatprep.subr.mxu0 0.0
        %5455 = vmatpush2.msra.mxu0 0.0
        %5456 = vmatprep.mubr.f32.mxu0 0.0
        %5457 = vmatmul.mubr.f32.gmra.mxu0 %v5118
        %v5458 = vpop.f32.mrf.mxu0
        %v5459 = vadd.f32 %v5317, %v5458
        %v5460 = vpop.f32.mrf.mxu0
        %v5461 = vadd.f32 %v5319, %v5460
        %5462 = vdwg.mxu0
        %5463 = vmatprep.subr.mxu0 %v5184
        %5464 = vmatpush1.msra.mxu0 %v5183
        %5465 = vmatprep.subr.mxu0 %v5180
        %5466 = vmatpush1.msra.mxu0 %v5179
        %5467 = vmatprep.subr.mxu0 %v5176
        %5468 = vmatpush1.msra.mxu0 %v5175
        %5469 = vmatprep.subr.mxu0 %v5172
        %5470 = vmatpush1.msra.mxu0 %v5171
        %5471 = vmatprep.subr.mxu0 %v5168
        %5472 = vmatpush1.msra.mxu0 %v5167
        %5473 = vmatprep.subr.mxu0 %v5164
        %5474 = vmatpush1.msra.mxu0 %v5163
        %5475 = vmatprep.subr.mxu0 %v5160
        %5476 = vmatpush1.msra.mxu0 %v5159
        %5477 = vmatprep.subr.mxu0 %v5156
        %5478 = vmatpush1.msra.mxu0 %v5155
        %5479 = vmatprep.subr.mxu0 %v5152
        %5480 = vmatpush1.msra.mxu0 %v5151
        %5481 = vmatprep.subr.mxu0 %v5148
        %5482 = vmatpush1.msra.mxu0 %v5147
        %5483 = vmatprep.subr.mxu0 %v5144
        %5484 = vmatpush1.msra.mxu0 %v5143
        %5485 = vmatprep.subr.mxu0 %v5140
        %5486 = vmatpush1.msra.mxu0 %v5139
        %5487 = vmatprep.subr.mxu0 %v5136
        %5488 = vmatpush1.msra.mxu0 %v5135
        %5489 = vmatprep.subr.mxu0 %v5132
        %5490 = vmatpush1.msra.mxu0 %v5131
        %5491 = vmatprep.subr.mxu0 %v5128
        %5492 = vmatpush1.msra.mxu0 %v5127
        %5493 = vmatprep.subr.mxu0 %v5124
        %5494 = vmatpush1.msra.mxu0 %v5123
        %5495 = vmatprep.subr.mxu0 0.0
        %5496 = vmatpush2.msra.mxu0 0.0
        %5497 = vmatprep.subr.mxu0 0.0
        %5498 = vmatpush2.msra.mxu0 0.0
        %5499 = vmatprep.subr.mxu0 0.0
        %5500 = vmatpush2.msra.mxu0 0.0
        %5501 = vmatprep.subr.mxu0 0.0
        %5502 = vmatpush2.msra.mxu0 0.0
        %5503 = vmatprep.subr.mxu0 0.0
        %5504 = vmatpush2.msra.mxu0 0.0
        %5505 = vmatprep.subr.mxu0 0.0
        %5506 = vmatpush2.msra.mxu0 0.0
        %5507 = vmatprep.subr.mxu0 0.0
        %5508 = vmatpush2.msra.mxu0 0.0
        %5509 = vmatprep.subr.mxu0 0.0
        %5510 = vmatpush2.msra.mxu0 0.0
        %5511 = vmatprep.subr.mxu0 0.0
        %5512 = vmatpush2.msra.mxu0 0.0
        %5513 = vmatprep.subr.mxu0 0.0
        %5514 = vmatpush2.msra.mxu0 0.0
        %5515 = vmatprep.subr.mxu0 0.0
        %5516 = vmatpush2.msra.mxu0 0.0
        %5517 = vmatprep.subr.mxu0 0.0
        %5518 = vmatpush2.msra.mxu0 0.0
        %5519 = vmatprep.subr.mxu0 0.0
        %5520 = vmatpush2.msra.mxu0 0.0
        %5521 = vmatprep.subr.mxu0 0.0
        %5522 = vmatpush2.msra.mxu0 0.0
        %5523 = vmatprep.subr.mxu0 0.0
        %5524 = vmatpush2.msra.mxu0 0.0
        %5525 = vmatprep.subr.mxu0 0.0
        %5526 = vmatpush2.msra.mxu0 0.0
        %5527 = vmatprep.mubr.f32.mxu0 0.0
        %5528 = vmatmul.mubr.f32.gmra.mxu0 %v5118
        %v5529 = vpop.f32.mrf.mxu0
        %v5530 = vadd.f32 %v5388, %v5529
        %v5531 = vpop.f32.mrf.mxu0
        %v5532 = vadd.f32 %v5390, %v5531
        %5533 = vdwg.mxu0
        %v5534 = vld [vmem:[%s6] sm:$0xf]
        %v5536 = vlaneseq
        %v5537 = vshrl.u32 %v5536, 7
        %v5538 = vsub.s32 0, %v5537
        %v5539 = vrot.slane %v5534, %v5538
        %v5540 = vlaneseq
        %v5541 = vshrl.u32 %v5540, 7
        %v5542 = vsub.s32 1, %v5541
        %v5543 = vrot.slane %v5534, %v5542
        %v5544 = vlaneseq
        %v5545 = vshrl.u32 %v5544, 7
        %v5546 = vsub.s32 2, %v5545
        %v5547 = vrot.slane %v5534, %v5546
        %v5548 = vlaneseq
        %v5549 = vshrl.u32 %v5548, 7
        %v5550 = vsub.s32 3, %v5549
        %v5551 = vrot.slane %v5534, %v5550
        %v5556 = vadd.f32 %v5459, %v5539
        %v5557 = vadd.f32 %v5461, %v5543
        %v5558 = vadd.f32 %v5530, %v5547
        %v5559 = vadd.f32 %v5532, %v5551
        %v5560 = vld [vmem:[%s1294] sm:$0xff]
        %v5561 = vxor.u32 %v5556, 2147483648
        %v5562 = vmul.f32 %v5561, 1.442695
        %v5563 = vpow.pop %v5562
        %v5564 = vadd.f32 %v5563, 1.0
        %v5565 = vrcp.pop %v5564
        %v5566 = vmul.f32 1.0, %v5565
        %v5567 = vxor.u32 %v5557, 2147483648
        %v5568 = vmul.f32 %v5567, 1.442695
        %v5569 = vpow.pop %v5568
        %v5570 = vadd.f32 %v5569, 1.0
        %v5571 = vrcp.pop %v5570
        %v5572 = vmul.f32 1.0, %v5571
        %v5573 = vtanh.pop %v5558
        %v5574 = vxor.u32 %v5559, 2147483648
        %v5575 = vmul.f32 %v5574, 1.442695
        %v5576 = vpow.pop %v5575
        %v5577 = vadd.f32 %v5576, 1.0
        %v5578 = vrcp.pop %v5577
        %v5579 = vmul.f32 1.0, %v5578
        %v5580 = vmul.f32 %v5572, %v5560
        %v5581 = vmul.f32 %v5566, %v5573
        %v5582 = vadd.f32 %v5580, %v5581
        %v5583 = vtanh.pop %v5582
        %v5584 = vmul.f32 %v5579, %v5583
        %5585 = vst [vmem:[%s918] sm:$0xff] %v5584
        %5586 = vst [vmem:[%s1294] sm:$0xff] %v5582
        %s5587 = scalar_lea.vmem %s192, 48 [#allocation13]
        %5588 = vst [vmem:[%s5587] sm:$0xff] %v5584
        %s5589 = scalar_lea.vmem [#allocation6], 224
        %v5590 = vld [vmem:[%s5589] sm:$0xff]
        %v5591 = vld [vmem:[%s5589 + $0x8] sm:$0xff]
        %v5592 = vld [vmem:[%s5589 + $0x10] sm:$0xff]
        %v5593 = vld [vmem:[%s5589 + $0x18] sm:$0xff]
        %v5594 = vld [vmem:[#allocation7] sm:$0xff]
        %v5595 = vld [vmem:[#allocation4] sm:$0xff]
        %v5596 = vld [vmem:[#allocation4 + $0x8] sm:$0xff]
        %v5597 = vld [vmem:[#allocation4 + $0x10] sm:$0xff]
        %v5598 = vld [vmem:[#allocation4 + $0x18] sm:$0xff]
        %v5599 = vld [vmem:[#allocation4 + $0x20] sm:$0xff]
        %v5600 = vld [vmem:[#allocation4 + $0x28] sm:$0xff]
        %v5601 = vld [vmem:[#allocation4 + $0x30] sm:$0xff]
        %v5602 = vld [vmem:[#allocation4 + $0x38] sm:$0xff]
        %v5603 = vld [vmem:[#allocation4 + $0x40] sm:$0xff]
        %v5604 = vld [vmem:[#allocation4 + $0x48] sm:$0xff]
        %v5605 = vld [vmem:[#allocation4 + $0x50] sm:$0xff]
        %v5606 = vld [vmem:[#allocation4 + $0x58] sm:$0xff]
        %v5607 = vld [vmem:[#allocation4 + $0x60] sm:$0xff]
        %v5608 = vld [vmem:[#allocation4 + $0x68] sm:$0xff]
        %v5609 = vld [vmem:[#allocation4 + $0x70] sm:$0xff]
        %v5610 = vld [vmem:[#allocation4 + $0x78] sm:$0xff]
        %v5611 = vld [vmem:[#allocation4 + $0x80] sm:$0xff]
        %v5612 = vld [vmem:[#allocation4 + $0x88] sm:$0xff]
        %v5613 = vld [vmem:[#allocation4 + $0x90] sm:$0xff]
        %v5614 = vld [vmem:[#allocation4 + $0x98] sm:$0xff]
        %v5615 = vld [vmem:[#allocation4 + $0xa0] sm:$0xff]
        %v5616 = vld [vmem:[#allocation4 + $0xa8] sm:$0xff]
        %v5617 = vld [vmem:[#allocation4 + $0xb0] sm:$0xff]
        %v5618 = vld [vmem:[#allocation4 + $0xb8] sm:$0xff]
        %v5619 = vld [vmem:[#allocation4 + $0xc0] sm:$0xff]
        %v5620 = vld [vmem:[#allocation4 + $0xc8] sm:$0xff]
        %v5621 = vld [vmem:[#allocation4 + $0xd0] sm:$0xff]
        %v5622 = vld [vmem:[#allocation4 + $0xd8] sm:$0xff]
        %v5623 = vld [vmem:[#allocation4 + $0xe0] sm:$0xff]
        %v5624 = vld [vmem:[#allocation4 + $0xe8] sm:$0xff]
        %v5625 = vld [vmem:[#allocation4 + $0xf0] sm:$0xff]
        %v5626 = vld [vmem:[#allocation4 + $0xf8] sm:$0xff]
        %v5627 = vld [vmem:[#allocation4 + $0x100] sm:$0xff]
        %v5628 = vld [vmem:[#allocation4 + $0x108] sm:$0xff]
        %v5629 = vld [vmem:[#allocation4 + $0x110] sm:$0xff]
        %v5630 = vld [vmem:[#allocation4 + $0x118] sm:$0xff]
        %v5631 = vld [vmem:[#allocation4 + $0x120] sm:$0xff]
        %v5632 = vld [vmem:[#allocation4 + $0x128] sm:$0xff]
        %v5633 = vld [vmem:[#allocation4 + $0x130] sm:$0xff]
        %v5634 = vld [vmem:[#allocation4 + $0x138] sm:$0xff]
        %v5635 = vld [vmem:[#allocation4 + $0x140] sm:$0xff]
        %v5636 = vld [vmem:[#allocation4 + $0x148] sm:$0xff]
        %v5637 = vld [vmem:[#allocation4 + $0x150] sm:$0xff]
        %v5638 = vld [vmem:[#allocation4 + $0x158] sm:$0xff]
        %v5639 = vld [vmem:[#allocation4 + $0x160] sm:$0xff]
        %v5640 = vld [vmem:[#allocation4 + $0x168] sm:$0xff]
        %v5641 = vld [vmem:[#allocation4 + $0x170] sm:$0xff]
        %v5642 = vld [vmem:[#allocation4 + $0x178] sm:$0xff]
        %v5643 = vld [vmem:[#allocation4 + $0x180] sm:$0xff]
        %v5644 = vld [vmem:[#allocation4 + $0x188] sm:$0xff]
        %v5645 = vld [vmem:[#allocation4 + $0x190] sm:$0xff]
        %v5646 = vld [vmem:[#allocation4 + $0x198] sm:$0xff]
        %v5647 = vld [vmem:[#allocation4 + $0x1a0] sm:$0xff]
        %v5648 = vld [vmem:[#allocation4 + $0x1a8] sm:$0xff]
        %v5649 = vld [vmem:[#allocation4 + $0x1b0] sm:$0xff]
        %v5650 = vld [vmem:[#allocation4 + $0x1b8] sm:$0xff]
        %v5651 = vld [vmem:[#allocation4 + $0x1c0] sm:$0xff]
        %v5652 = vld [vmem:[#allocation4 + $0x1c8] sm:$0xff]
        %v5653 = vld [vmem:[#allocation4 + $0x1d0] sm:$0xff]
        %v5654 = vld [vmem:[#allocation4 + $0x1d8] sm:$0xff]
        %v5655 = vld [vmem:[#allocation4 + $0x1e0] sm:$0xff]
        %v5656 = vld [vmem:[#allocation4 + $0x1e8] sm:$0xff]
        %v5657 = vld [vmem:[#allocation4 + $0x1f0] sm:$0xff]
        %v5658 = vld [vmem:[#allocation4 + $0x1f8] sm:$0xff]
        %5659 = vmatprep.subr.mxu0 %v5656
        %5660 = vmatpush1.msra.mxu0 %v5655
        %5661 = vmatprep.subr.mxu0 %v5652
        %5662 = vmatpush1.msra.mxu0 %v5651
        %5663 = vmatprep.subr.mxu0 %v5648
        %5664 = vmatpush1.msra.mxu0 %v5647
        %5665 = vmatprep.subr.mxu0 %v5644
        %5666 = vmatpush1.msra.mxu0 %v5643
        %5667 = vmatprep.subr.mxu0 %v5640
        %5668 = vmatpush1.msra.mxu0 %v5639
        %5669 = vmatprep.subr.mxu0 %v5636
        %5670 = vmatpush1.msra.mxu0 %v5635
        %5671 = vmatprep.subr.mxu0 %v5632
        %5672 = vmatpush1.msra.mxu0 %v5631
        %5673 = vmatprep.subr.mxu0 %v5628
        %5674 = vmatpush1.msra.mxu0 %v5627
        %5675 = vmatprep.subr.mxu0 %v5624
        %5676 = vmatpush1.msra.mxu0 %v5623
        %5677 = vmatprep.subr.mxu0 %v5620
        %5678 = vmatpush1.msra.mxu0 %v5619
        %5679 = vmatprep.subr.mxu0 %v5616
        %5680 = vmatpush1.msra.mxu0 %v5615
        %5681 = vmatprep.subr.mxu0 %v5612
        %5682 = vmatpush1.msra.mxu0 %v5611
        %5683 = vmatprep.subr.mxu0 %v5608
        %5684 = vmatpush1.msra.mxu0 %v5607
        %5685 = vmatprep.subr.mxu0 %v5604
        %5686 = vmatpush1.msra.mxu0 %v5603
        %5687 = vmatprep.subr.mxu0 %v5600
        %5688 = vmatpush1.msra.mxu0 %v5599
        %5689 = vmatprep.subr.mxu0 %v5596
        %5690 = vmatpush1.msra.mxu0 %v5595
        %5691 = vmatprep.subr.mxu0 0.0
        %5692 = vmatpush2.msra.mxu0 0.0
        %5693 = vmatprep.subr.mxu0 0.0
        %5694 = vmatpush2.msra.mxu0 0.0
        %5695 = vmatprep.subr.mxu0 0.0
        %5696 = vmatpush2.msra.mxu0 0.0
        %5697 = vmatprep.subr.mxu0 0.0
        %5698 = vmatpush2.msra.mxu0 0.0
        %5699 = vmatprep.subr.mxu0 0.0
        %5700 = vmatpush2.msra.mxu0 0.0
        %5701 = vmatprep.subr.mxu0 0.0
        %5702 = vmatpush2.msra.mxu0 0.0
        %5703 = vmatprep.subr.mxu0 0.0
        %5704 = vmatpush2.msra.mxu0 0.0
        %5705 = vmatprep.subr.mxu0 0.0
        %5706 = vmatpush2.msra.mxu0 0.0
        %5707 = vmatprep.subr.mxu0 0.0
        %5708 = vmatpush2.msra.mxu0 0.0
        %5709 = vmatprep.subr.mxu0 0.0
        %5710 = vmatpush2.msra.mxu0 0.0
        %5711 = vmatprep.subr.mxu0 0.0
        %5712 = vmatpush2.msra.mxu0 0.0
        %5713 = vmatprep.subr.mxu0 0.0
        %5714 = vmatpush2.msra.mxu0 0.0
        %5715 = vmatprep.subr.mxu0 0.0
        %5716 = vmatpush2.msra.mxu0 0.0
        %5717 = vmatprep.subr.mxu0 0.0
        %5718 = vmatpush2.msra.mxu0 0.0
        %5719 = vmatprep.subr.mxu0 0.0
        %5720 = vmatpush2.msra.mxu0 0.0
        %5721 = vmatprep.subr.mxu0 0.0
        %5722 = vmatpush2.msra.mxu0 0.0
        %5723 = vmatprep.mubr.f32.mxu0 0.0
        %5724 = vmatmul.mubr.f32.gmra.mxu0 %v5594
        %v5725 = vpop.f32.mrf.mxu0
        %v5726 = vadd.f32 0.0, %v5725
        %v5727 = vpop.f32.mrf.mxu0
        %v5728 = vadd.f32 0.0, %v5727
        %5729 = vdwg.mxu0
        %5730 = vmatprep.subr.mxu0 %v5658
        %5731 = vmatpush1.msra.mxu0 %v5657
        %5732 = vmatprep.subr.mxu0 %v5654
        %5733 = vmatpush1.msra.mxu0 %v5653
        %5734 = vmatprep.subr.mxu0 %v5650
        %5735 = vmatpush1.msra.mxu0 %v5649
        %5736 = vmatprep.subr.mxu0 %v5646
        %5737 = vmatpush1.msra.mxu0 %v5645
        %5738 = vmatprep.subr.mxu0 %v5642
        %5739 = vmatpush1.msra.mxu0 %v5641
        %5740 = vmatprep.subr.mxu0 %v5638
        %5741 = vmatpush1.msra.mxu0 %v5637
        %5742 = vmatprep.subr.mxu0 %v5634
        %5743 = vmatpush1.msra.mxu0 %v5633
        %5744 = vmatprep.subr.mxu0 %v5630
        %5745 = vmatpush1.msra.mxu0 %v5629
        %5746 = vmatprep.subr.mxu0 %v5626
        %5747 = vmatpush1.msra.mxu0 %v5625
        %5748 = vmatprep.subr.mxu0 %v5622
        %5749 = vmatpush1.msra.mxu0 %v5621
        %5750 = vmatprep.subr.mxu0 %v5618
        %5751 = vmatpush1.msra.mxu0 %v5617
        %5752 = vmatprep.subr.mxu0 %v5614
        %5753 = vmatpush1.msra.mxu0 %v5613
        %5754 = vmatprep.subr.mxu0 %v5610
        %5755 = vmatpush1.msra.mxu0 %v5609
        %5756 = vmatprep.subr.mxu0 %v5606
        %5757 = vmatpush1.msra.mxu0 %v5605
        %5758 = vmatprep.subr.mxu0 %v5602
        %5759 = vmatpush1.msra.mxu0 %v5601
        %5760 = vmatprep.subr.mxu0 %v5598
        %5761 = vmatpush1.msra.mxu0 %v5597
        %5762 = vmatprep.subr.mxu0 0.0
        %5763 = vmatpush2.msra.mxu0 0.0
        %5764 = vmatprep.subr.mxu0 0.0
        %5765 = vmatpush2.msra.mxu0 0.0
        %5766 = vmatprep.subr.mxu0 0.0
        %5767 = vmatpush2.msra.mxu0 0.0
        %5768 = vmatprep.subr.mxu0 0.0
        %5769 = vmatpush2.msra.mxu0 0.0
        %5770 = vmatprep.subr.mxu0 0.0
        %5771 = vmatpush2.msra.mxu0 0.0
        %5772 = vmatprep.subr.mxu0 0.0
        %5773 = vmatpush2.msra.mxu0 0.0
        %5774 = vmatprep.subr.mxu0 0.0
        %5775 = vmatpush2.msra.mxu0 0.0
        %5776 = vmatprep.subr.mxu0 0.0
        %5777 = vmatpush2.msra.mxu0 0.0
        %5778 = vmatprep.subr.mxu0 0.0
        %5779 = vmatpush2.msra.mxu0 0.0
        %5780 = vmatprep.subr.mxu0 0.0
        %5781 = vmatpush2.msra.mxu0 0.0
        %5782 = vmatprep.subr.mxu0 0.0
        %5783 = vmatpush2.msra.mxu0 0.0
        %5784 = vmatprep.subr.mxu0 0.0
        %5785 = vmatpush2.msra.mxu0 0.0
        %5786 = vmatprep.subr.mxu0 0.0
        %5787 = vmatpush2.msra.mxu0 0.0
        %5788 = vmatprep.subr.mxu0 0.0
        %5789 = vmatpush2.msra.mxu0 0.0
        %5790 = vmatprep.subr.mxu0 0.0
        %5791 = vmatpush2.msra.mxu0 0.0
        %5792 = vmatprep.subr.mxu0 0.0
        %5793 = vmatpush2.msra.mxu0 0.0
        %5794 = vmatprep.mubr.f32.mxu0 0.0
        %5795 = vmatmul.mubr.f32.gmra.mxu0 %v5594
        %v5796 = vpop.f32.mrf.mxu0
        %v5797 = vadd.f32 0.0, %v5796
        %v5798 = vpop.f32.mrf.mxu0
        %v5799 = vadd.f32 0.0, %v5798
        %5800 = vdwg.mxu0
        %v5801 = vadd.f32 %v5590, %v5726
        %v5802 = vadd.f32 %v5591, %v5728
        %v5803 = vadd.f32 %v5592, %v5797
        %v5804 = vadd.f32 %v5593, %v5799
        %v5805 = vld [vmem:[#allocation8] sm:$0xff]
        %v5806 = vxor.u32 %v5801, 2147483648
        %v5807 = vmul.f32 %v5806, 1.442695
        %v5808 = vpow.pop %v5807
        %v5809 = vadd.f32 %v5808, 1.0
        %v5810 = vrcp.pop %v5809
        %v5811 = vmul.f32 1.0, %v5810
        %v5812 = vxor.u32 %v5802, 2147483648
        %v5813 = vmul.f32 %v5812, 1.442695
        %v5814 = vpow.pop %v5813
        %v5815 = vadd.f32 %v5814, 1.0
        %v5816 = vrcp.pop %v5815
        %v5817 = vmul.f32 1.0, %v5816
        %v5818 = vtanh.pop %v5803
        %v5819 = vxor.u32 %v5804, 2147483648
        %v5820 = vmul.f32 %v5819, 1.442695
        %v5821 = vpow.pop %v5820
        %v5822 = vadd.f32 %v5821, 1.0
        %v5823 = vrcp.pop %v5822
        %v5824 = vmul.f32 1.0, %v5823
        %v5825 = vmul.f32 %v5817, %v5805
        %v5826 = vmul.f32 %v5811, %v5818
        %v5827 = vadd.f32 %v5825, %v5826
        %v5828 = vtanh.pop %v5827
        %v5829 = vmul.f32 %v5824, %v5828
        %5830 = vst [vmem:[#allocation7] sm:$0xff] %v5829
        %5831 = vst [vmem:[#allocation8] sm:$0xff] %v5827
        %v5832 = vld [vmem:[#allocation3] sm:$0xff]
        %v5833 = vld [vmem:[#allocation3 + $0x8] sm:$0xff]
        %v5834 = vld [vmem:[#allocation3 + $0x10] sm:$0xff]
        %v5835 = vld [vmem:[#allocation3 + $0x18] sm:$0xff]
        %v5836 = vld [vmem:[#allocation3 + $0x20] sm:$0xff]
        %v5837 = vld [vmem:[#allocation3 + $0x28] sm:$0xff]
        %v5838 = vld [vmem:[#allocation3 + $0x30] sm:$0xff]
        %v5839 = vld [vmem:[#allocation3 + $0x38] sm:$0xff]
        %v5840 = vld [vmem:[#allocation3 + $0x40] sm:$0xff]
        %v5841 = vld [vmem:[#allocation3 + $0x48] sm:$0xff]
        %v5842 = vld [vmem:[#allocation3 + $0x50] sm:$0xff]
        %v5843 = vld [vmem:[#allocation3 + $0x58] sm:$0xff]
        %v5844 = vld [vmem:[#allocation3 + $0x60] sm:$0xff]
        %v5845 = vld [vmem:[#allocation3 + $0x68] sm:$0xff]
        %v5846 = vld [vmem:[#allocation3 + $0x70] sm:$0xff]
        %v5847 = vld [vmem:[#allocation3 + $0x78] sm:$0xff]
        %v5848 = vld [vmem:[#allocation3 + $0x80] sm:$0xff]
        %v5849 = vld [vmem:[#allocation3 + $0x88] sm:$0xff]
        %v5850 = vld [vmem:[#allocation3 + $0x90] sm:$0xff]
        %v5851 = vld [vmem:[#allocation3 + $0x98] sm:$0xff]
        %v5852 = vld [vmem:[#allocation3 + $0xa0] sm:$0xff]
        %v5853 = vld [vmem:[#allocation3 + $0xa8] sm:$0xff]
        %v5854 = vld [vmem:[#allocation3 + $0xb0] sm:$0xff]
        %v5855 = vld [vmem:[#allocation3 + $0xb8] sm:$0xff]
        %v5856 = vld [vmem:[#allocation3 + $0xc0] sm:$0xff]
        %v5857 = vld [vmem:[#allocation3 + $0xc8] sm:$0xff]
        %v5858 = vld [vmem:[#allocation3 + $0xd0] sm:$0xff]
        %v5859 = vld [vmem:[#allocation3 + $0xd8] sm:$0xff]
        %v5860 = vld [vmem:[#allocation3 + $0xe0] sm:$0xff]
        %v5861 = vld [vmem:[#allocation3 + $0xe8] sm:$0xff]
        %v5862 = vld [vmem:[#allocation3 + $0xf0] sm:$0xff]
        %v5863 = vld [vmem:[#allocation3 + $0xf8] sm:$0xff]
        %v5864 = vld [vmem:[#allocation3 + $0x100] sm:$0xff]
        %v5865 = vld [vmem:[#allocation3 + $0x108] sm:$0xff]
        %v5866 = vld [vmem:[#allocation3 + $0x110] sm:$0xff]
        %v5867 = vld [vmem:[#allocation3 + $0x118] sm:$0xff]
        %v5868 = vld [vmem:[#allocation3 + $0x120] sm:$0xff]
        %v5869 = vld [vmem:[#allocation3 + $0x128] sm:$0xff]
        %v5870 = vld [vmem:[#allocation3 + $0x130] sm:$0xff]
        %v5871 = vld [vmem:[#allocation3 + $0x138] sm:$0xff]
        %v5872 = vld [vmem:[#allocation3 + $0x140] sm:$0xff]
        %v5873 = vld [vmem:[#allocation3 + $0x148] sm:$0xff]
        %v5874 = vld [vmem:[#allocation3 + $0x150] sm:$0xff]
        %v5875 = vld [vmem:[#allocation3 + $0x158] sm:$0xff]
        %v5876 = vld [vmem:[#allocation3 + $0x160] sm:$0xff]
        %v5877 = vld [vmem:[#allocation3 + $0x168] sm:$0xff]
        %v5878 = vld [vmem:[#allocation3 + $0x170] sm:$0xff]
        %v5879 = vld [vmem:[#allocation3 + $0x178] sm:$0xff]
        %v5880 = vld [vmem:[#allocation3 + $0x180] sm:$0xff]
        %v5881 = vld [vmem:[#allocation3 + $0x188] sm:$0xff]
        %v5882 = vld [vmem:[#allocation3 + $0x190] sm:$0xff]
        %v5883 = vld [vmem:[#allocation3 + $0x198] sm:$0xff]
        %v5884 = vld [vmem:[#allocation3 + $0x1a0] sm:$0xff]
        %v5885 = vld [vmem:[#allocation3 + $0x1a8] sm:$0xff]
        %v5886 = vld [vmem:[#allocation3 + $0x1b0] sm:$0xff]
        %v5887 = vld [vmem:[#allocation3 + $0x1b8] sm:$0xff]
        %v5888 = vld [vmem:[#allocation3 + $0x1c0] sm:$0xff]
        %v5889 = vld [vmem:[#allocation3 + $0x1c8] sm:$0xff]
        %v5890 = vld [vmem:[#allocation3 + $0x1d0] sm:$0xff]
        %v5891 = vld [vmem:[#allocation3 + $0x1d8] sm:$0xff]
        %v5892 = vld [vmem:[#allocation3 + $0x1e0] sm:$0xff]
        %v5893 = vld [vmem:[#allocation3 + $0x1e8] sm:$0xff]
        %v5894 = vld [vmem:[#allocation3 + $0x1f0] sm:$0xff]
        %v5895 = vld [vmem:[#allocation3 + $0x1f8] sm:$0xff]
        %v5896 = vld [vmem:[%s918] sm:$0xff]
        %v5897 = vld [vmem:[#allocation5] sm:$0xff]
        %v5898 = vld [vmem:[#allocation5 + $0x8] sm:$0xff]
        %v5899 = vld [vmem:[#allocation5 + $0x10] sm:$0xff]
        %v5900 = vld [vmem:[#allocation5 + $0x18] sm:$0xff]
        %v5901 = vld [vmem:[#allocation5 + $0x20] sm:$0xff]
        %v5902 = vld [vmem:[#allocation5 + $0x28] sm:$0xff]
        %v5903 = vld [vmem:[#allocation5 + $0x30] sm:$0xff]
        %v5904 = vld [vmem:[#allocation5 + $0x38] sm:$0xff]
        %v5905 = vld [vmem:[#allocation5 + $0x40] sm:$0xff]
        %v5906 = vld [vmem:[#allocation5 + $0x48] sm:$0xff]
        %v5907 = vld [vmem:[#allocation5 + $0x50] sm:$0xff]
        %v5908 = vld [vmem:[#allocation5 + $0x58] sm:$0xff]
        %v5909 = vld [vmem:[#allocation5 + $0x60] sm:$0xff]
        %v5910 = vld [vmem:[#allocation5 + $0x68] sm:$0xff]
        %v5911 = vld [vmem:[#allocation5 + $0x70] sm:$0xff]
        %v5912 = vld [vmem:[#allocation5 + $0x78] sm:$0xff]
        %v5913 = vld [vmem:[#allocation5 + $0x80] sm:$0xff]
        %v5914 = vld [vmem:[#allocation5 + $0x88] sm:$0xff]
        %v5915 = vld [vmem:[#allocation5 + $0x90] sm:$0xff]
        %v5916 = vld [vmem:[#allocation5 + $0x98] sm:$0xff]
        %v5917 = vld [vmem:[#allocation5 + $0xa0] sm:$0xff]
        %v5918 = vld [vmem:[#allocation5 + $0xa8] sm:$0xff]
        %v5919 = vld [vmem:[#allocation5 + $0xb0] sm:$0xff]
        %v5920 = vld [vmem:[#allocation5 + $0xb8] sm:$0xff]
        %v5921 = vld [vmem:[#allocation5 + $0xc0] sm:$0xff]
        %v5922 = vld [vmem:[#allocation5 + $0xc8] sm:$0xff]
        %v5923 = vld [vmem:[#allocation5 + $0xd0] sm:$0xff]
        %v5924 = vld [vmem:[#allocation5 + $0xd8] sm:$0xff]
        %v5925 = vld [vmem:[#allocation5 + $0xe0] sm:$0xff]
        %v5926 = vld [vmem:[#allocation5 + $0xe8] sm:$0xff]
        %v5927 = vld [vmem:[#allocation5 + $0xf0] sm:$0xff]
        %v5928 = vld [vmem:[#allocation5 + $0xf8] sm:$0xff]
        %v5929 = vld [vmem:[#allocation5 + $0x100] sm:$0xff]
        %v5930 = vld [vmem:[#allocation5 + $0x108] sm:$0xff]
        %v5931 = vld [vmem:[#allocation5 + $0x110] sm:$0xff]
        %v5932 = vld [vmem:[#allocation5 + $0x118] sm:$0xff]
        %v5933 = vld [vmem:[#allocation5 + $0x120] sm:$0xff]
        %v5934 = vld [vmem:[#allocation5 + $0x128] sm:$0xff]
        %v5935 = vld [vmem:[#allocation5 + $0x130] sm:$0xff]
        %v5936 = vld [vmem:[#allocation5 + $0x138] sm:$0xff]
        %v5937 = vld [vmem:[#allocation5 + $0x140] sm:$0xff]
        %v5938 = vld [vmem:[#allocation5 + $0x148] sm:$0xff]
        %v5939 = vld [vmem:[#allocation5 + $0x150] sm:$0xff]
        %v5940 = vld [vmem:[#allocation5 + $0x158] sm:$0xff]
        %v5941 = vld [vmem:[#allocation5 + $0x160] sm:$0xff]
        %v5942 = vld [vmem:[#allocation5 + $0x168] sm:$0xff]
        %v5943 = vld [vmem:[#allocation5 + $0x170] sm:$0xff]
        %v5944 = vld [vmem:[#allocation5 + $0x178] sm:$0xff]
        %v5945 = vld [vmem:[#allocation5 + $0x180] sm:$0xff]
        %v5946 = vld [vmem:[#allocation5 + $0x188] sm:$0xff]
        %v5947 = vld [vmem:[#allocation5 + $0x190] sm:$0xff]
        %v5948 = vld [vmem:[#allocation5 + $0x198] sm:$0xff]
        %v5949 = vld [vmem:[#allocation5 + $0x1a0] sm:$0xff]
        %v5950 = vld [vmem:[#allocation5 + $0x1a8] sm:$0xff]
        %v5951 = vld [vmem:[#allocation5 + $0x1b0] sm:$0xff]
        %v5952 = vld [vmem:[#allocation5 + $0x1b8] sm:$0xff]
        %v5953 = vld [vmem:[#allocation5 + $0x1c0] sm:$0xff]
        %v5954 = vld [vmem:[#allocation5 + $0x1c8] sm:$0xff]
        %v5955 = vld [vmem:[#allocation5 + $0x1d0] sm:$0xff]
        %v5956 = vld [vmem:[#allocation5 + $0x1d8] sm:$0xff]
        %v5957 = vld [vmem:[#allocation5 + $0x1e0] sm:$0xff]
        %v5958 = vld [vmem:[#allocation5 + $0x1e8] sm:$0xff]
        %v5959 = vld [vmem:[#allocation5 + $0x1f0] sm:$0xff]
        %v5960 = vld [vmem:[#allocation5 + $0x1f8] sm:$0xff]
        %5961 = vmatprep.subr.mxu0 %v5958
        %5962 = vmatpush1.msra.mxu0 %v5957
        %5963 = vmatprep.subr.mxu0 %v5954
        %5964 = vmatpush1.msra.mxu0 %v5953
        %5965 = vmatprep.subr.mxu0 %v5950
        %5966 = vmatpush1.msra.mxu0 %v5949
        %5967 = vmatprep.subr.mxu0 %v5946
        %5968 = vmatpush1.msra.mxu0 %v5945
        %5969 = vmatprep.subr.mxu0 %v5942
        %5970 = vmatpush1.msra.mxu0 %v5941
        %5971 = vmatprep.subr.mxu0 %v5938
        %5972 = vmatpush1.msra.mxu0 %v5937
        %5973 = vmatprep.subr.mxu0 %v5934
        %5974 = vmatpush1.msra.mxu0 %v5933
        %5975 = vmatprep.subr.mxu0 %v5930
        %5976 = vmatpush1.msra.mxu0 %v5929
        %5977 = vmatprep.subr.mxu0 %v5926
        %5978 = vmatpush1.msra.mxu0 %v5925
        %5979 = vmatprep.subr.mxu0 %v5922
        %5980 = vmatpush1.msra.mxu0 %v5921
        %5981 = vmatprep.subr.mxu0 %v5918
        %5982 = vmatpush1.msra.mxu0 %v5917
        %5983 = vmatprep.subr.mxu0 %v5914
        %5984 = vmatpush1.msra.mxu0 %v5913
        %5985 = vmatprep.subr.mxu0 %v5910
        %5986 = vmatpush1.msra.mxu0 %v5909
        %5987 = vmatprep.subr.mxu0 %v5906
        %5988 = vmatpush1.msra.mxu0 %v5905
        %5989 = vmatprep.subr.mxu0 %v5902
        %5990 = vmatpush1.msra.mxu0 %v5901
        %5991 = vmatprep.subr.mxu0 %v5898
        %5992 = vmatpush1.msra.mxu0 %v5897
        %5993 = vmatprep.subr.mxu0 0.0
        %5994 = vmatpush2.msra.mxu0 0.0
        %5995 = vmatprep.subr.mxu0 0.0
        %5996 = vmatpush2.msra.mxu0 0.0
        %5997 = vmatprep.subr.mxu0 0.0
        %5998 = vmatpush2.msra.mxu0 0.0
        %5999 = vmatprep.subr.mxu0 0.0
        %6000 = vmatpush2.msra.mxu0 0.0
        %6001 = vmatprep.subr.mxu0 0.0
        %6002 = vmatpush2.msra.mxu0 0.0
        %6003 = vmatprep.subr.mxu0 0.0
        %6004 = vmatpush2.msra.mxu0 0.0
        %6005 = vmatprep.subr.mxu0 0.0
        %6006 = vmatpush2.msra.mxu0 0.0
        %6007 = vmatprep.subr.mxu0 0.0
        %6008 = vmatpush2.msra.mxu0 0.0
        %6009 = vmatprep.subr.mxu0 0.0
        %6010 = vmatpush2.msra.mxu0 0.0
        %6011 = vmatprep.subr.mxu0 0.0
        %6012 = vmatpush2.msra.mxu0 0.0
        %6013 = vmatprep.subr.mxu0 0.0
        %6014 = vmatpush2.msra.mxu0 0.0
        %6015 = vmatprep.subr.mxu0 0.0
        %6016 = vmatpush2.msra.mxu0 0.0
        %6017 = vmatprep.subr.mxu0 0.0
        %6018 = vmatpush2.msra.mxu0 0.0
        %6019 = vmatprep.subr.mxu0 0.0
        %6020 = vmatpush2.msra.mxu0 0.0
        %6021 = vmatprep.subr.mxu0 0.0
        %6022 = vmatpush2.msra.mxu0 0.0
        %6023 = vmatprep.subr.mxu0 0.0
        %6024 = vmatpush2.msra.mxu0 0.0
        %6025 = vmatprep.mubr.f32.mxu0 0.0
        %6026 = vmatmul.mubr.f32.gmra.mxu0 %v5896
        %v6027 = vpop.f32.mrf.mxu0
        %v6028 = vadd.f32 0.0, %v6027
        %v6029 = vpop.f32.mrf.mxu0
        %v6030 = vadd.f32 0.0, %v6029
        %6031 = vdwg.mxu0
        %6032 = vmatprep.subr.mxu0 %v5960
        %6033 = vmatpush1.msra.mxu0 %v5959
        %6034 = vmatprep.subr.mxu0 %v5956
        %6035 = vmatpush1.msra.mxu0 %v5955
        %6036 = vmatprep.subr.mxu0 %v5952
        %6037 = vmatpush1.msra.mxu0 %v5951
        %6038 = vmatprep.subr.mxu0 %v5948
        %6039 = vmatpush1.msra.mxu0 %v5947
        %6040 = vmatprep.subr.mxu0 %v5944
        %6041 = vmatpush1.msra.mxu0 %v5943
        %6042 = vmatprep.subr.mxu0 %v5940
        %6043 = vmatpush1.msra.mxu0 %v5939
        %6044 = vmatprep.subr.mxu0 %v5936
        %6045 = vmatpush1.msra.mxu0 %v5935
        %6046 = vmatprep.subr.mxu0 %v5932
        %6047 = vmatpush1.msra.mxu0 %v5931
        %6048 = vmatprep.subr.mxu0 %v5928
        %6049 = vmatpush1.msra.mxu0 %v5927
        %6050 = vmatprep.subr.mxu0 %v5924
        %6051 = vmatpush1.msra.mxu0 %v5923
        %6052 = vmatprep.subr.mxu0 %v5920
        %6053 = vmatpush1.msra.mxu0 %v5919
        %6054 = vmatprep.subr.mxu0 %v5916
        %6055 = vmatpush1.msra.mxu0 %v5915
        %6056 = vmatprep.subr.mxu0 %v5912
        %6057 = vmatpush1.msra.mxu0 %v5911
        %6058 = vmatprep.subr.mxu0 %v5908
        %6059 = vmatpush1.msra.mxu0 %v5907
        %6060 = vmatprep.subr.mxu0 %v5904
        %6061 = vmatpush1.msra.mxu0 %v5903
        %6062 = vmatprep.subr.mxu0 %v5900
        %6063 = vmatpush1.msra.mxu0 %v5899
        %6064 = vmatprep.subr.mxu0 0.0
        %6065 = vmatpush2.msra.mxu0 0.0
        %6066 = vmatprep.subr.mxu0 0.0
        %6067 = vmatpush2.msra.mxu0 0.0
        %6068 = vmatprep.subr.mxu0 0.0
        %6069 = vmatpush2.msra.mxu0 0.0
        %6070 = vmatprep.subr.mxu0 0.0
        %6071 = vmatpush2.msra.mxu0 0.0
        %6072 = vmatprep.subr.mxu0 0.0
        %6073 = vmatpush2.msra.mxu0 0.0
        %6074 = vmatprep.subr.mxu0 0.0
        %6075 = vmatpush2.msra.mxu0 0.0
        %6076 = vmatprep.subr.mxu0 0.0
        %6077 = vmatpush2.msra.mxu0 0.0
        %6078 = vmatprep.subr.mxu0 0.0
        %6079 = vmatpush2.msra.mxu0 0.0
        %6080 = vmatprep.subr.mxu0 0.0
        %6081 = vmatpush2.msra.mxu0 0.0
        %6082 = vmatprep.subr.mxu0 0.0
        %6083 = vmatpush2.msra.mxu0 0.0
        %6084 = vmatprep.subr.mxu0 0.0
        %6085 = vmatpush2.msra.mxu0 0.0
        %6086 = vmatprep.subr.mxu0 0.0
        %6087 = vmatpush2.msra.mxu0 0.0
        %6088 = vmatprep.subr.mxu0 0.0
        %6089 = vmatpush2.msra.mxu0 0.0
        %6090 = vmatprep.subr.mxu0 0.0
        %6091 = vmatpush2.msra.mxu0 0.0
        %6092 = vmatprep.subr.mxu0 0.0
        %6093 = vmatpush2.msra.mxu0 0.0
        %6094 = vmatprep.subr.mxu0 0.0
        %6095 = vmatpush2.msra.mxu0 0.0
        %6096 = vmatprep.mubr.f32.mxu0 0.0
        %6097 = vmatmul.mubr.f32.gmra.mxu0 %v5896
        %v6098 = vpop.f32.mrf.mxu0
        %v6099 = vadd.f32 0.0, %v6098
        %v6100 = vpop.f32.mrf.mxu0
        %v6101 = vadd.f32 0.0, %v6100
        %6102 = vdwg.mxu0
        %6103 = vmatprep.subr.mxu0 %v5893
        %6104 = vmatpush1.msra.mxu0 %v5892
        %6105 = vmatprep.subr.mxu0 %v5889
        %6106 = vmatpush1.msra.mxu0 %v5888
        %6107 = vmatprep.subr.mxu0 %v5885
        %6108 = vmatpush1.msra.mxu0 %v5884
        %6109 = vmatprep.subr.mxu0 %v5881
        %6110 = vmatpush1.msra.mxu0 %v5880
        %6111 = vmatprep.subr.mxu0 %v5877
        %6112 = vmatpush1.msra.mxu0 %v5876
        %6113 = vmatprep.subr.mxu0 %v5873
        %6114 = vmatpush1.msra.mxu0 %v5872
        %6115 = vmatprep.subr.mxu0 %v5869
        %6116 = vmatpush1.msra.mxu0 %v5868
        %6117 = vmatprep.subr.mxu0 %v5865
        %6118 = vmatpush1.msra.mxu0 %v5864
        %6119 = vmatprep.subr.mxu0 %v5861
        %6120 = vmatpush1.msra.mxu0 %v5860
        %6121 = vmatprep.subr.mxu0 %v5857
        %6122 = vmatpush1.msra.mxu0 %v5856
        %6123 = vmatprep.subr.mxu0 %v5853
        %6124 = vmatpush1.msra.mxu0 %v5852
        %6125 = vmatprep.subr.mxu0 %v5849
        %6126 = vmatpush1.msra.mxu0 %v5848
        %6127 = vmatprep.subr.mxu0 %v5845
        %6128 = vmatpush1.msra.mxu0 %v5844
        %6129 = vmatprep.subr.mxu0 %v5841
        %6130 = vmatpush1.msra.mxu0 %v5840
        %6131 = vmatprep.subr.mxu0 %v5837
        %6132 = vmatpush1.msra.mxu0 %v5836
        %6133 = vmatprep.subr.mxu0 %v5833
        %6134 = vmatpush1.msra.mxu0 %v5832
        %6135 = vmatprep.subr.mxu0 0.0
        %6136 = vmatpush2.msra.mxu0 0.0
        %6137 = vmatprep.subr.mxu0 0.0
        %6138 = vmatpush2.msra.mxu0 0.0
        %6139 = vmatprep.subr.mxu0 0.0
        %6140 = vmatpush2.msra.mxu0 0.0
        %6141 = vmatprep.subr.mxu0 0.0
        %6142 = vmatpush2.msra.mxu0 0.0
        %6143 = vmatprep.subr.mxu0 0.0
        %6144 = vmatpush2.msra.mxu0 0.0
        %6145 = vmatprep.subr.mxu0 0.0
        %6146 = vmatpush2.msra.mxu0 0.0
        %6147 = vmatprep.subr.mxu0 0.0
        %6148 = vmatpush2.msra.mxu0 0.0
        %6149 = vmatprep.subr.mxu0 0.0
        %6150 = vmatpush2.msra.mxu0 0.0
        %6151 = vmatprep.subr.mxu0 0.0
        %6152 = vmatpush2.msra.mxu0 0.0
        %6153 = vmatprep.subr.mxu0 0.0
        %6154 = vmatpush2.msra.mxu0 0.0
        %6155 = vmatprep.subr.mxu0 0.0
        %6156 = vmatpush2.msra.mxu0 0.0
        %6157 = vmatprep.subr.mxu0 0.0
        %6158 = vmatpush2.msra.mxu0 0.0
        %6159 = vmatprep.subr.mxu0 0.0
        %6160 = vmatpush2.msra.mxu0 0.0
        %6161 = vmatprep.subr.mxu0 0.0
        %6162 = vmatpush2.msra.mxu0 0.0
        %6163 = vmatprep.subr.mxu0 0.0
        %6164 = vmatpush2.msra.mxu0 0.0
        %6165 = vmatprep.subr.mxu0 0.0
        %6166 = vmatpush2.msra.mxu0 0.0
        %6167 = vmatprep.mubr.f32.mxu0 0.0
        %6168 = vmatmul.mubr.f32.gmra.mxu0 %v5829
        %v6169 = vpop.f32.mrf.mxu0
        %v6170 = vadd.f32 %v6028, %v6169
        %v6171 = vpop.f32.mrf.mxu0
        %v6172 = vadd.f32 %v6030, %v6171
        %6173 = vdwg.mxu0
        %6174 = vmatprep.subr.mxu0 %v5895
        %6175 = vmatpush1.msra.mxu0 %v5894
        %6176 = vmatprep.subr.mxu0 %v5891
        %6177 = vmatpush1.msra.mxu0 %v5890
        %6178 = vmatprep.subr.mxu0 %v5887
        %6179 = vmatpush1.msra.mxu0 %v5886
        %6180 = vmatprep.subr.mxu0 %v5883
        %6181 = vmatpush1.msra.mxu0 %v5882
        %6182 = vmatprep.subr.mxu0 %v5879
        %6183 = vmatpush1.msra.mxu0 %v5878
        %6184 = vmatprep.subr.mxu0 %v5875
        %6185 = vmatpush1.msra.mxu0 %v5874
        %6186 = vmatprep.subr.mxu0 %v5871
        %6187 = vmatpush1.msra.mxu0 %v5870
        %6188 = vmatprep.subr.mxu0 %v5867
        %6189 = vmatpush1.msra.mxu0 %v5866
        %6190 = vmatprep.subr.mxu0 %v5863
        %6191 = vmatpush1.msra.mxu0 %v5862
        %6192 = vmatprep.subr.mxu0 %v5859
        %6193 = vmatpush1.msra.mxu0 %v5858
        %6194 = vmatprep.subr.mxu0 %v5855
        %6195 = vmatpush1.msra.mxu0 %v5854
        %6196 = vmatprep.subr.mxu0 %v5851
        %6197 = vmatpush1.msra.mxu0 %v5850
        %6198 = vmatprep.subr.mxu0 %v5847
        %6199 = vmatpush1.msra.mxu0 %v5846
        %6200 = vmatprep.subr.mxu0 %v5843
        %6201 = vmatpush1.msra.mxu0 %v5842
        %6202 = vmatprep.subr.mxu0 %v5839
        %6203 = vmatpush1.msra.mxu0 %v5838
        %6204 = vmatprep.subr.mxu0 %v5835
        %6205 = vmatpush1.msra.mxu0 %v5834
        %6206 = vmatprep.subr.mxu0 0.0
        %6207 = vmatpush2.msra.mxu0 0.0
        %6208 = vmatprep.subr.mxu0 0.0
        %6209 = vmatpush2.msra.mxu0 0.0
        %6210 = vmatprep.subr.mxu0 0.0
        %6211 = vmatpush2.msra.mxu0 0.0
        %6212 = vmatprep.subr.mxu0 0.0
        %6213 = vmatpush2.msra.mxu0 0.0
        %6214 = vmatprep.subr.mxu0 0.0
        %6215 = vmatpush2.msra.mxu0 0.0
        %6216 = vmatprep.subr.mxu0 0.0
        %6217 = vmatpush2.msra.mxu0 0.0
        %6218 = vmatprep.subr.mxu0 0.0
        %6219 = vmatpush2.msra.mxu0 0.0
        %6220 = vmatprep.subr.mxu0 0.0
        %6221 = vmatpush2.msra.mxu0 0.0
        %6222 = vmatprep.subr.mxu0 0.0
        %6223 = vmatpush2.msra.mxu0 0.0
        %6224 = vmatprep.subr.mxu0 0.0
        %6225 = vmatpush2.msra.mxu0 0.0
        %6226 = vmatprep.subr.mxu0 0.0
        %6227 = vmatpush2.msra.mxu0 0.0
        %6228 = vmatprep.subr.mxu0 0.0
        %6229 = vmatpush2.msra.mxu0 0.0
        %6230 = vmatprep.subr.mxu0 0.0
        %6231 = vmatpush2.msra.mxu0 0.0
        %6232 = vmatprep.subr.mxu0 0.0
        %6233 = vmatpush2.msra.mxu0 0.0
        %6234 = vmatprep.subr.mxu0 0.0
        %6235 = vmatpush2.msra.mxu0 0.0
        %6236 = vmatprep.subr.mxu0 0.0
        %6237 = vmatpush2.msra.mxu0 0.0
        %6238 = vmatprep.mubr.f32.mxu0 0.0
        %6239 = vmatmul.mubr.f32.gmra.mxu0 %v5829
        %v6240 = vpop.f32.mrf.mxu0
        %v6241 = vadd.f32 %v6099, %v6240
        %v6242 = vpop.f32.mrf.mxu0
        %v6243 = vadd.f32 %v6101, %v6242
        %6244 = vdwg.mxu0
        %v6245 = vld [vmem:[%s6] sm:$0xf]
        %v6247 = vlaneseq
        %v6248 = vshrl.u32 %v6247, 7
        %v6249 = vsub.s32 0, %v6248
        %v6250 = vrot.slane %v6245, %v6249
        %v6251 = vlaneseq
        %v6252 = vshrl.u32 %v6251, 7
        %v6253 = vsub.s32 1, %v6252
        %v6254 = vrot.slane %v6245, %v6253
        %v6255 = vlaneseq
        %v6256 = vshrl.u32 %v6255, 7
        %v6257 = vsub.s32 2, %v6256
        %v6258 = vrot.slane %v6245, %v6257
        %v6259 = vlaneseq
        %v6260 = vshrl.u32 %v6259, 7
        %v6261 = vsub.s32 3, %v6260
        %v6262 = vrot.slane %v6245, %v6261
        %v6267 = vadd.f32 %v6170, %v6250
        %v6268 = vadd.f32 %v6172, %v6254
        %v6269 = vadd.f32 %v6241, %v6258
        %v6270 = vadd.f32 %v6243, %v6262
        %v6271 = vld [vmem:[%s1294] sm:$0xff]
        %v6272 = vxor.u32 %v6267, 2147483648
        %v6273 = vmul.f32 %v6272, 1.442695
        %v6274 = vpow.pop %v6273
        %v6275 = vadd.f32 %v6274, 1.0
        %v6276 = vrcp.pop %v6275
        %v6277 = vmul.f32 1.0, %v6276
        %v6278 = vxor.u32 %v6268, 2147483648
        %v6279 = vmul.f32 %v6278, 1.442695
        %v6280 = vpow.pop %v6279
        %v6281 = vadd.f32 %v6280, 1.0
        %v6282 = vrcp.pop %v6281
        %v6283 = vmul.f32 1.0, %v6282
        %v6284 = vtanh.pop %v6269
        %v6285 = vxor.u32 %v6270, 2147483648
        %v6286 = vmul.f32 %v6285, 1.442695
        %v6287 = vpow.pop %v6286
        %v6288 = vadd.f32 %v6287, 1.0
        %v6289 = vrcp.pop %v6288
        %v6290 = vmul.f32 1.0, %v6289
        %v6291 = vmul.f32 %v6283, %v6271
        %v6292 = vmul.f32 %v6277, %v6284
        %v6293 = vadd.f32 %v6291, %v6292
        %v6294 = vtanh.pop %v6293
        %v6295 = vmul.f32 %v6290, %v6294
        %6296 = vst [vmem:[%s918] sm:$0xff] %v6295
        %6297 = vst [vmem:[%s1294] sm:$0xff] %v6293
        %s6298 = scalar_lea.vmem %s192, 56 [#allocation13]
        %6299 = vst [vmem:[%s6298] sm:$0xff] %v6295
        %s6300 = sand.u32 %s100, 1
        %s6301 = scalar_lea.sflag [#allocation12], %s6300
        %s6302 = sand.u32 %s100, 1
        %s6303 = smul.addr %s6302, 64
        %s6304 = scalar_lea.vmem [#allocation13], %s6303
        // Predicated region
        $region57: #{tpu_custom_call.1} parent=31 // pred_check
          %p6305 = pneg %p110
        $region58: #{tpu_custom_call.1} parent=31 // pred_check_branch
          %6307 = sbr.rel (%p6305) target = $region60
        $region59: #{tpu_custom_call.1} parent=31 // pred_region
          %s6308 = smul.u32 8, %s24
          %s6310 = ssub.s32 1024, 1024
          %6311 = vsyncadd %s6301, %s6310
          %s6312 = smul.addr %s6308, 128
          %s6313 = scalar_lea.hbm %s7, %s6312
          %s6314 = sshll.u32 %s6304, 4
          %s6315 = int_to_ptr.vmem [resolvable:$true] %s6314
          %6320 = dma.vmem_to_hbm [thread:$0]  %s6315, 1024, %s6313, %s6301, 128, 128, 8
        $region60: #{tpu_custom_call.1} parent=31 // pred_fallthru
          _
      $region32: #{tpu_custom_call.1} parent=5 // pred_fallthru
        _
      %p6321 = scmp.le.s32.totalorder 2, %s19
      // Predicated region
      $region61: #{tpu_custom_call.1} parent=5 // pred_check
        %p6322 = pneg %p6321
      $region62: #{tpu_custom_call.1} parent=5 // pred_check_branch
        %6324 = sbr.rel (%p6322) target = $region64
      $region63: #{tpu_custom_call.1} parent=5 // pred_region
        %s6325 = ssub.s32 %s19, 2
        // Predicated region
        $region65: #{tpu_custom_call.1} parent=63 // pred_check
          %p6326 = pneg %p116
        $region66: #{tpu_custom_call.1} parent=63 // pred_check_branch
          %6328 = sbr.rel (%p6326) target = $region68
        $region67: #{tpu_custom_call.1} parent=63 // pred_region
          %s6329 = sand.u32 %s101, 1
          %s6330 = scalar_lea.sflag [#allocation12], %s6329
          %s6331 = sand.u32 %s101, 1
          %s6332 = smul.addr %s6331, 64
          %s6333 = scalar_lea.vmem [#allocation13], %s6332
          %6334 = dma.done %s6330, 1024
        $region68: #{tpu_custom_call.1} parent=63 // pred_fallthru
          _
      $region64: #{tpu_custom_call.1} parent=5 // pred_fallthru
        _
    $region6: #{tpu_custom_call.1} parent=1 // loop_footer
      %s23 = sadd.s32 1, %s19
    $region7: #{tpu_custom_call.1} parent=1 // loop_footer_branch
      %18 = sbr.rel target = $region3
    $region8: #{tpu_custom_call.1} parent=1 // loop_exit
      _
    %6335 = vsyncpa [#allocation11], 1
    %s6336 = scalar_lea.sflag [#allocation11], 1
    %6337 = vsyncpa %s6336, 1
    %6338 = vsyncpa [#allocation12], 1
    %s6339 = scalar_lea.sflag [#allocation12], 1
    %6340 = vsyncpa %s6339, 1
  %6341 = vsyncmov [#allocation9]
  %s6342 = vpop.sfrf %6341
  %p6343 = scmp.eq.s32.totalorder %s6342, 0
  %p6344 = pneg %p6343
  %6346 = shalt.err (%p6344)
  %s6347 = scalar_lea.sflag [#allocation9], 1
  %6348 = vsyncmov %s6347
  %s6349 = vpop.sfrf %6348
  %p6350 = scmp.eq.s32.totalorder %s6349, 0
  %p6351 = pneg %p6350
  %6353 = shalt.err (%p6351)
  %s6354 = scalar_lea.sflag [#allocation9], 2
  %6355 = vsyncmov %s6354
  %s6356 = vpop.sfrf %6355
  %p6357 = scmp.eq.s32.totalorder %s6356, 0
  %p6358 = pneg %p6357
  %6360 = shalt.err (%p6358)
  %s6361 = scalar_lea.sflag [#allocation9], 3
  %6362 = vsyncmov %s6361
  %s6363 = vpop.sfrf %6362
  %p6364 = scmp.eq.s32.totalorder %s6363, 0
  %p6365 = pneg %p6364
  %6367 = shalt.err (%p6365)

</llo_original>
